<compile_context>
chip_gen: v7x
topology: tpu7x:2x2x1
jax: 0.10.0
libtpu: 0.0.40
codegen_flags: <defaults>
</compile_context>

<pallas_src>
import functools

import jax
import jax.numpy as jnp
from jax.experimental import pallas as pl
from jax.experimental.pallas import tpu as pltpu


# ---------------------------------------------------------------------------
# Static (Python-time) helpers: U, C and tile sizes are all static.
# ---------------------------------------------------------------------------

def _plane_params(o, a, b, C, U, center):
    """Source channel and (sx, sy) coefficients feeding output (o, U*h+a, U*w+b)."""
    m = o * U * U + a * U + b          # disp0 channel PixelShuffle reads for (o, a, b)
    k, c = divmod(m, C)                # torch.cat order: disp0 channel m = k*C + c
    i, j = divmod(k, U)                # plane index k = i*U + j
    return c, 4.0 * i - center, 4.0 * j - center


def _vmem_budget_and_limit():
    """Per-generation (working-set budget, scoped-VMEM limit) in bytes."""
    cap = 128 * 1024 * 1024                       # v4/v5e/v6e physical VMEM per core
    try:
        kind = jax.devices()[0].device_kind.lower()
        if "v7" in kind or "7x" in kind:
            cap = 64 * 1024 * 1024                # v7x: 64 MiB per TensorCore
    except Exception:                             # no TPU visible: be conservative
        cap = 64 * 1024 * 1024
    budget = min(cap // 2 - (4 << 20), 56 << 20)       # 28 MiB v7x, 56 MiB v5e/v6e
    limit = min(budget + (24 << 20), cap - (8 << 20))  # 52 MiB v7x, 80 MiB v5e/v6e
    return budget, limit


def _pick_row_tile(H, N, row_bytes, budget, min_steps=8):
    """Row tile TR: multiple of 8 dividing H, fits `budget`, and (if possible)
    keeps the grid at >= min_steps steps so input DMA, compute and the U^2-wide
    output writeback actually overlap (and v7x megacore has work to shard)."""
    if H <= 8:
        return H
    cands = [t for t in range(8, H + 1, 8) if H % t == 0]
    if not cands:
        # TODO(synk): pad H to a multiple of 8 instead of one full-height block
        # when a large H has no multiple-of-8 divisor.
        return H
    fitting = [t for t in cands if t * row_bytes <= budget] or [min(cands)]
    good = [t for t in fitting if N * (H // t) >= min_steps]
    return max(good) if good else min(fitting)


# ---------------------------------------------------------------------------
# Kernel
# ---------------------------------------------------------------------------

def _lane_repeat(x, U):
    """rep(x)[h, U*w + b] = x[h, w]  (duplicate every column U times).

    Lowered as broadcast + minor-dim collapse; kept to U+1 uses per tile in the
    C==1 fast path so any relayout cost stays hidden under the HBM stream."""
    if U == 1:
        return x
    TR, W = x.shape
    return jnp.broadcast_to(x[:, :, None], (TR, W, U)).reshape(TR, W * U)


def _fused_kernel(disp_ref, dx_ref, dy_ref, out_ref, *, U, C, center):
    # Blocks: disp/dx/dy (1, C, TR, W); out (1, C, TR, U*U*W) -- a packed layout
    # whose row-major bytes equal the final (C, U*TR, U*W) PixelShuffle output.
    TR, W = disp_ref.shape[2], disp_ref.shape[3]
    UW = U * W
    scale = float(U)
    lane = jax.lax.broadcasted_iota(jnp.int32, (1, UW), 1) % U   # b = lane % U

    if C == 1:
        d, dxv, dyv = disp_ref[0, 0], dx_ref[0, 0], dy_ref[0, 0]
        # Within a slab `a`: sx depends only on a, sy only on b = lane % U.
        sy_lane = (4.0 * lane.astype(jnp.float32) - center).astype(d.dtype)
        dy_term = _lane_repeat(dyv, U) * sy_lane      # shared across all slabs
        wd = scale * d
        for a in range(U):
            sx = 4.0 * a - center
            slab = _lane_repeat(wd + sx * dxv, U) + dy_term
            out_ref[0, 0, :, a * UW:(a + 1) * UW] = slab.astype(out_ref.dtype)
    else:
        # General channel count: the source channel / plane can differ per
        # lane parity b within a slab, so build the slab with per-b selects.
        for o in range(C):
            for a in range(U):
                slab = None
                for b in range(U):
                    c, sx, sy = _plane_params(o, a, b, C, U, center)
                    plane = (scale * disp_ref[0, c] + sx * dx_ref[0, c]
                             + sy * dy_ref[0, c])
                    wide = _lane_repeat(plane, U)
                    slab = wide if slab is None else jnp.where(lane == b, wide, slab)
                out_ref[0, o, :, a * UW:(a + 1) * UW] = slab.astype(out_ref.dtype)


# ---------------------------------------------------------------------------
# Public API
# ---------------------------------------------------------------------------

def slant_d_upsample_t4t4(tile_disp, tile_dx, tile_dy, upscale=2):
    """Forward pass of SlantDUpsampleBySlantedPlaneT4T4 (NCHW float inputs)."""
    U = int(upscale)
    center = 4.0 * (U - 1) / 2.0
    assert tile_disp.shape == tile_dx.shape == tile_dy.shape
    N, C, H, W = tile_disp.shape
    dtype = tile_disp.dtype
    item = jnp.dtype(dtype).itemsize

    budget, vmem_limit = _vmem_budget_and_limit()
    # Per-row VMEM: double-buffered pipeline blocks (3 inputs + U^2-wide output)
    # plus ~4 slab-sized in-kernel temporaries the pipeline does not see.
    row_bytes = 2 * (3 + U * U) * C * W * item + 4 * U * W * item
    tr = _pick_row_tile(H, N, row_bytes, budget)
    grid = (N, H // tr)

    in_spec = pl.BlockSpec((1, C, tr, W), lambda n, r: (n, 0, r, 0))
    out_spec = pl.BlockSpec((1, C, tr, U * U * W), lambda n, r: (n, 0, r, 0))
    cost = pl.CostEstimate(
        flops=4 * N * C * U * U * H * W,
        transcendentals=0,
        bytes_accessed=(3 + U * U) * N * C * H * W * item)

    kernel = functools.partial(_fused_kernel, U=U, C=C, center=center)
    packed = pl.pallas_call(
        kernel,
        out_shape=jax.ShapeDtypeStruct((N, C, H, U * U * W), dtype),
        grid=grid,
        in_specs=[in_spec, in_spec, in_spec],
        out_specs=out_spec,
        compiler_params=pltpu.CompilerParams(
            dimension_semantics=("parallel", "parallel"),
            vmem_limit_bytes=int(vmem_limit)),
        cost_estimate=cost,
    )(tile_disp, tile_dx, tile_dy)

    # Free (bitcast) reshape: row-major (N, C, H, U*U*W) == (N, C, U*H, U*W).
    return packed.reshape(N, C, U * H, U * W)


class SlantDUpsampleBySlantedPlaneT4T4:
    """Functional analogue of the PyTorch module."""

    def __init__(self, upscale):
        self.upscale = upscale

    def __call__(self, tile_disp, tile_dx, tile_dy):
        return slant_d_upsample_t4t4(tile_disp, tile_dx, tile_dy, self.upscale)


# ---------------------------------------------------------------------------
# Pure-JAX replica of the PyTorch forward (verification only).
# ---------------------------------------------------------------------------

def _reference(tile_disp, tile_dx, tile_dy, upscale):
    U = upscale
    center = 4 * (U - 1) / 2
    d = tile_disp * U
    planes = [d + (i * 4 - center) * tile_dx + (j * 4 - center) * tile_dy
              for i in range(U) for j in range(U)]
    disp0 = jnp.concatenate(planes, axis=1)
    N, CU2, H, W = disp0.shape
    Co = CU2 // (U * U)
    ps = disp0.reshape(N, Co, U, U, H, W).transpose(0, 1, 4, 2, 5, 3)
    return ps.reshape(N, Co, U * H, U * W)


if __name__ == "__main__":
    key = jax.random.PRNGKey(0)

    # (shape, upscale): HitNet tile slant maps are 1-channel NCHW; the C=2 case
    # exercises the exact torch.cat + PixelShuffle channel-mixing order.
    cases = [((2, 1, 32, 128), 2),
             ((1, 1, 16, 128), 4),
             ((2, 2, 16, 128), 2)]
    for shape, U in cases:
        key, k1, k2, k3 = jax.random.split(key, 4)
        tile_disp = jax.random.normal(k1, shape, dtype=jnp.float32)
        tile_dx = jax.random.normal(k2, shape, dtype=jnp.float32)
        tile_dy = jax.random.normal(k3, shape, dtype=jnp.float32)

        out = slant_d_upsample_t4t4(tile_disp, tile_dx, tile_dy, upscale=U)
        out = jax.block_until_ready(out)

        ref = _reference(tile_disp, tile_dx, tile_dy, U)
        N, C, H, W = shape
        assert out.shape == (N, C, U * H, U * W), out.shape
        err = float(jnp.max(jnp.abs(out - ref)))
        assert jnp.allclose(out, ref, atol=1e-4, rtol=1e-5), err

    print("KERNEL_OK")
</pallas_src>

<mosaic_0001>
module attributes {stable_mosaic.version = 11 : i64} {
  func.func @_fused_kernel(%arg0: i32, %arg1: i32, %arg2: memref<1x1x8x128xf32, #tpu.memory_space<vmem>>, %arg3: memref<1x1x8x128xf32, #tpu.memory_space<vmem>>, %arg4: memref<1x1x8x128xf32, #tpu.memory_space<vmem>>, %arg5: memref<1x1x8x512xf32, #tpu.memory_space<vmem>>) attributes {dimension_semantics = [#tpu.dimension_semantics<parallel>, #tpu.dimension_semantics<parallel>], iteration_bounds = array<i64: 2, 4>, scalar_prefetch = 0 : i64, scratch_operands = 0 : i64, tpu.core_type = #tpu.core_type<tc>, window_params = [{transform_indices = @transform_0, window_bounds = array<i64: 1, 1, 8, 128>}, {transform_indices = @transform_1, window_bounds = array<i64: 1, 1, 8, 128>}, {transform_indices = @transform_2, window_bounds = array<i64: 1, 1, 8, 128>}, {transform_indices = @transform_3, window_bounds = array<i64: 1, 1, 8, 512>}]} {
    %0 = tpu.iota {dimensions = array<i32: 1>} : vector<1x256xi32>
    %c2_i32 = arith.constant 2 : i32
    %c0_i32 = arith.constant 0 : i32
    %1 = arith.cmpi eq, %c2_i32, %c0_i32 : i32
    %c1_i32 = arith.constant 1 : i32
    %2 = arith.select %1, %c1_i32, %c2_i32 : i32
    %3 = vector.broadcast %2 : i32 to vector<1x256xi32>
    %4 = arith.remsi %0, %3 : vector<1x256xi32>
    %c0_i32_0 = arith.constant 0 : i32
    %5 = vector.broadcast %c0_i32_0 : i32 to vector<1x256xi32>
    %6 = arith.cmpi ne, %4, %5 : vector<1x256xi32>
    %c0_i32_1 = arith.constant 0 : i32
    %7 = vector.broadcast %c0_i32_1 : i32 to vector<1x256xi32>
    %8 = arith.cmpi slt, %4, %7 : vector<1x256xi32>
    %c0_i32_2 = arith.constant 0 : i32
    %9 = arith.cmpi slt, %2, %c0_i32_2 : i32
    %10 = vector.broadcast %9 : i1 to vector<1x256xi1>
    %11 = vector.broadcast %10 : vector<1x256xi1> to vector<1x256xi1>
    %12 = arith.xori %8, %11 : vector<1x256xi1>
    %13 = arith.andi %12, %6 : vector<1x256xi1>
    %14 = vector.broadcast %2 : i32 to vector<1x256xi32>
    %15 = arith.addi %4, %14 : vector<1x256xi32>
    %16 = arith.select %13, %15, %4 : vector<1x256xi1>, vector<1x256xi32>
    %c0 = arith.constant 0 : index
    %c0_3 = arith.constant 0 : index
    %c0_4 = arith.constant 0 : index
    %c0_5 = arith.constant 0 : index
    %17 = vector.load %arg2[%c0, %c0_3, %c0_4, %c0_5] : memref<1x1x8x128xf32, #tpu.memory_space<vmem>>, vector<1x1x8x128xf32>
    %18 = vector.shape_cast %17 : vector<1x1x8x128xf32> to vector<8x128xf32>
    %c0_6 = arith.constant 0 : index
    %c0_7 = arith.constant 0 : index
    %c0_8 = arith.constant 0 : index
    %c0_9 = arith.constant 0 : index
    %19 = vector.load %arg3[%c0_6, %c0_7, %c0_8, %c0_9] : memref<1x1x8x128xf32, #tpu.memory_space<vmem>>, vector<1x1x8x128xf32>
    %20 = vector.shape_cast %19 : vector<1x1x8x128xf32> to vector<8x128xf32>
    %c0_10 = arith.constant 0 : index
    %c0_11 = arith.constant 0 : index
    %c0_12 = arith.constant 0 : index
    %c0_13 = arith.constant 0 : index
    %21 = vector.load %arg4[%c0_10, %c0_11, %c0_12, %c0_13] : memref<1x1x8x128xf32, #tpu.memory_space<vmem>>, vector<1x1x8x128xf32>
    %22 = vector.shape_cast %21 : vector<1x1x8x128xf32> to vector<8x128xf32>
    %23 = arith.sitofp %16 : vector<1x256xi32> to vector<1x256xf32>
    %cst = arith.constant 4.000000e+00 : f32
    %24 = vector.broadcast %cst : f32 to vector<1x256xf32>
    %25 = arith.mulf %24, %23 : vector<1x256xf32>
    %cst_14 = arith.constant 2.000000e+00 : f32
    %26 = vector.broadcast %cst_14 : f32 to vector<1x256xf32>
    %27 = arith.subf %25, %26 : vector<1x256xf32>
    %28 = vector.shape_cast %22 : vector<8x128xf32> to vector<8x128x1xf32>
    %29 = vector.shape_cast %28 : vector<8x128x1xf32> to vector<8x128x1xf32>
    %30 = vector.broadcast %29 : vector<8x128x1xf32> to vector<8x128x2xf32>
    %31 = vector.shape_cast %30 : vector<8x128x2xf32> to vector<8x256xf32>
    %32 = vector.broadcast %27 : vector<1x256xf32> to vector<8x256xf32>
    %33 = arith.mulf %31, %32 : vector<8x256xf32>
    %cst_15 = arith.constant 2.000000e+00 : f32
    %34 = vector.broadcast %cst_15 : f32 to vector<8x128xf32>
    %35 = arith.mulf %34, %18 : vector<8x128xf32>
    %cst_16 = arith.constant -2.000000e+00 : f32
    %36 = vector.broadcast %cst_16 : f32 to vector<8x128xf32>
    %37 = arith.mulf %36, %20 : vector<8x128xf32>
    %38 = arith.addf %35, %37 : vector<8x128xf32>
    %39 = vector.shape_cast %38 : vector<8x128xf32> to vector<8x128x1xf32>
    %40 = vector.shape_cast %39 : vector<8x128x1xf32> to vector<8x128x1xf32>
    %41 = vector.broadcast %40 : vector<8x128x1xf32> to vector<8x128x2xf32>
    %42 = vector.shape_cast %41 : vector<8x128x2xf32> to vector<8x256xf32>
    %43 = arith.addf %42, %33 : vector<8x256xf32>
    %c0_17 = arith.constant 0 : index
    %c0_18 = arith.constant 0 : index
    %c0_19 = arith.constant 0 : index
    %c0_20 = arith.constant 0 : index
    %44 = vector.load %arg5[%c0_17, %c0_18, %c0_19, %c0_20] : memref<1x1x8x512xf32, #tpu.memory_space<vmem>>, vector<1x1x8x256xf32>
    %45 = vector.shape_cast %44 : vector<1x1x8x256xf32> to vector<8x256xf32>
    %46 = vector.shape_cast %43 : vector<8x256xf32> to vector<1x1x8x256xf32>
    tpu.vector_store %arg5[%c0_17, %c0_18, %c0_19, %c0_20], %46 {strides = array<i32>} : memref<1x1x8x512xf32, #tpu.memory_space<vmem>>, vector<1x1x8x256xf32>,
    %cst_21 = arith.constant 2.000000e+00 : f32
    %47 = vector.broadcast %cst_21 : f32 to vector<8x128xf32>
    %48 = arith.mulf %47, %20 : vector<8x128xf32>
    %49 = arith.addf %35, %48 : vector<8x128xf32>
    %50 = vector.shape_cast %49 : vector<8x128xf32> to vector<8x128x1xf32>
    %51 = vector.shape_cast %50 : vector<8x128x1xf32> to vector<8x128x1xf32>
    %52 = vector.broadcast %51 : vector<8x128x1xf32> to vector<8x128x2xf32>
    %53 = vector.shape_cast %52 : vector<8x128x2xf32> to vector<8x256xf32>
    %54 = arith.addf %53, %33 : vector<8x256xf32>
    %c0_22 = arith.constant 0 : index
    %c0_23 = arith.constant 0 : index
    %c0_24 = arith.constant 0 : index
    %c256 = arith.constant 256 : index
    %55 = vector.load %arg5[%c0_22, %c0_23, %c0_24, %c256] : memref<1x1x8x512xf32, #tpu.memory_space<vmem>>, vector<1x1x8x256xf32>
    %56 = vector.shape_cast %55 : vector<1x1x8x256xf32> to vector<8x256xf32>
    %57 = vector.shape_cast %54 : vector<8x256xf32> to vector<1x1x8x256xf32>
    tpu.vector_store %arg5[%c0_22, %c0_23, %c0_24, %c256], %57 {strides = array<i32>} : memref<1x1x8x512xf32, #tpu.memory_space<vmem>>, vector<1x1x8x256xf32>,
    return
  }
  func.func @transform_0(%arg0: i32, %arg1: i32) -> (i32, i32, i32, i32) {
    %c0_i32 = arith.constant 0 : i32
    %c0_i32_0 = arith.constant 0 : i32
    %c0_i32_1 = arith.constant 0 : i32
    return %arg0, %c0_i32, %arg1, %c0_i32_0 : i32, i32, i32, i32
  }
  func.func @transform_1(%arg0: i32, %arg1: i32) -> (i32, i32, i32, i32) {
    %c0_i32 = arith.constant 0 : i32
    %c0_i32_0 = arith.constant 0 : i32
    %c0_i32_1 = arith.constant 0 : i32
    return %arg0, %c0_i32, %arg1, %c0_i32_0 : i32, i32, i32, i32
  }
  func.func @transform_2(%arg0: i32, %arg1: i32) -> (i32, i32, i32, i32) {
    %c0_i32 = arith.constant 0 : i32
    %c0_i32_0 = arith.constant 0 : i32
    %c0_i32_1 = arith.constant 0 : i32
    return %arg0, %c0_i32, %arg1, %c0_i32_0 : i32, i32, i32, i32
  }
  func.func @transform_3(%arg0: i32, %arg1: i32) -> (i32, i32, i32, i32) {
    %c0_i32 = arith.constant 0 : i32
    %c0_i32_0 = arith.constant 0 : i32
    %c0_i32_1 = arith.constant 0 : i32
    return %arg0, %c0_i32, %arg1, %c0_i32_0 : i32, i32, i32, i32
  }
}

</mosaic_0001>

<llo_original>
// kernel: tpu_custom_call.1
$region0: #{tpu_custom_call.1}
  #allocation0 [shape = 'u32[]', space=smem, size = 0x4, offset = 0x4, fixed_abs, tag = 'smem constant byte address 0x4 - core index']
  #allocation1 [shape = 'u32[144,128]{1,0:T(1,128)}', space=vmem, size = 0x12000, scoped, tag = 'internal scratch']
  %s0 = inlined_call_operand.hbm [shape: f32[2,1,32,128], index: 0, kind: input, shape index: {}]
  %s1 = inlined_call_operand.hbm [shape: f32[2,1,32,128], index: 1, kind: input, shape index: {}]
  %s2 = inlined_call_operand.hbm [shape: f32[2,1,32,128], index: 2, kind: input, shape index: {}]
  %s3 = inlined_call_operand.hbm [shape: f32[2,1,32,512], index: 3, kind: output, shape index: {}]
  %s4 = sld [smem:[#allocation0]]
  $region57: #{tpu_custom_call.1} parent=0
    _
  %s6 = ssub.s32 1, %s4
  %s7 = scalar_select 0, %s6, %s4
  $region1: #{tpu_custom_call.1} parent=0
    #allocation2 [shape = 'u8[8192]{0}', space=vmem, size = 0x2000, scoped, tag = 'input window, operand 0']
    #allocation3 [shape = 's32[2]{0}', space=sflag, size = 0x8, scoped, tag = 'scoped memory for tpu_custom_call.1']
    #allocation4 [shape = 's32[2]{0}', space=sflag, size = 0x8, scoped, tag = 'scoped memory for tpu_custom_call.1']
    #allocation5 [shape = 'u8[8192]{0}', space=vmem, size = 0x2000, scoped, tag = 'input window, operand 1']
    #allocation6 [shape = 's32[2]{0}', space=sflag, size = 0x8, scoped, tag = 'scoped memory for tpu_custom_call.1']
    #allocation7 [shape = 'u8[8192]{0}', space=vmem, size = 0x2000, scoped, tag = 'input window, operand 2']
    #allocation8 [shape = 'u8[32768]{0}', space=vmem, size = 0x8000, scoped, tag = 'output window, operand 0']
    %8 = vsyncpa [#allocation3], 0
    %s9 = scalar_lea.sflag [#allocation3], 1
    %10 = vsyncpa %s9, 0
    %11 = vsyncpa [#allocation6], 0
    %s12 = scalar_lea.sflag [#allocation6], 1
    %13 = vsyncpa %s12, 0
    %14 = vsyncpa [#allocation4], 0
    %s15 = scalar_lea.sflag [#allocation4], 1
    %16 = vsyncpa %s15, 0
    loop: start=0, step=1, limit=10
    $region2: #{tpu_custom_call.1} parent=1 // loop_pre_header
      _
    $region3: #{tpu_custom_call.1} parent=1 // loop_header
      %s18 = sphi 0, %s22
      %p19 = scmp.ge.s32.totalorder %s18, 10
      %s25 = sphi 0, %s37
      %s26 = sphi 0, %s33
      %s27 = sphi 0, %s25
      %s28 = sphi 0, %s26
      %s29 = sphi 0, %s27
      %s30 = sphi 0, %s28
      %s42 = sphi 0, %s44
      %s45 = sphi 0, %s42
      %s46 = sphi 0, %s45
      %s62 = sphi 0, %s46
      %s70 = sphi 0, %s72
      %s73 = sphi 0, %s70
      %s74 = sphi 0, %s73
      %s90 = sphi 0, %s74
      %s98 = sphi 0, %s100
      %s101 = sphi 0, %s98
      %s102 = sphi 0, %s101
      %s118 = sphi 0, %s102
      %s126 = sphi 0, %s128
      %s129 = sphi 0, %s126
      %s130 = sphi 0, %s129
      %s146 = sphi 0, %s130
    $region4: #{tpu_custom_call.1} parent=1 // loop_header_branch
      %21 = sbr.rel (%p19) target = $region8
    $region5: #{tpu_custom_call.1} parent=1 // loop_body
      %s23 = ssub.s32 %s18, 1
      %s24 = ssub.s32 %s18, 2
      %s31 = sadd.s32 1, %s26
      %p32 = scmp.ge.s32.totalorder %s31, 4
      %s33 = scalar_select %p32, 0, %s31
      %s34 = sadd.s32 1, %s25
      %s35 = scalar_select %p32, %s34, %s25
      %p36 = scmp.ge.s32.totalorder %s35, 2
      %s37 = scalar_select %p36, 0, %s35
      %s38 = ssub.s32 %s25, %s37
      %s39 = ssub.s32 %s26, %s33
      %s40 = sor.u32 %s38, %s39
      %p41 = scmp.eq.s32.totalorder %s40, 0
      %s43 = sadd.s32 %s42, 1
      %s44 = scalar_select %p41, %s42, %s43
      %p47 = pneg %p41
      %p48 = scmp.eq.s32.totalorder %s18, 7
      %p49 = por %p47, %p48
      %p50 = scmp.ne.s32.totalorder %s42, %s45
      %p51 = scmp.eq.s32.totalorder %s18, 0
      %p52 = por %p50, %p51
      %p53 = scmp.ne.s32.totalorder %s42, %s45
      %p54 = scmp.eq.s32.totalorder %s23, 7
      %p55 = por %p53, %p54
      %p56 = scmp.ne.s32.totalorder %s45, %s46
      %p57 = scmp.eq.s32.totalorder %s23, 0
      %p58 = por %p56, %p57
      %p59 = scmp.ne.s32.totalorder %s45, %s46
      %p60 = scmp.eq.s32.totalorder %s24, 7
      %p61 = por %p59, %p60
      %p63 = scmp.ne.s32.totalorder %s46, %s62
      %p64 = scmp.eq.s32.totalorder %s24, 0
      %p65 = por %p63, %p64
      %s66 = ssub.s32 %s25, %s37
      %s67 = ssub.s32 %s26, %s33
      %s68 = sor.u32 %s66, %s67
      %p69 = scmp.eq.s32.totalorder %s68, 0
      %s71 = sadd.s32 %s70, 1
      %s72 = scalar_select %p69, %s70, %s71
      %p75 = pneg %p69
      %p76 = scmp.eq.s32.totalorder %s18, 7
      %p77 = por %p75, %p76
      %p78 = scmp.ne.s32.totalorder %s70, %s73
      %p79 = scmp.eq.s32.totalorder %s18, 0
      %p80 = por %p78, %p79
      %p81 = scmp.ne.s32.totalorder %s70, %s73
      %p82 = scmp.eq.s32.totalorder %s23, 7
      %p83 = por %p81, %p82
      %p84 = scmp.ne.s32.totalorder %s73, %s74
      %p85 = scmp.eq.s32.totalorder %s23, 0
      %p86 = por %p84, %p85
      %p87 = scmp.ne.s32.totalorder %s73, %s74
      %p88 = scmp.eq.s32.totalorder %s24, 7
      %p89 = por %p87, %p88
      %p91 = scmp.ne.s32.totalorder %s74, %s90
      %p92 = scmp.eq.s32.totalorder %s24, 0
      %p93 = por %p91, %p92
      %s94 = ssub.s32 %s25, %s37
      %s95 = ssub.s32 %s26, %s33
      %s96 = sor.u32 %s94, %s95
      %p97 = scmp.eq.s32.totalorder %s96, 0
      %s99 = sadd.s32 %s98, 1
      %s100 = scalar_select %p97, %s98, %s99
      %p103 = pneg %p97
      %p104 = scmp.eq.s32.totalorder %s18, 7
      %p105 = por %p103, %p104
      %p106 = scmp.ne.s32.totalorder %s98, %s101
      %p107 = scmp.eq.s32.totalorder %s18, 0
      %p108 = por %p106, %p107
      %p109 = scmp.ne.s32.totalorder %s98, %s101
      %p110 = scmp.eq.s32.totalorder %s23, 7
      %p111 = por %p109, %p110
      %p112 = scmp.ne.s32.totalorder %s101, %s102
      %p113 = scmp.eq.s32.totalorder %s23, 0
      %p114 = por %p112, %p113
      %p115 = scmp.ne.s32.totalorder %s101, %s102
      %p116 = scmp.eq.s32.totalorder %s24, 7
      %p117 = por %p115, %p116
      %p119 = scmp.ne.s32.totalorder %s102, %s118
      %p120 = scmp.eq.s32.totalorder %s24, 0
      %p121 = por %p119, %p120
      %s122 = ssub.s32 %s25, %s37
      %s123 = ssub.s32 %s26, %s33
      %s124 = sor.u32 %s122, %s123
      %p125 = scmp.eq.s32.totalorder %s124, 0
      %s127 = sadd.s32 %s126, 1
      %s128 = scalar_select %p125, %s126, %s127
      %p131 = pneg %p125
      %p132 = scmp.eq.s32.totalorder %s18, 7
      %p133 = por %p131, %p132
      %p134 = scmp.ne.s32.totalorder %s126, %s129
      %p135 = scmp.eq.s32.totalorder %s18, 0
      %p136 = por %p134, %p135
      %p137 = scmp.ne.s32.totalorder %s126, %s129
      %p138 = scmp.eq.s32.totalorder %s23, 7
      %p139 = por %p137, %p138
      %p140 = scmp.ne.s32.totalorder %s129, %s130
      %p141 = scmp.eq.s32.totalorder %s23, 0
      %p142 = por %p140, %p141
      %p143 = scmp.ne.s32.totalorder %s129, %s130
      %p144 = scmp.eq.s32.totalorder %s24, 7
      %p145 = por %p143, %p144
      %p147 = scmp.ne.s32.totalorder %s130, %s146
      %p148 = scmp.eq.s32.totalorder %s24, 0
      %p149 = por %p147, %p148
      %p150 = scmp.le.s32.totalorder 1, %s18
      %p151 = scmp.lt.s32.totalorder %s18, 9
      %p152 = pnand %p150, %p151
      %p153 = pneg %p152
      // Predicated region
      $region9: #{tpu_custom_call.1} parent=5 // pred_check
        _
      $region10: #{tpu_custom_call.1} parent=5 // pred_check_branch
        %155 = sbr.rel (%p152) target = $region12
      $region11: #{tpu_custom_call.1} parent=5 // pred_region
        %s156 = ssub.s32 %s18, 1
      $region12: #{tpu_custom_call.1} parent=5 // pred_fallthru
        _
      %p157 = scmp.lt.s32.totalorder %s18, 8
      // Predicated region
      $region13: #{tpu_custom_call.1} parent=5 // pred_check
        %p158 = pneg %p157
      $region14: #{tpu_custom_call.1} parent=5 // pred_check_branch
        %160 = sbr.rel (%p158) target = $region16
      $region15: #{tpu_custom_call.1} parent=5 // pred_region
        // Predicated region
        $region17: #{tpu_custom_call.1} parent=15 // pred_check
          %p161 = pneg %p52
        $region18: #{tpu_custom_call.1} parent=15 // pred_check_branch
          %163 = sbr.rel (%p161) target = $region20
        $region19: #{tpu_custom_call.1} parent=15 // pred_region
          %s164 = sand.u32 %s42, 1
          %s165 = scalar_lea.sflag [#allocation3], %s164
          %s166 = sand.u32 %s42, 1
          %s167 = smul.addr %s166, 8
          %s168 = scalar_lea.vmem [#allocation2], %s167
          %s170 = ssub.s32 128, 128
          %171 = vsyncadd %s165, %s170
          %s172 = smul.addr %s25, 4
          %s173 = sadd.s32 %s26, %s172
          %s174 = smul.addr %s173, 128
          %s175 = scalar_lea.hbm %s0, %s174
          %s177 = sshll.u32 %s168, 4
          %s178 = int_to_ptr.vmem [resolvable:$true] %s177
          %180 = dma.hbm_to_vmem [thread:$0]  %s175, 128, %s178, %s165
        $region20: #{tpu_custom_call.1} parent=15 // pred_fallthru
          _
        // Predicated region
        $region21: #{tpu_custom_call.1} parent=15 // pred_check
          %p181 = pneg %p80
        $region22: #{tpu_custom_call.1} parent=15 // pred_check_branch
          %183 = sbr.rel (%p181) target = $region24
        $region23: #{tpu_custom_call.1} parent=15 // pred_region
          %s184 = sand.u32 %s18, 1
          %s185 = scalar_lea.sflag [#allocation6], %s184
          %s186 = sand.u32 %s70, 1
          %s187 = smul.addr %s186, 8
          %s188 = scalar_lea.vmem [#allocation5], %s187
          %s190 = ssub.s32 128, 128
          %191 = vsyncadd %s185, %s190
          %s192 = smul.addr %s25, 4
          %s193 = sadd.s32 %s26, %s192
          %s194 = smul.addr %s193, 128
          %s195 = scalar_lea.hbm %s1, %s194
          %s197 = sshll.u32 %s188, 4
          %s198 = int_to_ptr.vmem [resolvable:$true] %s197
          %200 = dma.hbm_to_vmem [thread:$0]  %s195, 128, %s198, %s185
        $region24: #{tpu_custom_call.1} parent=15 // pred_fallthru
          _
        // Predicated region
        $region25: #{tpu_custom_call.1} parent=15 // pred_check
          %p201 = pneg %p108
        $region26: #{tpu_custom_call.1} parent=15 // pred_check_branch
          %203 = sbr.rel (%p201) target = $region28
        $region27: #{tpu_custom_call.1} parent=15 // pred_region
          %s204 = sand.u32 %s18, 1
          %s205 = scalar_lea.sflag [#allocation6], %s204
          %s206 = sand.u32 %s98, 1
          %s207 = smul.addr %s206, 8
          %s208 = scalar_lea.vmem [#allocation7], %s207
          %s210 = ssub.s32 128, 128
          %211 = vsyncadd %s205, %s210
          %s212 = smul.addr %s25, 4
          %s213 = sadd.s32 %s26, %s212
          %s214 = smul.addr %s213, 128
          %s215 = scalar_lea.hbm %s2, %s214
          %s217 = sshll.u32 %s208, 4
          %s218 = int_to_ptr.vmem [resolvable:$true] %s217
          %220 = dma.hbm_to_vmem [thread:$0]  %s215, 128, %s218, %s205
        $region28: #{tpu_custom_call.1} parent=15 // pred_fallthru
          _
      $region16: #{tpu_custom_call.1} parent=5 // pred_fallthru
        _
      %p221 = scmp.le.s32.totalorder 1, %s18
      %p222 = scmp.lt.s32.totalorder %s18, 9
      %p223 = pnand %p221, %p222
      %p224 = pneg %p223
      // Predicated region
      $region29: #{tpu_custom_call.1} parent=5 // pred_check
        _
      $region30: #{tpu_custom_call.1} parent=5 // pred_check_branch
        %226 = sbr.rel (%p223) target = $region32
      $region31: #{tpu_custom_call.1} parent=5 // pred_region
        %s227 = ssub.s32 %s18, 1
        %s228 = sand.u32 %s45, 1
        %s229 = scalar_lea.sflag [#allocation3], %s228
        %s230 = sand.u32 %s45, 1
        %s231 = smul.addr %s230, 8
        %s232 = scalar_lea.vmem [#allocation2], %s231
        // Predicated region
        $region33: #{tpu_custom_call.1} parent=31 // pred_check
          %p233 = pneg %p58
        $region34: #{tpu_custom_call.1} parent=31 // pred_check_branch
          %235 = sbr.rel (%p233) target = $region36
        $region35: #{tpu_custom_call.1} parent=31 // pred_region
          %236 = dma.done %s229, 128
        $region36: #{tpu_custom_call.1} parent=31 // pred_fallthru
          _
        %s237 = sand.u32 %s23, 1
        %s238 = scalar_lea.sflag [#allocation6], %s237
        %s239 = sand.u32 %s73, 1
        %s240 = smul.addr %s239, 8
        %s241 = scalar_lea.vmem [#allocation5], %s240
        // Predicated region
        $region37: #{tpu_custom_call.1} parent=31 // pred_check
          %p242 = pneg %p86
        $region38: #{tpu_custom_call.1} parent=31 // pred_check_branch
          %244 = sbr.rel (%p242) target = $region40
        $region39: #{tpu_custom_call.1} parent=31 // pred_region
          %245 = dma.done %s238, 128
        $region40: #{tpu_custom_call.1} parent=31 // pred_fallthru
          _
        %s246 = sand.u32 %s23, 1
        %s247 = scalar_lea.sflag [#allocation6], %s246
        %s248 = sand.u32 %s101, 1
        %s249 = smul.addr %s248, 8
        %s250 = scalar_lea.vmem [#allocation7], %s249
        // Predicated region
        $region41: #{tpu_custom_call.1} parent=31 // pred_check
          %p251 = pneg %p114
        $region42: #{tpu_custom_call.1} parent=31 // pred_check_branch
          %253 = sbr.rel (%p251) target = $region44
        $region43: #{tpu_custom_call.1} parent=31 // pred_region
          %254 = dma.done %s247, 128
        $region44: #{tpu_custom_call.1} parent=31 // pred_fallthru
          _
        %s255 = sand.u32 %s45, 1
        %s256 = scalar_lea.sflag [#allocation3], %s255
        %s257 = sand.u32 %s45, 1
        %s258 = smul.addr %s257, 8
        %s259 = scalar_lea.vmem [#allocation2], %s258
        %p260 = pneg %p58
        %p261 = pneg %p55
        %s262 = sand.u32 %s23, 1
        %s263 = scalar_lea.sflag [#allocation6], %s262
        %s264 = sand.u32 %s73, 1
        %s265 = smul.addr %s264, 8
        %s266 = scalar_lea.vmem [#allocation5], %s265
        %p267 = pneg %p86
        %p268 = pneg %p83
        %s269 = sand.u32 %s23, 1
        %s270 = scalar_lea.sflag [#allocation6], %s269
        %s271 = sand.u32 %s101, 1
        %s272 = smul.addr %s271, 8
        %s273 = scalar_lea.vmem [#allocation7], %s272
        %p274 = pneg %p114
        %p275 = pneg %p111
        %p276 = pneg %p142
        %p277 = pneg %p139
        %s278 = sand.u32 %s129, 1
        %s279 = scalar_lea.sflag [#allocation4], %s278
        %s280 = sand.u32 %s129, 1
        %s281 = smul.addr %s280, 32
        %s282 = scalar_lea.vmem [#allocation8], %s281
        %v283 = vlaneseq
        %v284 = vand.u32 %v283, 127
        %v285 = vadd.s32 %v284, 128
        %vm286 = vcmp.lt.s32.totalorder %v284, 0
        %v287 = vsub.s32 0, %v284
        %v288 = vsel %vm286, %v287, %v284
        %v289 = vshrl.u32 %v288, 1
        %v290 = vand.u32 %v288, 1
        %v291 = vsub.s32 0, %v290
        %v292 = vsel %vm286, %v291, %v290
        %vm293 = vcmp.lt.s32.totalorder %v285, 0
        %v294 = vsub.s32 0, %v285
        %v295 = vsel %vm293, %v294, %v285
        %v296 = vshrl.u32 %v295, 1
        %v297 = vand.u32 %v295, 1
        %v298 = vsub.s32 0, %v297
        %v299 = vsel %vm293, %v298, %v297
        %vm300 = vcmp.ne.s32.totalorder %v292, 0
        %vm301 = vcmp.ne.s32.totalorder %v299, 0
        %vm302 = vcmp.lt.s32.totalorder %v292, 0
        %vm303 = vcmp.lt.s32.totalorder %v299, 0
        %vm304 = vmand %vm302, %vm300
        %vm305 = vmand %vm303, %vm301
        %v306 = vadd.s32 %v292, 2
        %v307 = vadd.s32 %v299, 2
        %v308 = vsel %vm304, %v306, %v292
        %v309 = vsel %vm305, %v307, %v299
        %v310 = vld [vmem:[%s232] sm:$0xff]
        %v311 = vld [vmem:[%s241] sm:$0xff]
        %v312 = vld [vmem:[%s250] sm:$0xff]
        %v313 = vcvt.s32.f32 %v308
        %v314 = vcvt.s32.f32 %v309
        %v315 = vmul.f32 %v313, 4.0
        %v316 = vmul.f32 %v314, 4.0
        %v317 = vsub.f32 %v315, 2.0
        %v318 = vsub.f32 %v316, 2.0
        %v319 = vlaneseq
        %v320 = vshrl.u32 %v319, 7
        %v321 = vsub.s32 0, %v320
        %v322 = vrot.slane %v312, %v321
        %324 = vbcast.lane.b32.xlu0 %v322, 256
        %v325 = vpop.permute.xlu0 %324
        %s327 = sor.u32 256, 8
        %328 = vbcast.lane.b32.xlu0 %v322, %s327
        %v329 = vpop.permute.xlu0 %328
        %s331 = sor.u32 256, 16
        %332 = vbcast.lane.b32.xlu0 %v322, %s331
        %v333 = vpop.permute.xlu0 %332
        %s335 = sor.u32 256, 24
        %336 = vbcast.lane.b32.xlu0 %v322, %s335
        %v337 = vpop.permute.xlu0 %336
        %s339 = sor.u32 256, 32
        %340 = vbcast.lane.b32.xlu0 %v322, %s339
        %v341 = vpop.permute.xlu0 %340
        %s343 = sor.u32 256, 40
        %344 = vbcast.lane.b32.xlu0 %v322, %s343
        %v345 = vpop.permute.xlu0 %344
        %s347 = sor.u32 256, 48
        %348 = vbcast.lane.b32.xlu0 %v322, %s347
        %v349 = vpop.permute.xlu0 %348
        %s351 = sor.u32 256, 56
        %352 = vbcast.lane.b32.xlu0 %v322, %s351
        %v353 = vpop.permute.xlu0 %352
        %s355 = sor.u32 256, 64
        %356 = vbcast.lane.b32.xlu0 %v322, %s355
        %v357 = vpop.permute.xlu0 %356
        %s359 = sor.u32 256, 72
        %360 = vbcast.lane.b32.xlu0 %v322, %s359
        %v361 = vpop.permute.xlu0 %360
        %s363 = sor.u32 256, 80
        %364 = vbcast.lane.b32.xlu0 %v322, %s363
        %v365 = vpop.permute.xlu0 %364
        %s367 = sor.u32 256, 88
        %368 = vbcast.lane.b32.xlu0 %v322, %s367
        %v369 = vpop.permute.xlu0 %368
        %s371 = sor.u32 256, 96
        %372 = vbcast.lane.b32.xlu0 %v322, %s371
        %v373 = vpop.permute.xlu0 %372
        %s375 = sor.u32 256, 104
        %376 = vbcast.lane.b32.xlu0 %v322, %s375
        %v377 = vpop.permute.xlu0 %376
        %s379 = sor.u32 256, 112
        %380 = vbcast.lane.b32.xlu0 %v322, %s379
        %v381 = vpop.permute.xlu0 %380
        %s383 = sor.u32 256, 120
        %384 = vbcast.lane.b32.xlu0 %v322, %s383
        %v385 = vpop.permute.xlu0 %384
        %v386 = vlaneseq
        %v387 = vshrl.u32 %v386, 7
        %v388 = vsub.s32 1, %v387
        %v389 = vrot.slane %v312, %v388
        %391 = vbcast.lane.b32.xlu0 %v389, 256
        %v392 = vpop.permute.xlu0 %391
        %s394 = sor.u32 256, 8
        %395 = vbcast.lane.b32.xlu0 %v389, %s394
        %v396 = vpop.permute.xlu0 %395
        %s398 = sor.u32 256, 16
        %399 = vbcast.lane.b32.xlu0 %v389, %s398
        %v400 = vpop.permute.xlu0 %399
        %s402 = sor.u32 256, 24
        %403 = vbcast.lane.b32.xlu0 %v389, %s402
        %v404 = vpop.permute.xlu0 %403
        %s406 = sor.u32 256, 32
        %407 = vbcast.lane.b32.xlu0 %v389, %s406
        %v408 = vpop.permute.xlu0 %407
        %s410 = sor.u32 256, 40
        %411 = vbcast.lane.b32.xlu0 %v389, %s410
        %v412 = vpop.permute.xlu0 %411
        %s414 = sor.u32 256, 48
        %415 = vbcast.lane.b32.xlu0 %v389, %s414
        %v416 = vpop.permute.xlu0 %415
        %s418 = sor.u32 256, 56
        %419 = vbcast.lane.b32.xlu0 %v389, %s418
        %v420 = vpop.permute.xlu0 %419
        %s422 = sor.u32 256, 64
        %423 = vbcast.lane.b32.xlu0 %v389, %s422
        %v424 = vpop.permute.xlu0 %423
        %s426 = sor.u32 256, 72
        %427 = vbcast.lane.b32.xlu0 %v389, %s426
        %v428 = vpop.permute.xlu0 %427
        %s430 = sor.u32 256, 80
        %431 = vbcast.lane.b32.xlu0 %v389, %s430
        %v432 = vpop.permute.xlu0 %431
        %s434 = sor.u32 256, 88
        %435 = vbcast.lane.b32.xlu0 %v389, %s434
        %v436 = vpop.permute.xlu0 %435
        %s438 = sor.u32 256, 96
        %439 = vbcast.lane.b32.xlu0 %v389, %s438
        %v440 = vpop.permute.xlu0 %439
        %s442 = sor.u32 256, 104
        %443 = vbcast.lane.b32.xlu0 %v389, %s442
        %v444 = vpop.permute.xlu0 %443
        %s446 = sor.u32 256, 112
        %447 = vbcast.lane.b32.xlu0 %v389, %s446
        %v448 = vpop.permute.xlu0 %447
        %s450 = sor.u32 256, 120
        %451 = vbcast.lane.b32.xlu0 %v389, %s450
        %v452 = vpop.permute.xlu0 %451
        %v453 = vlaneseq
        %v454 = vshrl.u32 %v453, 7
        %v455 = vsub.s32 2, %v454
        %v456 = vrot.slane %v312, %v455
        %458 = vbcast.lane.b32.xlu0 %v456, 256
        %v459 = vpop.permute.xlu0 %458
        %s461 = sor.u32 256, 8
        %462 = vbcast.lane.b32.xlu0 %v456, %s461
        %v463 = vpop.permute.xlu0 %462
        %s465 = sor.u32 256, 16
        %466 = vbcast.lane.b32.xlu0 %v456, %s465
        %v467 = vpop.permute.xlu0 %466
        %s469 = sor.u32 256, 24
        %470 = vbcast.lane.b32.xlu0 %v456, %s469
        %v471 = vpop.permute.xlu0 %470
        %s473 = sor.u32 256, 32
        %474 = vbcast.lane.b32.xlu0 %v456, %s473
        %v475 = vpop.permute.xlu0 %474
        %s477 = sor.u32 256, 40
        %478 = vbcast.lane.b32.xlu0 %v456, %s477
        %v479 = vpop.permute.xlu0 %478
        %s481 = sor.u32 256, 48
        %482 = vbcast.lane.b32.xlu0 %v456, %s481
        %v483 = vpop.permute.xlu0 %482
        %s485 = sor.u32 256, 56
        %486 = vbcast.lane.b32.xlu0 %v456, %s485
        %v487 = vpop.permute.xlu0 %486
        %s489 = sor.u32 256, 64
        %490 = vbcast.lane.b32.xlu0 %v456, %s489
        %v491 = vpop.permute.xlu0 %490
        %s493 = sor.u32 256, 72
        %494 = vbcast.lane.b32.xlu0 %v456, %s493
        %v495 = vpop.permute.xlu0 %494
        %s497 = sor.u32 256, 80
        %498 = vbcast.lane.b32.xlu0 %v456, %s497
        %v499 = vpop.permute.xlu0 %498
        %s501 = sor.u32 256, 88
        %502 = vbcast.lane.b32.xlu0 %v456, %s501
        %v503 = vpop.permute.xlu0 %502
        %s505 = sor.u32 256, 96
        %506 = vbcast.lane.b32.xlu0 %v456, %s505
        %v507 = vpop.permute.xlu0 %506
        %s509 = sor.u32 256, 104
        %510 = vbcast.lane.b32.xlu0 %v456, %s509
        %v511 = vpop.permute.xlu0 %510
        %s513 = sor.u32 256, 112
        %514 = vbcast.lane.b32.xlu0 %v456, %s513
        %v515 = vpop.permute.xlu0 %514
        %s517 = sor.u32 256, 120
        %518 = vbcast.lane.b32.xlu0 %v456, %s517
        %v519 = vpop.permute.xlu0 %518
        %v520 = vlaneseq
        %v521 = vshrl.u32 %v520, 7
        %v522 = vsub.s32 3, %v521
        %v523 = vrot.slane %v312, %v522
        %525 = vbcast.lane.b32.xlu0 %v523, 256
        %v526 = vpop.permute.xlu0 %525
        %s528 = sor.u32 256, 8
        %529 = vbcast.lane.b32.xlu0 %v523, %s528
        %v530 = vpop.permute.xlu0 %529
        %s532 = sor.u32 256, 16
        %533 = vbcast.lane.b32.xlu0 %v523, %s532
        %v534 = vpop.permute.xlu0 %533
        %s536 = sor.u32 256, 24
        %537 = vbcast.lane.b32.xlu0 %v523, %s536
        %v538 = vpop.permute.xlu0 %537
        %s540 = sor.u32 256, 32
        %541 = vbcast.lane.b32.xlu0 %v523, %s540
        %v542 = vpop.permute.xlu0 %541
        %s544 = sor.u32 256, 40
        %545 = vbcast.lane.b32.xlu0 %v523, %s544
        %v546 = vpop.permute.xlu0 %545
        %s548 = sor.u32 256, 48
        %549 = vbcast.lane.b32.xlu0 %v523, %s548
        %v550 = vpop.permute.xlu0 %549
        %s552 = sor.u32 256, 56
        %553 = vbcast.lane.b32.xlu0 %v523, %s552
        %v554 = vpop.permute.xlu0 %553
        %s556 = sor.u32 256, 64
        %557 = vbcast.lane.b32.xlu0 %v523, %s556
        %v558 = vpop.permute.xlu0 %557
        %s560 = sor.u32 256, 72
        %561 = vbcast.lane.b32.xlu0 %v523, %s560
        %v562 = vpop.permute.xlu0 %561
        %s564 = sor.u32 256, 80
        %565 = vbcast.lane.b32.xlu0 %v523, %s564
        %v566 = vpop.permute.xlu0 %565
        %s568 = sor.u32 256, 88
        %569 = vbcast.lane.b32.xlu0 %v523, %s568
        %v570 = vpop.permute.xlu0 %569
        %s572 = sor.u32 256, 96
        %573 = vbcast.lane.b32.xlu0 %v523, %s572
        %v574 = vpop.permute.xlu0 %573
        %s576 = sor.u32 256, 104
        %577 = vbcast.lane.b32.xlu0 %v523, %s576
        %v578 = vpop.permute.xlu0 %577
        %s580 = sor.u32 256, 112
        %581 = vbcast.lane.b32.xlu0 %v523, %s580
        %v582 = vpop.permute.xlu0 %581
        %s584 = sor.u32 256, 120
        %585 = vbcast.lane.b32.xlu0 %v523, %s584
        %v586 = vpop.permute.xlu0 %585
        %v587 = vlaneseq
        %v588 = vshrl.u32 %v587, 7
        %v589 = vsub.s32 4, %v588
        %v590 = vrot.slane %v312, %v589
        %592 = vbcast.lane.b32.xlu0 %v590, 256
        %v593 = vpop.permute.xlu0 %592
        %s595 = sor.u32 256, 8
        %596 = vbcast.lane.b32.xlu0 %v590, %s595
        %v597 = vpop.permute.xlu0 %596
        %s599 = sor.u32 256, 16
        %600 = vbcast.lane.b32.xlu0 %v590, %s599
        %v601 = vpop.permute.xlu0 %600
        %s603 = sor.u32 256, 24
        %604 = vbcast.lane.b32.xlu0 %v590, %s603
        %v605 = vpop.permute.xlu0 %604
        %s607 = sor.u32 256, 32
        %608 = vbcast.lane.b32.xlu0 %v590, %s607
        %v609 = vpop.permute.xlu0 %608
        %s611 = sor.u32 256, 40
        %612 = vbcast.lane.b32.xlu0 %v590, %s611
        %v613 = vpop.permute.xlu0 %612
        %s615 = sor.u32 256, 48
        %616 = vbcast.lane.b32.xlu0 %v590, %s615
        %v617 = vpop.permute.xlu0 %616
        %s619 = sor.u32 256, 56
        %620 = vbcast.lane.b32.xlu0 %v590, %s619
        %v621 = vpop.permute.xlu0 %620
        %s623 = sor.u32 256, 64
        %624 = vbcast.lane.b32.xlu0 %v590, %s623
        %v625 = vpop.permute.xlu0 %624
        %s627 = sor.u32 256, 72
        %628 = vbcast.lane.b32.xlu0 %v590, %s627
        %v629 = vpop.permute.xlu0 %628
        %s631 = sor.u32 256, 80
        %632 = vbcast.lane.b32.xlu0 %v590, %s631
        %v633 = vpop.permute.xlu0 %632
        %s635 = sor.u32 256, 88
        %636 = vbcast.lane.b32.xlu0 %v590, %s635
        %v637 = vpop.permute.xlu0 %636
        %s639 = sor.u32 256, 96
        %640 = vbcast.lane.b32.xlu0 %v590, %s639
        %v641 = vpop.permute.xlu0 %640
        %s643 = sor.u32 256, 104
        %644 = vbcast.lane.b32.xlu0 %v590, %s643
        %v645 = vpop.permute.xlu0 %644
        %s647 = sor.u32 256, 112
        %648 = vbcast.lane.b32.xlu0 %v590, %s647
        %v649 = vpop.permute.xlu0 %648
        %s651 = sor.u32 256, 120
        %652 = vbcast.lane.b32.xlu0 %v590, %s651
        %v653 = vpop.permute.xlu0 %652
        %v654 = vlaneseq
        %v655 = vshrl.u32 %v654, 7
        %v656 = vsub.s32 5, %v655
        %v657 = vrot.slane %v312, %v656
        %659 = vbcast.lane.b32.xlu0 %v657, 256
        %v660 = vpop.permute.xlu0 %659
        %s662 = sor.u32 256, 8
        %663 = vbcast.lane.b32.xlu0 %v657, %s662
        %v664 = vpop.permute.xlu0 %663
        %s666 = sor.u32 256, 16
        %667 = vbcast.lane.b32.xlu0 %v657, %s666
        %v668 = vpop.permute.xlu0 %667
        %s670 = sor.u32 256, 24
        %671 = vbcast.lane.b32.xlu0 %v657, %s670
        %v672 = vpop.permute.xlu0 %671
        %s674 = sor.u32 256, 32
        %675 = vbcast.lane.b32.xlu0 %v657, %s674
        %v676 = vpop.permute.xlu0 %675
        %s678 = sor.u32 256, 40
        %679 = vbcast.lane.b32.xlu0 %v657, %s678
        %v680 = vpop.permute.xlu0 %679
        %s682 = sor.u32 256, 48
        %683 = vbcast.lane.b32.xlu0 %v657, %s682
        %v684 = vpop.permute.xlu0 %683
        %s686 = sor.u32 256, 56
        %687 = vbcast.lane.b32.xlu0 %v657, %s686
        %v688 = vpop.permute.xlu0 %687
        %s690 = sor.u32 256, 64
        %691 = vbcast.lane.b32.xlu0 %v657, %s690
        %v692 = vpop.permute.xlu0 %691
        %s694 = sor.u32 256, 72
        %695 = vbcast.lane.b32.xlu0 %v657, %s694
        %v696 = vpop.permute.xlu0 %695
        %s698 = sor.u32 256, 80
        %699 = vbcast.lane.b32.xlu0 %v657, %s698
        %v700 = vpop.permute.xlu0 %699
        %s702 = sor.u32 256, 88
        %703 = vbcast.lane.b32.xlu0 %v657, %s702
        %v704 = vpop.permute.xlu0 %703
        %s706 = sor.u32 256, 96
        %707 = vbcast.lane.b32.xlu0 %v657, %s706
        %v708 = vpop.permute.xlu0 %707
        %s710 = sor.u32 256, 104
        %711 = vbcast.lane.b32.xlu0 %v657, %s710
        %v712 = vpop.permute.xlu0 %711
        %s714 = sor.u32 256, 112
        %715 = vbcast.lane.b32.xlu0 %v657, %s714
        %v716 = vpop.permute.xlu0 %715
        %s718 = sor.u32 256, 120
        %719 = vbcast.lane.b32.xlu0 %v657, %s718
        %v720 = vpop.permute.xlu0 %719
        %v721 = vlaneseq
        %v722 = vshrl.u32 %v721, 7
        %v723 = vsub.s32 6, %v722
        %v724 = vrot.slane %v312, %v723
        %726 = vbcast.lane.b32.xlu0 %v724, 256
        %v727 = vpop.permute.xlu0 %726
        %s729 = sor.u32 256, 8
        %730 = vbcast.lane.b32.xlu0 %v724, %s729
        %v731 = vpop.permute.xlu0 %730
        %s733 = sor.u32 256, 16
        %734 = vbcast.lane.b32.xlu0 %v724, %s733
        %v735 = vpop.permute.xlu0 %734
        %s737 = sor.u32 256, 24
        %738 = vbcast.lane.b32.xlu0 %v724, %s737
        %v739 = vpop.permute.xlu0 %738
        %s741 = sor.u32 256, 32
        %742 = vbcast.lane.b32.xlu0 %v724, %s741
        %v743 = vpop.permute.xlu0 %742
        %s745 = sor.u32 256, 40
        %746 = vbcast.lane.b32.xlu0 %v724, %s745
        %v747 = vpop.permute.xlu0 %746
        %s749 = sor.u32 256, 48
        %750 = vbcast.lane.b32.xlu0 %v724, %s749
        %v751 = vpop.permute.xlu0 %750
        %s753 = sor.u32 256, 56
        %754 = vbcast.lane.b32.xlu0 %v724, %s753
        %v755 = vpop.permute.xlu0 %754
        %s757 = sor.u32 256, 64
        %758 = vbcast.lane.b32.xlu0 %v724, %s757
        %v759 = vpop.permute.xlu0 %758
        %s761 = sor.u32 256, 72
        %762 = vbcast.lane.b32.xlu0 %v724, %s761
        %v763 = vpop.permute.xlu0 %762
        %s765 = sor.u32 256, 80
        %766 = vbcast.lane.b32.xlu0 %v724, %s765
        %v767 = vpop.permute.xlu0 %766
        %s769 = sor.u32 256, 88
        %770 = vbcast.lane.b32.xlu0 %v724, %s769
        %v771 = vpop.permute.xlu0 %770
        %s773 = sor.u32 256, 96
        %774 = vbcast.lane.b32.xlu0 %v724, %s773
        %v775 = vpop.permute.xlu0 %774
        %s777 = sor.u32 256, 104
        %778 = vbcast.lane.b32.xlu0 %v724, %s777
        %v779 = vpop.permute.xlu0 %778
        %s781 = sor.u32 256, 112
        %782 = vbcast.lane.b32.xlu0 %v724, %s781
        %v783 = vpop.permute.xlu0 %782
        %s785 = sor.u32 256, 120
        %786 = vbcast.lane.b32.xlu0 %v724, %s785
        %v787 = vpop.permute.xlu0 %786
        %v788 = vlaneseq
        %v789 = vshrl.u32 %v788, 7
        %v790 = vsub.s32 7, %v789
        %v791 = vrot.slane %v312, %v790
        %793 = vbcast.lane.b32.xlu0 %v791, 256
        %v794 = vpop.permute.xlu0 %793
        %s796 = sor.u32 256, 8
        %797 = vbcast.lane.b32.xlu0 %v791, %s796
        %v798 = vpop.permute.xlu0 %797
        %s800 = sor.u32 256, 16
        %801 = vbcast.lane.b32.xlu0 %v791, %s800
        %v802 = vpop.permute.xlu0 %801
        %s804 = sor.u32 256, 24
        %805 = vbcast.lane.b32.xlu0 %v791, %s804
        %v806 = vpop.permute.xlu0 %805
        %s808 = sor.u32 256, 32
        %809 = vbcast.lane.b32.xlu0 %v791, %s808
        %v810 = vpop.permute.xlu0 %809
        %s812 = sor.u32 256, 40
        %813 = vbcast.lane.b32.xlu0 %v791, %s812
        %v814 = vpop.permute.xlu0 %813
        %s816 = sor.u32 256, 48
        %817 = vbcast.lane.b32.xlu0 %v791, %s816
        %v818 = vpop.permute.xlu0 %817
        %s820 = sor.u32 256, 56
        %821 = vbcast.lane.b32.xlu0 %v791, %s820
        %v822 = vpop.permute.xlu0 %821
        %s824 = sor.u32 256, 64
        %825 = vbcast.lane.b32.xlu0 %v791, %s824
        %v826 = vpop.permute.xlu0 %825
        %s828 = sor.u32 256, 72
        %829 = vbcast.lane.b32.xlu0 %v791, %s828
        %v830 = vpop.permute.xlu0 %829
        %s832 = sor.u32 256, 80
        %833 = vbcast.lane.b32.xlu0 %v791, %s832
        %v834 = vpop.permute.xlu0 %833
        %s836 = sor.u32 256, 88
        %837 = vbcast.lane.b32.xlu0 %v791, %s836
        %v838 = vpop.permute.xlu0 %837
        %s840 = sor.u32 256, 96
        %841 = vbcast.lane.b32.xlu0 %v791, %s840
        %v842 = vpop.permute.xlu0 %841
        %s844 = sor.u32 256, 104
        %845 = vbcast.lane.b32.xlu0 %v791, %s844
        %v846 = vpop.permute.xlu0 %845
        %s848 = sor.u32 256, 112
        %849 = vbcast.lane.b32.xlu0 %v791, %s848
        %v850 = vpop.permute.xlu0 %849
        %s852 = sor.u32 256, 120
        %853 = vbcast.lane.b32.xlu0 %v791, %s852
        %v854 = vpop.permute.xlu0 %853
        %v855 = vcombine.low %v325, %v459
        %v856 = vcombine.high %v325, %v459
        %v858 = vunpack.c.l.s4 1983009808
        %v859 = vunpack.c.0.s8 %v858
        %v860 = vlaneseq
        %v861 = vshrl.u32 %v860, 7
        %v862 = vsub.s32 %v859, %v861
        %v863 = vrot.slane %v855, %v862
        %v865 = vunpack.c.l.s4 1983009808
        %v866 = vunpack.c.0.s8 %v865
        %v867 = vlaneseq
        %v868 = vshrl.u32 %v867, 7
        %v869 = vsub.s32 %v866, %v868
        %v870 = vrot.slane %v856, %v869
        %v871 = vcombine.low %v392, %v526
        %v872 = vcombine.high %v392, %v526
        %v874 = vunpack.c.l.s4 1983009808
        %v875 = vunpack.c.0.s8 %v874
        %v876 = vlaneseq
        %v877 = vshrl.u32 %v876, 7
        %v878 = vsub.s32 %v875, %v877
        %v879 = vrot.slane %v871, %v878
        %v881 = vunpack.c.l.s4 1983009808
        %v882 = vunpack.c.0.s8 %v881
        %v883 = vlaneseq
        %v884 = vshrl.u32 %v883, 7
        %v885 = vsub.s32 %v882, %v884
        %v886 = vrot.slane %v872, %v885
        %v887 = vcombine.low %v593, %v727
        %v888 = vcombine.high %v593, %v727
        %v890 = vunpack.c.l.s4 1983009808
        %v891 = vunpack.c.0.s8 %v890
        %v892 = vlaneseq
        %v893 = vshrl.u32 %v892, 7
        %v894 = vsub.s32 %v891, %v893
        %v895 = vrot.slane %v887, %v894
        %v897 = vunpack.c.l.s4 1983009808
        %v898 = vunpack.c.0.s8 %v897
        %v899 = vlaneseq
        %v900 = vshrl.u32 %v899, 7
        %v901 = vsub.s32 %v898, %v900
        %v902 = vrot.slane %v888, %v901
        %v903 = vcombine.low %v660, %v794
        %v904 = vcombine.high %v660, %v794
        %v906 = vunpack.c.l.s4 1983009808
        %v907 = vunpack.c.0.s8 %v906
        %v908 = vlaneseq
        %v909 = vshrl.u32 %v908, 7
        %v910 = vsub.s32 %v907, %v909
        %v911 = vrot.slane %v903, %v910
        %v913 = vunpack.c.l.s4 1983009808
        %v914 = vunpack.c.0.s8 %v913
        %v915 = vlaneseq
        %v916 = vshrl.u32 %v915, 7
        %v917 = vsub.s32 %v914, %v916
        %v918 = vrot.slane %v904, %v917
        %v919 = vcombine.low %v863, %v879
        %v920 = vcombine.high %v863, %v879
        %v922 = vunpack.c.l.s4 1934713408
        %v923 = vunpack.c.0.s8 %v922
        %v924 = vlaneseq
        %v925 = vshrl.u32 %v924, 7
        %v926 = vsub.s32 %v923, %v925
        %v927 = vrot.slane %v919, %v926
        %v929 = vunpack.c.l.s4 1934713408
        %v930 = vunpack.c.0.s8 %v929
        %v931 = vlaneseq
        %v932 = vshrl.u32 %v931, 7
        %v933 = vsub.s32 %v930, %v932
        %v934 = vrot.slane %v920, %v933
        %v935 = vcombine.low %v870, %v886
        %v936 = vcombine.high %v870, %v886
        %v938 = vunpack.c.l.s4 1934713408
        %v939 = vunpack.c.0.s8 %v938
        %v940 = vlaneseq
        %v941 = vshrl.u32 %v940, 7
        %v942 = vsub.s32 %v939, %v941
        %v943 = vrot.slane %v935, %v942
        %v945 = vunpack.c.l.s4 1934713408
        %v946 = vunpack.c.0.s8 %v945
        %v947 = vlaneseq
        %v948 = vshrl.u32 %v947, 7
        %v949 = vsub.s32 %v946, %v948
        %v950 = vrot.slane %v936, %v949
        %v951 = vcombine.low %v895, %v911
        %v952 = vcombine.high %v895, %v911
        %v954 = vunpack.c.l.s4 1934713408
        %v955 = vunpack.c.0.s8 %v954
        %v956 = vlaneseq
        %v957 = vshrl.u32 %v956, 7
        %v958 = vsub.s32 %v955, %v957
        %v959 = vrot.slane %v951, %v958
        %v961 = vunpack.c.l.s4 1934713408
        %v962 = vunpack.c.0.s8 %v961
        %v963 = vlaneseq
        %v964 = vshrl.u32 %v963, 7
        %v965 = vsub.s32 %v962, %v964
        %v966 = vrot.slane %v952, %v965
        %v967 = vcombine.low %v902, %v918
        %v968 = vcombine.high %v902, %v918
        %v970 = vunpack.c.l.s4 1934713408
        %v971 = vunpack.c.0.s8 %v970
        %v972 = vlaneseq
        %v973 = vshrl.u32 %v972, 7
        %v974 = vsub.s32 %v971, %v973
        %v975 = vrot.slane %v967, %v974
        %v977 = vunpack.c.l.s4 1934713408
        %v978 = vunpack.c.0.s8 %v977
        %v979 = vlaneseq
        %v980 = vshrl.u32 %v979, 7
        %v981 = vsub.s32 %v978, %v980
        %v982 = vrot.slane %v968, %v981
        %v983 = vcombine.low %v927, %v959
        %v984 = vcombine.high %v927, %v959
        %v985 = vcombine.low %v934, %v966
        %v986 = vcombine.high %v934, %v966
        %v987 = vcombine.low %v943, %v975
        %v988 = vcombine.high %v943, %v975
        %v989 = vcombine.low %v950, %v982
        %v990 = vcombine.high %v950, %v982
        %v991 = vcombine.low %v329, %v463
        %v992 = vcombine.high %v329, %v463
        %v994 = vunpack.c.l.s4 1983009808
        %v995 = vunpack.c.0.s8 %v994
        %v996 = vlaneseq
        %v997 = vshrl.u32 %v996, 7
        %v998 = vsub.s32 %v995, %v997
        %v999 = vrot.slane %v991, %v998
        %v1001 = vunpack.c.l.s4 1983009808
        %v1002 = vunpack.c.0.s8 %v1001
        %v1003 = vlaneseq
        %v1004 = vshrl.u32 %v1003, 7
        %v1005 = vsub.s32 %v1002, %v1004
        %v1006 = vrot.slane %v992, %v1005
        %v1007 = vcombine.low %v396, %v530
        %v1008 = vcombine.high %v396, %v530
        %v1010 = vunpack.c.l.s4 1983009808
        %v1011 = vunpack.c.0.s8 %v1010
        %v1012 = vlaneseq
        %v1013 = vshrl.u32 %v1012, 7
        %v1014 = vsub.s32 %v1011, %v1013
        %v1015 = vrot.slane %v1007, %v1014
        %v1017 = vunpack.c.l.s4 1983009808
        %v1018 = vunpack.c.0.s8 %v1017
        %v1019 = vlaneseq
        %v1020 = vshrl.u32 %v1019, 7
        %v1021 = vsub.s32 %v1018, %v1020
        %v1022 = vrot.slane %v1008, %v1021
        %v1023 = vcombine.low %v597, %v731
        %v1024 = vcombine.high %v597, %v731
        %v1026 = vunpack.c.l.s4 1983009808
        %v1027 = vunpack.c.0.s8 %v1026
        %v1028 = vlaneseq
        %v1029 = vshrl.u32 %v1028, 7
        %v1030 = vsub.s32 %v1027, %v1029
        %v1031 = vrot.slane %v1023, %v1030
        %v1033 = vunpack.c.l.s4 1983009808
        %v1034 = vunpack.c.0.s8 %v1033
        %v1035 = vlaneseq
        %v1036 = vshrl.u32 %v1035, 7
        %v1037 = vsub.s32 %v1034, %v1036
        %v1038 = vrot.slane %v1024, %v1037
        %v1039 = vcombine.low %v664, %v798
        %v1040 = vcombine.high %v664, %v798
        %v1042 = vunpack.c.l.s4 1983009808
        %v1043 = vunpack.c.0.s8 %v1042
        %v1044 = vlaneseq
        %v1045 = vshrl.u32 %v1044, 7
        %v1046 = vsub.s32 %v1043, %v1045
        %v1047 = vrot.slane %v1039, %v1046
        %v1049 = vunpack.c.l.s4 1983009808
        %v1050 = vunpack.c.0.s8 %v1049
        %v1051 = vlaneseq
        %v1052 = vshrl.u32 %v1051, 7
        %v1053 = vsub.s32 %v1050, %v1052
        %v1054 = vrot.slane %v1040, %v1053
        %v1055 = vcombine.low %v999, %v1015
        %v1056 = vcombine.high %v999, %v1015
        %v1058 = vunpack.c.l.s4 1934713408
        %v1059 = vunpack.c.0.s8 %v1058
        %v1060 = vlaneseq
        %v1061 = vshrl.u32 %v1060, 7
        %v1062 = vsub.s32 %v1059, %v1061
        %v1063 = vrot.slane %v1055, %v1062
        %v1065 = vunpack.c.l.s4 1934713408
        %v1066 = vunpack.c.0.s8 %v1065
        %v1067 = vlaneseq
        %v1068 = vshrl.u32 %v1067, 7
        %v1069 = vsub.s32 %v1066, %v1068
        %v1070 = vrot.slane %v1056, %v1069
        %v1071 = vcombine.low %v1006, %v1022
        %v1072 = vcombine.high %v1006, %v1022
        %v1074 = vunpack.c.l.s4 1934713408
        %v1075 = vunpack.c.0.s8 %v1074
        %v1076 = vlaneseq
        %v1077 = vshrl.u32 %v1076, 7
        %v1078 = vsub.s32 %v1075, %v1077
        %v1079 = vrot.slane %v1071, %v1078
        %v1081 = vunpack.c.l.s4 1934713408
        %v1082 = vunpack.c.0.s8 %v1081
        %v1083 = vlaneseq
        %v1084 = vshrl.u32 %v1083, 7
        %v1085 = vsub.s32 %v1082, %v1084
        %v1086 = vrot.slane %v1072, %v1085
        %v1087 = vcombine.low %v1031, %v1047
        %v1088 = vcombine.high %v1031, %v1047
        %v1090 = vunpack.c.l.s4 1934713408
        %v1091 = vunpack.c.0.s8 %v1090
        %v1092 = vlaneseq
        %v1093 = vshrl.u32 %v1092, 7
        %v1094 = vsub.s32 %v1091, %v1093
        %v1095 = vrot.slane %v1087, %v1094
        %v1097 = vunpack.c.l.s4 1934713408
        %v1098 = vunpack.c.0.s8 %v1097
        %v1099 = vlaneseq
        %v1100 = vshrl.u32 %v1099, 7
        %v1101 = vsub.s32 %v1098, %v1100
        %v1102 = vrot.slane %v1088, %v1101
        %v1103 = vcombine.low %v1038, %v1054
        %v1104 = vcombine.high %v1038, %v1054
        %v1106 = vunpack.c.l.s4 1934713408
        %v1107 = vunpack.c.0.s8 %v1106
        %v1108 = vlaneseq
        %v1109 = vshrl.u32 %v1108, 7
        %v1110 = vsub.s32 %v1107, %v1109
        %v1111 = vrot.slane %v1103, %v1110
        %v1113 = vunpack.c.l.s4 1934713408
        %v1114 = vunpack.c.0.s8 %v1113
        %v1115 = vlaneseq
        %v1116 = vshrl.u32 %v1115, 7
        %v1117 = vsub.s32 %v1114, %v1116
        %v1118 = vrot.slane %v1104, %v1117
        %v1119 = vcombine.low %v1063, %v1095
        %v1120 = vcombine.high %v1063, %v1095
        %v1121 = vcombine.low %v1070, %v1102
        %v1122 = vcombine.high %v1070, %v1102
        %v1123 = vcombine.low %v1079, %v1111
        %v1124 = vcombine.high %v1079, %v1111
        %v1125 = vcombine.low %v1086, %v1118
        %v1126 = vcombine.high %v1086, %v1118
        %v1127 = vcombine.low %v333, %v467
        %v1128 = vcombine.high %v333, %v467
        %v1130 = vunpack.c.l.s4 1983009808
        %v1131 = vunpack.c.0.s8 %v1130
        %v1132 = vlaneseq
        %v1133 = vshrl.u32 %v1132, 7
        %v1134 = vsub.s32 %v1131, %v1133
        %v1135 = vrot.slane %v1127, %v1134
        %v1137 = vunpack.c.l.s4 1983009808
        %v1138 = vunpack.c.0.s8 %v1137
        %v1139 = vlaneseq
        %v1140 = vshrl.u32 %v1139, 7
        %v1141 = vsub.s32 %v1138, %v1140
        %v1142 = vrot.slane %v1128, %v1141
        %v1143 = vcombine.low %v400, %v534
        %v1144 = vcombine.high %v400, %v534
        %v1146 = vunpack.c.l.s4 1983009808
        %v1147 = vunpack.c.0.s8 %v1146
        %v1148 = vlaneseq
        %v1149 = vshrl.u32 %v1148, 7
        %v1150 = vsub.s32 %v1147, %v1149
        %v1151 = vrot.slane %v1143, %v1150
        %v1153 = vunpack.c.l.s4 1983009808
        %v1154 = vunpack.c.0.s8 %v1153
        %v1155 = vlaneseq
        %v1156 = vshrl.u32 %v1155, 7
        %v1157 = vsub.s32 %v1154, %v1156
        %v1158 = vrot.slane %v1144, %v1157
        %v1159 = vcombine.low %v601, %v735
        %v1160 = vcombine.high %v601, %v735
        %v1162 = vunpack.c.l.s4 1983009808
        %v1163 = vunpack.c.0.s8 %v1162
        %v1164 = vlaneseq
        %v1165 = vshrl.u32 %v1164, 7
        %v1166 = vsub.s32 %v1163, %v1165
        %v1167 = vrot.slane %v1159, %v1166
        %v1169 = vunpack.c.l.s4 1983009808
        %v1170 = vunpack.c.0.s8 %v1169
        %v1171 = vlaneseq
        %v1172 = vshrl.u32 %v1171, 7
        %v1173 = vsub.s32 %v1170, %v1172
        %v1174 = vrot.slane %v1160, %v1173
        %v1175 = vcombine.low %v668, %v802
        %v1176 = vcombine.high %v668, %v802
        %v1178 = vunpack.c.l.s4 1983009808
        %v1179 = vunpack.c.0.s8 %v1178
        %v1180 = vlaneseq
        %v1181 = vshrl.u32 %v1180, 7
        %v1182 = vsub.s32 %v1179, %v1181
        %v1183 = vrot.slane %v1175, %v1182
        %v1185 = vunpack.c.l.s4 1983009808
        %v1186 = vunpack.c.0.s8 %v1185
        %v1187 = vlaneseq
        %v1188 = vshrl.u32 %v1187, 7
        %v1189 = vsub.s32 %v1186, %v1188
        %v1190 = vrot.slane %v1176, %v1189
        %v1191 = vcombine.low %v1135, %v1151
        %v1192 = vcombine.high %v1135, %v1151
        %v1194 = vunpack.c.l.s4 1934713408
        %v1195 = vunpack.c.0.s8 %v1194
        %v1196 = vlaneseq
        %v1197 = vshrl.u32 %v1196, 7
        %v1198 = vsub.s32 %v1195, %v1197
        %v1199 = vrot.slane %v1191, %v1198
        %v1201 = vunpack.c.l.s4 1934713408
        %v1202 = vunpack.c.0.s8 %v1201
        %v1203 = vlaneseq
        %v1204 = vshrl.u32 %v1203, 7
        %v1205 = vsub.s32 %v1202, %v1204
        %v1206 = vrot.slane %v1192, %v1205
        %v1207 = vcombine.low %v1142, %v1158
        %v1208 = vcombine.high %v1142, %v1158
        %v1210 = vunpack.c.l.s4 1934713408
        %v1211 = vunpack.c.0.s8 %v1210
        %v1212 = vlaneseq
        %v1213 = vshrl.u32 %v1212, 7
        %v1214 = vsub.s32 %v1211, %v1213
        %v1215 = vrot.slane %v1207, %v1214
        %v1217 = vunpack.c.l.s4 1934713408
        %v1218 = vunpack.c.0.s8 %v1217
        %v1219 = vlaneseq
        %v1220 = vshrl.u32 %v1219, 7
        %v1221 = vsub.s32 %v1218, %v1220
        %v1222 = vrot.slane %v1208, %v1221
        %v1223 = vcombine.low %v1167, %v1183
        %v1224 = vcombine.high %v1167, %v1183
        %v1226 = vunpack.c.l.s4 1934713408
        %v1227 = vunpack.c.0.s8 %v1226
        %v1228 = vlaneseq
        %v1229 = vshrl.u32 %v1228, 7
        %v1230 = vsub.s32 %v1227, %v1229
        %v1231 = vrot.slane %v1223, %v1230
        %v1233 = vunpack.c.l.s4 1934713408
        %v1234 = vunpack.c.0.s8 %v1233
        %v1235 = vlaneseq
        %v1236 = vshrl.u32 %v1235, 7
        %v1237 = vsub.s32 %v1234, %v1236
        %v1238 = vrot.slane %v1224, %v1237
        %v1239 = vcombine.low %v1174, %v1190
        %v1240 = vcombine.high %v1174, %v1190
        %v1242 = vunpack.c.l.s4 1934713408
        %v1243 = vunpack.c.0.s8 %v1242
        %v1244 = vlaneseq
        %v1245 = vshrl.u32 %v1244, 7
        %v1246 = vsub.s32 %v1243, %v1245
        %v1247 = vrot.slane %v1239, %v1246
        %v1249 = vunpack.c.l.s4 1934713408
        %v1250 = vunpack.c.0.s8 %v1249
        %v1251 = vlaneseq
        %v1252 = vshrl.u32 %v1251, 7
        %v1253 = vsub.s32 %v1250, %v1252
        %v1254 = vrot.slane %v1240, %v1253
        %v1255 = vcombine.low %v1199, %v1231
        %v1256 = vcombine.high %v1199, %v1231
        %v1257 = vcombine.low %v1206, %v1238
        %v1258 = vcombine.high %v1206, %v1238
        %v1259 = vcombine.low %v1215, %v1247
        %v1260 = vcombine.high %v1215, %v1247
        %v1261 = vcombine.low %v1222, %v1254
        %v1262 = vcombine.high %v1222, %v1254
        %v1263 = vcombine.low %v337, %v471
        %v1264 = vcombine.high %v337, %v471
        %v1266 = vunpack.c.l.s4 1983009808
        %v1267 = vunpack.c.0.s8 %v1266
        %v1268 = vlaneseq
        %v1269 = vshrl.u32 %v1268, 7
        %v1270 = vsub.s32 %v1267, %v1269
        %v1271 = vrot.slane %v1263, %v1270
        %v1273 = vunpack.c.l.s4 1983009808
        %v1274 = vunpack.c.0.s8 %v1273
        %v1275 = vlaneseq
        %v1276 = vshrl.u32 %v1275, 7
        %v1277 = vsub.s32 %v1274, %v1276
        %v1278 = vrot.slane %v1264, %v1277
        %v1279 = vcombine.low %v404, %v538
        %v1280 = vcombine.high %v404, %v538
        %v1282 = vunpack.c.l.s4 1983009808
        %v1283 = vunpack.c.0.s8 %v1282
        %v1284 = vlaneseq
        %v1285 = vshrl.u32 %v1284, 7
        %v1286 = vsub.s32 %v1283, %v1285
        %v1287 = vrot.slane %v1279, %v1286
        %v1289 = vunpack.c.l.s4 1983009808
        %v1290 = vunpack.c.0.s8 %v1289
        %v1291 = vlaneseq
        %v1292 = vshrl.u32 %v1291, 7
        %v1293 = vsub.s32 %v1290, %v1292
        %v1294 = vrot.slane %v1280, %v1293
        %v1295 = vcombine.low %v605, %v739
        %v1296 = vcombine.high %v605, %v739
        %v1298 = vunpack.c.l.s4 1983009808
        %v1299 = vunpack.c.0.s8 %v1298
        %v1300 = vlaneseq
        %v1301 = vshrl.u32 %v1300, 7
        %v1302 = vsub.s32 %v1299, %v1301
        %v1303 = vrot.slane %v1295, %v1302
        %v1305 = vunpack.c.l.s4 1983009808
        %v1306 = vunpack.c.0.s8 %v1305
        %v1307 = vlaneseq
        %v1308 = vshrl.u32 %v1307, 7
        %v1309 = vsub.s32 %v1306, %v1308
        %v1310 = vrot.slane %v1296, %v1309
        %v1311 = vcombine.low %v672, %v806
        %v1312 = vcombine.high %v672, %v806
        %v1314 = vunpack.c.l.s4 1983009808
        %v1315 = vunpack.c.0.s8 %v1314
        %v1316 = vlaneseq
        %v1317 = vshrl.u32 %v1316, 7
        %v1318 = vsub.s32 %v1315, %v1317
        %v1319 = vrot.slane %v1311, %v1318
        %v1321 = vunpack.c.l.s4 1983009808
        %v1322 = vunpack.c.0.s8 %v1321
        %v1323 = vlaneseq
        %v1324 = vshrl.u32 %v1323, 7
        %v1325 = vsub.s32 %v1322, %v1324
        %v1326 = vrot.slane %v1312, %v1325
        %v1327 = vcombine.low %v1271, %v1287
        %v1328 = vcombine.high %v1271, %v1287
        %v1330 = vunpack.c.l.s4 1934713408
        %v1331 = vunpack.c.0.s8 %v1330
        %v1332 = vlaneseq
        %v1333 = vshrl.u32 %v1332, 7
        %v1334 = vsub.s32 %v1331, %v1333
        %v1335 = vrot.slane %v1327, %v1334
        %v1337 = vunpack.c.l.s4 1934713408
        %v1338 = vunpack.c.0.s8 %v1337
        %v1339 = vlaneseq
        %v1340 = vshrl.u32 %v1339, 7
        %v1341 = vsub.s32 %v1338, %v1340
        %v1342 = vrot.slane %v1328, %v1341
        %v1343 = vcombine.low %v1278, %v1294
        %v1344 = vcombine.high %v1278, %v1294
        %v1346 = vunpack.c.l.s4 1934713408
        %v1347 = vunpack.c.0.s8 %v1346
        %v1348 = vlaneseq
        %v1349 = vshrl.u32 %v1348, 7
        %v1350 = vsub.s32 %v1347, %v1349
        %v1351 = vrot.slane %v1343, %v1350
        %v1353 = vunpack.c.l.s4 1934713408
        %v1354 = vunpack.c.0.s8 %v1353
        %v1355 = vlaneseq
        %v1356 = vshrl.u32 %v1355, 7
        %v1357 = vsub.s32 %v1354, %v1356
        %v1358 = vrot.slane %v1344, %v1357
        %v1359 = vcombine.low %v1303, %v1319
        %v1360 = vcombine.high %v1303, %v1319
        %v1362 = vunpack.c.l.s4 1934713408
        %v1363 = vunpack.c.0.s8 %v1362
        %v1364 = vlaneseq
        %v1365 = vshrl.u32 %v1364, 7
        %v1366 = vsub.s32 %v1363, %v1365
        %v1367 = vrot.slane %v1359, %v1366
        %v1369 = vunpack.c.l.s4 1934713408
        %v1370 = vunpack.c.0.s8 %v1369
        %v1371 = vlaneseq
        %v1372 = vshrl.u32 %v1371, 7
        %v1373 = vsub.s32 %v1370, %v1372
        %v1374 = vrot.slane %v1360, %v1373
        %v1375 = vcombine.low %v1310, %v1326
        %v1376 = vcombine.high %v1310, %v1326
        %v1378 = vunpack.c.l.s4 1934713408
        %v1379 = vunpack.c.0.s8 %v1378
        %v1380 = vlaneseq
        %v1381 = vshrl.u32 %v1380, 7
        %v1382 = vsub.s32 %v1379, %v1381
        %v1383 = vrot.slane %v1375, %v1382
        %v1385 = vunpack.c.l.s4 1934713408
        %v1386 = vunpack.c.0.s8 %v1385
        %v1387 = vlaneseq
        %v1388 = vshrl.u32 %v1387, 7
        %v1389 = vsub.s32 %v1386, %v1388
        %v1390 = vrot.slane %v1376, %v1389
        %v1391 = vcombine.low %v1335, %v1367
        %v1392 = vcombine.high %v1335, %v1367
        %v1393 = vcombine.low %v1342, %v1374
        %v1394 = vcombine.high %v1342, %v1374
        %v1395 = vcombine.low %v1351, %v1383
        %v1396 = vcombine.high %v1351, %v1383
        %v1397 = vcombine.low %v1358, %v1390
        %v1398 = vcombine.high %v1358, %v1390
        %v1399 = vcombine.low %v341, %v475
        %v1400 = vcombine.high %v341, %v475
        %v1402 = vunpack.c.l.s4 1983009808
        %v1403 = vunpack.c.0.s8 %v1402
        %v1404 = vlaneseq
        %v1405 = vshrl.u32 %v1404, 7
        %v1406 = vsub.s32 %v1403, %v1405
        %v1407 = vrot.slane %v1399, %v1406
        %v1409 = vunpack.c.l.s4 1983009808
        %v1410 = vunpack.c.0.s8 %v1409
        %v1411 = vlaneseq
        %v1412 = vshrl.u32 %v1411, 7
        %v1413 = vsub.s32 %v1410, %v1412
        %v1414 = vrot.slane %v1400, %v1413
        %v1415 = vcombine.low %v408, %v542
        %v1416 = vcombine.high %v408, %v542
        %v1418 = vunpack.c.l.s4 1983009808
        %v1419 = vunpack.c.0.s8 %v1418
        %v1420 = vlaneseq
        %v1421 = vshrl.u32 %v1420, 7
        %v1422 = vsub.s32 %v1419, %v1421
        %v1423 = vrot.slane %v1415, %v1422
        %v1425 = vunpack.c.l.s4 1983009808
        %v1426 = vunpack.c.0.s8 %v1425
        %v1427 = vlaneseq
        %v1428 = vshrl.u32 %v1427, 7
        %v1429 = vsub.s32 %v1426, %v1428
        %v1430 = vrot.slane %v1416, %v1429
        %v1431 = vcombine.low %v609, %v743
        %v1432 = vcombine.high %v609, %v743
        %v1434 = vunpack.c.l.s4 1983009808
        %v1435 = vunpack.c.0.s8 %v1434
        %v1436 = vlaneseq
        %v1437 = vshrl.u32 %v1436, 7
        %v1438 = vsub.s32 %v1435, %v1437
        %v1439 = vrot.slane %v1431, %v1438
        %v1441 = vunpack.c.l.s4 1983009808
        %v1442 = vunpack.c.0.s8 %v1441
        %v1443 = vlaneseq
        %v1444 = vshrl.u32 %v1443, 7
        %v1445 = vsub.s32 %v1442, %v1444
        %v1446 = vrot.slane %v1432, %v1445
        %v1447 = vcombine.low %v676, %v810
        %v1448 = vcombine.high %v676, %v810
        %v1450 = vunpack.c.l.s4 1983009808
        %v1451 = vunpack.c.0.s8 %v1450
        %v1452 = vlaneseq
        %v1453 = vshrl.u32 %v1452, 7
        %v1454 = vsub.s32 %v1451, %v1453
        %v1455 = vrot.slane %v1447, %v1454
        %v1457 = vunpack.c.l.s4 1983009808
        %v1458 = vunpack.c.0.s8 %v1457
        %v1459 = vlaneseq
        %v1460 = vshrl.u32 %v1459, 7
        %v1461 = vsub.s32 %v1458, %v1460
        %v1462 = vrot.slane %v1448, %v1461
        %v1463 = vcombine.low %v1407, %v1423
        %v1464 = vcombine.high %v1407, %v1423
        %v1466 = vunpack.c.l.s4 1934713408
        %v1467 = vunpack.c.0.s8 %v1466
        %v1468 = vlaneseq
        %v1469 = vshrl.u32 %v1468, 7
        %v1470 = vsub.s32 %v1467, %v1469
        %v1471 = vrot.slane %v1463, %v1470
        %v1473 = vunpack.c.l.s4 1934713408
        %v1474 = vunpack.c.0.s8 %v1473
        %v1475 = vlaneseq
        %v1476 = vshrl.u32 %v1475, 7
        %v1477 = vsub.s32 %v1474, %v1476
        %v1478 = vrot.slane %v1464, %v1477
        %v1479 = vcombine.low %v1414, %v1430
        %v1480 = vcombine.high %v1414, %v1430
        %v1482 = vunpack.c.l.s4 1934713408
        %v1483 = vunpack.c.0.s8 %v1482
        %v1484 = vlaneseq
        %v1485 = vshrl.u32 %v1484, 7
        %v1486 = vsub.s32 %v1483, %v1485
        %v1487 = vrot.slane %v1479, %v1486
        %v1489 = vunpack.c.l.s4 1934713408
        %v1490 = vunpack.c.0.s8 %v1489
        %v1491 = vlaneseq
        %v1492 = vshrl.u32 %v1491, 7
        %v1493 = vsub.s32 %v1490, %v1492
        %v1494 = vrot.slane %v1480, %v1493
        %v1495 = vcombine.low %v1439, %v1455
        %v1496 = vcombine.high %v1439, %v1455
        %v1498 = vunpack.c.l.s4 1934713408
        %v1499 = vunpack.c.0.s8 %v1498
        %v1500 = vlaneseq
        %v1501 = vshrl.u32 %v1500, 7
        %v1502 = vsub.s32 %v1499, %v1501
        %v1503 = vrot.slane %v1495, %v1502
        %v1505 = vunpack.c.l.s4 1934713408
        %v1506 = vunpack.c.0.s8 %v1505
        %v1507 = vlaneseq
        %v1508 = vshrl.u32 %v1507, 7
        %v1509 = vsub.s32 %v1506, %v1508
        %v1510 = vrot.slane %v1496, %v1509
        %v1511 = vcombine.low %v1446, %v1462
        %v1512 = vcombine.high %v1446, %v1462
        %v1514 = vunpack.c.l.s4 1934713408
        %v1515 = vunpack.c.0.s8 %v1514
        %v1516 = vlaneseq
        %v1517 = vshrl.u32 %v1516, 7
        %v1518 = vsub.s32 %v1515, %v1517
        %v1519 = vrot.slane %v1511, %v1518
        %v1521 = vunpack.c.l.s4 1934713408
        %v1522 = vunpack.c.0.s8 %v1521
        %v1523 = vlaneseq
        %v1524 = vshrl.u32 %v1523, 7
        %v1525 = vsub.s32 %v1522, %v1524
        %v1526 = vrot.slane %v1512, %v1525
        %v1527 = vcombine.low %v1471, %v1503
        %v1528 = vcombine.high %v1471, %v1503
        %v1529 = vcombine.low %v1478, %v1510
        %v1530 = vcombine.high %v1478, %v1510
        %v1531 = vcombine.low %v1487, %v1519
        %v1532 = vcombine.high %v1487, %v1519
        %v1533 = vcombine.low %v1494, %v1526
        %v1534 = vcombine.high %v1494, %v1526
        %v1535 = vcombine.low %v345, %v479
        %v1536 = vcombine.high %v345, %v479
        %v1538 = vunpack.c.l.s4 1983009808
        %v1539 = vunpack.c.0.s8 %v1538
        %v1540 = vlaneseq
        %v1541 = vshrl.u32 %v1540, 7
        %v1542 = vsub.s32 %v1539, %v1541
        %v1543 = vrot.slane %v1535, %v1542
        %v1545 = vunpack.c.l.s4 1983009808
        %v1546 = vunpack.c.0.s8 %v1545
        %v1547 = vlaneseq
        %v1548 = vshrl.u32 %v1547, 7
        %v1549 = vsub.s32 %v1546, %v1548
        %v1550 = vrot.slane %v1536, %v1549
        %v1551 = vcombine.low %v412, %v546
        %v1552 = vcombine.high %v412, %v546
        %v1554 = vunpack.c.l.s4 1983009808
        %v1555 = vunpack.c.0.s8 %v1554
        %v1556 = vlaneseq
        %v1557 = vshrl.u32 %v1556, 7
        %v1558 = vsub.s32 %v1555, %v1557
        %v1559 = vrot.slane %v1551, %v1558
        %v1561 = vunpack.c.l.s4 1983009808
        %v1562 = vunpack.c.0.s8 %v1561
        %v1563 = vlaneseq
        %v1564 = vshrl.u32 %v1563, 7
        %v1565 = vsub.s32 %v1562, %v1564
        %v1566 = vrot.slane %v1552, %v1565
        %v1567 = vcombine.low %v613, %v747
        %v1568 = vcombine.high %v613, %v747
        %v1570 = vunpack.c.l.s4 1983009808
        %v1571 = vunpack.c.0.s8 %v1570
        %v1572 = vlaneseq
        %v1573 = vshrl.u32 %v1572, 7
        %v1574 = vsub.s32 %v1571, %v1573
        %v1575 = vrot.slane %v1567, %v1574
        %v1577 = vunpack.c.l.s4 1983009808
        %v1578 = vunpack.c.0.s8 %v1577
        %v1579 = vlaneseq
        %v1580 = vshrl.u32 %v1579, 7
        %v1581 = vsub.s32 %v1578, %v1580
        %v1582 = vrot.slane %v1568, %v1581
        %v1583 = vcombine.low %v680, %v814
        %v1584 = vcombine.high %v680, %v814
        %v1586 = vunpack.c.l.s4 1983009808
        %v1587 = vunpack.c.0.s8 %v1586
        %v1588 = vlaneseq
        %v1589 = vshrl.u32 %v1588, 7
        %v1590 = vsub.s32 %v1587, %v1589
        %v1591 = vrot.slane %v1583, %v1590
        %v1593 = vunpack.c.l.s4 1983009808
        %v1594 = vunpack.c.0.s8 %v1593
        %v1595 = vlaneseq
        %v1596 = vshrl.u32 %v1595, 7
        %v1597 = vsub.s32 %v1594, %v1596
        %v1598 = vrot.slane %v1584, %v1597
        %v1599 = vcombine.low %v1543, %v1559
        %v1600 = vcombine.high %v1543, %v1559
        %v1602 = vunpack.c.l.s4 1934713408
        %v1603 = vunpack.c.0.s8 %v1602
        %v1604 = vlaneseq
        %v1605 = vshrl.u32 %v1604, 7
        %v1606 = vsub.s32 %v1603, %v1605
        %v1607 = vrot.slane %v1599, %v1606
        %v1609 = vunpack.c.l.s4 1934713408
        %v1610 = vunpack.c.0.s8 %v1609
        %v1611 = vlaneseq
        %v1612 = vshrl.u32 %v1611, 7
        %v1613 = vsub.s32 %v1610, %v1612
        %v1614 = vrot.slane %v1600, %v1613
        %v1615 = vcombine.low %v1550, %v1566
        %v1616 = vcombine.high %v1550, %v1566
        %v1618 = vunpack.c.l.s4 1934713408
        %v1619 = vunpack.c.0.s8 %v1618
        %v1620 = vlaneseq
        %v1621 = vshrl.u32 %v1620, 7
        %v1622 = vsub.s32 %v1619, %v1621
        %v1623 = vrot.slane %v1615, %v1622
        %v1625 = vunpack.c.l.s4 1934713408
        %v1626 = vunpack.c.0.s8 %v1625
        %v1627 = vlaneseq
        %v1628 = vshrl.u32 %v1627, 7
        %v1629 = vsub.s32 %v1626, %v1628
        %v1630 = vrot.slane %v1616, %v1629
        %v1631 = vcombine.low %v1575, %v1591
        %v1632 = vcombine.high %v1575, %v1591
        %v1634 = vunpack.c.l.s4 1934713408
        %v1635 = vunpack.c.0.s8 %v1634
        %v1636 = vlaneseq
        %v1637 = vshrl.u32 %v1636, 7
        %v1638 = vsub.s32 %v1635, %v1637
        %v1639 = vrot.slane %v1631, %v1638
        %v1641 = vunpack.c.l.s4 1934713408
        %v1642 = vunpack.c.0.s8 %v1641
        %v1643 = vlaneseq
        %v1644 = vshrl.u32 %v1643, 7
        %v1645 = vsub.s32 %v1642, %v1644
        %v1646 = vrot.slane %v1632, %v1645
        %v1647 = vcombine.low %v1582, %v1598
        %v1648 = vcombine.high %v1582, %v1598
        %v1650 = vunpack.c.l.s4 1934713408
        %v1651 = vunpack.c.0.s8 %v1650
        %v1652 = vlaneseq
        %v1653 = vshrl.u32 %v1652, 7
        %v1654 = vsub.s32 %v1651, %v1653
        %v1655 = vrot.slane %v1647, %v1654
        %v1657 = vunpack.c.l.s4 1934713408
        %v1658 = vunpack.c.0.s8 %v1657
        %v1659 = vlaneseq
        %v1660 = vshrl.u32 %v1659, 7
        %v1661 = vsub.s32 %v1658, %v1660
        %v1662 = vrot.slane %v1648, %v1661
        %v1663 = vcombine.low %v1607, %v1639
        %v1664 = vcombine.high %v1607, %v1639
        %v1665 = vcombine.low %v1614, %v1646
        %v1666 = vcombine.high %v1614, %v1646
        %v1667 = vcombine.low %v1623, %v1655
        %v1668 = vcombine.high %v1623, %v1655
        %v1669 = vcombine.low %v1630, %v1662
        %v1670 = vcombine.high %v1630, %v1662
        %v1671 = vcombine.low %v349, %v483
        %v1672 = vcombine.high %v349, %v483
        %v1674 = vunpack.c.l.s4 1983009808
        %v1675 = vunpack.c.0.s8 %v1674
        %v1676 = vlaneseq
        %v1677 = vshrl.u32 %v1676, 7
        %v1678 = vsub.s32 %v1675, %v1677
        %v1679 = vrot.slane %v1671, %v1678
        %v1681 = vunpack.c.l.s4 1983009808
        %v1682 = vunpack.c.0.s8 %v1681
        %v1683 = vlaneseq
        %v1684 = vshrl.u32 %v1683, 7
        %v1685 = vsub.s32 %v1682, %v1684
        %v1686 = vrot.slane %v1672, %v1685
        %v1687 = vcombine.low %v416, %v550
        %v1688 = vcombine.high %v416, %v550
        %v1690 = vunpack.c.l.s4 1983009808
        %v1691 = vunpack.c.0.s8 %v1690
        %v1692 = vlaneseq
        %v1693 = vshrl.u32 %v1692, 7
        %v1694 = vsub.s32 %v1691, %v1693
        %v1695 = vrot.slane %v1687, %v1694
        %v1697 = vunpack.c.l.s4 1983009808
        %v1698 = vunpack.c.0.s8 %v1697
        %v1699 = vlaneseq
        %v1700 = vshrl.u32 %v1699, 7
        %v1701 = vsub.s32 %v1698, %v1700
        %v1702 = vrot.slane %v1688, %v1701
        %v1703 = vcombine.low %v617, %v751
        %v1704 = vcombine.high %v617, %v751
        %v1706 = vunpack.c.l.s4 1983009808
        %v1707 = vunpack.c.0.s8 %v1706
        %v1708 = vlaneseq
        %v1709 = vshrl.u32 %v1708, 7
        %v1710 = vsub.s32 %v1707, %v1709
        %v1711 = vrot.slane %v1703, %v1710
        %v1713 = vunpack.c.l.s4 1983009808
        %v1714 = vunpack.c.0.s8 %v1713
        %v1715 = vlaneseq
        %v1716 = vshrl.u32 %v1715, 7
        %v1717 = vsub.s32 %v1714, %v1716
        %v1718 = vrot.slane %v1704, %v1717
        %v1719 = vcombine.low %v684, %v818
        %v1720 = vcombine.high %v684, %v818
        %v1722 = vunpack.c.l.s4 1983009808
        %v1723 = vunpack.c.0.s8 %v1722
        %v1724 = vlaneseq
        %v1725 = vshrl.u32 %v1724, 7
        %v1726 = vsub.s32 %v1723, %v1725
        %v1727 = vrot.slane %v1719, %v1726
        %v1729 = vunpack.c.l.s4 1983009808
        %v1730 = vunpack.c.0.s8 %v1729
        %v1731 = vlaneseq
        %v1732 = vshrl.u32 %v1731, 7
        %v1733 = vsub.s32 %v1730, %v1732
        %v1734 = vrot.slane %v1720, %v1733
        %v1735 = vcombine.low %v1679, %v1695
        %v1736 = vcombine.high %v1679, %v1695
        %v1738 = vunpack.c.l.s4 1934713408
        %v1739 = vunpack.c.0.s8 %v1738
        %v1740 = vlaneseq
        %v1741 = vshrl.u32 %v1740, 7
        %v1742 = vsub.s32 %v1739, %v1741
        %v1743 = vrot.slane %v1735, %v1742
        %v1745 = vunpack.c.l.s4 1934713408
        %v1746 = vunpack.c.0.s8 %v1745
        %v1747 = vlaneseq
        %v1748 = vshrl.u32 %v1747, 7
        %v1749 = vsub.s32 %v1746, %v1748
        %v1750 = vrot.slane %v1736, %v1749
        %v1751 = vcombine.low %v1686, %v1702
        %v1752 = vcombine.high %v1686, %v1702
        %v1754 = vunpack.c.l.s4 1934713408
        %v1755 = vunpack.c.0.s8 %v1754
        %v1756 = vlaneseq
        %v1757 = vshrl.u32 %v1756, 7
        %v1758 = vsub.s32 %v1755, %v1757
        %v1759 = vrot.slane %v1751, %v1758
        %v1761 = vunpack.c.l.s4 1934713408
        %v1762 = vunpack.c.0.s8 %v1761
        %v1763 = vlaneseq
        %v1764 = vshrl.u32 %v1763, 7
        %v1765 = vsub.s32 %v1762, %v1764
        %v1766 = vrot.slane %v1752, %v1765
        %v1767 = vcombine.low %v1711, %v1727
        %v1768 = vcombine.high %v1711, %v1727
        %v1770 = vunpack.c.l.s4 1934713408
        %v1771 = vunpack.c.0.s8 %v1770
        %v1772 = vlaneseq
        %v1773 = vshrl.u32 %v1772, 7
        %v1774 = vsub.s32 %v1771, %v1773
        %v1775 = vrot.slane %v1767, %v1774
        %v1777 = vunpack.c.l.s4 1934713408
        %v1778 = vunpack.c.0.s8 %v1777
        %v1779 = vlaneseq
        %v1780 = vshrl.u32 %v1779, 7
        %v1781 = vsub.s32 %v1778, %v1780
        %v1782 = vrot.slane %v1768, %v1781
        %v1783 = vcombine.low %v1718, %v1734
        %v1784 = vcombine.high %v1718, %v1734
        %v1786 = vunpack.c.l.s4 1934713408
        %v1787 = vunpack.c.0.s8 %v1786
        %v1788 = vlaneseq
        %v1789 = vshrl.u32 %v1788, 7
        %v1790 = vsub.s32 %v1787, %v1789
        %v1791 = vrot.slane %v1783, %v1790
        %v1793 = vunpack.c.l.s4 1934713408
        %v1794 = vunpack.c.0.s8 %v1793
        %v1795 = vlaneseq
        %v1796 = vshrl.u32 %v1795, 7
        %v1797 = vsub.s32 %v1794, %v1796
        %v1798 = vrot.slane %v1784, %v1797
        %v1799 = vcombine.low %v1743, %v1775
        %v1800 = vcombine.high %v1743, %v1775
        %v1801 = vcombine.low %v1750, %v1782
        %v1802 = vcombine.high %v1750, %v1782
        %v1803 = vcombine.low %v1759, %v1791
        %v1804 = vcombine.high %v1759, %v1791
        %v1805 = vcombine.low %v1766, %v1798
        %v1806 = vcombine.high %v1766, %v1798
        %v1807 = vcombine.low %v353, %v487
        %v1808 = vcombine.high %v353, %v487
        %v1810 = vunpack.c.l.s4 1983009808
        %v1811 = vunpack.c.0.s8 %v1810
        %v1812 = vlaneseq
        %v1813 = vshrl.u32 %v1812, 7
        %v1814 = vsub.s32 %v1811, %v1813
        %v1815 = vrot.slane %v1807, %v1814
        %v1817 = vunpack.c.l.s4 1983009808
        %v1818 = vunpack.c.0.s8 %v1817
        %v1819 = vlaneseq
        %v1820 = vshrl.u32 %v1819, 7
        %v1821 = vsub.s32 %v1818, %v1820
        %v1822 = vrot.slane %v1808, %v1821
        %v1823 = vcombine.low %v420, %v554
        %v1824 = vcombine.high %v420, %v554
        %v1826 = vunpack.c.l.s4 1983009808
        %v1827 = vunpack.c.0.s8 %v1826
        %v1828 = vlaneseq
        %v1829 = vshrl.u32 %v1828, 7
        %v1830 = vsub.s32 %v1827, %v1829
        %v1831 = vrot.slane %v1823, %v1830
        %v1833 = vunpack.c.l.s4 1983009808
        %v1834 = vunpack.c.0.s8 %v1833
        %v1835 = vlaneseq
        %v1836 = vshrl.u32 %v1835, 7
        %v1837 = vsub.s32 %v1834, %v1836
        %v1838 = vrot.slane %v1824, %v1837
        %v1839 = vcombine.low %v621, %v755
        %v1840 = vcombine.high %v621, %v755
        %v1842 = vunpack.c.l.s4 1983009808
        %v1843 = vunpack.c.0.s8 %v1842
        %v1844 = vlaneseq
        %v1845 = vshrl.u32 %v1844, 7
        %v1846 = vsub.s32 %v1843, %v1845
        %v1847 = vrot.slane %v1839, %v1846
        %v1849 = vunpack.c.l.s4 1983009808
        %v1850 = vunpack.c.0.s8 %v1849
        %v1851 = vlaneseq
        %v1852 = vshrl.u32 %v1851, 7
        %v1853 = vsub.s32 %v1850, %v1852
        %v1854 = vrot.slane %v1840, %v1853
        %v1855 = vcombine.low %v688, %v822
        %v1856 = vcombine.high %v688, %v822
        %v1858 = vunpack.c.l.s4 1983009808
        %v1859 = vunpack.c.0.s8 %v1858
        %v1860 = vlaneseq
        %v1861 = vshrl.u32 %v1860, 7
        %v1862 = vsub.s32 %v1859, %v1861
        %v1863 = vrot.slane %v1855, %v1862
        %v1865 = vunpack.c.l.s4 1983009808
        %v1866 = vunpack.c.0.s8 %v1865
        %v1867 = vlaneseq
        %v1868 = vshrl.u32 %v1867, 7
        %v1869 = vsub.s32 %v1866, %v1868
        %v1870 = vrot.slane %v1856, %v1869
        %v1871 = vcombine.low %v1815, %v1831
        %v1872 = vcombine.high %v1815, %v1831
        %v1874 = vunpack.c.l.s4 1934713408
        %v1875 = vunpack.c.0.s8 %v1874
        %v1876 = vlaneseq
        %v1877 = vshrl.u32 %v1876, 7
        %v1878 = vsub.s32 %v1875, %v1877
        %v1879 = vrot.slane %v1871, %v1878
        %v1881 = vunpack.c.l.s4 1934713408
        %v1882 = vunpack.c.0.s8 %v1881
        %v1883 = vlaneseq
        %v1884 = vshrl.u32 %v1883, 7
        %v1885 = vsub.s32 %v1882, %v1884
        %v1886 = vrot.slane %v1872, %v1885
        %v1887 = vcombine.low %v1822, %v1838
        %v1888 = vcombine.high %v1822, %v1838
        %v1890 = vunpack.c.l.s4 1934713408
        %v1891 = vunpack.c.0.s8 %v1890
        %v1892 = vlaneseq
        %v1893 = vshrl.u32 %v1892, 7
        %v1894 = vsub.s32 %v1891, %v1893
        %v1895 = vrot.slane %v1887, %v1894
        %v1897 = vunpack.c.l.s4 1934713408
        %v1898 = vunpack.c.0.s8 %v1897
        %v1899 = vlaneseq
        %v1900 = vshrl.u32 %v1899, 7
        %v1901 = vsub.s32 %v1898, %v1900
        %v1902 = vrot.slane %v1888, %v1901
        %v1903 = vcombine.low %v1847, %v1863
        %v1904 = vcombine.high %v1847, %v1863
        %v1906 = vunpack.c.l.s4 1934713408
        %v1907 = vunpack.c.0.s8 %v1906
        %v1908 = vlaneseq
        %v1909 = vshrl.u32 %v1908, 7
        %v1910 = vsub.s32 %v1907, %v1909
        %v1911 = vrot.slane %v1903, %v1910
        %v1913 = vunpack.c.l.s4 1934713408
        %v1914 = vunpack.c.0.s8 %v1913
        %v1915 = vlaneseq
        %v1916 = vshrl.u32 %v1915, 7
        %v1917 = vsub.s32 %v1914, %v1916
        %v1918 = vrot.slane %v1904, %v1917
        %v1919 = vcombine.low %v1854, %v1870
        %v1920 = vcombine.high %v1854, %v1870
        %v1922 = vunpack.c.l.s4 1934713408
        %v1923 = vunpack.c.0.s8 %v1922
        %v1924 = vlaneseq
        %v1925 = vshrl.u32 %v1924, 7
        %v1926 = vsub.s32 %v1923, %v1925
        %v1927 = vrot.slane %v1919, %v1926
        %v1929 = vunpack.c.l.s4 1934713408
        %v1930 = vunpack.c.0.s8 %v1929
        %v1931 = vlaneseq
        %v1932 = vshrl.u32 %v1931, 7
        %v1933 = vsub.s32 %v1930, %v1932
        %v1934 = vrot.slane %v1920, %v1933
        %v1935 = vcombine.low %v1879, %v1911
        %v1936 = vcombine.high %v1879, %v1911
        %v1937 = vcombine.low %v1886, %v1918
        %v1938 = vcombine.high %v1886, %v1918
        %v1939 = vcombine.low %v1895, %v1927
        %v1940 = vcombine.high %v1895, %v1927
        %v1941 = vcombine.low %v1902, %v1934
        %v1942 = vcombine.high %v1902, %v1934
        %v1943 = vcombine.low %v357, %v491
        %v1944 = vcombine.high %v357, %v491
        %v1946 = vunpack.c.l.s4 1983009808
        %v1947 = vunpack.c.0.s8 %v1946
        %v1948 = vlaneseq
        %v1949 = vshrl.u32 %v1948, 7
        %v1950 = vsub.s32 %v1947, %v1949
        %v1951 = vrot.slane %v1943, %v1950
        %v1953 = vunpack.c.l.s4 1983009808
        %v1954 = vunpack.c.0.s8 %v1953
        %v1955 = vlaneseq
        %v1956 = vshrl.u32 %v1955, 7
        %v1957 = vsub.s32 %v1954, %v1956
        %v1958 = vrot.slane %v1944, %v1957
        %v1959 = vcombine.low %v424, %v558
        %v1960 = vcombine.high %v424, %v558
        %v1962 = vunpack.c.l.s4 1983009808
        %v1963 = vunpack.c.0.s8 %v1962
        %v1964 = vlaneseq
        %v1965 = vshrl.u32 %v1964, 7
        %v1966 = vsub.s32 %v1963, %v1965
        %v1967 = vrot.slane %v1959, %v1966
        %v1969 = vunpack.c.l.s4 1983009808
        %v1970 = vunpack.c.0.s8 %v1969
        %v1971 = vlaneseq
        %v1972 = vshrl.u32 %v1971, 7
        %v1973 = vsub.s32 %v1970, %v1972
        %v1974 = vrot.slane %v1960, %v1973
        %v1975 = vcombine.low %v625, %v759
        %v1976 = vcombine.high %v625, %v759
        %v1978 = vunpack.c.l.s4 1983009808
        %v1979 = vunpack.c.0.s8 %v1978
        %v1980 = vlaneseq
        %v1981 = vshrl.u32 %v1980, 7
        %v1982 = vsub.s32 %v1979, %v1981
        %v1983 = vrot.slane %v1975, %v1982
        %v1985 = vunpack.c.l.s4 1983009808
        %v1986 = vunpack.c.0.s8 %v1985
        %v1987 = vlaneseq
        %v1988 = vshrl.u32 %v1987, 7
        %v1989 = vsub.s32 %v1986, %v1988
        %v1990 = vrot.slane %v1976, %v1989
        %v1991 = vcombine.low %v692, %v826
        %v1992 = vcombine.high %v692, %v826
        %v1994 = vunpack.c.l.s4 1983009808
        %v1995 = vunpack.c.0.s8 %v1994
        %v1996 = vlaneseq
        %v1997 = vshrl.u32 %v1996, 7
        %v1998 = vsub.s32 %v1995, %v1997
        %v1999 = vrot.slane %v1991, %v1998
        %v2001 = vunpack.c.l.s4 1983009808
        %v2002 = vunpack.c.0.s8 %v2001
        %v2003 = vlaneseq
        %v2004 = vshrl.u32 %v2003, 7
        %v2005 = vsub.s32 %v2002, %v2004
        %v2006 = vrot.slane %v1992, %v2005
        %v2007 = vcombine.low %v1951, %v1967
        %v2008 = vcombine.high %v1951, %v1967
        %v2010 = vunpack.c.l.s4 1934713408
        %v2011 = vunpack.c.0.s8 %v2010
        %v2012 = vlaneseq
        %v2013 = vshrl.u32 %v2012, 7
        %v2014 = vsub.s32 %v2011, %v2013
        %v2015 = vrot.slane %v2007, %v2014
        %v2017 = vunpack.c.l.s4 1934713408
        %v2018 = vunpack.c.0.s8 %v2017
        %v2019 = vlaneseq
        %v2020 = vshrl.u32 %v2019, 7
        %v2021 = vsub.s32 %v2018, %v2020
        %v2022 = vrot.slane %v2008, %v2021
        %v2023 = vcombine.low %v1958, %v1974
        %v2024 = vcombine.high %v1958, %v1974
        %v2026 = vunpack.c.l.s4 1934713408
        %v2027 = vunpack.c.0.s8 %v2026
        %v2028 = vlaneseq
        %v2029 = vshrl.u32 %v2028, 7
        %v2030 = vsub.s32 %v2027, %v2029
        %v2031 = vrot.slane %v2023, %v2030
        %v2033 = vunpack.c.l.s4 1934713408
        %v2034 = vunpack.c.0.s8 %v2033
        %v2035 = vlaneseq
        %v2036 = vshrl.u32 %v2035, 7
        %v2037 = vsub.s32 %v2034, %v2036
        %v2038 = vrot.slane %v2024, %v2037
        %v2039 = vcombine.low %v1983, %v1999
        %v2040 = vcombine.high %v1983, %v1999
        %v2042 = vunpack.c.l.s4 1934713408
        %v2043 = vunpack.c.0.s8 %v2042
        %v2044 = vlaneseq
        %v2045 = vshrl.u32 %v2044, 7
        %v2046 = vsub.s32 %v2043, %v2045
        %v2047 = vrot.slane %v2039, %v2046
        %v2049 = vunpack.c.l.s4 1934713408
        %v2050 = vunpack.c.0.s8 %v2049
        %v2051 = vlaneseq
        %v2052 = vshrl.u32 %v2051, 7
        %v2053 = vsub.s32 %v2050, %v2052
        %v2054 = vrot.slane %v2040, %v2053
        %v2055 = vcombine.low %v1990, %v2006
        %v2056 = vcombine.high %v1990, %v2006
        %v2058 = vunpack.c.l.s4 1934713408
        %v2059 = vunpack.c.0.s8 %v2058
        %v2060 = vlaneseq
        %v2061 = vshrl.u32 %v2060, 7
        %v2062 = vsub.s32 %v2059, %v2061
        %v2063 = vrot.slane %v2055, %v2062
        %v2065 = vunpack.c.l.s4 1934713408
        %v2066 = vunpack.c.0.s8 %v2065
        %v2067 = vlaneseq
        %v2068 = vshrl.u32 %v2067, 7
        %v2069 = vsub.s32 %v2066, %v2068
        %v2070 = vrot.slane %v2056, %v2069
        %v2071 = vcombine.low %v2015, %v2047
        %v2072 = vcombine.high %v2015, %v2047
        %v2073 = vcombine.low %v2022, %v2054
        %v2074 = vcombine.high %v2022, %v2054
        %v2075 = vcombine.low %v2031, %v2063
        %v2076 = vcombine.high %v2031, %v2063
        %v2077 = vcombine.low %v2038, %v2070
        %v2078 = vcombine.high %v2038, %v2070
        %v2079 = vcombine.low %v361, %v495
        %v2080 = vcombine.high %v361, %v495
        %v2082 = vunpack.c.l.s4 1983009808
        %v2083 = vunpack.c.0.s8 %v2082
        %v2084 = vlaneseq
        %v2085 = vshrl.u32 %v2084, 7
        %v2086 = vsub.s32 %v2083, %v2085
        %v2087 = vrot.slane %v2079, %v2086
        %v2089 = vunpack.c.l.s4 1983009808
        %v2090 = vunpack.c.0.s8 %v2089
        %v2091 = vlaneseq
        %v2092 = vshrl.u32 %v2091, 7
        %v2093 = vsub.s32 %v2090, %v2092
        %v2094 = vrot.slane %v2080, %v2093
        %v2095 = vcombine.low %v428, %v562
        %v2096 = vcombine.high %v428, %v562
        %v2098 = vunpack.c.l.s4 1983009808
        %v2099 = vunpack.c.0.s8 %v2098
        %v2100 = vlaneseq
        %v2101 = vshrl.u32 %v2100, 7
        %v2102 = vsub.s32 %v2099, %v2101
        %v2103 = vrot.slane %v2095, %v2102
        %v2105 = vunpack.c.l.s4 1983009808
        %v2106 = vunpack.c.0.s8 %v2105
        %v2107 = vlaneseq
        %v2108 = vshrl.u32 %v2107, 7
        %v2109 = vsub.s32 %v2106, %v2108
        %v2110 = vrot.slane %v2096, %v2109
        %v2111 = vcombine.low %v629, %v763
        %v2112 = vcombine.high %v629, %v763
        %v2114 = vunpack.c.l.s4 1983009808
        %v2115 = vunpack.c.0.s8 %v2114
        %v2116 = vlaneseq
        %v2117 = vshrl.u32 %v2116, 7
        %v2118 = vsub.s32 %v2115, %v2117
        %v2119 = vrot.slane %v2111, %v2118
        %v2121 = vunpack.c.l.s4 1983009808
        %v2122 = vunpack.c.0.s8 %v2121
        %v2123 = vlaneseq
        %v2124 = vshrl.u32 %v2123, 7
        %v2125 = vsub.s32 %v2122, %v2124
        %v2126 = vrot.slane %v2112, %v2125
        %v2127 = vcombine.low %v696, %v830
        %v2128 = vcombine.high %v696, %v830
        %v2130 = vunpack.c.l.s4 1983009808
        %v2131 = vunpack.c.0.s8 %v2130
        %v2132 = vlaneseq
        %v2133 = vshrl.u32 %v2132, 7
        %v2134 = vsub.s32 %v2131, %v2133
        %v2135 = vrot.slane %v2127, %v2134
        %v2137 = vunpack.c.l.s4 1983009808
        %v2138 = vunpack.c.0.s8 %v2137
        %v2139 = vlaneseq
        %v2140 = vshrl.u32 %v2139, 7
        %v2141 = vsub.s32 %v2138, %v2140
        %v2142 = vrot.slane %v2128, %v2141
        %v2143 = vcombine.low %v2087, %v2103
        %v2144 = vcombine.high %v2087, %v2103
        %v2146 = vunpack.c.l.s4 1934713408
        %v2147 = vunpack.c.0.s8 %v2146
        %v2148 = vlaneseq
        %v2149 = vshrl.u32 %v2148, 7
        %v2150 = vsub.s32 %v2147, %v2149
        %v2151 = vrot.slane %v2143, %v2150
        %v2153 = vunpack.c.l.s4 1934713408
        %v2154 = vunpack.c.0.s8 %v2153
        %v2155 = vlaneseq
        %v2156 = vshrl.u32 %v2155, 7
        %v2157 = vsub.s32 %v2154, %v2156
        %v2158 = vrot.slane %v2144, %v2157
        %v2159 = vcombine.low %v2094, %v2110
        %v2160 = vcombine.high %v2094, %v2110
        %v2162 = vunpack.c.l.s4 1934713408
        %v2163 = vunpack.c.0.s8 %v2162
        %v2164 = vlaneseq
        %v2165 = vshrl.u32 %v2164, 7
        %v2166 = vsub.s32 %v2163, %v2165
        %v2167 = vrot.slane %v2159, %v2166
        %v2169 = vunpack.c.l.s4 1934713408
        %v2170 = vunpack.c.0.s8 %v2169
        %v2171 = vlaneseq
        %v2172 = vshrl.u32 %v2171, 7
        %v2173 = vsub.s32 %v2170, %v2172
        %v2174 = vrot.slane %v2160, %v2173
        %v2175 = vcombine.low %v2119, %v2135
        %v2176 = vcombine.high %v2119, %v2135
        %v2178 = vunpack.c.l.s4 1934713408
        %v2179 = vunpack.c.0.s8 %v2178
        %v2180 = vlaneseq
        %v2181 = vshrl.u32 %v2180, 7
        %v2182 = vsub.s32 %v2179, %v2181
        %v2183 = vrot.slane %v2175, %v2182
        %v2185 = vunpack.c.l.s4 1934713408
        %v2186 = vunpack.c.0.s8 %v2185
        %v2187 = vlaneseq
        %v2188 = vshrl.u32 %v2187, 7
        %v2189 = vsub.s32 %v2186, %v2188
        %v2190 = vrot.slane %v2176, %v2189
        %v2191 = vcombine.low %v2126, %v2142
        %v2192 = vcombine.high %v2126, %v2142
        %v2194 = vunpack.c.l.s4 1934713408
        %v2195 = vunpack.c.0.s8 %v2194
        %v2196 = vlaneseq
        %v2197 = vshrl.u32 %v2196, 7
        %v2198 = vsub.s32 %v2195, %v2197
        %v2199 = vrot.slane %v2191, %v2198
        %v2201 = vunpack.c.l.s4 1934713408
        %v2202 = vunpack.c.0.s8 %v2201
        %v2203 = vlaneseq
        %v2204 = vshrl.u32 %v2203, 7
        %v2205 = vsub.s32 %v2202, %v2204
        %v2206 = vrot.slane %v2192, %v2205
        %v2207 = vcombine.low %v2151, %v2183
        %v2208 = vcombine.high %v2151, %v2183
        %v2209 = vcombine.low %v2158, %v2190
        %v2210 = vcombine.high %v2158, %v2190
        %v2211 = vcombine.low %v2167, %v2199
        %v2212 = vcombine.high %v2167, %v2199
        %v2213 = vcombine.low %v2174, %v2206
        %v2214 = vcombine.high %v2174, %v2206
        %v2215 = vcombine.low %v365, %v499
        %v2216 = vcombine.high %v365, %v499
        %v2218 = vunpack.c.l.s4 1983009808
        %v2219 = vunpack.c.0.s8 %v2218
        %v2220 = vlaneseq
        %v2221 = vshrl.u32 %v2220, 7
        %v2222 = vsub.s32 %v2219, %v2221
        %v2223 = vrot.slane %v2215, %v2222
        %v2225 = vunpack.c.l.s4 1983009808
        %v2226 = vunpack.c.0.s8 %v2225
        %v2227 = vlaneseq
        %v2228 = vshrl.u32 %v2227, 7
        %v2229 = vsub.s32 %v2226, %v2228
        %v2230 = vrot.slane %v2216, %v2229
        %v2231 = vcombine.low %v432, %v566
        %v2232 = vcombine.high %v432, %v566
        %v2234 = vunpack.c.l.s4 1983009808
        %v2235 = vunpack.c.0.s8 %v2234
        %v2236 = vlaneseq
        %v2237 = vshrl.u32 %v2236, 7
        %v2238 = vsub.s32 %v2235, %v2237
        %v2239 = vrot.slane %v2231, %v2238
        %v2241 = vunpack.c.l.s4 1983009808
        %v2242 = vunpack.c.0.s8 %v2241
        %v2243 = vlaneseq
        %v2244 = vshrl.u32 %v2243, 7
        %v2245 = vsub.s32 %v2242, %v2244
        %v2246 = vrot.slane %v2232, %v2245
        %v2247 = vcombine.low %v633, %v767
        %v2248 = vcombine.high %v633, %v767
        %v2250 = vunpack.c.l.s4 1983009808
        %v2251 = vunpack.c.0.s8 %v2250
        %v2252 = vlaneseq
        %v2253 = vshrl.u32 %v2252, 7
        %v2254 = vsub.s32 %v2251, %v2253
        %v2255 = vrot.slane %v2247, %v2254
        %v2257 = vunpack.c.l.s4 1983009808
        %v2258 = vunpack.c.0.s8 %v2257
        %v2259 = vlaneseq
        %v2260 = vshrl.u32 %v2259, 7
        %v2261 = vsub.s32 %v2258, %v2260
        %v2262 = vrot.slane %v2248, %v2261
        %v2263 = vcombine.low %v700, %v834
        %v2264 = vcombine.high %v700, %v834
        %v2266 = vunpack.c.l.s4 1983009808
        %v2267 = vunpack.c.0.s8 %v2266
        %v2268 = vlaneseq
        %v2269 = vshrl.u32 %v2268, 7
        %v2270 = vsub.s32 %v2267, %v2269
        %v2271 = vrot.slane %v2263, %v2270
        %v2273 = vunpack.c.l.s4 1983009808
        %v2274 = vunpack.c.0.s8 %v2273
        %v2275 = vlaneseq
        %v2276 = vshrl.u32 %v2275, 7
        %v2277 = vsub.s32 %v2274, %v2276
        %v2278 = vrot.slane %v2264, %v2277
        %v2279 = vcombine.low %v2223, %v2239
        %v2280 = vcombine.high %v2223, %v2239
        %v2282 = vunpack.c.l.s4 1934713408
        %v2283 = vunpack.c.0.s8 %v2282
        %v2284 = vlaneseq
        %v2285 = vshrl.u32 %v2284, 7
        %v2286 = vsub.s32 %v2283, %v2285
        %v2287 = vrot.slane %v2279, %v2286
        %v2289 = vunpack.c.l.s4 1934713408
        %v2290 = vunpack.c.0.s8 %v2289
        %v2291 = vlaneseq
        %v2292 = vshrl.u32 %v2291, 7
        %v2293 = vsub.s32 %v2290, %v2292
        %v2294 = vrot.slane %v2280, %v2293
        %v2295 = vcombine.low %v2230, %v2246
        %v2296 = vcombine.high %v2230, %v2246
        %v2298 = vunpack.c.l.s4 1934713408
        %v2299 = vunpack.c.0.s8 %v2298
        %v2300 = vlaneseq
        %v2301 = vshrl.u32 %v2300, 7
        %v2302 = vsub.s32 %v2299, %v2301
        %v2303 = vrot.slane %v2295, %v2302
        %v2305 = vunpack.c.l.s4 1934713408
        %v2306 = vunpack.c.0.s8 %v2305
        %v2307 = vlaneseq
        %v2308 = vshrl.u32 %v2307, 7
        %v2309 = vsub.s32 %v2306, %v2308
        %v2310 = vrot.slane %v2296, %v2309
        %v2311 = vcombine.low %v2255, %v2271
        %v2312 = vcombine.high %v2255, %v2271
        %v2314 = vunpack.c.l.s4 1934713408
        %v2315 = vunpack.c.0.s8 %v2314
        %v2316 = vlaneseq
        %v2317 = vshrl.u32 %v2316, 7
        %v2318 = vsub.s32 %v2315, %v2317
        %v2319 = vrot.slane %v2311, %v2318
        %v2321 = vunpack.c.l.s4 1934713408
        %v2322 = vunpack.c.0.s8 %v2321
        %v2323 = vlaneseq
        %v2324 = vshrl.u32 %v2323, 7
        %v2325 = vsub.s32 %v2322, %v2324
        %v2326 = vrot.slane %v2312, %v2325
        %v2327 = vcombine.low %v2262, %v2278
        %v2328 = vcombine.high %v2262, %v2278
        %v2330 = vunpack.c.l.s4 1934713408
        %v2331 = vunpack.c.0.s8 %v2330
        %v2332 = vlaneseq
        %v2333 = vshrl.u32 %v2332, 7
        %v2334 = vsub.s32 %v2331, %v2333
        %v2335 = vrot.slane %v2327, %v2334
        %v2337 = vunpack.c.l.s4 1934713408
        %v2338 = vunpack.c.0.s8 %v2337
        %v2339 = vlaneseq
        %v2340 = vshrl.u32 %v2339, 7
        %v2341 = vsub.s32 %v2338, %v2340
        %v2342 = vrot.slane %v2328, %v2341
        %v2343 = vcombine.low %v2287, %v2319
        %v2344 = vcombine.high %v2287, %v2319
        %v2345 = vcombine.low %v2294, %v2326
        %v2346 = vcombine.high %v2294, %v2326
        %v2347 = vcombine.low %v2303, %v2335
        %v2348 = vcombine.high %v2303, %v2335
        %v2349 = vcombine.low %v2310, %v2342
        %v2350 = vcombine.high %v2310, %v2342
        %v2351 = vcombine.low %v369, %v503
        %v2352 = vcombine.high %v369, %v503
        %v2354 = vunpack.c.l.s4 1983009808
        %v2355 = vunpack.c.0.s8 %v2354
        %v2356 = vlaneseq
        %v2357 = vshrl.u32 %v2356, 7
        %v2358 = vsub.s32 %v2355, %v2357
        %v2359 = vrot.slane %v2351, %v2358
        %v2361 = vunpack.c.l.s4 1983009808
        %v2362 = vunpack.c.0.s8 %v2361
        %v2363 = vlaneseq
        %v2364 = vshrl.u32 %v2363, 7
        %v2365 = vsub.s32 %v2362, %v2364
        %v2366 = vrot.slane %v2352, %v2365
        %v2367 = vcombine.low %v436, %v570
        %v2368 = vcombine.high %v436, %v570
        %v2370 = vunpack.c.l.s4 1983009808
        %v2371 = vunpack.c.0.s8 %v2370
        %v2372 = vlaneseq
        %v2373 = vshrl.u32 %v2372, 7
        %v2374 = vsub.s32 %v2371, %v2373
        %v2375 = vrot.slane %v2367, %v2374
        %v2377 = vunpack.c.l.s4 1983009808
        %v2378 = vunpack.c.0.s8 %v2377
        %v2379 = vlaneseq
        %v2380 = vshrl.u32 %v2379, 7
        %v2381 = vsub.s32 %v2378, %v2380
        %v2382 = vrot.slane %v2368, %v2381
        %v2383 = vcombine.low %v637, %v771
        %v2384 = vcombine.high %v637, %v771
        %v2386 = vunpack.c.l.s4 1983009808
        %v2387 = vunpack.c.0.s8 %v2386
        %v2388 = vlaneseq
        %v2389 = vshrl.u32 %v2388, 7
        %v2390 = vsub.s32 %v2387, %v2389
        %v2391 = vrot.slane %v2383, %v2390
        %v2393 = vunpack.c.l.s4 1983009808
        %v2394 = vunpack.c.0.s8 %v2393
        %v2395 = vlaneseq
        %v2396 = vshrl.u32 %v2395, 7
        %v2397 = vsub.s32 %v2394, %v2396
        %v2398 = vrot.slane %v2384, %v2397
        %v2399 = vcombine.low %v704, %v838
        %v2400 = vcombine.high %v704, %v838
        %v2402 = vunpack.c.l.s4 1983009808
        %v2403 = vunpack.c.0.s8 %v2402
        %v2404 = vlaneseq
        %v2405 = vshrl.u32 %v2404, 7
        %v2406 = vsub.s32 %v2403, %v2405
        %v2407 = vrot.slane %v2399, %v2406
        %v2409 = vunpack.c.l.s4 1983009808
        %v2410 = vunpack.c.0.s8 %v2409
        %v2411 = vlaneseq
        %v2412 = vshrl.u32 %v2411, 7
        %v2413 = vsub.s32 %v2410, %v2412
        %v2414 = vrot.slane %v2400, %v2413
        %v2415 = vcombine.low %v2359, %v2375
        %v2416 = vcombine.high %v2359, %v2375
        %v2418 = vunpack.c.l.s4 1934713408
        %v2419 = vunpack.c.0.s8 %v2418
        %v2420 = vlaneseq
        %v2421 = vshrl.u32 %v2420, 7
        %v2422 = vsub.s32 %v2419, %v2421
        %v2423 = vrot.slane %v2415, %v2422
        %v2425 = vunpack.c.l.s4 1934713408
        %v2426 = vunpack.c.0.s8 %v2425
        %v2427 = vlaneseq
        %v2428 = vshrl.u32 %v2427, 7
        %v2429 = vsub.s32 %v2426, %v2428
        %v2430 = vrot.slane %v2416, %v2429
        %v2431 = vcombine.low %v2366, %v2382
        %v2432 = vcombine.high %v2366, %v2382
        %v2434 = vunpack.c.l.s4 1934713408
        %v2435 = vunpack.c.0.s8 %v2434
        %v2436 = vlaneseq
        %v2437 = vshrl.u32 %v2436, 7
        %v2438 = vsub.s32 %v2435, %v2437
        %v2439 = vrot.slane %v2431, %v2438
        %v2441 = vunpack.c.l.s4 1934713408
        %v2442 = vunpack.c.0.s8 %v2441
        %v2443 = vlaneseq
        %v2444 = vshrl.u32 %v2443, 7
        %v2445 = vsub.s32 %v2442, %v2444
        %v2446 = vrot.slane %v2432, %v2445
        %v2447 = vcombine.low %v2391, %v2407
        %v2448 = vcombine.high %v2391, %v2407
        %v2450 = vunpack.c.l.s4 1934713408
        %v2451 = vunpack.c.0.s8 %v2450
        %v2452 = vlaneseq
        %v2453 = vshrl.u32 %v2452, 7
        %v2454 = vsub.s32 %v2451, %v2453
        %v2455 = vrot.slane %v2447, %v2454
        %v2457 = vunpack.c.l.s4 1934713408
        %v2458 = vunpack.c.0.s8 %v2457
        %v2459 = vlaneseq
        %v2460 = vshrl.u32 %v2459, 7
        %v2461 = vsub.s32 %v2458, %v2460
        %v2462 = vrot.slane %v2448, %v2461
        %v2463 = vcombine.low %v2398, %v2414
        %v2464 = vcombine.high %v2398, %v2414
        %v2466 = vunpack.c.l.s4 1934713408
        %v2467 = vunpack.c.0.s8 %v2466
        %v2468 = vlaneseq
        %v2469 = vshrl.u32 %v2468, 7
        %v2470 = vsub.s32 %v2467, %v2469
        %v2471 = vrot.slane %v2463, %v2470
        %v2473 = vunpack.c.l.s4 1934713408
        %v2474 = vunpack.c.0.s8 %v2473
        %v2475 = vlaneseq
        %v2476 = vshrl.u32 %v2475, 7
        %v2477 = vsub.s32 %v2474, %v2476
        %v2478 = vrot.slane %v2464, %v2477
        %v2479 = vcombine.low %v2423, %v2455
        %v2480 = vcombine.high %v2423, %v2455
        %v2481 = vcombine.low %v2430, %v2462
        %v2482 = vcombine.high %v2430, %v2462
        %v2483 = vcombine.low %v2439, %v2471
        %v2484 = vcombine.high %v2439, %v2471
        %v2485 = vcombine.low %v2446, %v2478
        %v2486 = vcombine.high %v2446, %v2478
        %v2487 = vcombine.low %v373, %v507
        %v2488 = vcombine.high %v373, %v507
        %v2490 = vunpack.c.l.s4 1983009808
        %v2491 = vunpack.c.0.s8 %v2490
        %v2492 = vlaneseq
        %v2493 = vshrl.u32 %v2492, 7
        %v2494 = vsub.s32 %v2491, %v2493
        %v2495 = vrot.slane %v2487, %v2494
        %v2497 = vunpack.c.l.s4 1983009808
        %v2498 = vunpack.c.0.s8 %v2497
        %v2499 = vlaneseq
        %v2500 = vshrl.u32 %v2499, 7
        %v2501 = vsub.s32 %v2498, %v2500
        %v2502 = vrot.slane %v2488, %v2501
        %v2503 = vcombine.low %v440, %v574
        %v2504 = vcombine.high %v440, %v574
        %v2506 = vunpack.c.l.s4 1983009808
        %v2507 = vunpack.c.0.s8 %v2506
        %v2508 = vlaneseq
        %v2509 = vshrl.u32 %v2508, 7
        %v2510 = vsub.s32 %v2507, %v2509
        %v2511 = vrot.slane %v2503, %v2510
        %v2513 = vunpack.c.l.s4 1983009808
        %v2514 = vunpack.c.0.s8 %v2513
        %v2515 = vlaneseq
        %v2516 = vshrl.u32 %v2515, 7
        %v2517 = vsub.s32 %v2514, %v2516
        %v2518 = vrot.slane %v2504, %v2517
        %v2519 = vcombine.low %v641, %v775
        %v2520 = vcombine.high %v641, %v775
        %v2522 = vunpack.c.l.s4 1983009808
        %v2523 = vunpack.c.0.s8 %v2522
        %v2524 = vlaneseq
        %v2525 = vshrl.u32 %v2524, 7
        %v2526 = vsub.s32 %v2523, %v2525
        %v2527 = vrot.slane %v2519, %v2526
        %v2529 = vunpack.c.l.s4 1983009808
        %v2530 = vunpack.c.0.s8 %v2529
        %v2531 = vlaneseq
        %v2532 = vshrl.u32 %v2531, 7
        %v2533 = vsub.s32 %v2530, %v2532
        %v2534 = vrot.slane %v2520, %v2533
        %v2535 = vcombine.low %v708, %v842
        %v2536 = vcombine.high %v708, %v842
        %v2538 = vunpack.c.l.s4 1983009808
        %v2539 = vunpack.c.0.s8 %v2538
        %v2540 = vlaneseq
        %v2541 = vshrl.u32 %v2540, 7
        %v2542 = vsub.s32 %v2539, %v2541
        %v2543 = vrot.slane %v2535, %v2542
        %v2545 = vunpack.c.l.s4 1983009808
        %v2546 = vunpack.c.0.s8 %v2545
        %v2547 = vlaneseq
        %v2548 = vshrl.u32 %v2547, 7
        %v2549 = vsub.s32 %v2546, %v2548
        %v2550 = vrot.slane %v2536, %v2549
        %v2551 = vcombine.low %v2495, %v2511
        %v2552 = vcombine.high %v2495, %v2511
        %v2554 = vunpack.c.l.s4 1934713408
        %v2555 = vunpack.c.0.s8 %v2554
        %v2556 = vlaneseq
        %v2557 = vshrl.u32 %v2556, 7
        %v2558 = vsub.s32 %v2555, %v2557
        %v2559 = vrot.slane %v2551, %v2558
        %v2561 = vunpack.c.l.s4 1934713408
        %v2562 = vunpack.c.0.s8 %v2561
        %v2563 = vlaneseq
        %v2564 = vshrl.u32 %v2563, 7
        %v2565 = vsub.s32 %v2562, %v2564
        %v2566 = vrot.slane %v2552, %v2565
        %v2567 = vcombine.low %v2502, %v2518
        %v2568 = vcombine.high %v2502, %v2518
        %v2570 = vunpack.c.l.s4 1934713408
        %v2571 = vunpack.c.0.s8 %v2570
        %v2572 = vlaneseq
        %v2573 = vshrl.u32 %v2572, 7
        %v2574 = vsub.s32 %v2571, %v2573
        %v2575 = vrot.slane %v2567, %v2574
        %v2577 = vunpack.c.l.s4 1934713408
        %v2578 = vunpack.c.0.s8 %v2577
        %v2579 = vlaneseq
        %v2580 = vshrl.u32 %v2579, 7
        %v2581 = vsub.s32 %v2578, %v2580
        %v2582 = vrot.slane %v2568, %v2581
        %v2583 = vcombine.low %v2527, %v2543
        %v2584 = vcombine.high %v2527, %v2543
        %v2586 = vunpack.c.l.s4 1934713408
        %v2587 = vunpack.c.0.s8 %v2586
        %v2588 = vlaneseq
        %v2589 = vshrl.u32 %v2588, 7
        %v2590 = vsub.s32 %v2587, %v2589
        %v2591 = vrot.slane %v2583, %v2590
        %v2593 = vunpack.c.l.s4 1934713408
        %v2594 = vunpack.c.0.s8 %v2593
        %v2595 = vlaneseq
        %v2596 = vshrl.u32 %v2595, 7
        %v2597 = vsub.s32 %v2594, %v2596
        %v2598 = vrot.slane %v2584, %v2597
        %v2599 = vcombine.low %v2534, %v2550
        %v2600 = vcombine.high %v2534, %v2550
        %v2602 = vunpack.c.l.s4 1934713408
        %v2603 = vunpack.c.0.s8 %v2602
        %v2604 = vlaneseq
        %v2605 = vshrl.u32 %v2604, 7
        %v2606 = vsub.s32 %v2603, %v2605
        %v2607 = vrot.slane %v2599, %v2606
        %v2609 = vunpack.c.l.s4 1934713408
        %v2610 = vunpack.c.0.s8 %v2609
        %v2611 = vlaneseq
        %v2612 = vshrl.u32 %v2611, 7
        %v2613 = vsub.s32 %v2610, %v2612
        %v2614 = vrot.slane %v2600, %v2613
        %v2615 = vcombine.low %v2559, %v2591
        %v2616 = vcombine.high %v2559, %v2591
        %v2617 = vcombine.low %v2566, %v2598
        %v2618 = vcombine.high %v2566, %v2598
        %v2619 = vcombine.low %v2575, %v2607
        %v2620 = vcombine.high %v2575, %v2607
        %v2621 = vcombine.low %v2582, %v2614
        %v2622 = vcombine.high %v2582, %v2614
        %v2623 = vcombine.low %v377, %v511
        %v2624 = vcombine.high %v377, %v511
        %v2626 = vunpack.c.l.s4 1983009808
        %v2627 = vunpack.c.0.s8 %v2626
        %v2628 = vlaneseq
        %v2629 = vshrl.u32 %v2628, 7
        %v2630 = vsub.s32 %v2627, %v2629
        %v2631 = vrot.slane %v2623, %v2630
        %v2633 = vunpack.c.l.s4 1983009808
        %v2634 = vunpack.c.0.s8 %v2633
        %v2635 = vlaneseq
        %v2636 = vshrl.u32 %v2635, 7
        %v2637 = vsub.s32 %v2634, %v2636
        %v2638 = vrot.slane %v2624, %v2637
        %v2639 = vcombine.low %v444, %v578
        %v2640 = vcombine.high %v444, %v578
        %v2642 = vunpack.c.l.s4 1983009808
        %v2643 = vunpack.c.0.s8 %v2642
        %v2644 = vlaneseq
        %v2645 = vshrl.u32 %v2644, 7
        %v2646 = vsub.s32 %v2643, %v2645
        %v2647 = vrot.slane %v2639, %v2646
        %v2649 = vunpack.c.l.s4 1983009808
        %v2650 = vunpack.c.0.s8 %v2649
        %v2651 = vlaneseq
        %v2652 = vshrl.u32 %v2651, 7
        %v2653 = vsub.s32 %v2650, %v2652
        %v2654 = vrot.slane %v2640, %v2653
        %v2655 = vcombine.low %v645, %v779
        %v2656 = vcombine.high %v645, %v779
        %v2658 = vunpack.c.l.s4 1983009808
        %v2659 = vunpack.c.0.s8 %v2658
        %v2660 = vlaneseq
        %v2661 = vshrl.u32 %v2660, 7
        %v2662 = vsub.s32 %v2659, %v2661
        %v2663 = vrot.slane %v2655, %v2662
        %v2665 = vunpack.c.l.s4 1983009808
        %v2666 = vunpack.c.0.s8 %v2665
        %v2667 = vlaneseq
        %v2668 = vshrl.u32 %v2667, 7
        %v2669 = vsub.s32 %v2666, %v2668
        %v2670 = vrot.slane %v2656, %v2669
        %v2671 = vcombine.low %v712, %v846
        %v2672 = vcombine.high %v712, %v846
        %v2674 = vunpack.c.l.s4 1983009808
        %v2675 = vunpack.c.0.s8 %v2674
        %v2676 = vlaneseq
        %v2677 = vshrl.u32 %v2676, 7
        %v2678 = vsub.s32 %v2675, %v2677
        %v2679 = vrot.slane %v2671, %v2678
        %v2681 = vunpack.c.l.s4 1983009808
        %v2682 = vunpack.c.0.s8 %v2681
        %v2683 = vlaneseq
        %v2684 = vshrl.u32 %v2683, 7
        %v2685 = vsub.s32 %v2682, %v2684
        %v2686 = vrot.slane %v2672, %v2685
        %v2687 = vcombine.low %v2631, %v2647
        %v2688 = vcombine.high %v2631, %v2647
        %v2690 = vunpack.c.l.s4 1934713408
        %v2691 = vunpack.c.0.s8 %v2690
        %v2692 = vlaneseq
        %v2693 = vshrl.u32 %v2692, 7
        %v2694 = vsub.s32 %v2691, %v2693
        %v2695 = vrot.slane %v2687, %v2694
        %v2697 = vunpack.c.l.s4 1934713408
        %v2698 = vunpack.c.0.s8 %v2697
        %v2699 = vlaneseq
        %v2700 = vshrl.u32 %v2699, 7
        %v2701 = vsub.s32 %v2698, %v2700
        %v2702 = vrot.slane %v2688, %v2701
        %v2703 = vcombine.low %v2638, %v2654
        %v2704 = vcombine.high %v2638, %v2654
        %v2706 = vunpack.c.l.s4 1934713408
        %v2707 = vunpack.c.0.s8 %v2706
        %v2708 = vlaneseq
        %v2709 = vshrl.u32 %v2708, 7
        %v2710 = vsub.s32 %v2707, %v2709
        %v2711 = vrot.slane %v2703, %v2710
        %v2713 = vunpack.c.l.s4 1934713408
        %v2714 = vunpack.c.0.s8 %v2713
        %v2715 = vlaneseq
        %v2716 = vshrl.u32 %v2715, 7
        %v2717 = vsub.s32 %v2714, %v2716
        %v2718 = vrot.slane %v2704, %v2717
        %v2719 = vcombine.low %v2663, %v2679
        %v2720 = vcombine.high %v2663, %v2679
        %v2722 = vunpack.c.l.s4 1934713408
        %v2723 = vunpack.c.0.s8 %v2722
        %v2724 = vlaneseq
        %v2725 = vshrl.u32 %v2724, 7
        %v2726 = vsub.s32 %v2723, %v2725
        %v2727 = vrot.slane %v2719, %v2726
        %v2729 = vunpack.c.l.s4 1934713408
        %v2730 = vunpack.c.0.s8 %v2729
        %v2731 = vlaneseq
        %v2732 = vshrl.u32 %v2731, 7
        %v2733 = vsub.s32 %v2730, %v2732
        %v2734 = vrot.slane %v2720, %v2733
        %v2735 = vcombine.low %v2670, %v2686
        %v2736 = vcombine.high %v2670, %v2686
        %v2738 = vunpack.c.l.s4 1934713408
        %v2739 = vunpack.c.0.s8 %v2738
        %v2740 = vlaneseq
        %v2741 = vshrl.u32 %v2740, 7
        %v2742 = vsub.s32 %v2739, %v2741
        %v2743 = vrot.slane %v2735, %v2742
        %v2745 = vunpack.c.l.s4 1934713408
        %v2746 = vunpack.c.0.s8 %v2745
        %v2747 = vlaneseq
        %v2748 = vshrl.u32 %v2747, 7
        %v2749 = vsub.s32 %v2746, %v2748
        %v2750 = vrot.slane %v2736, %v2749
        %v2751 = vcombine.low %v2695, %v2727
        %v2752 = vcombine.high %v2695, %v2727
        %v2753 = vcombine.low %v2702, %v2734
        %v2754 = vcombine.high %v2702, %v2734
        %v2755 = vcombine.low %v2711, %v2743
        %v2756 = vcombine.high %v2711, %v2743
        %v2757 = vcombine.low %v2718, %v2750
        %v2758 = vcombine.high %v2718, %v2750
        %v2759 = vcombine.low %v381, %v515
        %v2760 = vcombine.high %v381, %v515
        %v2762 = vunpack.c.l.s4 1983009808
        %v2763 = vunpack.c.0.s8 %v2762
        %v2764 = vlaneseq
        %v2765 = vshrl.u32 %v2764, 7
        %v2766 = vsub.s32 %v2763, %v2765
        %v2767 = vrot.slane %v2759, %v2766
        %v2769 = vunpack.c.l.s4 1983009808
        %v2770 = vunpack.c.0.s8 %v2769
        %v2771 = vlaneseq
        %v2772 = vshrl.u32 %v2771, 7
        %v2773 = vsub.s32 %v2770, %v2772
        %v2774 = vrot.slane %v2760, %v2773
        %v2775 = vcombine.low %v448, %v582
        %v2776 = vcombine.high %v448, %v582
        %v2778 = vunpack.c.l.s4 1983009808
        %v2779 = vunpack.c.0.s8 %v2778
        %v2780 = vlaneseq
        %v2781 = vshrl.u32 %v2780, 7
        %v2782 = vsub.s32 %v2779, %v2781
        %v2783 = vrot.slane %v2775, %v2782
        %v2785 = vunpack.c.l.s4 1983009808
        %v2786 = vunpack.c.0.s8 %v2785
        %v2787 = vlaneseq
        %v2788 = vshrl.u32 %v2787, 7
        %v2789 = vsub.s32 %v2786, %v2788
        %v2790 = vrot.slane %v2776, %v2789
        %v2791 = vcombine.low %v649, %v783
        %v2792 = vcombine.high %v649, %v783
        %v2794 = vunpack.c.l.s4 1983009808
        %v2795 = vunpack.c.0.s8 %v2794
        %v2796 = vlaneseq
        %v2797 = vshrl.u32 %v2796, 7
        %v2798 = vsub.s32 %v2795, %v2797
        %v2799 = vrot.slane %v2791, %v2798
        %v2801 = vunpack.c.l.s4 1983009808
        %v2802 = vunpack.c.0.s8 %v2801
        %v2803 = vlaneseq
        %v2804 = vshrl.u32 %v2803, 7
        %v2805 = vsub.s32 %v2802, %v2804
        %v2806 = vrot.slane %v2792, %v2805
        %v2807 = vcombine.low %v716, %v850
        %v2808 = vcombine.high %v716, %v850
        %v2810 = vunpack.c.l.s4 1983009808
        %v2811 = vunpack.c.0.s8 %v2810
        %v2812 = vlaneseq
        %v2813 = vshrl.u32 %v2812, 7
        %v2814 = vsub.s32 %v2811, %v2813
        %v2815 = vrot.slane %v2807, %v2814
        %v2817 = vunpack.c.l.s4 1983009808
        %v2818 = vunpack.c.0.s8 %v2817
        %v2819 = vlaneseq
        %v2820 = vshrl.u32 %v2819, 7
        %v2821 = vsub.s32 %v2818, %v2820
        %v2822 = vrot.slane %v2808, %v2821
        %v2823 = vcombine.low %v2767, %v2783
        %v2824 = vcombine.high %v2767, %v2783
        %v2826 = vunpack.c.l.s4 1934713408
        %v2827 = vunpack.c.0.s8 %v2826
        %v2828 = vlaneseq
        %v2829 = vshrl.u32 %v2828, 7
        %v2830 = vsub.s32 %v2827, %v2829
        %v2831 = vrot.slane %v2823, %v2830
        %v2833 = vunpack.c.l.s4 1934713408
        %v2834 = vunpack.c.0.s8 %v2833
        %v2835 = vlaneseq
        %v2836 = vshrl.u32 %v2835, 7
        %v2837 = vsub.s32 %v2834, %v2836
        %v2838 = vrot.slane %v2824, %v2837
        %v2839 = vcombine.low %v2774, %v2790
        %v2840 = vcombine.high %v2774, %v2790
        %v2842 = vunpack.c.l.s4 1934713408
        %v2843 = vunpack.c.0.s8 %v2842
        %v2844 = vlaneseq
        %v2845 = vshrl.u32 %v2844, 7
        %v2846 = vsub.s32 %v2843, %v2845
        %v2847 = vrot.slane %v2839, %v2846
        %v2849 = vunpack.c.l.s4 1934713408
        %v2850 = vunpack.c.0.s8 %v2849
        %v2851 = vlaneseq
        %v2852 = vshrl.u32 %v2851, 7
        %v2853 = vsub.s32 %v2850, %v2852
        %v2854 = vrot.slane %v2840, %v2853
        %v2855 = vcombine.low %v2799, %v2815
        %v2856 = vcombine.high %v2799, %v2815
        %v2858 = vunpack.c.l.s4 1934713408
        %v2859 = vunpack.c.0.s8 %v2858
        %v2860 = vlaneseq
        %v2861 = vshrl.u32 %v2860, 7
        %v2862 = vsub.s32 %v2859, %v2861
        %v2863 = vrot.slane %v2855, %v2862
        %v2865 = vunpack.c.l.s4 1934713408
        %v2866 = vunpack.c.0.s8 %v2865
        %v2867 = vlaneseq
        %v2868 = vshrl.u32 %v2867, 7
        %v2869 = vsub.s32 %v2866, %v2868
        %v2870 = vrot.slane %v2856, %v2869
        %v2871 = vcombine.low %v2806, %v2822
        %v2872 = vcombine.high %v2806, %v2822
        %v2874 = vunpack.c.l.s4 1934713408
        %v2875 = vunpack.c.0.s8 %v2874
        %v2876 = vlaneseq
        %v2877 = vshrl.u32 %v2876, 7
        %v2878 = vsub.s32 %v2875, %v2877
        %v2879 = vrot.slane %v2871, %v2878
        %v2881 = vunpack.c.l.s4 1934713408
        %v2882 = vunpack.c.0.s8 %v2881
        %v2883 = vlaneseq
        %v2884 = vshrl.u32 %v2883, 7
        %v2885 = vsub.s32 %v2882, %v2884
        %v2886 = vrot.slane %v2872, %v2885
        %v2887 = vcombine.low %v2831, %v2863
        %v2888 = vcombine.high %v2831, %v2863
        %v2889 = vcombine.low %v2838, %v2870
        %v2890 = vcombine.high %v2838, %v2870
        %v2891 = vcombine.low %v2847, %v2879
        %v2892 = vcombine.high %v2847, %v2879
        %v2893 = vcombine.low %v2854, %v2886
        %v2894 = vcombine.high %v2854, %v2886
        %v2895 = vcombine.low %v385, %v519
        %v2896 = vcombine.high %v385, %v519
        %v2898 = vunpack.c.l.s4 1983009808
        %v2899 = vunpack.c.0.s8 %v2898
        %v2900 = vlaneseq
        %v2901 = vshrl.u32 %v2900, 7
        %v2902 = vsub.s32 %v2899, %v2901
        %v2903 = vrot.slane %v2895, %v2902
        %v2905 = vunpack.c.l.s4 1983009808
        %v2906 = vunpack.c.0.s8 %v2905
        %v2907 = vlaneseq
        %v2908 = vshrl.u32 %v2907, 7
        %v2909 = vsub.s32 %v2906, %v2908
        %v2910 = vrot.slane %v2896, %v2909
        %v2911 = vcombine.low %v452, %v586
        %v2912 = vcombine.high %v452, %v586
        %v2914 = vunpack.c.l.s4 1983009808
        %v2915 = vunpack.c.0.s8 %v2914
        %v2916 = vlaneseq
        %v2917 = vshrl.u32 %v2916, 7
        %v2918 = vsub.s32 %v2915, %v2917
        %v2919 = vrot.slane %v2911, %v2918
        %v2921 = vunpack.c.l.s4 1983009808
        %v2922 = vunpack.c.0.s8 %v2921
        %v2923 = vlaneseq
        %v2924 = vshrl.u32 %v2923, 7
        %v2925 = vsub.s32 %v2922, %v2924
        %v2926 = vrot.slane %v2912, %v2925
        %v2927 = vcombine.low %v653, %v787
        %v2928 = vcombine.high %v653, %v787
        %v2930 = vunpack.c.l.s4 1983009808
        %v2931 = vunpack.c.0.s8 %v2930
        %v2932 = vlaneseq
        %v2933 = vshrl.u32 %v2932, 7
        %v2934 = vsub.s32 %v2931, %v2933
        %v2935 = vrot.slane %v2927, %v2934
        %v2937 = vunpack.c.l.s4 1983009808
        %v2938 = vunpack.c.0.s8 %v2937
        %v2939 = vlaneseq
        %v2940 = vshrl.u32 %v2939, 7
        %v2941 = vsub.s32 %v2938, %v2940
        %v2942 = vrot.slane %v2928, %v2941
        %v2943 = vcombine.low %v720, %v854
        %v2944 = vcombine.high %v720, %v854
        %v2946 = vunpack.c.l.s4 1983009808
        %v2947 = vunpack.c.0.s8 %v2946
        %v2948 = vlaneseq
        %v2949 = vshrl.u32 %v2948, 7
        %v2950 = vsub.s32 %v2947, %v2949
        %v2951 = vrot.slane %v2943, %v2950
        %v2953 = vunpack.c.l.s4 1983009808
        %v2954 = vunpack.c.0.s8 %v2953
        %v2955 = vlaneseq
        %v2956 = vshrl.u32 %v2955, 7
        %v2957 = vsub.s32 %v2954, %v2956
        %v2958 = vrot.slane %v2944, %v2957
        %v2959 = vcombine.low %v2903, %v2919
        %v2960 = vcombine.high %v2903, %v2919
        %v2962 = vunpack.c.l.s4 1934713408
        %v2963 = vunpack.c.0.s8 %v2962
        %v2964 = vlaneseq
        %v2965 = vshrl.u32 %v2964, 7
        %v2966 = vsub.s32 %v2963, %v2965
        %v2967 = vrot.slane %v2959, %v2966
        %v2969 = vunpack.c.l.s4 1934713408
        %v2970 = vunpack.c.0.s8 %v2969
        %v2971 = vlaneseq
        %v2972 = vshrl.u32 %v2971, 7
        %v2973 = vsub.s32 %v2970, %v2972
        %v2974 = vrot.slane %v2960, %v2973
        %v2975 = vcombine.low %v2910, %v2926
        %v2976 = vcombine.high %v2910, %v2926
        %v2978 = vunpack.c.l.s4 1934713408
        %v2979 = vunpack.c.0.s8 %v2978
        %v2980 = vlaneseq
        %v2981 = vshrl.u32 %v2980, 7
        %v2982 = vsub.s32 %v2979, %v2981
        %v2983 = vrot.slane %v2975, %v2982
        %v2985 = vunpack.c.l.s4 1934713408
        %v2986 = vunpack.c.0.s8 %v2985
        %v2987 = vlaneseq
        %v2988 = vshrl.u32 %v2987, 7
        %v2989 = vsub.s32 %v2986, %v2988
        %v2990 = vrot.slane %v2976, %v2989
        %v2991 = vcombine.low %v2935, %v2951
        %v2992 = vcombine.high %v2935, %v2951
        %v2994 = vunpack.c.l.s4 1934713408
        %v2995 = vunpack.c.0.s8 %v2994
        %v2996 = vlaneseq
        %v2997 = vshrl.u32 %v2996, 7
        %v2998 = vsub.s32 %v2995, %v2997
        %v2999 = vrot.slane %v2991, %v2998
        %v3001 = vunpack.c.l.s4 1934713408
        %v3002 = vunpack.c.0.s8 %v3001
        %v3003 = vlaneseq
        %v3004 = vshrl.u32 %v3003, 7
        %v3005 = vsub.s32 %v3002, %v3004
        %v3006 = vrot.slane %v2992, %v3005
        %v3007 = vcombine.low %v2942, %v2958
        %v3008 = vcombine.high %v2942, %v2958
        %v3010 = vunpack.c.l.s4 1934713408
        %v3011 = vunpack.c.0.s8 %v3010
        %v3012 = vlaneseq
        %v3013 = vshrl.u32 %v3012, 7
        %v3014 = vsub.s32 %v3011, %v3013
        %v3015 = vrot.slane %v3007, %v3014
        %v3017 = vunpack.c.l.s4 1934713408
        %v3018 = vunpack.c.0.s8 %v3017
        %v3019 = vlaneseq
        %v3020 = vshrl.u32 %v3019, 7
        %v3021 = vsub.s32 %v3018, %v3020
        %v3022 = vrot.slane %v3008, %v3021
        %v3023 = vcombine.low %v2967, %v2999
        %v3024 = vcombine.high %v2967, %v2999
        %v3025 = vcombine.low %v2974, %v3006
        %v3026 = vcombine.high %v2974, %v3006
        %v3027 = vcombine.low %v2983, %v3015
        %v3028 = vcombine.high %v2983, %v3015
        %v3029 = vcombine.low %v2990, %v3022
        %v3030 = vcombine.high %v2990, %v3022
        %3032 = vrot.lane.b32.xlu0 %v984, 2
        %v3033 = vpop.permute.xlu0 %3032
        %3036 = vrot.lane.b32.xlu0 %v985, 4
        %v3037 = vpop.permute.xlu0 %3036
        %3040 = vrot.lane.b32.xlu0 %v986, 6
        %v3041 = vpop.permute.xlu0 %3040
        %3044 = vrot.lane.b32.xlu0 %v987, 8
        %v3045 = vpop.permute.xlu0 %3044
        %3048 = vrot.lane.b32.xlu0 %v988, 10
        %v3049 = vpop.permute.xlu0 %3048
        %3052 = vrot.lane.b32.xlu0 %v989, 12
        %v3053 = vpop.permute.xlu0 %3052
        %3056 = vrot.lane.b32.xlu0 %v990, 14
        %v3057 = vpop.permute.xlu0 %3056
        %3060 = vrot.lane.b32.xlu0 %v1119, 16
        %v3061 = vpop.permute.xlu0 %3060
        %3064 = vrot.lane.b32.xlu0 %v1120, 18
        %v3065 = vpop.permute.xlu0 %3064
        %3068 = vrot.lane.b32.xlu0 %v1121, 20
        %v3069 = vpop.permute.xlu0 %3068
        %3072 = vrot.lane.b32.xlu0 %v1122, 22
        %v3073 = vpop.permute.xlu0 %3072
        %3076 = vrot.lane.b32.xlu0 %v1123, 24
        %v3077 = vpop.permute.xlu0 %3076
        %3080 = vrot.lane.b32.xlu0 %v1124, 26
        %v3081 = vpop.permute.xlu0 %3080
        %3084 = vrot.lane.b32.xlu0 %v1125, 28
        %v3085 = vpop.permute.xlu0 %3084
        %3088 = vrot.lane.b32.xlu0 %v1126, 30
        %v3089 = vpop.permute.xlu0 %3088
        %3092 = vrot.lane.b32.xlu0 %v1255, 32
        %v3093 = vpop.permute.xlu0 %3092
        %3096 = vrot.lane.b32.xlu0 %v1256, 34
        %v3097 = vpop.permute.xlu0 %3096
        %3100 = vrot.lane.b32.xlu0 %v1257, 36
        %v3101 = vpop.permute.xlu0 %3100
        %3104 = vrot.lane.b32.xlu0 %v1258, 38
        %v3105 = vpop.permute.xlu0 %3104
        %3108 = vrot.lane.b32.xlu0 %v1259, 40
        %v3109 = vpop.permute.xlu0 %3108
        %3112 = vrot.lane.b32.xlu0 %v1260, 42
        %v3113 = vpop.permute.xlu0 %3112
        %3116 = vrot.lane.b32.xlu0 %v1261, 44
        %v3117 = vpop.permute.xlu0 %3116
        %3120 = vrot.lane.b32.xlu0 %v1262, 46
        %v3121 = vpop.permute.xlu0 %3120
        %3124 = vrot.lane.b32.xlu0 %v1391, 48
        %v3125 = vpop.permute.xlu0 %3124
        %3128 = vrot.lane.b32.xlu0 %v1392, 50
        %v3129 = vpop.permute.xlu0 %3128
        %3132 = vrot.lane.b32.xlu0 %v1393, 52
        %v3133 = vpop.permute.xlu0 %3132
        %3136 = vrot.lane.b32.xlu0 %v1394, 54
        %v3137 = vpop.permute.xlu0 %3136
        %3140 = vrot.lane.b32.xlu0 %v1395, 56
        %v3141 = vpop.permute.xlu0 %3140
        %3144 = vrot.lane.b32.xlu0 %v1396, 58
        %v3145 = vpop.permute.xlu0 %3144
        %3148 = vrot.lane.b32.xlu0 %v1397, 60
        %v3149 = vpop.permute.xlu0 %3148
        %3152 = vrot.lane.b32.xlu0 %v1398, 62
        %v3153 = vpop.permute.xlu0 %3152
        %3156 = vrot.lane.b32.xlu0 %v1527, 64
        %v3157 = vpop.permute.xlu0 %3156
        %3160 = vrot.lane.b32.xlu0 %v1528, 66
        %v3161 = vpop.permute.xlu0 %3160
        %3164 = vrot.lane.b32.xlu0 %v1529, 68
        %v3165 = vpop.permute.xlu0 %3164
        %3168 = vrot.lane.b32.xlu0 %v1530, 70
        %v3169 = vpop.permute.xlu0 %3168
        %3172 = vrot.lane.b32.xlu0 %v1531, 72
        %v3173 = vpop.permute.xlu0 %3172
        %3176 = vrot.lane.b32.xlu0 %v1532, 74
        %v3177 = vpop.permute.xlu0 %3176
        %3180 = vrot.lane.b32.xlu0 %v1533, 76
        %v3181 = vpop.permute.xlu0 %3180
        %3184 = vrot.lane.b32.xlu0 %v1534, 78
        %v3185 = vpop.permute.xlu0 %3184
        %3188 = vrot.lane.b32.xlu0 %v1663, 80
        %v3189 = vpop.permute.xlu0 %3188
        %3192 = vrot.lane.b32.xlu0 %v1664, 82
        %v3193 = vpop.permute.xlu0 %3192
        %3196 = vrot.lane.b32.xlu0 %v1665, 84
        %v3197 = vpop.permute.xlu0 %3196
        %3200 = vrot.lane.b32.xlu0 %v1666, 86
        %v3201 = vpop.permute.xlu0 %3200
        %3204 = vrot.lane.b32.xlu0 %v1667, 88
        %v3205 = vpop.permute.xlu0 %3204
        %3208 = vrot.lane.b32.xlu0 %v1668, 90
        %v3209 = vpop.permute.xlu0 %3208
        %3212 = vrot.lane.b32.xlu0 %v1669, 92
        %v3213 = vpop.permute.xlu0 %3212
        %3216 = vrot.lane.b32.xlu0 %v1670, 94
        %v3217 = vpop.permute.xlu0 %3216
        %3220 = vrot.lane.b32.xlu0 %v1799, 96
        %v3221 = vpop.permute.xlu0 %3220
        %3224 = vrot.lane.b32.xlu0 %v1800, 98
        %v3225 = vpop.permute.xlu0 %3224
        %3228 = vrot.lane.b32.xlu0 %v1801, 100
        %v3229 = vpop.permute.xlu0 %3228
        %3232 = vrot.lane.b32.xlu0 %v1802, 102
        %v3233 = vpop.permute.xlu0 %3232
        %3236 = vrot.lane.b32.xlu0 %v1803, 104
        %v3237 = vpop.permute.xlu0 %3236
        %3240 = vrot.lane.b32.xlu0 %v1804, 106
        %v3241 = vpop.permute.xlu0 %3240
        %3244 = vrot.lane.b32.xlu0 %v1805, 108
        %v3245 = vpop.permute.xlu0 %3244
        %3248 = vrot.lane.b32.xlu0 %v1806, 110
        %v3249 = vpop.permute.xlu0 %3248
        %3252 = vrot.lane.b32.xlu0 %v1935, 112
        %v3253 = vpop.permute.xlu0 %3252
        %3256 = vrot.lane.b32.xlu0 %v1936, 114
        %v3257 = vpop.permute.xlu0 %3256
        %3260 = vrot.lane.b32.xlu0 %v1937, 116
        %v3261 = vpop.permute.xlu0 %3260
        %3264 = vrot.lane.b32.xlu0 %v1938, 118
        %v3265 = vpop.permute.xlu0 %3264
        %3268 = vrot.lane.b32.xlu0 %v1939, 120
        %v3269 = vpop.permute.xlu0 %3268
        %3272 = vrot.lane.b32.xlu0 %v1940, 122
        %v3273 = vpop.permute.xlu0 %3272
        %3276 = vrot.lane.b32.xlu0 %v1941, 124
        %v3277 = vpop.permute.xlu0 %3276
        %3280 = vrot.lane.b32.xlu0 %v1942, 126
        %v3281 = vpop.permute.xlu0 %3280
        %3284 = vrot.lane.b32.xlu0 %v2072, 2
        %v3285 = vpop.permute.xlu0 %3284
        %3288 = vrot.lane.b32.xlu0 %v2073, 4
        %v3289 = vpop.permute.xlu0 %3288
        %3292 = vrot.lane.b32.xlu0 %v2074, 6
        %v3293 = vpop.permute.xlu0 %3292
        %3296 = vrot.lane.b32.xlu0 %v2075, 8
        %v3297 = vpop.permute.xlu0 %3296
        %3300 = vrot.lane.b32.xlu0 %v2076, 10
        %v3301 = vpop.permute.xlu0 %3300
        %3304 = vrot.lane.b32.xlu0 %v2077, 12
        %v3305 = vpop.permute.xlu0 %3304
        %3308 = vrot.lane.b32.xlu0 %v2078, 14
        %v3309 = vpop.permute.xlu0 %3308
        %3312 = vrot.lane.b32.xlu0 %v2207, 16
        %v3313 = vpop.permute.xlu0 %3312
        %3316 = vrot.lane.b32.xlu0 %v2208, 18
        %v3317 = vpop.permute.xlu0 %3316
        %3320 = vrot.lane.b32.xlu0 %v2209, 20
        %v3321 = vpop.permute.xlu0 %3320
        %3324 = vrot.lane.b32.xlu0 %v2210, 22
        %v3325 = vpop.permute.xlu0 %3324
        %3328 = vrot.lane.b32.xlu0 %v2211, 24
        %v3329 = vpop.permute.xlu0 %3328
        %3332 = vrot.lane.b32.xlu0 %v2212, 26
        %v3333 = vpop.permute.xlu0 %3332
        %3336 = vrot.lane.b32.xlu0 %v2213, 28
        %v3337 = vpop.permute.xlu0 %3336
        %3340 = vrot.lane.b32.xlu0 %v2214, 30
        %v3341 = vpop.permute.xlu0 %3340
        %3344 = vrot.lane.b32.xlu0 %v2343, 32
        %v3345 = vpop.permute.xlu0 %3344
        %3348 = vrot.lane.b32.xlu0 %v2344, 34
        %v3349 = vpop.permute.xlu0 %3348
        %3352 = vrot.lane.b32.xlu0 %v2345, 36
        %v3353 = vpop.permute.xlu0 %3352
        %3356 = vrot.lane.b32.xlu0 %v2346, 38
        %v3357 = vpop.permute.xlu0 %3356
        %3360 = vrot.lane.b32.xlu0 %v2347, 40
        %v3361 = vpop.permute.xlu0 %3360
        %3364 = vrot.lane.b32.xlu0 %v2348, 42
        %v3365 = vpop.permute.xlu0 %3364
        %3368 = vrot.lane.b32.xlu0 %v2349, 44
        %v3369 = vpop.permute.xlu0 %3368
        %3372 = vrot.lane.b32.xlu0 %v2350, 46
        %v3373 = vpop.permute.xlu0 %3372
        %3376 = vrot.lane.b32.xlu0 %v2479, 48
        %v3377 = vpop.permute.xlu0 %3376
        %3380 = vrot.lane.b32.xlu0 %v2480, 50
        %v3381 = vpop.permute.xlu0 %3380
        %3384 = vrot.lane.b32.xlu0 %v2481, 52
        %v3385 = vpop.permute.xlu0 %3384
        %3388 = vrot.lane.b32.xlu0 %v2482, 54
        %v3389 = vpop.permute.xlu0 %3388
        %3392 = vrot.lane.b32.xlu0 %v2483, 56
        %v3393 = vpop.permute.xlu0 %3392
        %3396 = vrot.lane.b32.xlu0 %v2484, 58
        %v3397 = vpop.permute.xlu0 %3396
        %3400 = vrot.lane.b32.xlu0 %v2485, 60
        %v3401 = vpop.permute.xlu0 %3400
        %3404 = vrot.lane.b32.xlu0 %v2486, 62
        %v3405 = vpop.permute.xlu0 %3404
        %3408 = vrot.lane.b32.xlu0 %v2615, 64
        %v3409 = vpop.permute.xlu0 %3408
        %3412 = vrot.lane.b32.xlu0 %v2616, 66
        %v3413 = vpop.permute.xlu0 %3412
        %3416 = vrot.lane.b32.xlu0 %v2617, 68
        %v3417 = vpop.permute.xlu0 %3416
        %3420 = vrot.lane.b32.xlu0 %v2618, 70
        %v3421 = vpop.permute.xlu0 %3420
        %3424 = vrot.lane.b32.xlu0 %v2619, 72
        %v3425 = vpop.permute.xlu0 %3424
        %3428 = vrot.lane.b32.xlu0 %v2620, 74
        %v3429 = vpop.permute.xlu0 %3428
        %3432 = vrot.lane.b32.xlu0 %v2621, 76
        %v3433 = vpop.permute.xlu0 %3432
        %3436 = vrot.lane.b32.xlu0 %v2622, 78
        %v3437 = vpop.permute.xlu0 %3436
        %3440 = vrot.lane.b32.xlu0 %v2751, 80
        %v3441 = vpop.permute.xlu0 %3440
        %3444 = vrot.lane.b32.xlu0 %v2752, 82
        %v3445 = vpop.permute.xlu0 %3444
        %3448 = vrot.lane.b32.xlu0 %v2753, 84
        %v3449 = vpop.permute.xlu0 %3448
        %3452 = vrot.lane.b32.xlu0 %v2754, 86
        %v3453 = vpop.permute.xlu0 %3452
        %3456 = vrot.lane.b32.xlu0 %v2755, 88
        %v3457 = vpop.permute.xlu0 %3456
        %3460 = vrot.lane.b32.xlu0 %v2756, 90
        %v3461 = vpop.permute.xlu0 %3460
        %3464 = vrot.lane.b32.xlu0 %v2757, 92
        %v3465 = vpop.permute.xlu0 %3464
        %3468 = vrot.lane.b32.xlu0 %v2758, 94
        %v3469 = vpop.permute.xlu0 %3468
        %3472 = vrot.lane.b32.xlu0 %v2887, 96
        %v3473 = vpop.permute.xlu0 %3472
        %3476 = vrot.lane.b32.xlu0 %v2888, 98
        %v3477 = vpop.permute.xlu0 %3476
        %3480 = vrot.lane.b32.xlu0 %v2889, 100
        %v3481 = vpop.permute.xlu0 %3480
        %3484 = vrot.lane.b32.xlu0 %v2890, 102
        %v3485 = vpop.permute.xlu0 %3484
        %3488 = vrot.lane.b32.xlu0 %v2891, 104
        %v3489 = vpop.permute.xlu0 %3488
        %3492 = vrot.lane.b32.xlu0 %v2892, 106
        %v3493 = vpop.permute.xlu0 %3492
        %3496 = vrot.lane.b32.xlu0 %v2893, 108
        %v3497 = vpop.permute.xlu0 %3496
        %3500 = vrot.lane.b32.xlu0 %v2894, 110
        %v3501 = vpop.permute.xlu0 %3500
        %3504 = vrot.lane.b32.xlu0 %v3023, 112
        %v3505 = vpop.permute.xlu0 %3504
        %3508 = vrot.lane.b32.xlu0 %v3024, 114
        %v3509 = vpop.permute.xlu0 %3508
        %3512 = vrot.lane.b32.xlu0 %v3025, 116
        %v3513 = vpop.permute.xlu0 %3512
        %3516 = vrot.lane.b32.xlu0 %v3026, 118
        %v3517 = vpop.permute.xlu0 %3516
        %3520 = vrot.lane.b32.xlu0 %v3027, 120
        %v3521 = vpop.permute.xlu0 %3520
        %3524 = vrot.lane.b32.xlu0 %v3028, 122
        %v3525 = vpop.permute.xlu0 %3524
        %3528 = vrot.lane.b32.xlu0 %v3029, 124
        %v3529 = vpop.permute.xlu0 %3528
        %3532 = vrot.lane.b32.xlu0 %v3030, 126
        %v3533 = vpop.permute.xlu0 %3532
        %vm3535 = vcmask 15360
        %v3536 = vsel %vm3535, %v983, %v3033
        %vm3537 = vcmask 31744
        %v3538 = vsel %vm3537, %v3536, %v3037
        %vm3539 = vcmask 48128
        %v3540 = vsel %vm3539, %v3538, %v3041
        %vm3541 = vcmask 64512
        %v3542 = vsel %vm3541, %v3540, %v3045
        %vm3543 = vcmask 80896
        %v3544 = vsel %vm3543, %v3542, %v3049
        %vm3545 = vcmask 97280
        %v3546 = vsel %vm3545, %v3544, %v3053
        %vm3547 = vcmask 113664
        %v3548 = vsel %vm3547, %v3546, %v3057
        %vm3549 = vcmask 130048
        %v3550 = vsel %vm3549, %v3548, %v3061
        %vm3551 = vcmask 146432
        %v3552 = vsel %vm3551, %v3550, %v3065
        %vm3553 = vcmask 162816
        %v3554 = vsel %vm3553, %v3552, %v3069
        %vm3555 = vcmask 179200
        %v3556 = vsel %vm3555, %v3554, %v3073
        %vm3557 = vcmask 195584
        %v3558 = vsel %vm3557, %v3556, %v3077
        %vm3559 = vcmask 211968
        %v3560 = vsel %vm3559, %v3558, %v3081
        %vm3561 = vcmask 228352
        %v3562 = vsel %vm3561, %v3560, %v3085
        %vm3563 = vcmask 244736
        %v3564 = vsel %vm3563, %v3562, %v3089
        %vm3565 = vcmask 261120
        %v3566 = vsel %vm3565, %v3564, %v3093
        %vm3567 = vcmask 277504
        %v3568 = vsel %vm3567, %v3566, %v3097
        %vm3569 = vcmask 293888
        %v3570 = vsel %vm3569, %v3568, %v3101
        %vm3571 = vcmask 310272
        %v3572 = vsel %vm3571, %v3570, %v3105
        %vm3573 = vcmask 326656
        %v3574 = vsel %vm3573, %v3572, %v3109
        %vm3575 = vcmask 343040
        %v3576 = vsel %vm3575, %v3574, %v3113
        %vm3577 = vcmask 359424
        %v3578 = vsel %vm3577, %v3576, %v3117
        %vm3579 = vcmask 375808
        %v3580 = vsel %vm3579, %v3578, %v3121
        %vm3581 = vcmask 392192
        %v3582 = vsel %vm3581, %v3580, %v3125
        %vm3583 = vcmask 408576
        %v3584 = vsel %vm3583, %v3582, %v3129
        %vm3585 = vcmask 424960
        %v3586 = vsel %vm3585, %v3584, %v3133
        %vm3587 = vcmask 441344
        %v3588 = vsel %vm3587, %v3586, %v3137
        %vm3589 = vcmask 457728
        %v3590 = vsel %vm3589, %v3588, %v3141
        %vm3591 = vcmask 474112
        %v3592 = vsel %vm3591, %v3590, %v3145
        %vm3593 = vcmask 490496
        %v3594 = vsel %vm3593, %v3592, %v3149
        %vm3595 = vcmask 506880
        %v3596 = vsel %vm3595, %v3594, %v3153
        %vm3597 = vcmask 523264
        %v3598 = vsel %vm3597, %v3596, %v3157
        %vm3599 = vcmask 539648
        %v3600 = vsel %vm3599, %v3598, %v3161
        %vm3601 = vcmask 556032
        %v3602 = vsel %vm3601, %v3600, %v3165
        %vm3603 = vcmask 572416
        %v3604 = vsel %vm3603, %v3602, %v3169
        %vm3605 = vcmask 588800
        %v3606 = vsel %vm3605, %v3604, %v3173
        %vm3607 = vcmask 605184
        %v3608 = vsel %vm3607, %v3606, %v3177
        %vm3609 = vcmask 621568
        %v3610 = vsel %vm3609, %v3608, %v3181
        %vm3611 = vcmask 637952
        %v3612 = vsel %vm3611, %v3610, %v3185
        %vm3613 = vcmask 654336
        %v3614 = vsel %vm3613, %v3612, %v3189
        %vm3615 = vcmask 670720
        %v3616 = vsel %vm3615, %v3614, %v3193
        %vm3617 = vcmask 687104
        %v3618 = vsel %vm3617, %v3616, %v3197
        %vm3619 = vcmask 703488
        %v3620 = vsel %vm3619, %v3618, %v3201
        %vm3621 = vcmask 719872
        %v3622 = vsel %vm3621, %v3620, %v3205
        %vm3623 = vcmask 736256
        %v3624 = vsel %vm3623, %v3622, %v3209
        %vm3625 = vcmask 752640
        %v3626 = vsel %vm3625, %v3624, %v3213
        %vm3627 = vcmask 769024
        %v3628 = vsel %vm3627, %v3626, %v3217
        %vm3629 = vcmask 785408
        %v3630 = vsel %vm3629, %v3628, %v3221
        %vm3631 = vcmask 801792
        %v3632 = vsel %vm3631, %v3630, %v3225
        %vm3633 = vcmask 818176
        %v3634 = vsel %vm3633, %v3632, %v3229
        %vm3635 = vcmask 834560
        %v3636 = vsel %vm3635, %v3634, %v3233
        %vm3637 = vcmask 850944
        %v3638 = vsel %vm3637, %v3636, %v3237
        %vm3639 = vcmask 867328
        %v3640 = vsel %vm3639, %v3638, %v3241
        %vm3641 = vcmask 883712
        %v3642 = vsel %vm3641, %v3640, %v3245
        %vm3643 = vcmask 900096
        %v3644 = vsel %vm3643, %v3642, %v3249
        %vm3645 = vcmask 916480
        %v3646 = vsel %vm3645, %v3644, %v3253
        %vm3647 = vcmask 932864
        %v3648 = vsel %vm3647, %v3646, %v3257
        %vm3649 = vcmask 949248
        %v3650 = vsel %vm3649, %v3648, %v3261
        %vm3651 = vcmask 965632
        %v3652 = vsel %vm3651, %v3650, %v3265
        %vm3653 = vcmask 982016
        %v3654 = vsel %vm3653, %v3652, %v3269
        %vm3655 = vcmask 998400
        %v3656 = vsel %vm3655, %v3654, %v3273
        %vm3657 = vcmask 1014784
        %v3658 = vsel %vm3657, %v3656, %v3277
        %vm3659 = vcmask 1031168
        %v3660 = vsel %vm3659, %v3658, %v3281
        %v3661 = vsel %vm3535, %v2071, %v3285
        %v3662 = vsel %vm3537, %v3661, %v3289
        %v3663 = vsel %vm3539, %v3662, %v3293
        %v3664 = vsel %vm3541, %v3663, %v3297
        %v3665 = vsel %vm3543, %v3664, %v3301
        %v3666 = vsel %vm3545, %v3665, %v3305
        %v3667 = vsel %vm3547, %v3666, %v3309
        %v3668 = vsel %vm3549, %v3667, %v3313
        %v3669 = vsel %vm3551, %v3668, %v3317
        %v3670 = vsel %vm3553, %v3669, %v3321
        %v3671 = vsel %vm3555, %v3670, %v3325
        %v3672 = vsel %vm3557, %v3671, %v3329
        %v3673 = vsel %vm3559, %v3672, %v3333
        %v3674 = vsel %vm3561, %v3673, %v3337
        %v3675 = vsel %vm3563, %v3674, %v3341
        %v3676 = vsel %vm3565, %v3675, %v3345
        %v3677 = vsel %vm3567, %v3676, %v3349
        %v3678 = vsel %vm3569, %v3677, %v3353
        %v3679 = vsel %vm3571, %v3678, %v3357
        %v3680 = vsel %vm3573, %v3679, %v3361
        %v3681 = vsel %vm3575, %v3680, %v3365
        %v3682 = vsel %vm3577, %v3681, %v3369
        %v3683 = vsel %vm3579, %v3682, %v3373
        %v3684 = vsel %vm3581, %v3683, %v3377
        %v3685 = vsel %vm3583, %v3684, %v3381
        %v3686 = vsel %vm3585, %v3685, %v3385
        %v3687 = vsel %vm3587, %v3686, %v3389
        %v3688 = vsel %vm3589, %v3687, %v3393
        %v3689 = vsel %vm3591, %v3688, %v3397
        %v3690 = vsel %vm3593, %v3689, %v3401
        %v3691 = vsel %vm3595, %v3690, %v3405
        %v3692 = vsel %vm3597, %v3691, %v3409
        %v3693 = vsel %vm3599, %v3692, %v3413
        %v3694 = vsel %vm3601, %v3693, %v3417
        %v3695 = vsel %vm3603, %v3694, %v3421
        %v3696 = vsel %vm3605, %v3695, %v3425
        %v3697 = vsel %vm3607, %v3696, %v3429
        %v3698 = vsel %vm3609, %v3697, %v3433
        %v3699 = vsel %vm3611, %v3698, %v3437
        %v3700 = vsel %vm3613, %v3699, %v3441
        %v3701 = vsel %vm3615, %v3700, %v3445
        %v3702 = vsel %vm3617, %v3701, %v3449
        %v3703 = vsel %vm3619, %v3702, %v3453
        %v3704 = vsel %vm3621, %v3703, %v3457
        %v3705 = vsel %vm3623, %v3704, %v3461
        %v3706 = vsel %vm3625, %v3705, %v3465
        %v3707 = vsel %vm3627, %v3706, %v3469
        %v3708 = vsel %vm3629, %v3707, %v3473
        %v3709 = vsel %vm3631, %v3708, %v3477
        %v3710 = vsel %vm3633, %v3709, %v3481
        %v3711 = vsel %vm3635, %v3710, %v3485
        %v3712 = vsel %vm3637, %v3711, %v3489
        %v3713 = vsel %vm3639, %v3712, %v3493
        %v3714 = vsel %vm3641, %v3713, %v3497
        %v3715 = vsel %vm3643, %v3714, %v3501
        %v3716 = vsel %vm3645, %v3715, %v3505
        %v3717 = vsel %vm3647, %v3716, %v3509
        %v3718 = vsel %vm3649, %v3717, %v3513
        %v3719 = vsel %vm3651, %v3718, %v3517
        %v3720 = vsel %vm3653, %v3719, %v3521
        %v3721 = vsel %vm3655, %v3720, %v3525
        %v3722 = vsel %vm3657, %v3721, %v3529
        %v3723 = vsel %vm3659, %v3722, %v3533
        %v3724 = vmul.f32 %v3660, %v317
        %v3725 = vmul.f32 %v3723, %v318
        %v3726 = vmul.f32 %v310, 2.0
        %v3727 = vmul.f32 %v311, -2.0
        %v3728 = vadd.f32 %v3726, %v3727
        %v3729 = vlaneseq
        %v3730 = vshrl.u32 %v3729, 7
        %v3731 = vsub.s32 0, %v3730
        %v3732 = vrot.slane %v3728, %v3731
        %3734 = vbcast.lane.b32.xlu0 %v3732, 256
        %v3735 = vpop.permute.xlu0 %3734
        %s3737 = sor.u32 256, 8
        %3738 = vbcast.lane.b32.xlu0 %v3732, %s3737
        %v3739 = vpop.permute.xlu0 %3738
        %s3741 = sor.u32 256, 16
        %3742 = vbcast.lane.b32.xlu0 %v3732, %s3741
        %v3743 = vpop.permute.xlu0 %3742
        %s3745 = sor.u32 256, 24
        %3746 = vbcast.lane.b32.xlu0 %v3732, %s3745
        %v3747 = vpop.permute.xlu0 %3746
        %s3749 = sor.u32 256, 32
        %3750 = vbcast.lane.b32.xlu0 %v3732, %s3749
        %v3751 = vpop.permute.xlu0 %3750
        %s3753 = sor.u32 256, 40
        %3754 = vbcast.lane.b32.xlu0 %v3732, %s3753
        %v3755 = vpop.permute.xlu0 %3754
        %s3757 = sor.u32 256, 48
        %3758 = vbcast.lane.b32.xlu0 %v3732, %s3757
        %v3759 = vpop.permute.xlu0 %3758
        %s3761 = sor.u32 256, 56
        %3762 = vbcast.lane.b32.xlu0 %v3732, %s3761
        %v3763 = vpop.permute.xlu0 %3762
        %s3765 = sor.u32 256, 64
        %3766 = vbcast.lane.b32.xlu0 %v3732, %s3765
        %v3767 = vpop.permute.xlu0 %3766
        %s3769 = sor.u32 256, 72
        %3770 = vbcast.lane.b32.xlu0 %v3732, %s3769
        %v3771 = vpop.permute.xlu0 %3770
        %s3773 = sor.u32 256, 80
        %3774 = vbcast.lane.b32.xlu0 %v3732, %s3773
        %v3775 = vpop.permute.xlu0 %3774
        %s3777 = sor.u32 256, 88
        %3778 = vbcast.lane.b32.xlu0 %v3732, %s3777
        %v3779 = vpop.permute.xlu0 %3778
        %s3781 = sor.u32 256, 96
        %3782 = vbcast.lane.b32.xlu0 %v3732, %s3781
        %v3783 = vpop.permute.xlu0 %3782
        %s3785 = sor.u32 256, 104
        %3786 = vbcast.lane.b32.xlu0 %v3732, %s3785
        %v3787 = vpop.permute.xlu0 %3786
        %s3789 = sor.u32 256, 112
        %3790 = vbcast.lane.b32.xlu0 %v3732, %s3789
        %v3791 = vpop.permute.xlu0 %3790
        %s3793 = sor.u32 256, 120
        %3794 = vbcast.lane.b32.xlu0 %v3732, %s3793
        %v3795 = vpop.permute.xlu0 %3794
        %v3796 = vlaneseq
        %v3797 = vshrl.u32 %v3796, 7
        %v3798 = vsub.s32 1, %v3797
        %v3799 = vrot.slane %v3728, %v3798
        %3801 = vbcast.lane.b32.xlu0 %v3799, 256
        %v3802 = vpop.permute.xlu0 %3801
        %s3804 = sor.u32 256, 8
        %3805 = vbcast.lane.b32.xlu0 %v3799, %s3804
        %v3806 = vpop.permute.xlu0 %3805
        %s3808 = sor.u32 256, 16
        %3809 = vbcast.lane.b32.xlu0 %v3799, %s3808
        %v3810 = vpop.permute.xlu0 %3809
        %s3812 = sor.u32 256, 24
        %3813 = vbcast.lane.b32.xlu0 %v3799, %s3812
        %v3814 = vpop.permute.xlu0 %3813
        %s3816 = sor.u32 256, 32
        %3817 = vbcast.lane.b32.xlu0 %v3799, %s3816
        %v3818 = vpop.permute.xlu0 %3817
        %s3820 = sor.u32 256, 40
        %3821 = vbcast.lane.b32.xlu0 %v3799, %s3820
        %v3822 = vpop.permute.xlu0 %3821
        %s3824 = sor.u32 256, 48
        %3825 = vbcast.lane.b32.xlu0 %v3799, %s3824
        %v3826 = vpop.permute.xlu0 %3825
        %s3828 = sor.u32 256, 56
        %3829 = vbcast.lane.b32.xlu0 %v3799, %s3828
        %v3830 = vpop.permute.xlu0 %3829
        %s3832 = sor.u32 256, 64
        %3833 = vbcast.lane.b32.xlu0 %v3799, %s3832
        %v3834 = vpop.permute.xlu0 %3833
        %s3836 = sor.u32 256, 72
        %3837 = vbcast.lane.b32.xlu0 %v3799, %s3836
        %v3838 = vpop.permute.xlu0 %3837
        %s3840 = sor.u32 256, 80
        %3841 = vbcast.lane.b32.xlu0 %v3799, %s3840
        %v3842 = vpop.permute.xlu0 %3841
        %s3844 = sor.u32 256, 88
        %3845 = vbcast.lane.b32.xlu0 %v3799, %s3844
        %v3846 = vpop.permute.xlu0 %3845
        %s3848 = sor.u32 256, 96
        %3849 = vbcast.lane.b32.xlu0 %v3799, %s3848
        %v3850 = vpop.permute.xlu0 %3849
        %s3852 = sor.u32 256, 104
        %3853 = vbcast.lane.b32.xlu0 %v3799, %s3852
        %v3854 = vpop.permute.xlu0 %3853
        %s3856 = sor.u32 256, 112
        %3857 = vbcast.lane.b32.xlu0 %v3799, %s3856
        %v3858 = vpop.permute.xlu0 %3857
        %s3860 = sor.u32 256, 120
        %3861 = vbcast.lane.b32.xlu0 %v3799, %s3860
        %v3862 = vpop.permute.xlu0 %3861
        %v3863 = vlaneseq
        %v3864 = vshrl.u32 %v3863, 7
        %v3865 = vsub.s32 2, %v3864
        %v3866 = vrot.slane %v3728, %v3865
        %3868 = vbcast.lane.b32.xlu0 %v3866, 256
        %v3869 = vpop.permute.xlu0 %3868
        %s3871 = sor.u32 256, 8
        %3872 = vbcast.lane.b32.xlu0 %v3866, %s3871
        %v3873 = vpop.permute.xlu0 %3872
        %s3875 = sor.u32 256, 16
        %3876 = vbcast.lane.b32.xlu0 %v3866, %s3875
        %v3877 = vpop.permute.xlu0 %3876
        %s3879 = sor.u32 256, 24
        %3880 = vbcast.lane.b32.xlu0 %v3866, %s3879
        %v3881 = vpop.permute.xlu0 %3880
        %s3883 = sor.u32 256, 32
        %3884 = vbcast.lane.b32.xlu0 %v3866, %s3883
        %v3885 = vpop.permute.xlu0 %3884
        %s3887 = sor.u32 256, 40
        %3888 = vbcast.lane.b32.xlu0 %v3866, %s3887
        %v3889 = vpop.permute.xlu0 %3888
        %s3891 = sor.u32 256, 48
        %3892 = vbcast.lane.b32.xlu0 %v3866, %s3891
        %v3893 = vpop.permute.xlu0 %3892
        %s3895 = sor.u32 256, 56
        %3896 = vbcast.lane.b32.xlu0 %v3866, %s3895
        %v3897 = vpop.permute.xlu0 %3896
        %s3899 = sor.u32 256, 64
        %3900 = vbcast.lane.b32.xlu0 %v3866, %s3899
        %v3901 = vpop.permute.xlu0 %3900
        %s3903 = sor.u32 256, 72
        %3904 = vbcast.lane.b32.xlu0 %v3866, %s3903
        %v3905 = vpop.permute.xlu0 %3904
        %s3907 = sor.u32 256, 80
        %3908 = vbcast.lane.b32.xlu0 %v3866, %s3907
        %v3909 = vpop.permute.xlu0 %3908
        %s3911 = sor.u32 256, 88
        %3912 = vbcast.lane.b32.xlu0 %v3866, %s3911
        %v3913 = vpop.permute.xlu0 %3912
        %s3915 = sor.u32 256, 96
        %3916 = vbcast.lane.b32.xlu0 %v3866, %s3915
        %v3917 = vpop.permute.xlu0 %3916
        %s3919 = sor.u32 256, 104
        %3920 = vbcast.lane.b32.xlu0 %v3866, %s3919
        %v3921 = vpop.permute.xlu0 %3920
        %s3923 = sor.u32 256, 112
        %3924 = vbcast.lane.b32.xlu0 %v3866, %s3923
        %v3925 = vpop.permute.xlu0 %3924
        %s3927 = sor.u32 256, 120
        %3928 = vbcast.lane.b32.xlu0 %v3866, %s3927
        %v3929 = vpop.permute.xlu0 %3928
        %v3930 = vlaneseq
        %v3931 = vshrl.u32 %v3930, 7
        %v3932 = vsub.s32 3, %v3931
        %v3933 = vrot.slane %v3728, %v3932
        %3935 = vbcast.lane.b32.xlu0 %v3933, 256
        %v3936 = vpop.permute.xlu0 %3935
        %s3938 = sor.u32 256, 8
        %3939 = vbcast.lane.b32.xlu0 %v3933, %s3938
        %v3940 = vpop.permute.xlu0 %3939
        %s3942 = sor.u32 256, 16
        %3943 = vbcast.lane.b32.xlu0 %v3933, %s3942
        %v3944 = vpop.permute.xlu0 %3943
        %s3946 = sor.u32 256, 24
        %3947 = vbcast.lane.b32.xlu0 %v3933, %s3946
        %v3948 = vpop.permute.xlu0 %3947
        %s3950 = sor.u32 256, 32
        %3951 = vbcast.lane.b32.xlu0 %v3933, %s3950
        %v3952 = vpop.permute.xlu0 %3951
        %s3954 = sor.u32 256, 40
        %3955 = vbcast.lane.b32.xlu0 %v3933, %s3954
        %v3956 = vpop.permute.xlu0 %3955
        %s3958 = sor.u32 256, 48
        %3959 = vbcast.lane.b32.xlu0 %v3933, %s3958
        %v3960 = vpop.permute.xlu0 %3959
        %s3962 = sor.u32 256, 56
        %3963 = vbcast.lane.b32.xlu0 %v3933, %s3962
        %v3964 = vpop.permute.xlu0 %3963
        %s3966 = sor.u32 256, 64
        %3967 = vbcast.lane.b32.xlu0 %v3933, %s3966
        %v3968 = vpop.permute.xlu0 %3967
        %s3970 = sor.u32 256, 72
        %3971 = vbcast.lane.b32.xlu0 %v3933, %s3970
        %v3972 = vpop.permute.xlu0 %3971
        %s3974 = sor.u32 256, 80
        %3975 = vbcast.lane.b32.xlu0 %v3933, %s3974
        %v3976 = vpop.permute.xlu0 %3975
        %s3978 = sor.u32 256, 88
        %3979 = vbcast.lane.b32.xlu0 %v3933, %s3978
        %v3980 = vpop.permute.xlu0 %3979
        %s3982 = sor.u32 256, 96
        %3983 = vbcast.lane.b32.xlu0 %v3933, %s3982
        %v3984 = vpop.permute.xlu0 %3983
        %s3986 = sor.u32 256, 104
        %3987 = vbcast.lane.b32.xlu0 %v3933, %s3986
        %v3988 = vpop.permute.xlu0 %3987
        %s3990 = sor.u32 256, 112
        %3991 = vbcast.lane.b32.xlu0 %v3933, %s3990
        %v3992 = vpop.permute.xlu0 %3991
        %s3994 = sor.u32 256, 120
        %3995 = vbcast.lane.b32.xlu0 %v3933, %s3994
        %v3996 = vpop.permute.xlu0 %3995
        %v3997 = vlaneseq
        %v3998 = vshrl.u32 %v3997, 7
        %v3999 = vsub.s32 4, %v3998
        %v4000 = vrot.slane %v3728, %v3999
        %4002 = vbcast.lane.b32.xlu0 %v4000, 256
        %v4003 = vpop.permute.xlu0 %4002
        %s4005 = sor.u32 256, 8
        %4006 = vbcast.lane.b32.xlu0 %v4000, %s4005
        %v4007 = vpop.permute.xlu0 %4006
        %s4009 = sor.u32 256, 16
        %4010 = vbcast.lane.b32.xlu0 %v4000, %s4009
        %v4011 = vpop.permute.xlu0 %4010
        %s4013 = sor.u32 256, 24
        %4014 = vbcast.lane.b32.xlu0 %v4000, %s4013
        %v4015 = vpop.permute.xlu0 %4014
        %s4017 = sor.u32 256, 32
        %4018 = vbcast.lane.b32.xlu0 %v4000, %s4017
        %v4019 = vpop.permute.xlu0 %4018
        %s4021 = sor.u32 256, 40
        %4022 = vbcast.lane.b32.xlu0 %v4000, %s4021
        %v4023 = vpop.permute.xlu0 %4022
        %s4025 = sor.u32 256, 48
        %4026 = vbcast.lane.b32.xlu0 %v4000, %s4025
        %v4027 = vpop.permute.xlu0 %4026
        %s4029 = sor.u32 256, 56
        %4030 = vbcast.lane.b32.xlu0 %v4000, %s4029
        %v4031 = vpop.permute.xlu0 %4030
        %s4033 = sor.u32 256, 64
        %4034 = vbcast.lane.b32.xlu0 %v4000, %s4033
        %v4035 = vpop.permute.xlu0 %4034
        %s4037 = sor.u32 256, 72
        %4038 = vbcast.lane.b32.xlu0 %v4000, %s4037
        %v4039 = vpop.permute.xlu0 %4038
        %s4041 = sor.u32 256, 80
        %4042 = vbcast.lane.b32.xlu0 %v4000, %s4041
        %v4043 = vpop.permute.xlu0 %4042
        %s4045 = sor.u32 256, 88
        %4046 = vbcast.lane.b32.xlu0 %v4000, %s4045
        %v4047 = vpop.permute.xlu0 %4046
        %s4049 = sor.u32 256, 96
        %4050 = vbcast.lane.b32.xlu0 %v4000, %s4049
        %v4051 = vpop.permute.xlu0 %4050
        %s4053 = sor.u32 256, 104
        %4054 = vbcast.lane.b32.xlu0 %v4000, %s4053
        %v4055 = vpop.permute.xlu0 %4054
        %s4057 = sor.u32 256, 112
        %4058 = vbcast.lane.b32.xlu0 %v4000, %s4057
        %v4059 = vpop.permute.xlu0 %4058
        %s4061 = sor.u32 256, 120
        %4062 = vbcast.lane.b32.xlu0 %v4000, %s4061
        %v4063 = vpop.permute.xlu0 %4062
        %v4064 = vlaneseq
        %v4065 = vshrl.u32 %v4064, 7
        %v4066 = vsub.s32 5, %v4065
        %v4067 = vrot.slane %v3728, %v4066
        %4069 = vbcast.lane.b32.xlu0 %v4067, 256
        %v4070 = vpop.permute.xlu0 %4069
        %s4072 = sor.u32 256, 8
        %4073 = vbcast.lane.b32.xlu0 %v4067, %s4072
        %v4074 = vpop.permute.xlu0 %4073
        %s4076 = sor.u32 256, 16
        %4077 = vbcast.lane.b32.xlu0 %v4067, %s4076
        %v4078 = vpop.permute.xlu0 %4077
        %s4080 = sor.u32 256, 24
        %4081 = vbcast.lane.b32.xlu0 %v4067, %s4080
        %v4082 = vpop.permute.xlu0 %4081
        %s4084 = sor.u32 256, 32
        %4085 = vbcast.lane.b32.xlu0 %v4067, %s4084
        %v4086 = vpop.permute.xlu0 %4085
        %s4088 = sor.u32 256, 40
        %4089 = vbcast.lane.b32.xlu0 %v4067, %s4088
        %v4090 = vpop.permute.xlu0 %4089
        %s4092 = sor.u32 256, 48
        %4093 = vbcast.lane.b32.xlu0 %v4067, %s4092
        %v4094 = vpop.permute.xlu0 %4093
        %s4096 = sor.u32 256, 56
        %4097 = vbcast.lane.b32.xlu0 %v4067, %s4096
        %v4098 = vpop.permute.xlu0 %4097
        %s4100 = sor.u32 256, 64
        %4101 = vbcast.lane.b32.xlu0 %v4067, %s4100
        %v4102 = vpop.permute.xlu0 %4101
        %s4104 = sor.u32 256, 72
        %4105 = vbcast.lane.b32.xlu0 %v4067, %s4104
        %v4106 = vpop.permute.xlu0 %4105
        %s4108 = sor.u32 256, 80
        %4109 = vbcast.lane.b32.xlu0 %v4067, %s4108
        %v4110 = vpop.permute.xlu0 %4109
        %s4112 = sor.u32 256, 88
        %4113 = vbcast.lane.b32.xlu0 %v4067, %s4112
        %v4114 = vpop.permute.xlu0 %4113
        %s4116 = sor.u32 256, 96
        %4117 = vbcast.lane.b32.xlu0 %v4067, %s4116
        %v4118 = vpop.permute.xlu0 %4117
        %s4120 = sor.u32 256, 104
        %4121 = vbcast.lane.b32.xlu0 %v4067, %s4120
        %v4122 = vpop.permute.xlu0 %4121
        %s4124 = sor.u32 256, 112
        %4125 = vbcast.lane.b32.xlu0 %v4067, %s4124
        %v4126 = vpop.permute.xlu0 %4125
        %s4128 = sor.u32 256, 120
        %4129 = vbcast.lane.b32.xlu0 %v4067, %s4128
        %v4130 = vpop.permute.xlu0 %4129
        %v4131 = vlaneseq
        %v4132 = vshrl.u32 %v4131, 7
        %v4133 = vsub.s32 6, %v4132
        %v4134 = vrot.slane %v3728, %v4133
        %4136 = vbcast.lane.b32.xlu0 %v4134, 256
        %v4137 = vpop.permute.xlu0 %4136
        %s4139 = sor.u32 256, 8
        %4140 = vbcast.lane.b32.xlu0 %v4134, %s4139
        %v4141 = vpop.permute.xlu0 %4140
        %s4143 = sor.u32 256, 16
        %4144 = vbcast.lane.b32.xlu0 %v4134, %s4143
        %v4145 = vpop.permute.xlu0 %4144
        %s4147 = sor.u32 256, 24
        %4148 = vbcast.lane.b32.xlu0 %v4134, %s4147
        %v4149 = vpop.permute.xlu0 %4148
        %s4151 = sor.u32 256, 32
        %4152 = vbcast.lane.b32.xlu0 %v4134, %s4151
        %v4153 = vpop.permute.xlu0 %4152
        %s4155 = sor.u32 256, 40
        %4156 = vbcast.lane.b32.xlu0 %v4134, %s4155
        %v4157 = vpop.permute.xlu0 %4156
        %s4159 = sor.u32 256, 48
        %4160 = vbcast.lane.b32.xlu0 %v4134, %s4159
        %v4161 = vpop.permute.xlu0 %4160
        %s4163 = sor.u32 256, 56
        %4164 = vbcast.lane.b32.xlu0 %v4134, %s4163
        %v4165 = vpop.permute.xlu0 %4164
        %s4167 = sor.u32 256, 64
        %4168 = vbcast.lane.b32.xlu0 %v4134, %s4167
        %v4169 = vpop.permute.xlu0 %4168
        %s4171 = sor.u32 256, 72
        %4172 = vbcast.lane.b32.xlu0 %v4134, %s4171
        %v4173 = vpop.permute.xlu0 %4172
        %s4175 = sor.u32 256, 80
        %4176 = vbcast.lane.b32.xlu0 %v4134, %s4175
        %v4177 = vpop.permute.xlu0 %4176
        %s4179 = sor.u32 256, 88
        %4180 = vbcast.lane.b32.xlu0 %v4134, %s4179
        %v4181 = vpop.permute.xlu0 %4180
        %s4183 = sor.u32 256, 96
        %4184 = vbcast.lane.b32.xlu0 %v4134, %s4183
        %v4185 = vpop.permute.xlu0 %4184
        %s4187 = sor.u32 256, 104
        %4188 = vbcast.lane.b32.xlu0 %v4134, %s4187
        %v4189 = vpop.permute.xlu0 %4188
        %s4191 = sor.u32 256, 112
        %4192 = vbcast.lane.b32.xlu0 %v4134, %s4191
        %v4193 = vpop.permute.xlu0 %4192
        %s4195 = sor.u32 256, 120
        %4196 = vbcast.lane.b32.xlu0 %v4134, %s4195
        %v4197 = vpop.permute.xlu0 %4196
        %v4198 = vlaneseq
        %v4199 = vshrl.u32 %v4198, 7
        %v4200 = vsub.s32 7, %v4199
        %v4201 = vrot.slane %v3728, %v4200
        %4203 = vbcast.lane.b32.xlu0 %v4201, 256
        %v4204 = vpop.permute.xlu0 %4203
        %s4206 = sor.u32 256, 8
        %4207 = vbcast.lane.b32.xlu0 %v4201, %s4206
        %v4208 = vpop.permute.xlu0 %4207
        %s4210 = sor.u32 256, 16
        %4211 = vbcast.lane.b32.xlu0 %v4201, %s4210
        %v4212 = vpop.permute.xlu0 %4211
        %s4214 = sor.u32 256, 24
        %4215 = vbcast.lane.b32.xlu0 %v4201, %s4214
        %v4216 = vpop.permute.xlu0 %4215
        %s4218 = sor.u32 256, 32
        %4219 = vbcast.lane.b32.xlu0 %v4201, %s4218
        %v4220 = vpop.permute.xlu0 %4219
        %s4222 = sor.u32 256, 40
        %4223 = vbcast.lane.b32.xlu0 %v4201, %s4222
        %v4224 = vpop.permute.xlu0 %4223
        %s4226 = sor.u32 256, 48
        %4227 = vbcast.lane.b32.xlu0 %v4201, %s4226
        %v4228 = vpop.permute.xlu0 %4227
        %s4230 = sor.u32 256, 56
        %4231 = vbcast.lane.b32.xlu0 %v4201, %s4230
        %v4232 = vpop.permute.xlu0 %4231
        %s4234 = sor.u32 256, 64
        %4235 = vbcast.lane.b32.xlu0 %v4201, %s4234
        %v4236 = vpop.permute.xlu0 %4235
        %s4238 = sor.u32 256, 72
        %4239 = vbcast.lane.b32.xlu0 %v4201, %s4238
        %v4240 = vpop.permute.xlu0 %4239
        %s4242 = sor.u32 256, 80
        %4243 = vbcast.lane.b32.xlu0 %v4201, %s4242
        %v4244 = vpop.permute.xlu0 %4243
        %s4246 = sor.u32 256, 88
        %4247 = vbcast.lane.b32.xlu0 %v4201, %s4246
        %v4248 = vpop.permute.xlu0 %4247
        %s4250 = sor.u32 256, 96
        %4251 = vbcast.lane.b32.xlu0 %v4201, %s4250
        %v4252 = vpop.permute.xlu0 %4251
        %s4254 = sor.u32 256, 104
        %4255 = vbcast.lane.b32.xlu0 %v4201, %s4254
        %v4256 = vpop.permute.xlu0 %4255
        %s4258 = sor.u32 256, 112
        %4259 = vbcast.lane.b32.xlu0 %v4201, %s4258
        %v4260 = vpop.permute.xlu0 %4259
        %s4262 = sor.u32 256, 120
        %4263 = vbcast.lane.b32.xlu0 %v4201, %s4262
        %v4264 = vpop.permute.xlu0 %4263
        %v4265 = vcombine.low %v3735, %v3869
        %v4266 = vcombine.high %v3735, %v3869
        %v4268 = vunpack.c.l.s4 1983009808
        %v4269 = vunpack.c.0.s8 %v4268
        %v4270 = vlaneseq
        %v4271 = vshrl.u32 %v4270, 7
        %v4272 = vsub.s32 %v4269, %v4271
        %v4273 = vrot.slane %v4265, %v4272
        %v4275 = vunpack.c.l.s4 1983009808
        %v4276 = vunpack.c.0.s8 %v4275
        %v4277 = vlaneseq
        %v4278 = vshrl.u32 %v4277, 7
        %v4279 = vsub.s32 %v4276, %v4278
        %v4280 = vrot.slane %v4266, %v4279
        %v4281 = vcombine.low %v3802, %v3936
        %v4282 = vcombine.high %v3802, %v3936
        %v4284 = vunpack.c.l.s4 1983009808
        %v4285 = vunpack.c.0.s8 %v4284
        %v4286 = vlaneseq
        %v4287 = vshrl.u32 %v4286, 7
        %v4288 = vsub.s32 %v4285, %v4287
        %v4289 = vrot.slane %v4281, %v4288
        %v4291 = vunpack.c.l.s4 1983009808
        %v4292 = vunpack.c.0.s8 %v4291
        %v4293 = vlaneseq
        %v4294 = vshrl.u32 %v4293, 7
        %v4295 = vsub.s32 %v4292, %v4294
        %v4296 = vrot.slane %v4282, %v4295
        %v4297 = vcombine.low %v4003, %v4137
        %v4298 = vcombine.high %v4003, %v4137
        %v4300 = vunpack.c.l.s4 1983009808
        %v4301 = vunpack.c.0.s8 %v4300
        %v4302 = vlaneseq
        %v4303 = vshrl.u32 %v4302, 7
        %v4304 = vsub.s32 %v4301, %v4303
        %v4305 = vrot.slane %v4297, %v4304
        %v4307 = vunpack.c.l.s4 1983009808
        %v4308 = vunpack.c.0.s8 %v4307
        %v4309 = vlaneseq
        %v4310 = vshrl.u32 %v4309, 7
        %v4311 = vsub.s32 %v4308, %v4310
        %v4312 = vrot.slane %v4298, %v4311
        %v4313 = vcombine.low %v4070, %v4204
        %v4314 = vcombine.high %v4070, %v4204
        %v4316 = vunpack.c.l.s4 1983009808
        %v4317 = vunpack.c.0.s8 %v4316
        %v4318 = vlaneseq
        %v4319 = vshrl.u32 %v4318, 7
        %v4320 = vsub.s32 %v4317, %v4319
        %v4321 = vrot.slane %v4313, %v4320
        %v4323 = vunpack.c.l.s4 1983009808
        %v4324 = vunpack.c.0.s8 %v4323
        %v4325 = vlaneseq
        %v4326 = vshrl.u32 %v4325, 7
        %v4327 = vsub.s32 %v4324, %v4326
        %v4328 = vrot.slane %v4314, %v4327
        %v4329 = vcombine.low %v4273, %v4289
        %v4330 = vcombine.high %v4273, %v4289
        %v4332 = vunpack.c.l.s4 1934713408
        %v4333 = vunpack.c.0.s8 %v4332
        %v4334 = vlaneseq
        %v4335 = vshrl.u32 %v4334, 7
        %v4336 = vsub.s32 %v4333, %v4335
        %v4337 = vrot.slane %v4329, %v4336
        %v4339 = vunpack.c.l.s4 1934713408
        %v4340 = vunpack.c.0.s8 %v4339
        %v4341 = vlaneseq
        %v4342 = vshrl.u32 %v4341, 7
        %v4343 = vsub.s32 %v4340, %v4342
        %v4344 = vrot.slane %v4330, %v4343
        %v4345 = vcombine.low %v4280, %v4296
        %v4346 = vcombine.high %v4280, %v4296
        %v4348 = vunpack.c.l.s4 1934713408
        %v4349 = vunpack.c.0.s8 %v4348
        %v4350 = vlaneseq
        %v4351 = vshrl.u32 %v4350, 7
        %v4352 = vsub.s32 %v4349, %v4351
        %v4353 = vrot.slane %v4345, %v4352
        %v4355 = vunpack.c.l.s4 1934713408
        %v4356 = vunpack.c.0.s8 %v4355
        %v4357 = vlaneseq
        %v4358 = vshrl.u32 %v4357, 7
        %v4359 = vsub.s32 %v4356, %v4358
        %v4360 = vrot.slane %v4346, %v4359
        %v4361 = vcombine.low %v4305, %v4321
        %v4362 = vcombine.high %v4305, %v4321
        %v4364 = vunpack.c.l.s4 1934713408
        %v4365 = vunpack.c.0.s8 %v4364
        %v4366 = vlaneseq
        %v4367 = vshrl.u32 %v4366, 7
        %v4368 = vsub.s32 %v4365, %v4367
        %v4369 = vrot.slane %v4361, %v4368
        %v4371 = vunpack.c.l.s4 1934713408
        %v4372 = vunpack.c.0.s8 %v4371
        %v4373 = vlaneseq
        %v4374 = vshrl.u32 %v4373, 7
        %v4375 = vsub.s32 %v4372, %v4374
        %v4376 = vrot.slane %v4362, %v4375
        %v4377 = vcombine.low %v4312, %v4328
        %v4378 = vcombine.high %v4312, %v4328
        %v4380 = vunpack.c.l.s4 1934713408
        %v4381 = vunpack.c.0.s8 %v4380
        %v4382 = vlaneseq
        %v4383 = vshrl.u32 %v4382, 7
        %v4384 = vsub.s32 %v4381, %v4383
        %v4385 = vrot.slane %v4377, %v4384
        %v4387 = vunpack.c.l.s4 1934713408
        %v4388 = vunpack.c.0.s8 %v4387
        %v4389 = vlaneseq
        %v4390 = vshrl.u32 %v4389, 7
        %v4391 = vsub.s32 %v4388, %v4390
        %v4392 = vrot.slane %v4378, %v4391
        %v4393 = vcombine.low %v4337, %v4369
        %v4394 = vcombine.high %v4337, %v4369
        %v4395 = vcombine.low %v4344, %v4376
        %v4396 = vcombine.high %v4344, %v4376
        %v4397 = vcombine.low %v4353, %v4385
        %v4398 = vcombine.high %v4353, %v4385
        %v4399 = vcombine.low %v4360, %v4392
        %v4400 = vcombine.high %v4360, %v4392
        %v4401 = vcombine.low %v3739, %v3873
        %v4402 = vcombine.high %v3739, %v3873
        %v4404 = vunpack.c.l.s4 1983009808
        %v4405 = vunpack.c.0.s8 %v4404
        %v4406 = vlaneseq
        %v4407 = vshrl.u32 %v4406, 7
        %v4408 = vsub.s32 %v4405, %v4407
        %v4409 = vrot.slane %v4401, %v4408
        %v4411 = vunpack.c.l.s4 1983009808
        %v4412 = vunpack.c.0.s8 %v4411
        %v4413 = vlaneseq
        %v4414 = vshrl.u32 %v4413, 7
        %v4415 = vsub.s32 %v4412, %v4414
        %v4416 = vrot.slane %v4402, %v4415
        %v4417 = vcombine.low %v3806, %v3940
        %v4418 = vcombine.high %v3806, %v3940
        %v4420 = vunpack.c.l.s4 1983009808
        %v4421 = vunpack.c.0.s8 %v4420
        %v4422 = vlaneseq
        %v4423 = vshrl.u32 %v4422, 7
        %v4424 = vsub.s32 %v4421, %v4423
        %v4425 = vrot.slane %v4417, %v4424
        %v4427 = vunpack.c.l.s4 1983009808
        %v4428 = vunpack.c.0.s8 %v4427
        %v4429 = vlaneseq
        %v4430 = vshrl.u32 %v4429, 7
        %v4431 = vsub.s32 %v4428, %v4430
        %v4432 = vrot.slane %v4418, %v4431
        %v4433 = vcombine.low %v4007, %v4141
        %v4434 = vcombine.high %v4007, %v4141
        %v4436 = vunpack.c.l.s4 1983009808
        %v4437 = vunpack.c.0.s8 %v4436
        %v4438 = vlaneseq
        %v4439 = vshrl.u32 %v4438, 7
        %v4440 = vsub.s32 %v4437, %v4439
        %v4441 = vrot.slane %v4433, %v4440
        %v4443 = vunpack.c.l.s4 1983009808
        %v4444 = vunpack.c.0.s8 %v4443
        %v4445 = vlaneseq
        %v4446 = vshrl.u32 %v4445, 7
        %v4447 = vsub.s32 %v4444, %v4446
        %v4448 = vrot.slane %v4434, %v4447
        %v4449 = vcombine.low %v4074, %v4208
        %v4450 = vcombine.high %v4074, %v4208
        %v4452 = vunpack.c.l.s4 1983009808
        %v4453 = vunpack.c.0.s8 %v4452
        %v4454 = vlaneseq
        %v4455 = vshrl.u32 %v4454, 7
        %v4456 = vsub.s32 %v4453, %v4455
        %v4457 = vrot.slane %v4449, %v4456
        %v4459 = vunpack.c.l.s4 1983009808
        %v4460 = vunpack.c.0.s8 %v4459
        %v4461 = vlaneseq
        %v4462 = vshrl.u32 %v4461, 7
        %v4463 = vsub.s32 %v4460, %v4462
        %v4464 = vrot.slane %v4450, %v4463
        %v4465 = vcombine.low %v4409, %v4425
        %v4466 = vcombine.high %v4409, %v4425
        %v4468 = vunpack.c.l.s4 1934713408
        %v4469 = vunpack.c.0.s8 %v4468
        %v4470 = vlaneseq
        %v4471 = vshrl.u32 %v4470, 7
        %v4472 = vsub.s32 %v4469, %v4471
        %v4473 = vrot.slane %v4465, %v4472
        %v4475 = vunpack.c.l.s4 1934713408
        %v4476 = vunpack.c.0.s8 %v4475
        %v4477 = vlaneseq
        %v4478 = vshrl.u32 %v4477, 7
        %v4479 = vsub.s32 %v4476, %v4478
        %v4480 = vrot.slane %v4466, %v4479
        %v4481 = vcombine.low %v4416, %v4432
        %v4482 = vcombine.high %v4416, %v4432
        %v4484 = vunpack.c.l.s4 1934713408
        %v4485 = vunpack.c.0.s8 %v4484
        %v4486 = vlaneseq
        %v4487 = vshrl.u32 %v4486, 7
        %v4488 = vsub.s32 %v4485, %v4487
        %v4489 = vrot.slane %v4481, %v4488
        %v4491 = vunpack.c.l.s4 1934713408
        %v4492 = vunpack.c.0.s8 %v4491
        %v4493 = vlaneseq
        %v4494 = vshrl.u32 %v4493, 7
        %v4495 = vsub.s32 %v4492, %v4494
        %v4496 = vrot.slane %v4482, %v4495
        %v4497 = vcombine.low %v4441, %v4457
        %v4498 = vcombine.high %v4441, %v4457
        %v4500 = vunpack.c.l.s4 1934713408
        %v4501 = vunpack.c.0.s8 %v4500
        %v4502 = vlaneseq
        %v4503 = vshrl.u32 %v4502, 7
        %v4504 = vsub.s32 %v4501, %v4503
        %v4505 = vrot.slane %v4497, %v4504
        %v4507 = vunpack.c.l.s4 1934713408
        %v4508 = vunpack.c.0.s8 %v4507
        %v4509 = vlaneseq
        %v4510 = vshrl.u32 %v4509, 7
        %v4511 = vsub.s32 %v4508, %v4510
        %v4512 = vrot.slane %v4498, %v4511
        %v4513 = vcombine.low %v4448, %v4464
        %v4514 = vcombine.high %v4448, %v4464
        %v4516 = vunpack.c.l.s4 1934713408
        %v4517 = vunpack.c.0.s8 %v4516
        %v4518 = vlaneseq
        %v4519 = vshrl.u32 %v4518, 7
        %v4520 = vsub.s32 %v4517, %v4519
        %v4521 = vrot.slane %v4513, %v4520
        %v4523 = vunpack.c.l.s4 1934713408
        %v4524 = vunpack.c.0.s8 %v4523
        %v4525 = vlaneseq
        %v4526 = vshrl.u32 %v4525, 7
        %v4527 = vsub.s32 %v4524, %v4526
        %v4528 = vrot.slane %v4514, %v4527
        %v4529 = vcombine.low %v4473, %v4505
        %v4530 = vcombine.high %v4473, %v4505
        %v4531 = vcombine.low %v4480, %v4512
        %v4532 = vcombine.high %v4480, %v4512
        %v4533 = vcombine.low %v4489, %v4521
        %v4534 = vcombine.high %v4489, %v4521
        %v4535 = vcombine.low %v4496, %v4528
        %v4536 = vcombine.high %v4496, %v4528
        %v4537 = vcombine.low %v3743, %v3877
        %v4538 = vcombine.high %v3743, %v3877
        %v4540 = vunpack.c.l.s4 1983009808
        %v4541 = vunpack.c.0.s8 %v4540
        %v4542 = vlaneseq
        %v4543 = vshrl.u32 %v4542, 7
        %v4544 = vsub.s32 %v4541, %v4543
        %v4545 = vrot.slane %v4537, %v4544
        %v4547 = vunpack.c.l.s4 1983009808
        %v4548 = vunpack.c.0.s8 %v4547
        %v4549 = vlaneseq
        %v4550 = vshrl.u32 %v4549, 7
        %v4551 = vsub.s32 %v4548, %v4550
        %v4552 = vrot.slane %v4538, %v4551
        %v4553 = vcombine.low %v3810, %v3944
        %v4554 = vcombine.high %v3810, %v3944
        %v4556 = vunpack.c.l.s4 1983009808
        %v4557 = vunpack.c.0.s8 %v4556
        %v4558 = vlaneseq
        %v4559 = vshrl.u32 %v4558, 7
        %v4560 = vsub.s32 %v4557, %v4559
        %v4561 = vrot.slane %v4553, %v4560
        %v4563 = vunpack.c.l.s4 1983009808
        %v4564 = vunpack.c.0.s8 %v4563
        %v4565 = vlaneseq
        %v4566 = vshrl.u32 %v4565, 7
        %v4567 = vsub.s32 %v4564, %v4566
        %v4568 = vrot.slane %v4554, %v4567
        %v4569 = vcombine.low %v4011, %v4145
        %v4570 = vcombine.high %v4011, %v4145
        %v4572 = vunpack.c.l.s4 1983009808
        %v4573 = vunpack.c.0.s8 %v4572
        %v4574 = vlaneseq
        %v4575 = vshrl.u32 %v4574, 7
        %v4576 = vsub.s32 %v4573, %v4575
        %v4577 = vrot.slane %v4569, %v4576
        %v4579 = vunpack.c.l.s4 1983009808
        %v4580 = vunpack.c.0.s8 %v4579
        %v4581 = vlaneseq
        %v4582 = vshrl.u32 %v4581, 7
        %v4583 = vsub.s32 %v4580, %v4582
        %v4584 = vrot.slane %v4570, %v4583
        %v4585 = vcombine.low %v4078, %v4212
        %v4586 = vcombine.high %v4078, %v4212
        %v4588 = vunpack.c.l.s4 1983009808
        %v4589 = vunpack.c.0.s8 %v4588
        %v4590 = vlaneseq
        %v4591 = vshrl.u32 %v4590, 7
        %v4592 = vsub.s32 %v4589, %v4591
        %v4593 = vrot.slane %v4585, %v4592
        %v4595 = vunpack.c.l.s4 1983009808
        %v4596 = vunpack.c.0.s8 %v4595
        %v4597 = vlaneseq
        %v4598 = vshrl.u32 %v4597, 7
        %v4599 = vsub.s32 %v4596, %v4598
        %v4600 = vrot.slane %v4586, %v4599
        %v4601 = vcombine.low %v4545, %v4561
        %v4602 = vcombine.high %v4545, %v4561
        %v4604 = vunpack.c.l.s4 1934713408
        %v4605 = vunpack.c.0.s8 %v4604
        %v4606 = vlaneseq
        %v4607 = vshrl.u32 %v4606, 7
        %v4608 = vsub.s32 %v4605, %v4607
        %v4609 = vrot.slane %v4601, %v4608
        %v4611 = vunpack.c.l.s4 1934713408
        %v4612 = vunpack.c.0.s8 %v4611
        %v4613 = vlaneseq
        %v4614 = vshrl.u32 %v4613, 7
        %v4615 = vsub.s32 %v4612, %v4614
        %v4616 = vrot.slane %v4602, %v4615
        %v4617 = vcombine.low %v4552, %v4568
        %v4618 = vcombine.high %v4552, %v4568
        %v4620 = vunpack.c.l.s4 1934713408
        %v4621 = vunpack.c.0.s8 %v4620
        %v4622 = vlaneseq
        %v4623 = vshrl.u32 %v4622, 7
        %v4624 = vsub.s32 %v4621, %v4623
        %v4625 = vrot.slane %v4617, %v4624
        %v4627 = vunpack.c.l.s4 1934713408
        %v4628 = vunpack.c.0.s8 %v4627
        %v4629 = vlaneseq
        %v4630 = vshrl.u32 %v4629, 7
        %v4631 = vsub.s32 %v4628, %v4630
        %v4632 = vrot.slane %v4618, %v4631
        %v4633 = vcombine.low %v4577, %v4593
        %v4634 = vcombine.high %v4577, %v4593
        %v4636 = vunpack.c.l.s4 1934713408
        %v4637 = vunpack.c.0.s8 %v4636
        %v4638 = vlaneseq
        %v4639 = vshrl.u32 %v4638, 7
        %v4640 = vsub.s32 %v4637, %v4639
        %v4641 = vrot.slane %v4633, %v4640
        %v4643 = vunpack.c.l.s4 1934713408
        %v4644 = vunpack.c.0.s8 %v4643
        %v4645 = vlaneseq
        %v4646 = vshrl.u32 %v4645, 7
        %v4647 = vsub.s32 %v4644, %v4646
        %v4648 = vrot.slane %v4634, %v4647
        %v4649 = vcombine.low %v4584, %v4600
        %v4650 = vcombine.high %v4584, %v4600
        %v4652 = vunpack.c.l.s4 1934713408
        %v4653 = vunpack.c.0.s8 %v4652
        %v4654 = vlaneseq
        %v4655 = vshrl.u32 %v4654, 7
        %v4656 = vsub.s32 %v4653, %v4655
        %v4657 = vrot.slane %v4649, %v4656
        %v4659 = vunpack.c.l.s4 1934713408
        %v4660 = vunpack.c.0.s8 %v4659
        %v4661 = vlaneseq
        %v4662 = vshrl.u32 %v4661, 7
        %v4663 = vsub.s32 %v4660, %v4662
        %v4664 = vrot.slane %v4650, %v4663
        %v4665 = vcombine.low %v4609, %v4641
        %v4666 = vcombine.high %v4609, %v4641
        %v4667 = vcombine.low %v4616, %v4648
        %v4668 = vcombine.high %v4616, %v4648
        %v4669 = vcombine.low %v4625, %v4657
        %v4670 = vcombine.high %v4625, %v4657
        %v4671 = vcombine.low %v4632, %v4664
        %v4672 = vcombine.high %v4632, %v4664
        %v4673 = vcombine.low %v3747, %v3881
        %v4674 = vcombine.high %v3747, %v3881
        %v4676 = vunpack.c.l.s4 1983009808
        %v4677 = vunpack.c.0.s8 %v4676
        %v4678 = vlaneseq
        %v4679 = vshrl.u32 %v4678, 7
        %v4680 = vsub.s32 %v4677, %v4679
        %v4681 = vrot.slane %v4673, %v4680
        %v4683 = vunpack.c.l.s4 1983009808
        %v4684 = vunpack.c.0.s8 %v4683
        %v4685 = vlaneseq
        %v4686 = vshrl.u32 %v4685, 7
        %v4687 = vsub.s32 %v4684, %v4686
        %v4688 = vrot.slane %v4674, %v4687
        %v4689 = vcombine.low %v3814, %v3948
        %v4690 = vcombine.high %v3814, %v3948
        %v4692 = vunpack.c.l.s4 1983009808
        %v4693 = vunpack.c.0.s8 %v4692
        %v4694 = vlaneseq
        %v4695 = vshrl.u32 %v4694, 7
        %v4696 = vsub.s32 %v4693, %v4695
        %v4697 = vrot.slane %v4689, %v4696
        %v4699 = vunpack.c.l.s4 1983009808
        %v4700 = vunpack.c.0.s8 %v4699
        %v4701 = vlaneseq
        %v4702 = vshrl.u32 %v4701, 7
        %v4703 = vsub.s32 %v4700, %v4702
        %v4704 = vrot.slane %v4690, %v4703
        %v4705 = vcombine.low %v4015, %v4149
        %v4706 = vcombine.high %v4015, %v4149
        %v4708 = vunpack.c.l.s4 1983009808
        %v4709 = vunpack.c.0.s8 %v4708
        %v4710 = vlaneseq
        %v4711 = vshrl.u32 %v4710, 7
        %v4712 = vsub.s32 %v4709, %v4711
        %v4713 = vrot.slane %v4705, %v4712
        %v4715 = vunpack.c.l.s4 1983009808
        %v4716 = vunpack.c.0.s8 %v4715
        %v4717 = vlaneseq
        %v4718 = vshrl.u32 %v4717, 7
        %v4719 = vsub.s32 %v4716, %v4718
        %v4720 = vrot.slane %v4706, %v4719
        %v4721 = vcombine.low %v4082, %v4216
        %v4722 = vcombine.high %v4082, %v4216
        %v4724 = vunpack.c.l.s4 1983009808
        %v4725 = vunpack.c.0.s8 %v4724
        %v4726 = vlaneseq
        %v4727 = vshrl.u32 %v4726, 7
        %v4728 = vsub.s32 %v4725, %v4727
        %v4729 = vrot.slane %v4721, %v4728
        %v4731 = vunpack.c.l.s4 1983009808
        %v4732 = vunpack.c.0.s8 %v4731
        %v4733 = vlaneseq
        %v4734 = vshrl.u32 %v4733, 7
        %v4735 = vsub.s32 %v4732, %v4734
        %v4736 = vrot.slane %v4722, %v4735
        %v4737 = vcombine.low %v4681, %v4697
        %v4738 = vcombine.high %v4681, %v4697
        %v4740 = vunpack.c.l.s4 1934713408
        %v4741 = vunpack.c.0.s8 %v4740
        %v4742 = vlaneseq
        %v4743 = vshrl.u32 %v4742, 7
        %v4744 = vsub.s32 %v4741, %v4743
        %v4745 = vrot.slane %v4737, %v4744
        %v4747 = vunpack.c.l.s4 1934713408
        %v4748 = vunpack.c.0.s8 %v4747
        %v4749 = vlaneseq
        %v4750 = vshrl.u32 %v4749, 7
        %v4751 = vsub.s32 %v4748, %v4750
        %v4752 = vrot.slane %v4738, %v4751
        %v4753 = vcombine.low %v4688, %v4704
        %v4754 = vcombine.high %v4688, %v4704
        %v4756 = vunpack.c.l.s4 1934713408
        %v4757 = vunpack.c.0.s8 %v4756
        %v4758 = vlaneseq
        %v4759 = vshrl.u32 %v4758, 7
        %v4760 = vsub.s32 %v4757, %v4759
        %v4761 = vrot.slane %v4753, %v4760
        %v4763 = vunpack.c.l.s4 1934713408
        %v4764 = vunpack.c.0.s8 %v4763
        %v4765 = vlaneseq
        %v4766 = vshrl.u32 %v4765, 7
        %v4767 = vsub.s32 %v4764, %v4766
        %v4768 = vrot.slane %v4754, %v4767
        %v4769 = vcombine.low %v4713, %v4729
        %v4770 = vcombine.high %v4713, %v4729
        %v4772 = vunpack.c.l.s4 1934713408
        %v4773 = vunpack.c.0.s8 %v4772
        %v4774 = vlaneseq
        %v4775 = vshrl.u32 %v4774, 7
        %v4776 = vsub.s32 %v4773, %v4775
        %v4777 = vrot.slane %v4769, %v4776
        %v4779 = vunpack.c.l.s4 1934713408
        %v4780 = vunpack.c.0.s8 %v4779
        %v4781 = vlaneseq
        %v4782 = vshrl.u32 %v4781, 7
        %v4783 = vsub.s32 %v4780, %v4782
        %v4784 = vrot.slane %v4770, %v4783
        %v4785 = vcombine.low %v4720, %v4736
        %v4786 = vcombine.high %v4720, %v4736
        %v4788 = vunpack.c.l.s4 1934713408
        %v4789 = vunpack.c.0.s8 %v4788
        %v4790 = vlaneseq
        %v4791 = vshrl.u32 %v4790, 7
        %v4792 = vsub.s32 %v4789, %v4791
        %v4793 = vrot.slane %v4785, %v4792
        %v4795 = vunpack.c.l.s4 1934713408
        %v4796 = vunpack.c.0.s8 %v4795
        %v4797 = vlaneseq
        %v4798 = vshrl.u32 %v4797, 7
        %v4799 = vsub.s32 %v4796, %v4798
        %v4800 = vrot.slane %v4786, %v4799
        %v4801 = vcombine.low %v4745, %v4777
        %v4802 = vcombine.high %v4745, %v4777
        %v4803 = vcombine.low %v4752, %v4784
        %v4804 = vcombine.high %v4752, %v4784
        %v4805 = vcombine.low %v4761, %v4793
        %v4806 = vcombine.high %v4761, %v4793
        %v4807 = vcombine.low %v4768, %v4800
        %v4808 = vcombine.high %v4768, %v4800
        %v4809 = vcombine.low %v3751, %v3885
        %v4810 = vcombine.high %v3751, %v3885
        %v4812 = vunpack.c.l.s4 1983009808
        %v4813 = vunpack.c.0.s8 %v4812
        %v4814 = vlaneseq
        %v4815 = vshrl.u32 %v4814, 7
        %v4816 = vsub.s32 %v4813, %v4815
        %v4817 = vrot.slane %v4809, %v4816
        %v4819 = vunpack.c.l.s4 1983009808
        %v4820 = vunpack.c.0.s8 %v4819
        %v4821 = vlaneseq
        %v4822 = vshrl.u32 %v4821, 7
        %v4823 = vsub.s32 %v4820, %v4822
        %v4824 = vrot.slane %v4810, %v4823
        %v4825 = vcombine.low %v3818, %v3952
        %v4826 = vcombine.high %v3818, %v3952
        %v4828 = vunpack.c.l.s4 1983009808
        %v4829 = vunpack.c.0.s8 %v4828
        %v4830 = vlaneseq
        %v4831 = vshrl.u32 %v4830, 7
        %v4832 = vsub.s32 %v4829, %v4831
        %v4833 = vrot.slane %v4825, %v4832
        %v4835 = vunpack.c.l.s4 1983009808
        %v4836 = vunpack.c.0.s8 %v4835
        %v4837 = vlaneseq
        %v4838 = vshrl.u32 %v4837, 7
        %v4839 = vsub.s32 %v4836, %v4838
        %v4840 = vrot.slane %v4826, %v4839
        %v4841 = vcombine.low %v4019, %v4153
        %v4842 = vcombine.high %v4019, %v4153
        %v4844 = vunpack.c.l.s4 1983009808
        %v4845 = vunpack.c.0.s8 %v4844
        %v4846 = vlaneseq
        %v4847 = vshrl.u32 %v4846, 7
        %v4848 = vsub.s32 %v4845, %v4847
        %v4849 = vrot.slane %v4841, %v4848
        %v4851 = vunpack.c.l.s4 1983009808
        %v4852 = vunpack.c.0.s8 %v4851
        %v4853 = vlaneseq
        %v4854 = vshrl.u32 %v4853, 7
        %v4855 = vsub.s32 %v4852, %v4854
        %v4856 = vrot.slane %v4842, %v4855
        %v4857 = vcombine.low %v4086, %v4220
        %v4858 = vcombine.high %v4086, %v4220
        %v4860 = vunpack.c.l.s4 1983009808
        %v4861 = vunpack.c.0.s8 %v4860
        %v4862 = vlaneseq
        %v4863 = vshrl.u32 %v4862, 7
        %v4864 = vsub.s32 %v4861, %v4863
        %v4865 = vrot.slane %v4857, %v4864
        %v4867 = vunpack.c.l.s4 1983009808
        %v4868 = vunpack.c.0.s8 %v4867
        %v4869 = vlaneseq
        %v4870 = vshrl.u32 %v4869, 7
        %v4871 = vsub.s32 %v4868, %v4870
        %v4872 = vrot.slane %v4858, %v4871
        %v4873 = vcombine.low %v4817, %v4833
        %v4874 = vcombine.high %v4817, %v4833
        %v4876 = vunpack.c.l.s4 1934713408
        %v4877 = vunpack.c.0.s8 %v4876
        %v4878 = vlaneseq
        %v4879 = vshrl.u32 %v4878, 7
        %v4880 = vsub.s32 %v4877, %v4879
        %v4881 = vrot.slane %v4873, %v4880
        %v4883 = vunpack.c.l.s4 1934713408
        %v4884 = vunpack.c.0.s8 %v4883
        %v4885 = vlaneseq
        %v4886 = vshrl.u32 %v4885, 7
        %v4887 = vsub.s32 %v4884, %v4886
        %v4888 = vrot.slane %v4874, %v4887
        %v4889 = vcombine.low %v4824, %v4840
        %v4890 = vcombine.high %v4824, %v4840
        %v4892 = vunpack.c.l.s4 1934713408
        %v4893 = vunpack.c.0.s8 %v4892
        %v4894 = vlaneseq
        %v4895 = vshrl.u32 %v4894, 7
        %v4896 = vsub.s32 %v4893, %v4895
        %v4897 = vrot.slane %v4889, %v4896
        %v4899 = vunpack.c.l.s4 1934713408
        %v4900 = vunpack.c.0.s8 %v4899
        %v4901 = vlaneseq
        %v4902 = vshrl.u32 %v4901, 7
        %v4903 = vsub.s32 %v4900, %v4902
        %v4904 = vrot.slane %v4890, %v4903
        %v4905 = vcombine.low %v4849, %v4865
        %v4906 = vcombine.high %v4849, %v4865
        %v4908 = vunpack.c.l.s4 1934713408
        %v4909 = vunpack.c.0.s8 %v4908
        %v4910 = vlaneseq
        %v4911 = vshrl.u32 %v4910, 7
        %v4912 = vsub.s32 %v4909, %v4911
        %v4913 = vrot.slane %v4905, %v4912
        %v4915 = vunpack.c.l.s4 1934713408
        %v4916 = vunpack.c.0.s8 %v4915
        %v4917 = vlaneseq
        %v4918 = vshrl.u32 %v4917, 7
        %v4919 = vsub.s32 %v4916, %v4918
        %v4920 = vrot.slane %v4906, %v4919
        %v4921 = vcombine.low %v4856, %v4872
        %v4922 = vcombine.high %v4856, %v4872
        %v4924 = vunpack.c.l.s4 1934713408
        %v4925 = vunpack.c.0.s8 %v4924
        %v4926 = vlaneseq
        %v4927 = vshrl.u32 %v4926, 7
        %v4928 = vsub.s32 %v4925, %v4927
        %v4929 = vrot.slane %v4921, %v4928
        %v4931 = vunpack.c.l.s4 1934713408
        %v4932 = vunpack.c.0.s8 %v4931
        %v4933 = vlaneseq
        %v4934 = vshrl.u32 %v4933, 7
        %v4935 = vsub.s32 %v4932, %v4934
        %v4936 = vrot.slane %v4922, %v4935
        %v4937 = vcombine.low %v4881, %v4913
        %v4938 = vcombine.high %v4881, %v4913
        %v4939 = vcombine.low %v4888, %v4920
        %v4940 = vcombine.high %v4888, %v4920
        %v4941 = vcombine.low %v4897, %v4929
        %v4942 = vcombine.high %v4897, %v4929
        %v4943 = vcombine.low %v4904, %v4936
        %v4944 = vcombine.high %v4904, %v4936
        %v4945 = vcombine.low %v3755, %v3889
        %v4946 = vcombine.high %v3755, %v3889
        %v4948 = vunpack.c.l.s4 1983009808
        %v4949 = vunpack.c.0.s8 %v4948
        %v4950 = vlaneseq
        %v4951 = vshrl.u32 %v4950, 7
        %v4952 = vsub.s32 %v4949, %v4951
        %v4953 = vrot.slane %v4945, %v4952
        %v4955 = vunpack.c.l.s4 1983009808
        %v4956 = vunpack.c.0.s8 %v4955
        %v4957 = vlaneseq
        %v4958 = vshrl.u32 %v4957, 7
        %v4959 = vsub.s32 %v4956, %v4958
        %v4960 = vrot.slane %v4946, %v4959
        %v4961 = vcombine.low %v3822, %v3956
        %v4962 = vcombine.high %v3822, %v3956
        %v4964 = vunpack.c.l.s4 1983009808
        %v4965 = vunpack.c.0.s8 %v4964
        %v4966 = vlaneseq
        %v4967 = vshrl.u32 %v4966, 7
        %v4968 = vsub.s32 %v4965, %v4967
        %v4969 = vrot.slane %v4961, %v4968
        %v4971 = vunpack.c.l.s4 1983009808
        %v4972 = vunpack.c.0.s8 %v4971
        %v4973 = vlaneseq
        %v4974 = vshrl.u32 %v4973, 7
        %v4975 = vsub.s32 %v4972, %v4974
        %v4976 = vrot.slane %v4962, %v4975
        %v4977 = vcombine.low %v4023, %v4157
        %v4978 = vcombine.high %v4023, %v4157
        %v4980 = vunpack.c.l.s4 1983009808
        %v4981 = vunpack.c.0.s8 %v4980
        %v4982 = vlaneseq
        %v4983 = vshrl.u32 %v4982, 7
        %v4984 = vsub.s32 %v4981, %v4983
        %v4985 = vrot.slane %v4977, %v4984
        %v4987 = vunpack.c.l.s4 1983009808
        %v4988 = vunpack.c.0.s8 %v4987
        %v4989 = vlaneseq
        %v4990 = vshrl.u32 %v4989, 7
        %v4991 = vsub.s32 %v4988, %v4990
        %v4992 = vrot.slane %v4978, %v4991
        %v4993 = vcombine.low %v4090, %v4224
        %v4994 = vcombine.high %v4090, %v4224
        %v4996 = vunpack.c.l.s4 1983009808
        %v4997 = vunpack.c.0.s8 %v4996
        %v4998 = vlaneseq
        %v4999 = vshrl.u32 %v4998, 7
        %v5000 = vsub.s32 %v4997, %v4999
        %v5001 = vrot.slane %v4993, %v5000
        %v5003 = vunpack.c.l.s4 1983009808
        %v5004 = vunpack.c.0.s8 %v5003
        %v5005 = vlaneseq
        %v5006 = vshrl.u32 %v5005, 7
        %v5007 = vsub.s32 %v5004, %v5006
        %v5008 = vrot.slane %v4994, %v5007
        %v5009 = vcombine.low %v4953, %v4969
        %v5010 = vcombine.high %v4953, %v4969
        %v5012 = vunpack.c.l.s4 1934713408
        %v5013 = vunpack.c.0.s8 %v5012
        %v5014 = vlaneseq
        %v5015 = vshrl.u32 %v5014, 7
        %v5016 = vsub.s32 %v5013, %v5015
        %v5017 = vrot.slane %v5009, %v5016
        %v5019 = vunpack.c.l.s4 1934713408
        %v5020 = vunpack.c.0.s8 %v5019
        %v5021 = vlaneseq
        %v5022 = vshrl.u32 %v5021, 7
        %v5023 = vsub.s32 %v5020, %v5022
        %v5024 = vrot.slane %v5010, %v5023
        %v5025 = vcombine.low %v4960, %v4976
        %v5026 = vcombine.high %v4960, %v4976
        %v5028 = vunpack.c.l.s4 1934713408
        %v5029 = vunpack.c.0.s8 %v5028
        %v5030 = vlaneseq
        %v5031 = vshrl.u32 %v5030, 7
        %v5032 = vsub.s32 %v5029, %v5031
        %v5033 = vrot.slane %v5025, %v5032
        %v5035 = vunpack.c.l.s4 1934713408
        %v5036 = vunpack.c.0.s8 %v5035
        %v5037 = vlaneseq
        %v5038 = vshrl.u32 %v5037, 7
        %v5039 = vsub.s32 %v5036, %v5038
        %v5040 = vrot.slane %v5026, %v5039
        %v5041 = vcombine.low %v4985, %v5001
        %v5042 = vcombine.high %v4985, %v5001
        %v5044 = vunpack.c.l.s4 1934713408
        %v5045 = vunpack.c.0.s8 %v5044
        %v5046 = vlaneseq
        %v5047 = vshrl.u32 %v5046, 7
        %v5048 = vsub.s32 %v5045, %v5047
        %v5049 = vrot.slane %v5041, %v5048
        %v5051 = vunpack.c.l.s4 1934713408
        %v5052 = vunpack.c.0.s8 %v5051
        %v5053 = vlaneseq
        %v5054 = vshrl.u32 %v5053, 7
        %v5055 = vsub.s32 %v5052, %v5054
        %v5056 = vrot.slane %v5042, %v5055
        %v5057 = vcombine.low %v4992, %v5008
        %v5058 = vcombine.high %v4992, %v5008
        %v5060 = vunpack.c.l.s4 1934713408
        %v5061 = vunpack.c.0.s8 %v5060
        %v5062 = vlaneseq
        %v5063 = vshrl.u32 %v5062, 7
        %v5064 = vsub.s32 %v5061, %v5063
        %v5065 = vrot.slane %v5057, %v5064
        %v5067 = vunpack.c.l.s4 1934713408
        %v5068 = vunpack.c.0.s8 %v5067
        %v5069 = vlaneseq
        %v5070 = vshrl.u32 %v5069, 7
        %v5071 = vsub.s32 %v5068, %v5070
        %v5072 = vrot.slane %v5058, %v5071
        %v5073 = vcombine.low %v5017, %v5049
        %v5074 = vcombine.high %v5017, %v5049
        %v5075 = vcombine.low %v5024, %v5056
        %v5076 = vcombine.high %v5024, %v5056
        %v5077 = vcombine.low %v5033, %v5065
        %v5078 = vcombine.high %v5033, %v5065
        %v5079 = vcombine.low %v5040, %v5072
        %v5080 = vcombine.high %v5040, %v5072
        %v5081 = vcombine.low %v3759, %v3893
        %v5082 = vcombine.high %v3759, %v3893
        %v5084 = vunpack.c.l.s4 1983009808
        %v5085 = vunpack.c.0.s8 %v5084
        %v5086 = vlaneseq
        %v5087 = vshrl.u32 %v5086, 7
        %v5088 = vsub.s32 %v5085, %v5087
        %v5089 = vrot.slane %v5081, %v5088
        %v5091 = vunpack.c.l.s4 1983009808
        %v5092 = vunpack.c.0.s8 %v5091
        %v5093 = vlaneseq
        %v5094 = vshrl.u32 %v5093, 7
        %v5095 = vsub.s32 %v5092, %v5094
        %v5096 = vrot.slane %v5082, %v5095
        %v5097 = vcombine.low %v3826, %v3960
        %v5098 = vcombine.high %v3826, %v3960
        %v5100 = vunpack.c.l.s4 1983009808
        %v5101 = vunpack.c.0.s8 %v5100
        %v5102 = vlaneseq
        %v5103 = vshrl.u32 %v5102, 7
        %v5104 = vsub.s32 %v5101, %v5103
        %v5105 = vrot.slane %v5097, %v5104
        %v5107 = vunpack.c.l.s4 1983009808
        %v5108 = vunpack.c.0.s8 %v5107
        %v5109 = vlaneseq
        %v5110 = vshrl.u32 %v5109, 7
        %v5111 = vsub.s32 %v5108, %v5110
        %v5112 = vrot.slane %v5098, %v5111
        %v5113 = vcombine.low %v4027, %v4161
        %v5114 = vcombine.high %v4027, %v4161
        %v5116 = vunpack.c.l.s4 1983009808
        %v5117 = vunpack.c.0.s8 %v5116
        %v5118 = vlaneseq
        %v5119 = vshrl.u32 %v5118, 7
        %v5120 = vsub.s32 %v5117, %v5119
        %v5121 = vrot.slane %v5113, %v5120
        %v5123 = vunpack.c.l.s4 1983009808
        %v5124 = vunpack.c.0.s8 %v5123
        %v5125 = vlaneseq
        %v5126 = vshrl.u32 %v5125, 7
        %v5127 = vsub.s32 %v5124, %v5126
        %v5128 = vrot.slane %v5114, %v5127
        %v5129 = vcombine.low %v4094, %v4228
        %v5130 = vcombine.high %v4094, %v4228
        %v5132 = vunpack.c.l.s4 1983009808
        %v5133 = vunpack.c.0.s8 %v5132
        %v5134 = vlaneseq
        %v5135 = vshrl.u32 %v5134, 7
        %v5136 = vsub.s32 %v5133, %v5135
        %v5137 = vrot.slane %v5129, %v5136
        %v5139 = vunpack.c.l.s4 1983009808
        %v5140 = vunpack.c.0.s8 %v5139
        %v5141 = vlaneseq
        %v5142 = vshrl.u32 %v5141, 7
        %v5143 = vsub.s32 %v5140, %v5142
        %v5144 = vrot.slane %v5130, %v5143
        %v5145 = vcombine.low %v5089, %v5105
        %v5146 = vcombine.high %v5089, %v5105
        %v5148 = vunpack.c.l.s4 1934713408
        %v5149 = vunpack.c.0.s8 %v5148
        %v5150 = vlaneseq
        %v5151 = vshrl.u32 %v5150, 7
        %v5152 = vsub.s32 %v5149, %v5151
        %v5153 = vrot.slane %v5145, %v5152
        %v5155 = vunpack.c.l.s4 1934713408
        %v5156 = vunpack.c.0.s8 %v5155
        %v5157 = vlaneseq
        %v5158 = vshrl.u32 %v5157, 7
        %v5159 = vsub.s32 %v5156, %v5158
        %v5160 = vrot.slane %v5146, %v5159
        %v5161 = vcombine.low %v5096, %v5112
        %v5162 = vcombine.high %v5096, %v5112
        %v5164 = vunpack.c.l.s4 1934713408
        %v5165 = vunpack.c.0.s8 %v5164
        %v5166 = vlaneseq
        %v5167 = vshrl.u32 %v5166, 7
        %v5168 = vsub.s32 %v5165, %v5167
        %v5169 = vrot.slane %v5161, %v5168
        %v5171 = vunpack.c.l.s4 1934713408
        %v5172 = vunpack.c.0.s8 %v5171
        %v5173 = vlaneseq
        %v5174 = vshrl.u32 %v5173, 7
        %v5175 = vsub.s32 %v5172, %v5174
        %v5176 = vrot.slane %v5162, %v5175
        %v5177 = vcombine.low %v5121, %v5137
        %v5178 = vcombine.high %v5121, %v5137
        %v5180 = vunpack.c.l.s4 1934713408
        %v5181 = vunpack.c.0.s8 %v5180
        %v5182 = vlaneseq
        %v5183 = vshrl.u32 %v5182, 7
        %v5184 = vsub.s32 %v5181, %v5183
        %v5185 = vrot.slane %v5177, %v5184
        %v5187 = vunpack.c.l.s4 1934713408
        %v5188 = vunpack.c.0.s8 %v5187
        %v5189 = vlaneseq
        %v5190 = vshrl.u32 %v5189, 7
        %v5191 = vsub.s32 %v5188, %v5190
        %v5192 = vrot.slane %v5178, %v5191
        %v5193 = vcombine.low %v5128, %v5144
        %v5194 = vcombine.high %v5128, %v5144
        %v5196 = vunpack.c.l.s4 1934713408
        %v5197 = vunpack.c.0.s8 %v5196
        %v5198 = vlaneseq
        %v5199 = vshrl.u32 %v5198, 7
        %v5200 = vsub.s32 %v5197, %v5199
        %v5201 = vrot.slane %v5193, %v5200
        %v5203 = vunpack.c.l.s4 1934713408
        %v5204 = vunpack.c.0.s8 %v5203
        %v5205 = vlaneseq
        %v5206 = vshrl.u32 %v5205, 7
        %v5207 = vsub.s32 %v5204, %v5206
        %v5208 = vrot.slane %v5194, %v5207
        %v5209 = vcombine.low %v5153, %v5185
        %v5210 = vcombine.high %v5153, %v5185
        %v5211 = vcombine.low %v5160, %v5192
        %v5212 = vcombine.high %v5160, %v5192
        %v5213 = vcombine.low %v5169, %v5201
        %v5214 = vcombine.high %v5169, %v5201
        %v5215 = vcombine.low %v5176, %v5208
        %v5216 = vcombine.high %v5176, %v5208
        %v5217 = vcombine.low %v3763, %v3897
        %v5218 = vcombine.high %v3763, %v3897
        %v5220 = vunpack.c.l.s4 1983009808
        %v5221 = vunpack.c.0.s8 %v5220
        %v5222 = vlaneseq
        %v5223 = vshrl.u32 %v5222, 7
        %v5224 = vsub.s32 %v5221, %v5223
        %v5225 = vrot.slane %v5217, %v5224
        %v5227 = vunpack.c.l.s4 1983009808
        %v5228 = vunpack.c.0.s8 %v5227
        %v5229 = vlaneseq
        %v5230 = vshrl.u32 %v5229, 7
        %v5231 = vsub.s32 %v5228, %v5230
        %v5232 = vrot.slane %v5218, %v5231
        %v5233 = vcombine.low %v3830, %v3964
        %v5234 = vcombine.high %v3830, %v3964
        %v5236 = vunpack.c.l.s4 1983009808
        %v5237 = vunpack.c.0.s8 %v5236
        %v5238 = vlaneseq
        %v5239 = vshrl.u32 %v5238, 7
        %v5240 = vsub.s32 %v5237, %v5239
        %v5241 = vrot.slane %v5233, %v5240
        %v5243 = vunpack.c.l.s4 1983009808
        %v5244 = vunpack.c.0.s8 %v5243
        %v5245 = vlaneseq
        %v5246 = vshrl.u32 %v5245, 7
        %v5247 = vsub.s32 %v5244, %v5246
        %v5248 = vrot.slane %v5234, %v5247
        %v5249 = vcombine.low %v4031, %v4165
        %v5250 = vcombine.high %v4031, %v4165
        %v5252 = vunpack.c.l.s4 1983009808
        %v5253 = vunpack.c.0.s8 %v5252
        %v5254 = vlaneseq
        %v5255 = vshrl.u32 %v5254, 7
        %v5256 = vsub.s32 %v5253, %v5255
        %v5257 = vrot.slane %v5249, %v5256
        %v5259 = vunpack.c.l.s4 1983009808
        %v5260 = vunpack.c.0.s8 %v5259
        %v5261 = vlaneseq
        %v5262 = vshrl.u32 %v5261, 7
        %v5263 = vsub.s32 %v5260, %v5262
        %v5264 = vrot.slane %v5250, %v5263
        %v5265 = vcombine.low %v4098, %v4232
        %v5266 = vcombine.high %v4098, %v4232
        %v5268 = vunpack.c.l.s4 1983009808
        %v5269 = vunpack.c.0.s8 %v5268
        %v5270 = vlaneseq
        %v5271 = vshrl.u32 %v5270, 7
        %v5272 = vsub.s32 %v5269, %v5271
        %v5273 = vrot.slane %v5265, %v5272
        %v5275 = vunpack.c.l.s4 1983009808
        %v5276 = vunpack.c.0.s8 %v5275
        %v5277 = vlaneseq
        %v5278 = vshrl.u32 %v5277, 7
        %v5279 = vsub.s32 %v5276, %v5278
        %v5280 = vrot.slane %v5266, %v5279
        %v5281 = vcombine.low %v5225, %v5241
        %v5282 = vcombine.high %v5225, %v5241
        %v5284 = vunpack.c.l.s4 1934713408
        %v5285 = vunpack.c.0.s8 %v5284
        %v5286 = vlaneseq
        %v5287 = vshrl.u32 %v5286, 7
        %v5288 = vsub.s32 %v5285, %v5287
        %v5289 = vrot.slane %v5281, %v5288
        %v5291 = vunpack.c.l.s4 1934713408
        %v5292 = vunpack.c.0.s8 %v5291
        %v5293 = vlaneseq
        %v5294 = vshrl.u32 %v5293, 7
        %v5295 = vsub.s32 %v5292, %v5294
        %v5296 = vrot.slane %v5282, %v5295
        %v5297 = vcombine.low %v5232, %v5248
        %v5298 = vcombine.high %v5232, %v5248
        %v5300 = vunpack.c.l.s4 1934713408
        %v5301 = vunpack.c.0.s8 %v5300
        %v5302 = vlaneseq
        %v5303 = vshrl.u32 %v5302, 7
        %v5304 = vsub.s32 %v5301, %v5303
        %v5305 = vrot.slane %v5297, %v5304
        %v5307 = vunpack.c.l.s4 1934713408
        %v5308 = vunpack.c.0.s8 %v5307
        %v5309 = vlaneseq
        %v5310 = vshrl.u32 %v5309, 7
        %v5311 = vsub.s32 %v5308, %v5310
        %v5312 = vrot.slane %v5298, %v5311
        %v5313 = vcombine.low %v5257, %v5273
        %v5314 = vcombine.high %v5257, %v5273
        %v5316 = vunpack.c.l.s4 1934713408
        %v5317 = vunpack.c.0.s8 %v5316
        %v5318 = vlaneseq
        %v5319 = vshrl.u32 %v5318, 7
        %v5320 = vsub.s32 %v5317, %v5319
        %v5321 = vrot.slane %v5313, %v5320
        %v5323 = vunpack.c.l.s4 1934713408
        %v5324 = vunpack.c.0.s8 %v5323
        %v5325 = vlaneseq
        %v5326 = vshrl.u32 %v5325, 7
        %v5327 = vsub.s32 %v5324, %v5326
        %v5328 = vrot.slane %v5314, %v5327
        %v5329 = vcombine.low %v5264, %v5280
        %v5330 = vcombine.high %v5264, %v5280
        %v5332 = vunpack.c.l.s4 1934713408
        %v5333 = vunpack.c.0.s8 %v5332
        %v5334 = vlaneseq
        %v5335 = vshrl.u32 %v5334, 7
        %v5336 = vsub.s32 %v5333, %v5335
        %v5337 = vrot.slane %v5329, %v5336
        %v5339 = vunpack.c.l.s4 1934713408
        %v5340 = vunpack.c.0.s8 %v5339
        %v5341 = vlaneseq
        %v5342 = vshrl.u32 %v5341, 7
        %v5343 = vsub.s32 %v5340, %v5342
        %v5344 = vrot.slane %v5330, %v5343
        %v5345 = vcombine.low %v5289, %v5321
        %v5346 = vcombine.high %v5289, %v5321
        %v5347 = vcombine.low %v5296, %v5328
        %v5348 = vcombine.high %v5296, %v5328
        %v5349 = vcombine.low %v5305, %v5337
        %v5350 = vcombine.high %v5305, %v5337
        %v5351 = vcombine.low %v5312, %v5344
        %v5352 = vcombine.high %v5312, %v5344
        %v5353 = vcombine.low %v3767, %v3901
        %v5354 = vcombine.high %v3767, %v3901
        %v5356 = vunpack.c.l.s4 1983009808
        %v5357 = vunpack.c.0.s8 %v5356
        %v5358 = vlaneseq
        %v5359 = vshrl.u32 %v5358, 7
        %v5360 = vsub.s32 %v5357, %v5359
        %v5361 = vrot.slane %v5353, %v5360
        %v5363 = vunpack.c.l.s4 1983009808
        %v5364 = vunpack.c.0.s8 %v5363
        %v5365 = vlaneseq
        %v5366 = vshrl.u32 %v5365, 7
        %v5367 = vsub.s32 %v5364, %v5366
        %v5368 = vrot.slane %v5354, %v5367
        %v5369 = vcombine.low %v3834, %v3968
        %v5370 = vcombine.high %v3834, %v3968
        %v5372 = vunpack.c.l.s4 1983009808
        %v5373 = vunpack.c.0.s8 %v5372
        %v5374 = vlaneseq
        %v5375 = vshrl.u32 %v5374, 7
        %v5376 = vsub.s32 %v5373, %v5375
        %v5377 = vrot.slane %v5369, %v5376
        %v5379 = vunpack.c.l.s4 1983009808
        %v5380 = vunpack.c.0.s8 %v5379
        %v5381 = vlaneseq
        %v5382 = vshrl.u32 %v5381, 7
        %v5383 = vsub.s32 %v5380, %v5382
        %v5384 = vrot.slane %v5370, %v5383
        %v5385 = vcombine.low %v4035, %v4169
        %v5386 = vcombine.high %v4035, %v4169
        %v5388 = vunpack.c.l.s4 1983009808
        %v5389 = vunpack.c.0.s8 %v5388
        %v5390 = vlaneseq
        %v5391 = vshrl.u32 %v5390, 7
        %v5392 = vsub.s32 %v5389, %v5391
        %v5393 = vrot.slane %v5385, %v5392
        %v5395 = vunpack.c.l.s4 1983009808
        %v5396 = vunpack.c.0.s8 %v5395
        %v5397 = vlaneseq
        %v5398 = vshrl.u32 %v5397, 7
        %v5399 = vsub.s32 %v5396, %v5398
        %v5400 = vrot.slane %v5386, %v5399
        %v5401 = vcombine.low %v4102, %v4236
        %v5402 = vcombine.high %v4102, %v4236
        %v5404 = vunpack.c.l.s4 1983009808
        %v5405 = vunpack.c.0.s8 %v5404
        %v5406 = vlaneseq
        %v5407 = vshrl.u32 %v5406, 7
        %v5408 = vsub.s32 %v5405, %v5407
        %v5409 = vrot.slane %v5401, %v5408
        %v5411 = vunpack.c.l.s4 1983009808
        %v5412 = vunpack.c.0.s8 %v5411
        %v5413 = vlaneseq
        %v5414 = vshrl.u32 %v5413, 7
        %v5415 = vsub.s32 %v5412, %v5414
        %v5416 = vrot.slane %v5402, %v5415
        %v5417 = vcombine.low %v5361, %v5377
        %v5418 = vcombine.high %v5361, %v5377
        %v5420 = vunpack.c.l.s4 1934713408
        %v5421 = vunpack.c.0.s8 %v5420
        %v5422 = vlaneseq
        %v5423 = vshrl.u32 %v5422, 7
        %v5424 = vsub.s32 %v5421, %v5423
        %v5425 = vrot.slane %v5417, %v5424
        %v5427 = vunpack.c.l.s4 1934713408
        %v5428 = vunpack.c.0.s8 %v5427
        %v5429 = vlaneseq
        %v5430 = vshrl.u32 %v5429, 7
        %v5431 = vsub.s32 %v5428, %v5430
        %v5432 = vrot.slane %v5418, %v5431
        %v5433 = vcombine.low %v5368, %v5384
        %v5434 = vcombine.high %v5368, %v5384
        %v5436 = vunpack.c.l.s4 1934713408
        %v5437 = vunpack.c.0.s8 %v5436
        %v5438 = vlaneseq
        %v5439 = vshrl.u32 %v5438, 7
        %v5440 = vsub.s32 %v5437, %v5439
        %v5441 = vrot.slane %v5433, %v5440
        %v5443 = vunpack.c.l.s4 1934713408
        %v5444 = vunpack.c.0.s8 %v5443
        %v5445 = vlaneseq
        %v5446 = vshrl.u32 %v5445, 7
        %v5447 = vsub.s32 %v5444, %v5446
        %v5448 = vrot.slane %v5434, %v5447
        %v5449 = vcombine.low %v5393, %v5409
        %v5450 = vcombine.high %v5393, %v5409
        %v5452 = vunpack.c.l.s4 1934713408
        %v5453 = vunpack.c.0.s8 %v5452
        %v5454 = vlaneseq
        %v5455 = vshrl.u32 %v5454, 7
        %v5456 = vsub.s32 %v5453, %v5455
        %v5457 = vrot.slane %v5449, %v5456
        %v5459 = vunpack.c.l.s4 1934713408
        %v5460 = vunpack.c.0.s8 %v5459
        %v5461 = vlaneseq
        %v5462 = vshrl.u32 %v5461, 7
        %v5463 = vsub.s32 %v5460, %v5462
        %v5464 = vrot.slane %v5450, %v5463
        %v5465 = vcombine.low %v5400, %v5416
        %v5466 = vcombine.high %v5400, %v5416
        %v5468 = vunpack.c.l.s4 1934713408
        %v5469 = vunpack.c.0.s8 %v5468
        %v5470 = vlaneseq
        %v5471 = vshrl.u32 %v5470, 7
        %v5472 = vsub.s32 %v5469, %v5471
        %v5473 = vrot.slane %v5465, %v5472
        %v5475 = vunpack.c.l.s4 1934713408
        %v5476 = vunpack.c.0.s8 %v5475
        %v5477 = vlaneseq
        %v5478 = vshrl.u32 %v5477, 7
        %v5479 = vsub.s32 %v5476, %v5478
        %v5480 = vrot.slane %v5466, %v5479
        %v5481 = vcombine.low %v5425, %v5457
        %v5482 = vcombine.high %v5425, %v5457
        %v5483 = vcombine.low %v5432, %v5464
        %v5484 = vcombine.high %v5432, %v5464
        %v5485 = vcombine.low %v5441, %v5473
        %v5486 = vcombine.high %v5441, %v5473
        %v5487 = vcombine.low %v5448, %v5480
        %v5488 = vcombine.high %v5448, %v5480
        %v5489 = vcombine.low %v3771, %v3905
        %v5490 = vcombine.high %v3771, %v3905
        %v5492 = vunpack.c.l.s4 1983009808
        %v5493 = vunpack.c.0.s8 %v5492
        %v5494 = vlaneseq
        %v5495 = vshrl.u32 %v5494, 7
        %v5496 = vsub.s32 %v5493, %v5495
        %v5497 = vrot.slane %v5489, %v5496
        %v5499 = vunpack.c.l.s4 1983009808
        %v5500 = vunpack.c.0.s8 %v5499
        %v5501 = vlaneseq
        %v5502 = vshrl.u32 %v5501, 7
        %v5503 = vsub.s32 %v5500, %v5502
        %v5504 = vrot.slane %v5490, %v5503
        %v5505 = vcombine.low %v3838, %v3972
        %v5506 = vcombine.high %v3838, %v3972
        %v5508 = vunpack.c.l.s4 1983009808
        %v5509 = vunpack.c.0.s8 %v5508
        %v5510 = vlaneseq
        %v5511 = vshrl.u32 %v5510, 7
        %v5512 = vsub.s32 %v5509, %v5511
        %v5513 = vrot.slane %v5505, %v5512
        %v5515 = vunpack.c.l.s4 1983009808
        %v5516 = vunpack.c.0.s8 %v5515
        %v5517 = vlaneseq
        %v5518 = vshrl.u32 %v5517, 7
        %v5519 = vsub.s32 %v5516, %v5518
        %v5520 = vrot.slane %v5506, %v5519
        %v5521 = vcombine.low %v4039, %v4173
        %v5522 = vcombine.high %v4039, %v4173
        %v5524 = vunpack.c.l.s4 1983009808
        %v5525 = vunpack.c.0.s8 %v5524
        %v5526 = vlaneseq
        %v5527 = vshrl.u32 %v5526, 7
        %v5528 = vsub.s32 %v5525, %v5527
        %v5529 = vrot.slane %v5521, %v5528
        %v5531 = vunpack.c.l.s4 1983009808
        %v5532 = vunpack.c.0.s8 %v5531
        %v5533 = vlaneseq
        %v5534 = vshrl.u32 %v5533, 7
        %v5535 = vsub.s32 %v5532, %v5534
        %v5536 = vrot.slane %v5522, %v5535
        %v5537 = vcombine.low %v4106, %v4240
        %v5538 = vcombine.high %v4106, %v4240
        %v5540 = vunpack.c.l.s4 1983009808
        %v5541 = vunpack.c.0.s8 %v5540
        %v5542 = vlaneseq
        %v5543 = vshrl.u32 %v5542, 7
        %v5544 = vsub.s32 %v5541, %v5543
        %v5545 = vrot.slane %v5537, %v5544
        %v5547 = vunpack.c.l.s4 1983009808
        %v5548 = vunpack.c.0.s8 %v5547
        %v5549 = vlaneseq
        %v5550 = vshrl.u32 %v5549, 7
        %v5551 = vsub.s32 %v5548, %v5550
        %v5552 = vrot.slane %v5538, %v5551
        %v5553 = vcombine.low %v5497, %v5513
        %v5554 = vcombine.high %v5497, %v5513
        %v5556 = vunpack.c.l.s4 1934713408
        %v5557 = vunpack.c.0.s8 %v5556
        %v5558 = vlaneseq
        %v5559 = vshrl.u32 %v5558, 7
        %v5560 = vsub.s32 %v5557, %v5559
        %v5561 = vrot.slane %v5553, %v5560
        %v5563 = vunpack.c.l.s4 1934713408
        %v5564 = vunpack.c.0.s8 %v5563
        %v5565 = vlaneseq
        %v5566 = vshrl.u32 %v5565, 7
        %v5567 = vsub.s32 %v5564, %v5566
        %v5568 = vrot.slane %v5554, %v5567
        %v5569 = vcombine.low %v5504, %v5520
        %v5570 = vcombine.high %v5504, %v5520
        %v5572 = vunpack.c.l.s4 1934713408
        %v5573 = vunpack.c.0.s8 %v5572
        %v5574 = vlaneseq
        %v5575 = vshrl.u32 %v5574, 7
        %v5576 = vsub.s32 %v5573, %v5575
        %v5577 = vrot.slane %v5569, %v5576
        %v5579 = vunpack.c.l.s4 1934713408
        %v5580 = vunpack.c.0.s8 %v5579
        %v5581 = vlaneseq
        %v5582 = vshrl.u32 %v5581, 7
        %v5583 = vsub.s32 %v5580, %v5582
        %v5584 = vrot.slane %v5570, %v5583
        %v5585 = vcombine.low %v5529, %v5545
        %v5586 = vcombine.high %v5529, %v5545
        %v5588 = vunpack.c.l.s4 1934713408
        %v5589 = vunpack.c.0.s8 %v5588
        %v5590 = vlaneseq
        %v5591 = vshrl.u32 %v5590, 7
        %v5592 = vsub.s32 %v5589, %v5591
        %v5593 = vrot.slane %v5585, %v5592
        %v5595 = vunpack.c.l.s4 1934713408
        %v5596 = vunpack.c.0.s8 %v5595
        %v5597 = vlaneseq
        %v5598 = vshrl.u32 %v5597, 7
        %v5599 = vsub.s32 %v5596, %v5598
        %v5600 = vrot.slane %v5586, %v5599
        %v5601 = vcombine.low %v5536, %v5552
        %v5602 = vcombine.high %v5536, %v5552
        %v5604 = vunpack.c.l.s4 1934713408
        %v5605 = vunpack.c.0.s8 %v5604
        %v5606 = vlaneseq
        %v5607 = vshrl.u32 %v5606, 7
        %v5608 = vsub.s32 %v5605, %v5607
        %v5609 = vrot.slane %v5601, %v5608
        %v5611 = vunpack.c.l.s4 1934713408
        %v5612 = vunpack.c.0.s8 %v5611
        %v5613 = vlaneseq
        %v5614 = vshrl.u32 %v5613, 7
        %v5615 = vsub.s32 %v5612, %v5614
        %v5616 = vrot.slane %v5602, %v5615
        %v5617 = vcombine.low %v5561, %v5593
        %v5618 = vcombine.high %v5561, %v5593
        %v5619 = vcombine.low %v5568, %v5600
        %v5620 = vcombine.high %v5568, %v5600
        %v5621 = vcombine.low %v5577, %v5609
        %v5622 = vcombine.high %v5577, %v5609
        %v5623 = vcombine.low %v5584, %v5616
        %v5624 = vcombine.high %v5584, %v5616
        %v5625 = vcombine.low %v3775, %v3909
        %v5626 = vcombine.high %v3775, %v3909
        %v5628 = vunpack.c.l.s4 1983009808
        %v5629 = vunpack.c.0.s8 %v5628
        %v5630 = vlaneseq
        %v5631 = vshrl.u32 %v5630, 7
        %v5632 = vsub.s32 %v5629, %v5631
        %v5633 = vrot.slane %v5625, %v5632
        %v5635 = vunpack.c.l.s4 1983009808
        %v5636 = vunpack.c.0.s8 %v5635
        %v5637 = vlaneseq
        %v5638 = vshrl.u32 %v5637, 7
        %v5639 = vsub.s32 %v5636, %v5638
        %v5640 = vrot.slane %v5626, %v5639
        %v5641 = vcombine.low %v3842, %v3976
        %v5642 = vcombine.high %v3842, %v3976
        %v5644 = vunpack.c.l.s4 1983009808
        %v5645 = vunpack.c.0.s8 %v5644
        %v5646 = vlaneseq
        %v5647 = vshrl.u32 %v5646, 7
        %v5648 = vsub.s32 %v5645, %v5647
        %v5649 = vrot.slane %v5641, %v5648
        %v5651 = vunpack.c.l.s4 1983009808
        %v5652 = vunpack.c.0.s8 %v5651
        %v5653 = vlaneseq
        %v5654 = vshrl.u32 %v5653, 7
        %v5655 = vsub.s32 %v5652, %v5654
        %v5656 = vrot.slane %v5642, %v5655
        %v5657 = vcombine.low %v4043, %v4177
        %v5658 = vcombine.high %v4043, %v4177
        %v5660 = vunpack.c.l.s4 1983009808
        %v5661 = vunpack.c.0.s8 %v5660
        %v5662 = vlaneseq
        %v5663 = vshrl.u32 %v5662, 7
        %v5664 = vsub.s32 %v5661, %v5663
        %v5665 = vrot.slane %v5657, %v5664
        %v5667 = vunpack.c.l.s4 1983009808
        %v5668 = vunpack.c.0.s8 %v5667
        %v5669 = vlaneseq
        %v5670 = vshrl.u32 %v5669, 7
        %v5671 = vsub.s32 %v5668, %v5670
        %v5672 = vrot.slane %v5658, %v5671
        %v5673 = vcombine.low %v4110, %v4244
        %v5674 = vcombine.high %v4110, %v4244
        %v5676 = vunpack.c.l.s4 1983009808
        %v5677 = vunpack.c.0.s8 %v5676
        %v5678 = vlaneseq
        %v5679 = vshrl.u32 %v5678, 7
        %v5680 = vsub.s32 %v5677, %v5679
        %v5681 = vrot.slane %v5673, %v5680
        %v5683 = vunpack.c.l.s4 1983009808
        %v5684 = vunpack.c.0.s8 %v5683
        %v5685 = vlaneseq
        %v5686 = vshrl.u32 %v5685, 7
        %v5687 = vsub.s32 %v5684, %v5686
        %v5688 = vrot.slane %v5674, %v5687
        %v5689 = vcombine.low %v5633, %v5649
        %v5690 = vcombine.high %v5633, %v5649
        %v5692 = vunpack.c.l.s4 1934713408
        %v5693 = vunpack.c.0.s8 %v5692
        %v5694 = vlaneseq
        %v5695 = vshrl.u32 %v5694, 7
        %v5696 = vsub.s32 %v5693, %v5695
        %v5697 = vrot.slane %v5689, %v5696
        %v5699 = vunpack.c.l.s4 1934713408
        %v5700 = vunpack.c.0.s8 %v5699
        %v5701 = vlaneseq
        %v5702 = vshrl.u32 %v5701, 7
        %v5703 = vsub.s32 %v5700, %v5702
        %v5704 = vrot.slane %v5690, %v5703
        %v5705 = vcombine.low %v5640, %v5656
        %v5706 = vcombine.high %v5640, %v5656
        %v5708 = vunpack.c.l.s4 1934713408
        %v5709 = vunpack.c.0.s8 %v5708
        %v5710 = vlaneseq
        %v5711 = vshrl.u32 %v5710, 7
        %v5712 = vsub.s32 %v5709, %v5711
        %v5713 = vrot.slane %v5705, %v5712
        %v5715 = vunpack.c.l.s4 1934713408
        %v5716 = vunpack.c.0.s8 %v5715
        %v5717 = vlaneseq
        %v5718 = vshrl.u32 %v5717, 7
        %v5719 = vsub.s32 %v5716, %v5718
        %v5720 = vrot.slane %v5706, %v5719
        %v5721 = vcombine.low %v5665, %v5681
        %v5722 = vcombine.high %v5665, %v5681
        %v5724 = vunpack.c.l.s4 1934713408
        %v5725 = vunpack.c.0.s8 %v5724
        %v5726 = vlaneseq
        %v5727 = vshrl.u32 %v5726, 7
        %v5728 = vsub.s32 %v5725, %v5727
        %v5729 = vrot.slane %v5721, %v5728
        %v5731 = vunpack.c.l.s4 1934713408
        %v5732 = vunpack.c.0.s8 %v5731
        %v5733 = vlaneseq
        %v5734 = vshrl.u32 %v5733, 7
        %v5735 = vsub.s32 %v5732, %v5734
        %v5736 = vrot.slane %v5722, %v5735
        %v5737 = vcombine.low %v5672, %v5688
        %v5738 = vcombine.high %v5672, %v5688
        %v5740 = vunpack.c.l.s4 1934713408
        %v5741 = vunpack.c.0.s8 %v5740
        %v5742 = vlaneseq
        %v5743 = vshrl.u32 %v5742, 7
        %v5744 = vsub.s32 %v5741, %v5743
        %v5745 = vrot.slane %v5737, %v5744
        %v5747 = vunpack.c.l.s4 1934713408
        %v5748 = vunpack.c.0.s8 %v5747
        %v5749 = vlaneseq
        %v5750 = vshrl.u32 %v5749, 7
        %v5751 = vsub.s32 %v5748, %v5750
        %v5752 = vrot.slane %v5738, %v5751
        %v5753 = vcombine.low %v5697, %v5729
        %v5754 = vcombine.high %v5697, %v5729
        %v5755 = vcombine.low %v5704, %v5736
        %v5756 = vcombine.high %v5704, %v5736
        %v5757 = vcombine.low %v5713, %v5745
        %v5758 = vcombine.high %v5713, %v5745
        %v5759 = vcombine.low %v5720, %v5752
        %v5760 = vcombine.high %v5720, %v5752
        %v5761 = vcombine.low %v3779, %v3913
        %v5762 = vcombine.high %v3779, %v3913
        %v5764 = vunpack.c.l.s4 1983009808
        %v5765 = vunpack.c.0.s8 %v5764
        %v5766 = vlaneseq
        %v5767 = vshrl.u32 %v5766, 7
        %v5768 = vsub.s32 %v5765, %v5767
        %v5769 = vrot.slane %v5761, %v5768
        %v5771 = vunpack.c.l.s4 1983009808
        %v5772 = vunpack.c.0.s8 %v5771
        %v5773 = vlaneseq
        %v5774 = vshrl.u32 %v5773, 7
        %v5775 = vsub.s32 %v5772, %v5774
        %v5776 = vrot.slane %v5762, %v5775
        %v5777 = vcombine.low %v3846, %v3980
        %v5778 = vcombine.high %v3846, %v3980
        %v5780 = vunpack.c.l.s4 1983009808
        %v5781 = vunpack.c.0.s8 %v5780
        %v5782 = vlaneseq
        %v5783 = vshrl.u32 %v5782, 7
        %v5784 = vsub.s32 %v5781, %v5783
        %v5785 = vrot.slane %v5777, %v5784
        %v5787 = vunpack.c.l.s4 1983009808
        %v5788 = vunpack.c.0.s8 %v5787
        %v5789 = vlaneseq
        %v5790 = vshrl.u32 %v5789, 7
        %v5791 = vsub.s32 %v5788, %v5790
        %v5792 = vrot.slane %v5778, %v5791
        %v5793 = vcombine.low %v4047, %v4181
        %v5794 = vcombine.high %v4047, %v4181
        %v5796 = vunpack.c.l.s4 1983009808
        %v5797 = vunpack.c.0.s8 %v5796
        %v5798 = vlaneseq
        %v5799 = vshrl.u32 %v5798, 7
        %v5800 = vsub.s32 %v5797, %v5799
        %v5801 = vrot.slane %v5793, %v5800
        %v5803 = vunpack.c.l.s4 1983009808
        %v5804 = vunpack.c.0.s8 %v5803
        %v5805 = vlaneseq
        %v5806 = vshrl.u32 %v5805, 7
        %v5807 = vsub.s32 %v5804, %v5806
        %v5808 = vrot.slane %v5794, %v5807
        %v5809 = vcombine.low %v4114, %v4248
        %v5810 = vcombine.high %v4114, %v4248
        %v5812 = vunpack.c.l.s4 1983009808
        %v5813 = vunpack.c.0.s8 %v5812
        %v5814 = vlaneseq
        %v5815 = vshrl.u32 %v5814, 7
        %v5816 = vsub.s32 %v5813, %v5815
        %v5817 = vrot.slane %v5809, %v5816
        %v5819 = vunpack.c.l.s4 1983009808
        %v5820 = vunpack.c.0.s8 %v5819
        %v5821 = vlaneseq
        %v5822 = vshrl.u32 %v5821, 7
        %v5823 = vsub.s32 %v5820, %v5822
        %v5824 = vrot.slane %v5810, %v5823
        %v5825 = vcombine.low %v5769, %v5785
        %v5826 = vcombine.high %v5769, %v5785
        %v5828 = vunpack.c.l.s4 1934713408
        %v5829 = vunpack.c.0.s8 %v5828
        %v5830 = vlaneseq
        %v5831 = vshrl.u32 %v5830, 7
        %v5832 = vsub.s32 %v5829, %v5831
        %v5833 = vrot.slane %v5825, %v5832
        %v5835 = vunpack.c.l.s4 1934713408
        %v5836 = vunpack.c.0.s8 %v5835
        %v5837 = vlaneseq
        %v5838 = vshrl.u32 %v5837, 7
        %v5839 = vsub.s32 %v5836, %v5838
        %v5840 = vrot.slane %v5826, %v5839
        %v5841 = vcombine.low %v5776, %v5792
        %v5842 = vcombine.high %v5776, %v5792
        %v5844 = vunpack.c.l.s4 1934713408
        %v5845 = vunpack.c.0.s8 %v5844
        %v5846 = vlaneseq
        %v5847 = vshrl.u32 %v5846, 7
        %v5848 = vsub.s32 %v5845, %v5847
        %v5849 = vrot.slane %v5841, %v5848
        %v5851 = vunpack.c.l.s4 1934713408
        %v5852 = vunpack.c.0.s8 %v5851
        %v5853 = vlaneseq
        %v5854 = vshrl.u32 %v5853, 7
        %v5855 = vsub.s32 %v5852, %v5854
        %v5856 = vrot.slane %v5842, %v5855
        %v5857 = vcombine.low %v5801, %v5817
        %v5858 = vcombine.high %v5801, %v5817
        %v5860 = vunpack.c.l.s4 1934713408
        %v5861 = vunpack.c.0.s8 %v5860
        %v5862 = vlaneseq
        %v5863 = vshrl.u32 %v5862, 7
        %v5864 = vsub.s32 %v5861, %v5863
        %v5865 = vrot.slane %v5857, %v5864
        %v5867 = vunpack.c.l.s4 1934713408
        %v5868 = vunpack.c.0.s8 %v5867
        %v5869 = vlaneseq
        %v5870 = vshrl.u32 %v5869, 7
        %v5871 = vsub.s32 %v5868, %v5870
        %v5872 = vrot.slane %v5858, %v5871
        %v5873 = vcombine.low %v5808, %v5824
        %v5874 = vcombine.high %v5808, %v5824
        %v5876 = vunpack.c.l.s4 1934713408
        %v5877 = vunpack.c.0.s8 %v5876
        %v5878 = vlaneseq
        %v5879 = vshrl.u32 %v5878, 7
        %v5880 = vsub.s32 %v5877, %v5879
        %v5881 = vrot.slane %v5873, %v5880
        %v5883 = vunpack.c.l.s4 1934713408
        %v5884 = vunpack.c.0.s8 %v5883
        %v5885 = vlaneseq
        %v5886 = vshrl.u32 %v5885, 7
        %v5887 = vsub.s32 %v5884, %v5886
        %v5888 = vrot.slane %v5874, %v5887
        %v5889 = vcombine.low %v5833, %v5865
        %v5890 = vcombine.high %v5833, %v5865
        %v5891 = vcombine.low %v5840, %v5872
        %v5892 = vcombine.high %v5840, %v5872
        %v5893 = vcombine.low %v5849, %v5881
        %v5894 = vcombine.high %v5849, %v5881
        %v5895 = vcombine.low %v5856, %v5888
        %v5896 = vcombine.high %v5856, %v5888
        %v5897 = vcombine.low %v3783, %v3917
        %v5898 = vcombine.high %v3783, %v3917
        %v5900 = vunpack.c.l.s4 1983009808
        %v5901 = vunpack.c.0.s8 %v5900
        %v5902 = vlaneseq
        %v5903 = vshrl.u32 %v5902, 7
        %v5904 = vsub.s32 %v5901, %v5903
        %v5905 = vrot.slane %v5897, %v5904
        %v5907 = vunpack.c.l.s4 1983009808
        %v5908 = vunpack.c.0.s8 %v5907
        %v5909 = vlaneseq
        %v5910 = vshrl.u32 %v5909, 7
        %v5911 = vsub.s32 %v5908, %v5910
        %v5912 = vrot.slane %v5898, %v5911
        %v5913 = vcombine.low %v3850, %v3984
        %v5914 = vcombine.high %v3850, %v3984
        %v5916 = vunpack.c.l.s4 1983009808
        %v5917 = vunpack.c.0.s8 %v5916
        %v5918 = vlaneseq
        %v5919 = vshrl.u32 %v5918, 7
        %v5920 = vsub.s32 %v5917, %v5919
        %v5921 = vrot.slane %v5913, %v5920
        %v5923 = vunpack.c.l.s4 1983009808
        %v5924 = vunpack.c.0.s8 %v5923
        %v5925 = vlaneseq
        %v5926 = vshrl.u32 %v5925, 7
        %v5927 = vsub.s32 %v5924, %v5926
        %v5928 = vrot.slane %v5914, %v5927
        %v5929 = vcombine.low %v4051, %v4185
        %v5930 = vcombine.high %v4051, %v4185
        %v5932 = vunpack.c.l.s4 1983009808
        %v5933 = vunpack.c.0.s8 %v5932
        %v5934 = vlaneseq
        %v5935 = vshrl.u32 %v5934, 7
        %v5936 = vsub.s32 %v5933, %v5935
        %v5937 = vrot.slane %v5929, %v5936
        %v5939 = vunpack.c.l.s4 1983009808
        %v5940 = vunpack.c.0.s8 %v5939
        %v5941 = vlaneseq
        %v5942 = vshrl.u32 %v5941, 7
        %v5943 = vsub.s32 %v5940, %v5942
        %v5944 = vrot.slane %v5930, %v5943
        %v5945 = vcombine.low %v4118, %v4252
        %v5946 = vcombine.high %v4118, %v4252
        %v5948 = vunpack.c.l.s4 1983009808
        %v5949 = vunpack.c.0.s8 %v5948
        %v5950 = vlaneseq
        %v5951 = vshrl.u32 %v5950, 7
        %v5952 = vsub.s32 %v5949, %v5951
        %v5953 = vrot.slane %v5945, %v5952
        %v5955 = vunpack.c.l.s4 1983009808
        %v5956 = vunpack.c.0.s8 %v5955
        %v5957 = vlaneseq
        %v5958 = vshrl.u32 %v5957, 7
        %v5959 = vsub.s32 %v5956, %v5958
        %v5960 = vrot.slane %v5946, %v5959
        %v5961 = vcombine.low %v5905, %v5921
        %v5962 = vcombine.high %v5905, %v5921
        %v5964 = vunpack.c.l.s4 1934713408
        %v5965 = vunpack.c.0.s8 %v5964
        %v5966 = vlaneseq
        %v5967 = vshrl.u32 %v5966, 7
        %v5968 = vsub.s32 %v5965, %v5967
        %v5969 = vrot.slane %v5961, %v5968
        %v5971 = vunpack.c.l.s4 1934713408
        %v5972 = vunpack.c.0.s8 %v5971
        %v5973 = vlaneseq
        %v5974 = vshrl.u32 %v5973, 7
        %v5975 = vsub.s32 %v5972, %v5974
        %v5976 = vrot.slane %v5962, %v5975
        %v5977 = vcombine.low %v5912, %v5928
        %v5978 = vcombine.high %v5912, %v5928
        %v5980 = vunpack.c.l.s4 1934713408
        %v5981 = vunpack.c.0.s8 %v5980
        %v5982 = vlaneseq
        %v5983 = vshrl.u32 %v5982, 7
        %v5984 = vsub.s32 %v5981, %v5983
        %v5985 = vrot.slane %v5977, %v5984
        %v5987 = vunpack.c.l.s4 1934713408
        %v5988 = vunpack.c.0.s8 %v5987
        %v5989 = vlaneseq
        %v5990 = vshrl.u32 %v5989, 7
        %v5991 = vsub.s32 %v5988, %v5990
        %v5992 = vrot.slane %v5978, %v5991
        %v5993 = vcombine.low %v5937, %v5953
        %v5994 = vcombine.high %v5937, %v5953
        %v5996 = vunpack.c.l.s4 1934713408
        %v5997 = vunpack.c.0.s8 %v5996
        %v5998 = vlaneseq
        %v5999 = vshrl.u32 %v5998, 7
        %v6000 = vsub.s32 %v5997, %v5999
        %v6001 = vrot.slane %v5993, %v6000
        %v6003 = vunpack.c.l.s4 1934713408
        %v6004 = vunpack.c.0.s8 %v6003
        %v6005 = vlaneseq
        %v6006 = vshrl.u32 %v6005, 7
        %v6007 = vsub.s32 %v6004, %v6006
        %v6008 = vrot.slane %v5994, %v6007
        %v6009 = vcombine.low %v5944, %v5960
        %v6010 = vcombine.high %v5944, %v5960
        %v6012 = vunpack.c.l.s4 1934713408
        %v6013 = vunpack.c.0.s8 %v6012
        %v6014 = vlaneseq
        %v6015 = vshrl.u32 %v6014, 7
        %v6016 = vsub.s32 %v6013, %v6015
        %v6017 = vrot.slane %v6009, %v6016
        %v6019 = vunpack.c.l.s4 1934713408
        %v6020 = vunpack.c.0.s8 %v6019
        %v6021 = vlaneseq
        %v6022 = vshrl.u32 %v6021, 7
        %v6023 = vsub.s32 %v6020, %v6022
        %v6024 = vrot.slane %v6010, %v6023
        %v6025 = vcombine.low %v5969, %v6001
        %v6026 = vcombine.high %v5969, %v6001
        %v6027 = vcombine.low %v5976, %v6008
        %v6028 = vcombine.high %v5976, %v6008
        %v6029 = vcombine.low %v5985, %v6017
        %v6030 = vcombine.high %v5985, %v6017
        %v6031 = vcombine.low %v5992, %v6024
        %v6032 = vcombine.high %v5992, %v6024
        %v6033 = vcombine.low %v3787, %v3921
        %v6034 = vcombine.high %v3787, %v3921
        %v6036 = vunpack.c.l.s4 1983009808
        %v6037 = vunpack.c.0.s8 %v6036
        %v6038 = vlaneseq
        %v6039 = vshrl.u32 %v6038, 7
        %v6040 = vsub.s32 %v6037, %v6039
        %v6041 = vrot.slane %v6033, %v6040
        %v6043 = vunpack.c.l.s4 1983009808
        %v6044 = vunpack.c.0.s8 %v6043
        %v6045 = vlaneseq
        %v6046 = vshrl.u32 %v6045, 7
        %v6047 = vsub.s32 %v6044, %v6046
        %v6048 = vrot.slane %v6034, %v6047
        %v6049 = vcombine.low %v3854, %v3988
        %v6050 = vcombine.high %v3854, %v3988
        %v6052 = vunpack.c.l.s4 1983009808
        %v6053 = vunpack.c.0.s8 %v6052
        %v6054 = vlaneseq
        %v6055 = vshrl.u32 %v6054, 7
        %v6056 = vsub.s32 %v6053, %v6055
        %v6057 = vrot.slane %v6049, %v6056
        %v6059 = vunpack.c.l.s4 1983009808
        %v6060 = vunpack.c.0.s8 %v6059
        %v6061 = vlaneseq
        %v6062 = vshrl.u32 %v6061, 7
        %v6063 = vsub.s32 %v6060, %v6062
        %v6064 = vrot.slane %v6050, %v6063
        %v6065 = vcombine.low %v4055, %v4189
        %v6066 = vcombine.high %v4055, %v4189
        %v6068 = vunpack.c.l.s4 1983009808
        %v6069 = vunpack.c.0.s8 %v6068
        %v6070 = vlaneseq
        %v6071 = vshrl.u32 %v6070, 7
        %v6072 = vsub.s32 %v6069, %v6071
        %v6073 = vrot.slane %v6065, %v6072
        %v6075 = vunpack.c.l.s4 1983009808
        %v6076 = vunpack.c.0.s8 %v6075
        %v6077 = vlaneseq
        %v6078 = vshrl.u32 %v6077, 7
        %v6079 = vsub.s32 %v6076, %v6078
        %v6080 = vrot.slane %v6066, %v6079
        %v6081 = vcombine.low %v4122, %v4256
        %v6082 = vcombine.high %v4122, %v4256
        %v6084 = vunpack.c.l.s4 1983009808
        %v6085 = vunpack.c.0.s8 %v6084
        %v6086 = vlaneseq
        %v6087 = vshrl.u32 %v6086, 7
        %v6088 = vsub.s32 %v6085, %v6087
        %v6089 = vrot.slane %v6081, %v6088
        %v6091 = vunpack.c.l.s4 1983009808
        %v6092 = vunpack.c.0.s8 %v6091
        %v6093 = vlaneseq
        %v6094 = vshrl.u32 %v6093, 7
        %v6095 = vsub.s32 %v6092, %v6094
        %v6096 = vrot.slane %v6082, %v6095
        %v6097 = vcombine.low %v6041, %v6057
        %v6098 = vcombine.high %v6041, %v6057
        %v6100 = vunpack.c.l.s4 1934713408
        %v6101 = vunpack.c.0.s8 %v6100
        %v6102 = vlaneseq
        %v6103 = vshrl.u32 %v6102, 7
        %v6104 = vsub.s32 %v6101, %v6103
        %v6105 = vrot.slane %v6097, %v6104
        %v6107 = vunpack.c.l.s4 1934713408
        %v6108 = vunpack.c.0.s8 %v6107
        %v6109 = vlaneseq
        %v6110 = vshrl.u32 %v6109, 7
        %v6111 = vsub.s32 %v6108, %v6110
        %v6112 = vrot.slane %v6098, %v6111
        %v6113 = vcombine.low %v6048, %v6064
        %v6114 = vcombine.high %v6048, %v6064
        %v6116 = vunpack.c.l.s4 1934713408
        %v6117 = vunpack.c.0.s8 %v6116
        %v6118 = vlaneseq
        %v6119 = vshrl.u32 %v6118, 7
        %v6120 = vsub.s32 %v6117, %v6119
        %v6121 = vrot.slane %v6113, %v6120
        %v6123 = vunpack.c.l.s4 1934713408
        %v6124 = vunpack.c.0.s8 %v6123
        %v6125 = vlaneseq
        %v6126 = vshrl.u32 %v6125, 7
        %v6127 = vsub.s32 %v6124, %v6126
        %v6128 = vrot.slane %v6114, %v6127
        %v6129 = vcombine.low %v6073, %v6089
        %v6130 = vcombine.high %v6073, %v6089
        %v6132 = vunpack.c.l.s4 1934713408
        %v6133 = vunpack.c.0.s8 %v6132
        %v6134 = vlaneseq
        %v6135 = vshrl.u32 %v6134, 7
        %v6136 = vsub.s32 %v6133, %v6135
        %v6137 = vrot.slane %v6129, %v6136
        %v6139 = vunpack.c.l.s4 1934713408
        %v6140 = vunpack.c.0.s8 %v6139
        %v6141 = vlaneseq
        %v6142 = vshrl.u32 %v6141, 7
        %v6143 = vsub.s32 %v6140, %v6142
        %v6144 = vrot.slane %v6130, %v6143
        %v6145 = vcombine.low %v6080, %v6096
        %v6146 = vcombine.high %v6080, %v6096
        %v6148 = vunpack.c.l.s4 1934713408
        %v6149 = vunpack.c.0.s8 %v6148
        %v6150 = vlaneseq
        %v6151 = vshrl.u32 %v6150, 7
        %v6152 = vsub.s32 %v6149, %v6151
        %v6153 = vrot.slane %v6145, %v6152
        %v6155 = vunpack.c.l.s4 1934713408
        %v6156 = vunpack.c.0.s8 %v6155
        %v6157 = vlaneseq
        %v6158 = vshrl.u32 %v6157, 7
        %v6159 = vsub.s32 %v6156, %v6158
        %v6160 = vrot.slane %v6146, %v6159
        %v6161 = vcombine.low %v6105, %v6137
        %v6162 = vcombine.high %v6105, %v6137
        %v6163 = vcombine.low %v6112, %v6144
        %v6164 = vcombine.high %v6112, %v6144
        %v6165 = vcombine.low %v6121, %v6153
        %v6166 = vcombine.high %v6121, %v6153
        %v6167 = vcombine.low %v6128, %v6160
        %v6168 = vcombine.high %v6128, %v6160
        %v6169 = vcombine.low %v3791, %v3925
        %v6170 = vcombine.high %v3791, %v3925
        %v6172 = vunpack.c.l.s4 1983009808
        %v6173 = vunpack.c.0.s8 %v6172
        %v6174 = vlaneseq
        %v6175 = vshrl.u32 %v6174, 7
        %v6176 = vsub.s32 %v6173, %v6175
        %v6177 = vrot.slane %v6169, %v6176
        %v6179 = vunpack.c.l.s4 1983009808
        %v6180 = vunpack.c.0.s8 %v6179
        %v6181 = vlaneseq
        %v6182 = vshrl.u32 %v6181, 7
        %v6183 = vsub.s32 %v6180, %v6182
        %v6184 = vrot.slane %v6170, %v6183
        %v6185 = vcombine.low %v3858, %v3992
        %v6186 = vcombine.high %v3858, %v3992
        %v6188 = vunpack.c.l.s4 1983009808
        %v6189 = vunpack.c.0.s8 %v6188
        %v6190 = vlaneseq
        %v6191 = vshrl.u32 %v6190, 7
        %v6192 = vsub.s32 %v6189, %v6191
        %v6193 = vrot.slane %v6185, %v6192
        %v6195 = vunpack.c.l.s4 1983009808
        %v6196 = vunpack.c.0.s8 %v6195
        %v6197 = vlaneseq
        %v6198 = vshrl.u32 %v6197, 7
        %v6199 = vsub.s32 %v6196, %v6198
        %v6200 = vrot.slane %v6186, %v6199
        %v6201 = vcombine.low %v4059, %v4193
        %v6202 = vcombine.high %v4059, %v4193
        %v6204 = vunpack.c.l.s4 1983009808
        %v6205 = vunpack.c.0.s8 %v6204
        %v6206 = vlaneseq
        %v6207 = vshrl.u32 %v6206, 7
        %v6208 = vsub.s32 %v6205, %v6207
        %v6209 = vrot.slane %v6201, %v6208
        %v6211 = vunpack.c.l.s4 1983009808
        %v6212 = vunpack.c.0.s8 %v6211
        %v6213 = vlaneseq
        %v6214 = vshrl.u32 %v6213, 7
        %v6215 = vsub.s32 %v6212, %v6214
        %v6216 = vrot.slane %v6202, %v6215
        %v6217 = vcombine.low %v4126, %v4260
        %v6218 = vcombine.high %v4126, %v4260
        %v6220 = vunpack.c.l.s4 1983009808
        %v6221 = vunpack.c.0.s8 %v6220
        %v6222 = vlaneseq
        %v6223 = vshrl.u32 %v6222, 7
        %v6224 = vsub.s32 %v6221, %v6223
        %v6225 = vrot.slane %v6217, %v6224
        %v6227 = vunpack.c.l.s4 1983009808
        %v6228 = vunpack.c.0.s8 %v6227
        %v6229 = vlaneseq
        %v6230 = vshrl.u32 %v6229, 7
        %v6231 = vsub.s32 %v6228, %v6230
        %v6232 = vrot.slane %v6218, %v6231
        %v6233 = vcombine.low %v6177, %v6193
        %v6234 = vcombine.high %v6177, %v6193
        %v6236 = vunpack.c.l.s4 1934713408
        %v6237 = vunpack.c.0.s8 %v6236
        %v6238 = vlaneseq
        %v6239 = vshrl.u32 %v6238, 7
        %v6240 = vsub.s32 %v6237, %v6239
        %v6241 = vrot.slane %v6233, %v6240
        %v6243 = vunpack.c.l.s4 1934713408
        %v6244 = vunpack.c.0.s8 %v6243
        %v6245 = vlaneseq
        %v6246 = vshrl.u32 %v6245, 7
        %v6247 = vsub.s32 %v6244, %v6246
        %v6248 = vrot.slane %v6234, %v6247
        %v6249 = vcombine.low %v6184, %v6200
        %v6250 = vcombine.high %v6184, %v6200
        %v6252 = vunpack.c.l.s4 1934713408
        %v6253 = vunpack.c.0.s8 %v6252
        %v6254 = vlaneseq
        %v6255 = vshrl.u32 %v6254, 7
        %v6256 = vsub.s32 %v6253, %v6255
        %v6257 = vrot.slane %v6249, %v6256
        %v6259 = vunpack.c.l.s4 1934713408
        %v6260 = vunpack.c.0.s8 %v6259
        %v6261 = vlaneseq
        %v6262 = vshrl.u32 %v6261, 7
        %v6263 = vsub.s32 %v6260, %v6262
        %v6264 = vrot.slane %v6250, %v6263
        %v6265 = vcombine.low %v6209, %v6225
        %v6266 = vcombine.high %v6209, %v6225
        %v6268 = vunpack.c.l.s4 1934713408
        %v6269 = vunpack.c.0.s8 %v6268
        %v6270 = vlaneseq
        %v6271 = vshrl.u32 %v6270, 7
        %v6272 = vsub.s32 %v6269, %v6271
        %v6273 = vrot.slane %v6265, %v6272
        %v6275 = vunpack.c.l.s4 1934713408
        %v6276 = vunpack.c.0.s8 %v6275
        %v6277 = vlaneseq
        %v6278 = vshrl.u32 %v6277, 7
        %v6279 = vsub.s32 %v6276, %v6278
        %v6280 = vrot.slane %v6266, %v6279
        %v6281 = vcombine.low %v6216, %v6232
        %v6282 = vcombine.high %v6216, %v6232
        %v6284 = vunpack.c.l.s4 1934713408
        %v6285 = vunpack.c.0.s8 %v6284
        %v6286 = vlaneseq
        %v6287 = vshrl.u32 %v6286, 7
        %v6288 = vsub.s32 %v6285, %v6287
        %v6289 = vrot.slane %v6281, %v6288
        %v6291 = vunpack.c.l.s4 1934713408
        %v6292 = vunpack.c.0.s8 %v6291
        %v6293 = vlaneseq
        %v6294 = vshrl.u32 %v6293, 7
        %v6295 = vsub.s32 %v6292, %v6294
        %v6296 = vrot.slane %v6282, %v6295
        %v6297 = vcombine.low %v6241, %v6273
        %v6298 = vcombine.high %v6241, %v6273
        %v6299 = vcombine.low %v6248, %v6280
        %v6300 = vcombine.high %v6248, %v6280
        %v6301 = vcombine.low %v6257, %v6289
        %v6302 = vcombine.high %v6257, %v6289
        %v6303 = vcombine.low %v6264, %v6296
        %v6304 = vcombine.high %v6264, %v6296
        %v6305 = vcombine.low %v3795, %v3929
        %v6306 = vcombine.high %v3795, %v3929
        %v6308 = vunpack.c.l.s4 1983009808
        %v6309 = vunpack.c.0.s8 %v6308
        %v6310 = vlaneseq
        %v6311 = vshrl.u32 %v6310, 7
        %v6312 = vsub.s32 %v6309, %v6311
        %v6313 = vrot.slane %v6305, %v6312
        %v6315 = vunpack.c.l.s4 1983009808
        %v6316 = vunpack.c.0.s8 %v6315
        %v6317 = vlaneseq
        %v6318 = vshrl.u32 %v6317, 7
        %v6319 = vsub.s32 %v6316, %v6318
        %v6320 = vrot.slane %v6306, %v6319
        %v6321 = vcombine.low %v3862, %v3996
        %v6322 = vcombine.high %v3862, %v3996
        %v6324 = vunpack.c.l.s4 1983009808
        %v6325 = vunpack.c.0.s8 %v6324
        %v6326 = vlaneseq
        %v6327 = vshrl.u32 %v6326, 7
        %v6328 = vsub.s32 %v6325, %v6327
        %v6329 = vrot.slane %v6321, %v6328
        %v6331 = vunpack.c.l.s4 1983009808
        %v6332 = vunpack.c.0.s8 %v6331
        %v6333 = vlaneseq
        %v6334 = vshrl.u32 %v6333, 7
        %v6335 = vsub.s32 %v6332, %v6334
        %v6336 = vrot.slane %v6322, %v6335
        %v6337 = vcombine.low %v4063, %v4197
        %v6338 = vcombine.high %v4063, %v4197
        %v6340 = vunpack.c.l.s4 1983009808
        %v6341 = vunpack.c.0.s8 %v6340
        %v6342 = vlaneseq
        %v6343 = vshrl.u32 %v6342, 7
        %v6344 = vsub.s32 %v6341, %v6343
        %v6345 = vrot.slane %v6337, %v6344
        %v6347 = vunpack.c.l.s4 1983009808
        %v6348 = vunpack.c.0.s8 %v6347
        %v6349 = vlaneseq
        %v6350 = vshrl.u32 %v6349, 7
        %v6351 = vsub.s32 %v6348, %v6350
        %v6352 = vrot.slane %v6338, %v6351
        %v6353 = vcombine.low %v4130, %v4264
        %v6354 = vcombine.high %v4130, %v4264
        %v6356 = vunpack.c.l.s4 1983009808
        %v6357 = vunpack.c.0.s8 %v6356
        %v6358 = vlaneseq
        %v6359 = vshrl.u32 %v6358, 7
        %v6360 = vsub.s32 %v6357, %v6359
        %v6361 = vrot.slane %v6353, %v6360
        %v6363 = vunpack.c.l.s4 1983009808
        %v6364 = vunpack.c.0.s8 %v6363
        %v6365 = vlaneseq
        %v6366 = vshrl.u32 %v6365, 7
        %v6367 = vsub.s32 %v6364, %v6366
        %v6368 = vrot.slane %v6354, %v6367
        %v6369 = vcombine.low %v6313, %v6329
        %v6370 = vcombine.high %v6313, %v6329
        %v6372 = vunpack.c.l.s4 1934713408
        %v6373 = vunpack.c.0.s8 %v6372
        %v6374 = vlaneseq
        %v6375 = vshrl.u32 %v6374, 7
        %v6376 = vsub.s32 %v6373, %v6375
        %v6377 = vrot.slane %v6369, %v6376
        %v6379 = vunpack.c.l.s4 1934713408
        %v6380 = vunpack.c.0.s8 %v6379
        %v6381 = vlaneseq
        %v6382 = vshrl.u32 %v6381, 7
        %v6383 = vsub.s32 %v6380, %v6382
        %v6384 = vrot.slane %v6370, %v6383
        %v6385 = vcombine.low %v6320, %v6336
        %v6386 = vcombine.high %v6320, %v6336
        %v6388 = vunpack.c.l.s4 1934713408
        %v6389 = vunpack.c.0.s8 %v6388
        %v6390 = vlaneseq
        %v6391 = vshrl.u32 %v6390, 7
        %v6392 = vsub.s32 %v6389, %v6391
        %v6393 = vrot.slane %v6385, %v6392
        %v6395 = vunpack.c.l.s4 1934713408
        %v6396 = vunpack.c.0.s8 %v6395
        %v6397 = vlaneseq
        %v6398 = vshrl.u32 %v6397, 7
        %v6399 = vsub.s32 %v6396, %v6398
        %v6400 = vrot.slane %v6386, %v6399
        %v6401 = vcombine.low %v6345, %v6361
        %v6402 = vcombine.high %v6345, %v6361
        %v6404 = vunpack.c.l.s4 1934713408
        %v6405 = vunpack.c.0.s8 %v6404
        %v6406 = vlaneseq
        %v6407 = vshrl.u32 %v6406, 7
        %v6408 = vsub.s32 %v6405, %v6407
        %v6409 = vrot.slane %v6401, %v6408
        %v6411 = vunpack.c.l.s4 1934713408
        %v6412 = vunpack.c.0.s8 %v6411
        %v6413 = vlaneseq
        %v6414 = vshrl.u32 %v6413, 7
        %v6415 = vsub.s32 %v6412, %v6414
        %v6416 = vrot.slane %v6402, %v6415
        %v6417 = vcombine.low %v6352, %v6368
        %v6418 = vcombine.high %v6352, %v6368
        %v6420 = vunpack.c.l.s4 1934713408
        %v6421 = vunpack.c.0.s8 %v6420
        %v6422 = vlaneseq
        %v6423 = vshrl.u32 %v6422, 7
        %v6424 = vsub.s32 %v6421, %v6423
        %v6425 = vrot.slane %v6417, %v6424
        %v6427 = vunpack.c.l.s4 1934713408
        %v6428 = vunpack.c.0.s8 %v6427
        %v6429 = vlaneseq
        %v6430 = vshrl.u32 %v6429, 7
        %v6431 = vsub.s32 %v6428, %v6430
        %v6432 = vrot.slane %v6418, %v6431
        %v6433 = vcombine.low %v6377, %v6409
        %v6434 = vcombine.high %v6377, %v6409
        %v6435 = vcombine.low %v6384, %v6416
        %v6436 = vcombine.high %v6384, %v6416
        %v6437 = vcombine.low %v6393, %v6425
        %v6438 = vcombine.high %v6393, %v6425
        %v6439 = vcombine.low %v6400, %v6432
        %v6440 = vcombine.high %v6400, %v6432
        %6442 = vrot.lane.b32.xlu0 %v4394, 2
        %v6443 = vpop.permute.xlu0 %6442
        %6446 = vrot.lane.b32.xlu0 %v4395, 4
        %v6447 = vpop.permute.xlu0 %6446
        %6450 = vrot.lane.b32.xlu0 %v4396, 6
        %v6451 = vpop.permute.xlu0 %6450
        %6454 = vrot.lane.b32.xlu0 %v4397, 8
        %v6455 = vpop.permute.xlu0 %6454
        %6458 = vrot.lane.b32.xlu0 %v4398, 10
        %v6459 = vpop.permute.xlu0 %6458
        %6462 = vrot.lane.b32.xlu0 %v4399, 12
        %v6463 = vpop.permute.xlu0 %6462
        %6466 = vrot.lane.b32.xlu0 %v4400, 14
        %v6467 = vpop.permute.xlu0 %6466
        %6470 = vrot.lane.b32.xlu0 %v4529, 16
        %v6471 = vpop.permute.xlu0 %6470
        %6474 = vrot.lane.b32.xlu0 %v4530, 18
        %v6475 = vpop.permute.xlu0 %6474
        %6478 = vrot.lane.b32.xlu0 %v4531, 20
        %v6479 = vpop.permute.xlu0 %6478
        %6482 = vrot.lane.b32.xlu0 %v4532, 22
        %v6483 = vpop.permute.xlu0 %6482
        %6486 = vrot.lane.b32.xlu0 %v4533, 24
        %v6487 = vpop.permute.xlu0 %6486
        %6490 = vrot.lane.b32.xlu0 %v4534, 26
        %v6491 = vpop.permute.xlu0 %6490
        %6494 = vrot.lane.b32.xlu0 %v4535, 28
        %v6495 = vpop.permute.xlu0 %6494
        %6498 = vrot.lane.b32.xlu0 %v4536, 30
        %v6499 = vpop.permute.xlu0 %6498
        %6502 = vrot.lane.b32.xlu0 %v4665, 32
        %v6503 = vpop.permute.xlu0 %6502
        %6506 = vrot.lane.b32.xlu0 %v4666, 34
        %v6507 = vpop.permute.xlu0 %6506
        %6510 = vrot.lane.b32.xlu0 %v4667, 36
        %v6511 = vpop.permute.xlu0 %6510
        %6514 = vrot.lane.b32.xlu0 %v4668, 38
        %v6515 = vpop.permute.xlu0 %6514
        %6518 = vrot.lane.b32.xlu0 %v4669, 40
        %v6519 = vpop.permute.xlu0 %6518
        %6522 = vrot.lane.b32.xlu0 %v4670, 42
        %v6523 = vpop.permute.xlu0 %6522
        %6526 = vrot.lane.b32.xlu0 %v4671, 44
        %v6527 = vpop.permute.xlu0 %6526
        %6530 = vrot.lane.b32.xlu0 %v4672, 46
        %v6531 = vpop.permute.xlu0 %6530
        %6534 = vrot.lane.b32.xlu0 %v4801, 48
        %v6535 = vpop.permute.xlu0 %6534
        %6538 = vrot.lane.b32.xlu0 %v4802, 50
        %v6539 = vpop.permute.xlu0 %6538
        %6542 = vrot.lane.b32.xlu0 %v4803, 52
        %v6543 = vpop.permute.xlu0 %6542
        %6546 = vrot.lane.b32.xlu0 %v4804, 54
        %v6547 = vpop.permute.xlu0 %6546
        %6550 = vrot.lane.b32.xlu0 %v4805, 56
        %v6551 = vpop.permute.xlu0 %6550
        %6554 = vrot.lane.b32.xlu0 %v4806, 58
        %v6555 = vpop.permute.xlu0 %6554
        %6558 = vrot.lane.b32.xlu0 %v4807, 60
        %v6559 = vpop.permute.xlu0 %6558
        %6562 = vrot.lane.b32.xlu0 %v4808, 62
        %v6563 = vpop.permute.xlu0 %6562
        %6566 = vrot.lane.b32.xlu0 %v4937, 64
        %v6567 = vpop.permute.xlu0 %6566
        %6570 = vrot.lane.b32.xlu0 %v4938, 66
        %v6571 = vpop.permute.xlu0 %6570
        %6574 = vrot.lane.b32.xlu0 %v4939, 68
        %v6575 = vpop.permute.xlu0 %6574
        %6578 = vrot.lane.b32.xlu0 %v4940, 70
        %v6579 = vpop.permute.xlu0 %6578
        %6582 = vrot.lane.b32.xlu0 %v4941, 72
        %v6583 = vpop.permute.xlu0 %6582
        %6586 = vrot.lane.b32.xlu0 %v4942, 74
        %v6587 = vpop.permute.xlu0 %6586
        %6590 = vrot.lane.b32.xlu0 %v4943, 76
        %v6591 = vpop.permute.xlu0 %6590
        %6594 = vrot.lane.b32.xlu0 %v4944, 78
        %v6595 = vpop.permute.xlu0 %6594
        %6598 = vrot.lane.b32.xlu0 %v5073, 80
        %v6599 = vpop.permute.xlu0 %6598
        %6602 = vrot.lane.b32.xlu0 %v5074, 82
        %v6603 = vpop.permute.xlu0 %6602
        %6606 = vrot.lane.b32.xlu0 %v5075, 84
        %v6607 = vpop.permute.xlu0 %6606
        %6610 = vrot.lane.b32.xlu0 %v5076, 86
        %v6611 = vpop.permute.xlu0 %6610
        %6614 = vrot.lane.b32.xlu0 %v5077, 88
        %v6615 = vpop.permute.xlu0 %6614
        %6618 = vrot.lane.b32.xlu0 %v5078, 90
        %v6619 = vpop.permute.xlu0 %6618
        %6622 = vrot.lane.b32.xlu0 %v5079, 92
        %v6623 = vpop.permute.xlu0 %6622
        %6626 = vrot.lane.b32.xlu0 %v5080, 94
        %v6627 = vpop.permute.xlu0 %6626
        %6630 = vrot.lane.b32.xlu0 %v5209, 96
        %v6631 = vpop.permute.xlu0 %6630
        %6634 = vrot.lane.b32.xlu0 %v5210, 98
        %v6635 = vpop.permute.xlu0 %6634
        %6638 = vrot.lane.b32.xlu0 %v5211, 100
        %v6639 = vpop.permute.xlu0 %6638
        %6642 = vrot.lane.b32.xlu0 %v5212, 102
        %v6643 = vpop.permute.xlu0 %6642
        %6646 = vrot.lane.b32.xlu0 %v5213, 104
        %v6647 = vpop.permute.xlu0 %6646
        %6650 = vrot.lane.b32.xlu0 %v5214, 106
        %v6651 = vpop.permute.xlu0 %6650
        %6654 = vrot.lane.b32.xlu0 %v5215, 108
        %v6655 = vpop.permute.xlu0 %6654
        %6658 = vrot.lane.b32.xlu0 %v5216, 110
        %v6659 = vpop.permute.xlu0 %6658
        %6662 = vrot.lane.b32.xlu0 %v5345, 112
        %v6663 = vpop.permute.xlu0 %6662
        %6666 = vrot.lane.b32.xlu0 %v5346, 114
        %v6667 = vpop.permute.xlu0 %6666
        %6670 = vrot.lane.b32.xlu0 %v5347, 116
        %v6671 = vpop.permute.xlu0 %6670
        %6674 = vrot.lane.b32.xlu0 %v5348, 118
        %v6675 = vpop.permute.xlu0 %6674
        %6678 = vrot.lane.b32.xlu0 %v5349, 120
        %v6679 = vpop.permute.xlu0 %6678
        %6682 = vrot.lane.b32.xlu0 %v5350, 122
        %v6683 = vpop.permute.xlu0 %6682
        %6686 = vrot.lane.b32.xlu0 %v5351, 124
        %v6687 = vpop.permute.xlu0 %6686
        %6690 = vrot.lane.b32.xlu0 %v5352, 126
        %v6691 = vpop.permute.xlu0 %6690
        %6694 = vrot.lane.b32.xlu0 %v5482, 2
        %v6695 = vpop.permute.xlu0 %6694
        %6698 = vrot.lane.b32.xlu0 %v5483, 4
        %v6699 = vpop.permute.xlu0 %6698
        %6702 = vrot.lane.b32.xlu0 %v5484, 6
        %v6703 = vpop.permute.xlu0 %6702
        %6706 = vrot.lane.b32.xlu0 %v5485, 8
        %v6707 = vpop.permute.xlu0 %6706
        %6710 = vrot.lane.b32.xlu0 %v5486, 10
        %v6711 = vpop.permute.xlu0 %6710
        %6714 = vrot.lane.b32.xlu0 %v5487, 12
        %v6715 = vpop.permute.xlu0 %6714
        %6718 = vrot.lane.b32.xlu0 %v5488, 14
        %v6719 = vpop.permute.xlu0 %6718
        %6722 = vrot.lane.b32.xlu0 %v5617, 16
        %v6723 = vpop.permute.xlu0 %6722
        %6726 = vrot.lane.b32.xlu0 %v5618, 18
        %v6727 = vpop.permute.xlu0 %6726
        %6730 = vrot.lane.b32.xlu0 %v5619, 20
        %v6731 = vpop.permute.xlu0 %6730
        %6734 = vrot.lane.b32.xlu0 %v5620, 22
        %v6735 = vpop.permute.xlu0 %6734
        %6738 = vrot.lane.b32.xlu0 %v5621, 24
        %v6739 = vpop.permute.xlu0 %6738
        %6742 = vrot.lane.b32.xlu0 %v5622, 26
        %v6743 = vpop.permute.xlu0 %6742
        %6746 = vrot.lane.b32.xlu0 %v5623, 28
        %v6747 = vpop.permute.xlu0 %6746
        %6750 = vrot.lane.b32.xlu0 %v5624, 30
        %v6751 = vpop.permute.xlu0 %6750
        %6754 = vrot.lane.b32.xlu0 %v5753, 32
        %v6755 = vpop.permute.xlu0 %6754
        %6758 = vrot.lane.b32.xlu0 %v5754, 34
        %v6759 = vpop.permute.xlu0 %6758
        %6762 = vrot.lane.b32.xlu0 %v5755, 36
        %v6763 = vpop.permute.xlu0 %6762
        %6766 = vrot.lane.b32.xlu0 %v5756, 38
        %v6767 = vpop.permute.xlu0 %6766
        %6770 = vrot.lane.b32.xlu0 %v5757, 40
        %v6771 = vpop.permute.xlu0 %6770
        %6774 = vrot.lane.b32.xlu0 %v5758, 42
        %v6775 = vpop.permute.xlu0 %6774
        %6778 = vrot.lane.b32.xlu0 %v5759, 44
        %v6779 = vpop.permute.xlu0 %6778
        %6782 = vrot.lane.b32.xlu0 %v5760, 46
        %v6783 = vpop.permute.xlu0 %6782
        %6786 = vrot.lane.b32.xlu0 %v5889, 48
        %v6787 = vpop.permute.xlu0 %6786
        %6790 = vrot.lane.b32.xlu0 %v5890, 50
        %v6791 = vpop.permute.xlu0 %6790
        %6794 = vrot.lane.b32.xlu0 %v5891, 52
        %v6795 = vpop.permute.xlu0 %6794
        %6798 = vrot.lane.b32.xlu0 %v5892, 54
        %v6799 = vpop.permute.xlu0 %6798
        %6802 = vrot.lane.b32.xlu0 %v5893, 56
        %v6803 = vpop.permute.xlu0 %6802
        %6806 = vrot.lane.b32.xlu0 %v5894, 58
        %v6807 = vpop.permute.xlu0 %6806
        %6810 = vrot.lane.b32.xlu0 %v5895, 60
        %v6811 = vpop.permute.xlu0 %6810
        %6814 = vrot.lane.b32.xlu0 %v5896, 62
        %v6815 = vpop.permute.xlu0 %6814
        %6818 = vrot.lane.b32.xlu0 %v6025, 64
        %v6819 = vpop.permute.xlu0 %6818
        %6822 = vrot.lane.b32.xlu0 %v6026, 66
        %v6823 = vpop.permute.xlu0 %6822
        %6826 = vrot.lane.b32.xlu0 %v6027, 68
        %v6827 = vpop.permute.xlu0 %6826
        %6830 = vrot.lane.b32.xlu0 %v6028, 70
        %v6831 = vpop.permute.xlu0 %6830
        %6834 = vrot.lane.b32.xlu0 %v6029, 72
        %v6835 = vpop.permute.xlu0 %6834
        %6838 = vrot.lane.b32.xlu0 %v6030, 74
        %v6839 = vpop.permute.xlu0 %6838
        %6842 = vrot.lane.b32.xlu0 %v6031, 76
        %v6843 = vpop.permute.xlu0 %6842
        %6846 = vrot.lane.b32.xlu0 %v6032, 78
        %v6847 = vpop.permute.xlu0 %6846
        %6850 = vrot.lane.b32.xlu0 %v6161, 80
        %v6851 = vpop.permute.xlu0 %6850
        %6854 = vrot.lane.b32.xlu0 %v6162, 82
        %v6855 = vpop.permute.xlu0 %6854
        %6858 = vrot.lane.b32.xlu0 %v6163, 84
        %v6859 = vpop.permute.xlu0 %6858
        %6862 = vrot.lane.b32.xlu0 %v6164, 86
        %v6863 = vpop.permute.xlu0 %6862
        %6866 = vrot.lane.b32.xlu0 %v6165, 88
        %v6867 = vpop.permute.xlu0 %6866
        %6870 = vrot.lane.b32.xlu0 %v6166, 90
        %v6871 = vpop.permute.xlu0 %6870
        %6874 = vrot.lane.b32.xlu0 %v6167, 92
        %v6875 = vpop.permute.xlu0 %6874
        %6878 = vrot.lane.b32.xlu0 %v6168, 94
        %v6879 = vpop.permute.xlu0 %6878
        %6882 = vrot.lane.b32.xlu0 %v6297, 96
        %v6883 = vpop.permute.xlu0 %6882
        %6886 = vrot.lane.b32.xlu0 %v6298, 98
        %v6887 = vpop.permute.xlu0 %6886
        %6890 = vrot.lane.b32.xlu0 %v6299, 100
        %v6891 = vpop.permute.xlu0 %6890
        %6894 = vrot.lane.b32.xlu0 %v6300, 102
        %v6895 = vpop.permute.xlu0 %6894
        %6898 = vrot.lane.b32.xlu0 %v6301, 104
        %v6899 = vpop.permute.xlu0 %6898
        %6902 = vrot.lane.b32.xlu0 %v6302, 106
        %v6903 = vpop.permute.xlu0 %6902
        %6906 = vrot.lane.b32.xlu0 %v6303, 108
        %v6907 = vpop.permute.xlu0 %6906
        %6910 = vrot.lane.b32.xlu0 %v6304, 110
        %v6911 = vpop.permute.xlu0 %6910
        %6914 = vrot.lane.b32.xlu0 %v6433, 112
        %v6915 = vpop.permute.xlu0 %6914
        %6918 = vrot.lane.b32.xlu0 %v6434, 114
        %v6919 = vpop.permute.xlu0 %6918
        %6922 = vrot.lane.b32.xlu0 %v6435, 116
        %v6923 = vpop.permute.xlu0 %6922
        %6926 = vrot.lane.b32.xlu0 %v6436, 118
        %v6927 = vpop.permute.xlu0 %6926
        %6930 = vrot.lane.b32.xlu0 %v6437, 120
        %v6931 = vpop.permute.xlu0 %6930
        %6934 = vrot.lane.b32.xlu0 %v6438, 122
        %v6935 = vpop.permute.xlu0 %6934
        %6938 = vrot.lane.b32.xlu0 %v6439, 124
        %v6939 = vpop.permute.xlu0 %6938
        %6942 = vrot.lane.b32.xlu0 %v6440, 126
        %v6943 = vpop.permute.xlu0 %6942
        %v6945 = vsel %vm3535, %v4393, %v6443
        %v6946 = vsel %vm3537, %v6945, %v6447
        %v6947 = vsel %vm3539, %v6946, %v6451
        %v6948 = vsel %vm3541, %v6947, %v6455
        %v6949 = vsel %vm3543, %v6948, %v6459
        %v6950 = vsel %vm3545, %v6949, %v6463
        %v6951 = vsel %vm3547, %v6950, %v6467
        %v6952 = vsel %vm3549, %v6951, %v6471
        %v6953 = vsel %vm3551, %v6952, %v6475
        %v6954 = vsel %vm3553, %v6953, %v6479
        %v6955 = vsel %vm3555, %v6954, %v6483
        %v6956 = vsel %vm3557, %v6955, %v6487
        %v6957 = vsel %vm3559, %v6956, %v6491
        %v6958 = vsel %vm3561, %v6957, %v6495
        %v6959 = vsel %vm3563, %v6958, %v6499
        %v6960 = vsel %vm3565, %v6959, %v6503
        %v6961 = vsel %vm3567, %v6960, %v6507
        %v6962 = vsel %vm3569, %v6961, %v6511
        %v6963 = vsel %vm3571, %v6962, %v6515
        %v6964 = vsel %vm3573, %v6963, %v6519
        %v6965 = vsel %vm3575, %v6964, %v6523
        %v6966 = vsel %vm3577, %v6965, %v6527
        %v6967 = vsel %vm3579, %v6966, %v6531
        %v6968 = vsel %vm3581, %v6967, %v6535
        %v6969 = vsel %vm3583, %v6968, %v6539
        %v6970 = vsel %vm3585, %v6969, %v6543
        %v6971 = vsel %vm3587, %v6970, %v6547
        %v6972 = vsel %vm3589, %v6971, %v6551
        %v6973 = vsel %vm3591, %v6972, %v6555
        %v6974 = vsel %vm3593, %v6973, %v6559
        %v6975 = vsel %vm3595, %v6974, %v6563
        %v6976 = vsel %vm3597, %v6975, %v6567
        %v6977 = vsel %vm3599, %v6976, %v6571
        %v6978 = vsel %vm3601, %v6977, %v6575
        %v6979 = vsel %vm3603, %v6978, %v6579
        %v6980 = vsel %vm3605, %v6979, %v6583
        %v6981 = vsel %vm3607, %v6980, %v6587
        %v6982 = vsel %vm3609, %v6981, %v6591
        %v6983 = vsel %vm3611, %v6982, %v6595
        %v6984 = vsel %vm3613, %v6983, %v6599
        %v6985 = vsel %vm3615, %v6984, %v6603
        %v6986 = vsel %vm3617, %v6985, %v6607
        %v6987 = vsel %vm3619, %v6986, %v6611
        %v6988 = vsel %vm3621, %v6987, %v6615
        %v6989 = vsel %vm3623, %v6988, %v6619
        %v6990 = vsel %vm3625, %v6989, %v6623
        %v6991 = vsel %vm3627, %v6990, %v6627
        %v6992 = vsel %vm3629, %v6991, %v6631
        %v6993 = vsel %vm3631, %v6992, %v6635
        %v6994 = vsel %vm3633, %v6993, %v6639
        %v6995 = vsel %vm3635, %v6994, %v6643
        %v6996 = vsel %vm3637, %v6995, %v6647
        %v6997 = vsel %vm3639, %v6996, %v6651
        %v6998 = vsel %vm3641, %v6997, %v6655
        %v6999 = vsel %vm3643, %v6998, %v6659
        %v7000 = vsel %vm3645, %v6999, %v6663
        %v7001 = vsel %vm3647, %v7000, %v6667
        %v7002 = vsel %vm3649, %v7001, %v6671
        %v7003 = vsel %vm3651, %v7002, %v6675
        %v7004 = vsel %vm3653, %v7003, %v6679
        %v7005 = vsel %vm3655, %v7004, %v6683
        %v7006 = vsel %vm3657, %v7005, %v6687
        %v7007 = vsel %vm3659, %v7006, %v6691
        %v7008 = vsel %vm3535, %v5481, %v6695
        %v7009 = vsel %vm3537, %v7008, %v6699
        %v7010 = vsel %vm3539, %v7009, %v6703
        %v7011 = vsel %vm3541, %v7010, %v6707
        %v7012 = vsel %vm3543, %v7011, %v6711
        %v7013 = vsel %vm3545, %v7012, %v6715
        %v7014 = vsel %vm3547, %v7013, %v6719
        %v7015 = vsel %vm3549, %v7014, %v6723
        %v7016 = vsel %vm3551, %v7015, %v6727
        %v7017 = vsel %vm3553, %v7016, %v6731
        %v7018 = vsel %vm3555, %v7017, %v6735
        %v7019 = vsel %vm3557, %v7018, %v6739
        %v7020 = vsel %vm3559, %v7019, %v6743
        %v7021 = vsel %vm3561, %v7020, %v6747
        %v7022 = vsel %vm3563, %v7021, %v6751
        %v7023 = vsel %vm3565, %v7022, %v6755
        %v7024 = vsel %vm3567, %v7023, %v6759
        %v7025 = vsel %vm3569, %v7024, %v6763
        %v7026 = vsel %vm3571, %v7025, %v6767
        %v7027 = vsel %vm3573, %v7026, %v6771
        %v7028 = vsel %vm3575, %v7027, %v6775
        %v7029 = vsel %vm3577, %v7028, %v6779
        %v7030 = vsel %vm3579, %v7029, %v6783
        %v7031 = vsel %vm3581, %v7030, %v6787
        %v7032 = vsel %vm3583, %v7031, %v6791
        %v7033 = vsel %vm3585, %v7032, %v6795
        %v7034 = vsel %vm3587, %v7033, %v6799
        %v7035 = vsel %vm3589, %v7034, %v6803
        %v7036 = vsel %vm3591, %v7035, %v6807
        %v7037 = vsel %vm3593, %v7036, %v6811
        %v7038 = vsel %vm3595, %v7037, %v6815
        %v7039 = vsel %vm3597, %v7038, %v6819
        %v7040 = vsel %vm3599, %v7039, %v6823
        %v7041 = vsel %vm3601, %v7040, %v6827
        %v7042 = vsel %vm3603, %v7041, %v6831
        %v7043 = vsel %vm3605, %v7042, %v6835
        %v7044 = vsel %vm3607, %v7043, %v6839
        %v7045 = vsel %vm3609, %v7044, %v6843
        %v7046 = vsel %vm3611, %v7045, %v6847
        %v7047 = vsel %vm3613, %v7046, %v6851
        %v7048 = vsel %vm3615, %v7047, %v6855
        %v7049 = vsel %vm3617, %v7048, %v6859
        %v7050 = vsel %vm3619, %v7049, %v6863
        %v7051 = vsel %vm3621, %v7050, %v6867
        %v7052 = vsel %vm3623, %v7051, %v6871
        %v7053 = vsel %vm3625, %v7052, %v6875
        %v7054 = vsel %vm3627, %v7053, %v6879
        %v7055 = vsel %vm3629, %v7054, %v6883
        %v7056 = vsel %vm3631, %v7055, %v6887
        %v7057 = vsel %vm3633, %v7056, %v6891
        %v7058 = vsel %vm3635, %v7057, %v6895
        %v7059 = vsel %vm3637, %v7058, %v6899
        %v7060 = vsel %vm3639, %v7059, %v6903
        %v7061 = vsel %vm3641, %v7060, %v6907
        %v7062 = vsel %vm3643, %v7061, %v6911
        %v7063 = vsel %vm3645, %v7062, %v6915
        %v7064 = vsel %vm3647, %v7063, %v6919
        %v7065 = vsel %vm3649, %v7064, %v6923
        %v7066 = vsel %vm3651, %v7065, %v6927
        %v7067 = vsel %vm3653, %v7066, %v6931
        %v7068 = vsel %vm3655, %v7067, %v6935
        %v7069 = vsel %vm3657, %v7068, %v6939
        %v7070 = vsel %vm3659, %v7069, %v6943
        %v7071 = vadd.f32 %v7007, %v3724
        %v7072 = vadd.f32 %v7070, %v3725
        %7073 = vst [vmem:[%s282] sm:$0xff] %v7071
        %7074 = vst [vmem:[%s282 + $0x8] sm:$0xff] %v7072
        %v7075 = vmul.f32 %v311, 2.0
        %v7076 = vadd.f32 %v3726, %v7075
        %v7077 = vlaneseq
        %v7078 = vshrl.u32 %v7077, 7
        %v7079 = vsub.s32 0, %v7078
        %v7080 = vrot.slane %v7076, %v7079
        %7082 = vbcast.lane.b32.xlu0 %v7080, 256
        %v7083 = vpop.permute.xlu0 %7082
        %s7085 = sor.u32 256, 8
        %7086 = vbcast.lane.b32.xlu0 %v7080, %s7085
        %v7087 = vpop.permute.xlu0 %7086
        %s7089 = sor.u32 256, 16
        %7090 = vbcast.lane.b32.xlu0 %v7080, %s7089
        %v7091 = vpop.permute.xlu0 %7090
        %s7093 = sor.u32 256, 24
        %7094 = vbcast.lane.b32.xlu0 %v7080, %s7093
        %v7095 = vpop.permute.xlu0 %7094
        %s7097 = sor.u32 256, 32
        %7098 = vbcast.lane.b32.xlu0 %v7080, %s7097
        %v7099 = vpop.permute.xlu0 %7098
        %s7101 = sor.u32 256, 40
        %7102 = vbcast.lane.b32.xlu0 %v7080, %s7101
        %v7103 = vpop.permute.xlu0 %7102
        %s7105 = sor.u32 256, 48
        %7106 = vbcast.lane.b32.xlu0 %v7080, %s7105
        %v7107 = vpop.permute.xlu0 %7106
        %s7109 = sor.u32 256, 56
        %7110 = vbcast.lane.b32.xlu0 %v7080, %s7109
        %v7111 = vpop.permute.xlu0 %7110
        %s7113 = sor.u32 256, 64
        %7114 = vbcast.lane.b32.xlu0 %v7080, %s7113
        %v7115 = vpop.permute.xlu0 %7114
        %s7117 = sor.u32 256, 72
        %7118 = vbcast.lane.b32.xlu0 %v7080, %s7117
        %v7119 = vpop.permute.xlu0 %7118
        %s7121 = sor.u32 256, 80
        %7122 = vbcast.lane.b32.xlu0 %v7080, %s7121
        %v7123 = vpop.permute.xlu0 %7122
        %s7125 = sor.u32 256, 88
        %7126 = vbcast.lane.b32.xlu0 %v7080, %s7125
        %v7127 = vpop.permute.xlu0 %7126
        %s7129 = sor.u32 256, 96
        %7130 = vbcast.lane.b32.xlu0 %v7080, %s7129
        %v7131 = vpop.permute.xlu0 %7130
        %s7133 = sor.u32 256, 104
        %7134 = vbcast.lane.b32.xlu0 %v7080, %s7133
        %v7135 = vpop.permute.xlu0 %7134
        %s7137 = sor.u32 256, 112
        %7138 = vbcast.lane.b32.xlu0 %v7080, %s7137
        %v7139 = vpop.permute.xlu0 %7138
        %s7141 = sor.u32 256, 120
        %7142 = vbcast.lane.b32.xlu0 %v7080, %s7141
        %v7143 = vpop.permute.xlu0 %7142
        %v7144 = vlaneseq
        %v7145 = vshrl.u32 %v7144, 7
        %v7146 = vsub.s32 1, %v7145
        %v7147 = vrot.slane %v7076, %v7146
        %7149 = vbcast.lane.b32.xlu0 %v7147, 256
        %v7150 = vpop.permute.xlu0 %7149
        %s7152 = sor.u32 256, 8
        %7153 = vbcast.lane.b32.xlu0 %v7147, %s7152
        %v7154 = vpop.permute.xlu0 %7153
        %s7156 = sor.u32 256, 16
        %7157 = vbcast.lane.b32.xlu0 %v7147, %s7156
        %v7158 = vpop.permute.xlu0 %7157
        %s7160 = sor.u32 256, 24
        %7161 = vbcast.lane.b32.xlu0 %v7147, %s7160
        %v7162 = vpop.permute.xlu0 %7161
        %s7164 = sor.u32 256, 32
        %7165 = vbcast.lane.b32.xlu0 %v7147, %s7164
        %v7166 = vpop.permute.xlu0 %7165
        %s7168 = sor.u32 256, 40
        %7169 = vbcast.lane.b32.xlu0 %v7147, %s7168
        %v7170 = vpop.permute.xlu0 %7169
        %s7172 = sor.u32 256, 48
        %7173 = vbcast.lane.b32.xlu0 %v7147, %s7172
        %v7174 = vpop.permute.xlu0 %7173
        %s7176 = sor.u32 256, 56
        %7177 = vbcast.lane.b32.xlu0 %v7147, %s7176
        %v7178 = vpop.permute.xlu0 %7177
        %s7180 = sor.u32 256, 64
        %7181 = vbcast.lane.b32.xlu0 %v7147, %s7180
        %v7182 = vpop.permute.xlu0 %7181
        %s7184 = sor.u32 256, 72
        %7185 = vbcast.lane.b32.xlu0 %v7147, %s7184
        %v7186 = vpop.permute.xlu0 %7185
        %s7188 = sor.u32 256, 80
        %7189 = vbcast.lane.b32.xlu0 %v7147, %s7188
        %v7190 = vpop.permute.xlu0 %7189
        %s7192 = sor.u32 256, 88
        %7193 = vbcast.lane.b32.xlu0 %v7147, %s7192
        %v7194 = vpop.permute.xlu0 %7193
        %s7196 = sor.u32 256, 96
        %7197 = vbcast.lane.b32.xlu0 %v7147, %s7196
        %v7198 = vpop.permute.xlu0 %7197
        %s7200 = sor.u32 256, 104
        %7201 = vbcast.lane.b32.xlu0 %v7147, %s7200
        %v7202 = vpop.permute.xlu0 %7201
        %s7204 = sor.u32 256, 112
        %7205 = vbcast.lane.b32.xlu0 %v7147, %s7204
        %v7206 = vpop.permute.xlu0 %7205
        %s7208 = sor.u32 256, 120
        %7209 = vbcast.lane.b32.xlu0 %v7147, %s7208
        %v7210 = vpop.permute.xlu0 %7209
        %v7211 = vlaneseq
        %v7212 = vshrl.u32 %v7211, 7
        %v7213 = vsub.s32 2, %v7212
        %v7214 = vrot.slane %v7076, %v7213
        %7216 = vbcast.lane.b32.xlu0 %v7214, 256
        %v7217 = vpop.permute.xlu0 %7216
        %s7219 = sor.u32 256, 8
        %7220 = vbcast.lane.b32.xlu0 %v7214, %s7219
        %v7221 = vpop.permute.xlu0 %7220
        %s7223 = sor.u32 256, 16
        %7224 = vbcast.lane.b32.xlu0 %v7214, %s7223
        %v7225 = vpop.permute.xlu0 %7224
        %s7227 = sor.u32 256, 24
        %7228 = vbcast.lane.b32.xlu0 %v7214, %s7227
        %v7229 = vpop.permute.xlu0 %7228
        %s7231 = sor.u32 256, 32
        %7232 = vbcast.lane.b32.xlu0 %v7214, %s7231
        %v7233 = vpop.permute.xlu0 %7232
        %s7235 = sor.u32 256, 40
        %7236 = vbcast.lane.b32.xlu0 %v7214, %s7235
        %v7237 = vpop.permute.xlu0 %7236
        %s7239 = sor.u32 256, 48
        %7240 = vbcast.lane.b32.xlu0 %v7214, %s7239
        %v7241 = vpop.permute.xlu0 %7240
        %s7243 = sor.u32 256, 56
        %7244 = vbcast.lane.b32.xlu0 %v7214, %s7243
        %v7245 = vpop.permute.xlu0 %7244
        %s7247 = sor.u32 256, 64
        %7248 = vbcast.lane.b32.xlu0 %v7214, %s7247
        %v7249 = vpop.permute.xlu0 %7248
        %s7251 = sor.u32 256, 72
        %7252 = vbcast.lane.b32.xlu0 %v7214, %s7251
        %v7253 = vpop.permute.xlu0 %7252
        %s7255 = sor.u32 256, 80
        %7256 = vbcast.lane.b32.xlu0 %v7214, %s7255
        %v7257 = vpop.permute.xlu0 %7256
        %s7259 = sor.u32 256, 88
        %7260 = vbcast.lane.b32.xlu0 %v7214, %s7259
        %v7261 = vpop.permute.xlu0 %7260
        %s7263 = sor.u32 256, 96
        %7264 = vbcast.lane.b32.xlu0 %v7214, %s7263
        %v7265 = vpop.permute.xlu0 %7264
        %s7267 = sor.u32 256, 104
        %7268 = vbcast.lane.b32.xlu0 %v7214, %s7267
        %v7269 = vpop.permute.xlu0 %7268
        %s7271 = sor.u32 256, 112
        %7272 = vbcast.lane.b32.xlu0 %v7214, %s7271
        %v7273 = vpop.permute.xlu0 %7272
        %s7275 = sor.u32 256, 120
        %7276 = vbcast.lane.b32.xlu0 %v7214, %s7275
        %v7277 = vpop.permute.xlu0 %7276
        %v7278 = vlaneseq
        %v7279 = vshrl.u32 %v7278, 7
        %v7280 = vsub.s32 3, %v7279
        %v7281 = vrot.slane %v7076, %v7280
        %7283 = vbcast.lane.b32.xlu0 %v7281, 256
        %v7284 = vpop.permute.xlu0 %7283
        %s7286 = sor.u32 256, 8
        %7287 = vbcast.lane.b32.xlu0 %v7281, %s7286
        %v7288 = vpop.permute.xlu0 %7287
        %s7290 = sor.u32 256, 16
        %7291 = vbcast.lane.b32.xlu0 %v7281, %s7290
        %v7292 = vpop.permute.xlu0 %7291
        %s7294 = sor.u32 256, 24
        %7295 = vbcast.lane.b32.xlu0 %v7281, %s7294
        %v7296 = vpop.permute.xlu0 %7295
        %s7298 = sor.u32 256, 32
        %7299 = vbcast.lane.b32.xlu0 %v7281, %s7298
        %v7300 = vpop.permute.xlu0 %7299
        %s7302 = sor.u32 256, 40
        %7303 = vbcast.lane.b32.xlu0 %v7281, %s7302
        %v7304 = vpop.permute.xlu0 %7303
        %s7306 = sor.u32 256, 48
        %7307 = vbcast.lane.b32.xlu0 %v7281, %s7306
        %v7308 = vpop.permute.xlu0 %7307
        %s7310 = sor.u32 256, 56
        %7311 = vbcast.lane.b32.xlu0 %v7281, %s7310
        %v7312 = vpop.permute.xlu0 %7311
        %s7314 = sor.u32 256, 64
        %7315 = vbcast.lane.b32.xlu0 %v7281, %s7314
        %v7316 = vpop.permute.xlu0 %7315
        %s7318 = sor.u32 256, 72
        %7319 = vbcast.lane.b32.xlu0 %v7281, %s7318
        %v7320 = vpop.permute.xlu0 %7319
        %s7322 = sor.u32 256, 80
        %7323 = vbcast.lane.b32.xlu0 %v7281, %s7322
        %v7324 = vpop.permute.xlu0 %7323
        %s7326 = sor.u32 256, 88
        %7327 = vbcast.lane.b32.xlu0 %v7281, %s7326
        %v7328 = vpop.permute.xlu0 %7327
        %s7330 = sor.u32 256, 96
        %7331 = vbcast.lane.b32.xlu0 %v7281, %s7330
        %v7332 = vpop.permute.xlu0 %7331
        %s7334 = sor.u32 256, 104
        %7335 = vbcast.lane.b32.xlu0 %v7281, %s7334
        %v7336 = vpop.permute.xlu0 %7335
        %s7338 = sor.u32 256, 112
        %7339 = vbcast.lane.b32.xlu0 %v7281, %s7338
        %v7340 = vpop.permute.xlu0 %7339
        %s7342 = sor.u32 256, 120
        %7343 = vbcast.lane.b32.xlu0 %v7281, %s7342
        %v7344 = vpop.permute.xlu0 %7343
        %v7345 = vlaneseq
        %v7346 = vshrl.u32 %v7345, 7
        %v7347 = vsub.s32 4, %v7346
        %v7348 = vrot.slane %v7076, %v7347
        %7350 = vbcast.lane.b32.xlu0 %v7348, 256
        %v7351 = vpop.permute.xlu0 %7350
        %s7353 = sor.u32 256, 8
        %7354 = vbcast.lane.b32.xlu0 %v7348, %s7353
        %v7355 = vpop.permute.xlu0 %7354
        %s7357 = sor.u32 256, 16
        %7358 = vbcast.lane.b32.xlu0 %v7348, %s7357
        %v7359 = vpop.permute.xlu0 %7358
        %s7361 = sor.u32 256, 24
        %7362 = vbcast.lane.b32.xlu0 %v7348, %s7361
        %v7363 = vpop.permute.xlu0 %7362
        %s7365 = sor.u32 256, 32
        %7366 = vbcast.lane.b32.xlu0 %v7348, %s7365
        %v7367 = vpop.permute.xlu0 %7366
        %s7369 = sor.u32 256, 40
        %7370 = vbcast.lane.b32.xlu0 %v7348, %s7369
        %v7371 = vpop.permute.xlu0 %7370
        %s7373 = sor.u32 256, 48
        %7374 = vbcast.lane.b32.xlu0 %v7348, %s7373
        %v7375 = vpop.permute.xlu0 %7374
        %s7377 = sor.u32 256, 56
        %7378 = vbcast.lane.b32.xlu0 %v7348, %s7377
        %v7379 = vpop.permute.xlu0 %7378
        %s7381 = sor.u32 256, 64
        %7382 = vbcast.lane.b32.xlu0 %v7348, %s7381
        %v7383 = vpop.permute.xlu0 %7382
        %s7385 = sor.u32 256, 72
        %7386 = vbcast.lane.b32.xlu0 %v7348, %s7385
        %v7387 = vpop.permute.xlu0 %7386
        %s7389 = sor.u32 256, 80
        %7390 = vbcast.lane.b32.xlu0 %v7348, %s7389
        %v7391 = vpop.permute.xlu0 %7390
        %s7393 = sor.u32 256, 88
        %7394 = vbcast.lane.b32.xlu0 %v7348, %s7393
        %v7395 = vpop.permute.xlu0 %7394
        %s7397 = sor.u32 256, 96
        %7398 = vbcast.lane.b32.xlu0 %v7348, %s7397
        %v7399 = vpop.permute.xlu0 %7398
        %s7401 = sor.u32 256, 104
        %7402 = vbcast.lane.b32.xlu0 %v7348, %s7401
        %v7403 = vpop.permute.xlu0 %7402
        %s7405 = sor.u32 256, 112
        %7406 = vbcast.lane.b32.xlu0 %v7348, %s7405
        %v7407 = vpop.permute.xlu0 %7406
        %s7409 = sor.u32 256, 120
        %7410 = vbcast.lane.b32.xlu0 %v7348, %s7409
        %v7411 = vpop.permute.xlu0 %7410
        %v7412 = vlaneseq
        %v7413 = vshrl.u32 %v7412, 7
        %v7414 = vsub.s32 5, %v7413
        %v7415 = vrot.slane %v7076, %v7414
        %7417 = vbcast.lane.b32.xlu0 %v7415, 256
        %v7418 = vpop.permute.xlu0 %7417
        %s7420 = sor.u32 256, 8
        %7421 = vbcast.lane.b32.xlu0 %v7415, %s7420
        %v7422 = vpop.permute.xlu0 %7421
        %s7424 = sor.u32 256, 16
        %7425 = vbcast.lane.b32.xlu0 %v7415, %s7424
        %v7426 = vpop.permute.xlu0 %7425
        %s7428 = sor.u32 256, 24
        %7429 = vbcast.lane.b32.xlu0 %v7415, %s7428
        %v7430 = vpop.permute.xlu0 %7429
        %s7432 = sor.u32 256, 32
        %7433 = vbcast.lane.b32.xlu0 %v7415, %s7432
        %v7434 = vpop.permute.xlu0 %7433
        %s7436 = sor.u32 256, 40
        %7437 = vbcast.lane.b32.xlu0 %v7415, %s7436
        %v7438 = vpop.permute.xlu0 %7437
        %s7440 = sor.u32 256, 48
        %7441 = vbcast.lane.b32.xlu0 %v7415, %s7440
        %v7442 = vpop.permute.xlu0 %7441
        %s7444 = sor.u32 256, 56
        %7445 = vbcast.lane.b32.xlu0 %v7415, %s7444
        %v7446 = vpop.permute.xlu0 %7445
        %s7448 = sor.u32 256, 64
        %7449 = vbcast.lane.b32.xlu0 %v7415, %s7448
        %v7450 = vpop.permute.xlu0 %7449
        %s7452 = sor.u32 256, 72
        %7453 = vbcast.lane.b32.xlu0 %v7415, %s7452
        %v7454 = vpop.permute.xlu0 %7453
        %s7456 = sor.u32 256, 80
        %7457 = vbcast.lane.b32.xlu0 %v7415, %s7456
        %v7458 = vpop.permute.xlu0 %7457
        %s7460 = sor.u32 256, 88
        %7461 = vbcast.lane.b32.xlu0 %v7415, %s7460
        %v7462 = vpop.permute.xlu0 %7461
        %s7464 = sor.u32 256, 96
        %7465 = vbcast.lane.b32.xlu0 %v7415, %s7464
        %v7466 = vpop.permute.xlu0 %7465
        %s7468 = sor.u32 256, 104
        %7469 = vbcast.lane.b32.xlu0 %v7415, %s7468
        %v7470 = vpop.permute.xlu0 %7469
        %s7472 = sor.u32 256, 112
        %7473 = vbcast.lane.b32.xlu0 %v7415, %s7472
        %v7474 = vpop.permute.xlu0 %7473
        %s7476 = sor.u32 256, 120
        %7477 = vbcast.lane.b32.xlu0 %v7415, %s7476
        %v7478 = vpop.permute.xlu0 %7477
        %v7479 = vlaneseq
        %v7480 = vshrl.u32 %v7479, 7
        %v7481 = vsub.s32 6, %v7480
        %v7482 = vrot.slane %v7076, %v7481
        %7484 = vbcast.lane.b32.xlu0 %v7482, 256
        %v7485 = vpop.permute.xlu0 %7484
        %s7487 = sor.u32 256, 8
        %7488 = vbcast.lane.b32.xlu0 %v7482, %s7487
        %v7489 = vpop.permute.xlu0 %7488
        %s7491 = sor.u32 256, 16
        %7492 = vbcast.lane.b32.xlu0 %v7482, %s7491
        %v7493 = vpop.permute.xlu0 %7492
        %s7495 = sor.u32 256, 24
        %7496 = vbcast.lane.b32.xlu0 %v7482, %s7495
        %v7497 = vpop.permute.xlu0 %7496
        %s7499 = sor.u32 256, 32
        %7500 = vbcast.lane.b32.xlu0 %v7482, %s7499
        %v7501 = vpop.permute.xlu0 %7500
        %s7503 = sor.u32 256, 40
        %7504 = vbcast.lane.b32.xlu0 %v7482, %s7503
        %v7505 = vpop.permute.xlu0 %7504
        %s7507 = sor.u32 256, 48
        %7508 = vbcast.lane.b32.xlu0 %v7482, %s7507
        %v7509 = vpop.permute.xlu0 %7508
        %s7511 = sor.u32 256, 56
        %7512 = vbcast.lane.b32.xlu0 %v7482, %s7511
        %v7513 = vpop.permute.xlu0 %7512
        %s7515 = sor.u32 256, 64
        %7516 = vbcast.lane.b32.xlu0 %v7482, %s7515
        %v7517 = vpop.permute.xlu0 %7516
        %s7519 = sor.u32 256, 72
        %7520 = vbcast.lane.b32.xlu0 %v7482, %s7519
        %v7521 = vpop.permute.xlu0 %7520
        %s7523 = sor.u32 256, 80
        %7524 = vbcast.lane.b32.xlu0 %v7482, %s7523
        %v7525 = vpop.permute.xlu0 %7524
        %s7527 = sor.u32 256, 88
        %7528 = vbcast.lane.b32.xlu0 %v7482, %s7527
        %v7529 = vpop.permute.xlu0 %7528
        %s7531 = sor.u32 256, 96
        %7532 = vbcast.lane.b32.xlu0 %v7482, %s7531
        %v7533 = vpop.permute.xlu0 %7532
        %s7535 = sor.u32 256, 104
        %7536 = vbcast.lane.b32.xlu0 %v7482, %s7535
        %v7537 = vpop.permute.xlu0 %7536
        %s7539 = sor.u32 256, 112
        %7540 = vbcast.lane.b32.xlu0 %v7482, %s7539
        %v7541 = vpop.permute.xlu0 %7540
        %s7543 = sor.u32 256, 120
        %7544 = vbcast.lane.b32.xlu0 %v7482, %s7543
        %v7545 = vpop.permute.xlu0 %7544
        %v7546 = vlaneseq
        %v7547 = vshrl.u32 %v7546, 7
        %v7548 = vsub.s32 7, %v7547
        %v7549 = vrot.slane %v7076, %v7548
        %7551 = vbcast.lane.b32.xlu0 %v7549, 256
        %v7552 = vpop.permute.xlu0 %7551
        %s7554 = sor.u32 256, 8
        %7555 = vbcast.lane.b32.xlu0 %v7549, %s7554
        %v7556 = vpop.permute.xlu0 %7555
        %s7558 = sor.u32 256, 16
        %7559 = vbcast.lane.b32.xlu0 %v7549, %s7558
        %v7560 = vpop.permute.xlu0 %7559
        %s7562 = sor.u32 256, 24
        %7563 = vbcast.lane.b32.xlu0 %v7549, %s7562
        %v7564 = vpop.permute.xlu0 %7563
        %s7566 = sor.u32 256, 32
        %7567 = vbcast.lane.b32.xlu0 %v7549, %s7566
        %v7568 = vpop.permute.xlu0 %7567
        %s7570 = sor.u32 256, 40
        %7571 = vbcast.lane.b32.xlu0 %v7549, %s7570
        %v7572 = vpop.permute.xlu0 %7571
        %s7574 = sor.u32 256, 48
        %7575 = vbcast.lane.b32.xlu0 %v7549, %s7574
        %v7576 = vpop.permute.xlu0 %7575
        %s7578 = sor.u32 256, 56
        %7579 = vbcast.lane.b32.xlu0 %v7549, %s7578
        %v7580 = vpop.permute.xlu0 %7579
        %s7582 = sor.u32 256, 64
        %7583 = vbcast.lane.b32.xlu0 %v7549, %s7582
        %v7584 = vpop.permute.xlu0 %7583
        %s7586 = sor.u32 256, 72
        %7587 = vbcast.lane.b32.xlu0 %v7549, %s7586
        %v7588 = vpop.permute.xlu0 %7587
        %s7590 = sor.u32 256, 80
        %7591 = vbcast.lane.b32.xlu0 %v7549, %s7590
        %v7592 = vpop.permute.xlu0 %7591
        %s7594 = sor.u32 256, 88
        %7595 = vbcast.lane.b32.xlu0 %v7549, %s7594
        %v7596 = vpop.permute.xlu0 %7595
        %s7598 = sor.u32 256, 96
        %7599 = vbcast.lane.b32.xlu0 %v7549, %s7598
        %v7600 = vpop.permute.xlu0 %7599
        %s7602 = sor.u32 256, 104
        %7603 = vbcast.lane.b32.xlu0 %v7549, %s7602
        %v7604 = vpop.permute.xlu0 %7603
        %s7606 = sor.u32 256, 112
        %7607 = vbcast.lane.b32.xlu0 %v7549, %s7606
        %v7608 = vpop.permute.xlu0 %7607
        %s7610 = sor.u32 256, 120
        %7611 = vbcast.lane.b32.xlu0 %v7549, %s7610
        %v7612 = vpop.permute.xlu0 %7611
        %v7613 = vcombine.low %v7083, %v7217
        %v7614 = vcombine.high %v7083, %v7217
        %v7616 = vunpack.c.l.s4 1983009808
        %v7617 = vunpack.c.0.s8 %v7616
        %v7618 = vlaneseq
        %v7619 = vshrl.u32 %v7618, 7
        %v7620 = vsub.s32 %v7617, %v7619
        %v7621 = vrot.slane %v7613, %v7620
        %v7623 = vunpack.c.l.s4 1983009808
        %v7624 = vunpack.c.0.s8 %v7623
        %v7625 = vlaneseq
        %v7626 = vshrl.u32 %v7625, 7
        %v7627 = vsub.s32 %v7624, %v7626
        %v7628 = vrot.slane %v7614, %v7627
        %v7629 = vcombine.low %v7150, %v7284
        %v7630 = vcombine.high %v7150, %v7284
        %v7632 = vunpack.c.l.s4 1983009808
        %v7633 = vunpack.c.0.s8 %v7632
        %v7634 = vlaneseq
        %v7635 = vshrl.u32 %v7634, 7
        %v7636 = vsub.s32 %v7633, %v7635
        %v7637 = vrot.slane %v7629, %v7636
        %v7639 = vunpack.c.l.s4 1983009808
        %v7640 = vunpack.c.0.s8 %v7639
        %v7641 = vlaneseq
        %v7642 = vshrl.u32 %v7641, 7
        %v7643 = vsub.s32 %v7640, %v7642
        %v7644 = vrot.slane %v7630, %v7643
        %v7645 = vcombine.low %v7351, %v7485
        %v7646 = vcombine.high %v7351, %v7485
        %v7648 = vunpack.c.l.s4 1983009808
        %v7649 = vunpack.c.0.s8 %v7648
        %v7650 = vlaneseq
        %v7651 = vshrl.u32 %v7650, 7
        %v7652 = vsub.s32 %v7649, %v7651
        %v7653 = vrot.slane %v7645, %v7652
        %v7655 = vunpack.c.l.s4 1983009808
        %v7656 = vunpack.c.0.s8 %v7655
        %v7657 = vlaneseq
        %v7658 = vshrl.u32 %v7657, 7
        %v7659 = vsub.s32 %v7656, %v7658
        %v7660 = vrot.slane %v7646, %v7659
        %v7661 = vcombine.low %v7418, %v7552
        %v7662 = vcombine.high %v7418, %v7552
        %v7664 = vunpack.c.l.s4 1983009808
        %v7665 = vunpack.c.0.s8 %v7664
        %v7666 = vlaneseq
        %v7667 = vshrl.u32 %v7666, 7
        %v7668 = vsub.s32 %v7665, %v7667
        %v7669 = vrot.slane %v7661, %v7668
        %v7671 = vunpack.c.l.s4 1983009808
        %v7672 = vunpack.c.0.s8 %v7671
        %v7673 = vlaneseq
        %v7674 = vshrl.u32 %v7673, 7
        %v7675 = vsub.s32 %v7672, %v7674
        %v7676 = vrot.slane %v7662, %v7675
        %v7677 = vcombine.low %v7621, %v7637
        %v7678 = vcombine.high %v7621, %v7637
        %v7680 = vunpack.c.l.s4 1934713408
        %v7681 = vunpack.c.0.s8 %v7680
        %v7682 = vlaneseq
        %v7683 = vshrl.u32 %v7682, 7
        %v7684 = vsub.s32 %v7681, %v7683
        %v7685 = vrot.slane %v7677, %v7684
        %v7687 = vunpack.c.l.s4 1934713408
        %v7688 = vunpack.c.0.s8 %v7687
        %v7689 = vlaneseq
        %v7690 = vshrl.u32 %v7689, 7
        %v7691 = vsub.s32 %v7688, %v7690
        %v7692 = vrot.slane %v7678, %v7691
        %v7693 = vcombine.low %v7628, %v7644
        %v7694 = vcombine.high %v7628, %v7644
        %v7696 = vunpack.c.l.s4 1934713408
        %v7697 = vunpack.c.0.s8 %v7696
        %v7698 = vlaneseq
        %v7699 = vshrl.u32 %v7698, 7
        %v7700 = vsub.s32 %v7697, %v7699
        %v7701 = vrot.slane %v7693, %v7700
        %v7703 = vunpack.c.l.s4 1934713408
        %v7704 = vunpack.c.0.s8 %v7703
        %v7705 = vlaneseq
        %v7706 = vshrl.u32 %v7705, 7
        %v7707 = vsub.s32 %v7704, %v7706
        %v7708 = vrot.slane %v7694, %v7707
        %v7709 = vcombine.low %v7653, %v7669
        %v7710 = vcombine.high %v7653, %v7669
        %v7712 = vunpack.c.l.s4 1934713408
        %v7713 = vunpack.c.0.s8 %v7712
        %v7714 = vlaneseq
        %v7715 = vshrl.u32 %v7714, 7
        %v7716 = vsub.s32 %v7713, %v7715
        %v7717 = vrot.slane %v7709, %v7716
        %v7719 = vunpack.c.l.s4 1934713408
        %v7720 = vunpack.c.0.s8 %v7719
        %v7721 = vlaneseq
        %v7722 = vshrl.u32 %v7721, 7
        %v7723 = vsub.s32 %v7720, %v7722
        %v7724 = vrot.slane %v7710, %v7723
        %v7725 = vcombine.low %v7660, %v7676
        %v7726 = vcombine.high %v7660, %v7676
        %v7728 = vunpack.c.l.s4 1934713408
        %v7729 = vunpack.c.0.s8 %v7728
        %v7730 = vlaneseq
        %v7731 = vshrl.u32 %v7730, 7
        %v7732 = vsub.s32 %v7729, %v7731
        %v7733 = vrot.slane %v7725, %v7732
        %v7735 = vunpack.c.l.s4 1934713408
        %v7736 = vunpack.c.0.s8 %v7735
        %v7737 = vlaneseq
        %v7738 = vshrl.u32 %v7737, 7
        %v7739 = vsub.s32 %v7736, %v7738
        %v7740 = vrot.slane %v7726, %v7739
        %v7741 = vcombine.low %v7685, %v7717
        %v7742 = vcombine.high %v7685, %v7717
        %v7743 = vcombine.low %v7692, %v7724
        %v7744 = vcombine.high %v7692, %v7724
        %v7745 = vcombine.low %v7701, %v7733
        %v7746 = vcombine.high %v7701, %v7733
        %v7747 = vcombine.low %v7708, %v7740
        %v7748 = vcombine.high %v7708, %v7740
        %v7749 = vcombine.low %v7087, %v7221
        %v7750 = vcombine.high %v7087, %v7221
        %v7752 = vunpack.c.l.s4 1983009808
        %v7753 = vunpack.c.0.s8 %v7752
        %v7754 = vlaneseq
        %v7755 = vshrl.u32 %v7754, 7
        %v7756 = vsub.s32 %v7753, %v7755
        %v7757 = vrot.slane %v7749, %v7756
        %v7759 = vunpack.c.l.s4 1983009808
        %v7760 = vunpack.c.0.s8 %v7759
        %v7761 = vlaneseq
        %v7762 = vshrl.u32 %v7761, 7
        %v7763 = vsub.s32 %v7760, %v7762
        %v7764 = vrot.slane %v7750, %v7763
        %v7765 = vcombine.low %v7154, %v7288
        %v7766 = vcombine.high %v7154, %v7288
        %v7768 = vunpack.c.l.s4 1983009808
        %v7769 = vunpack.c.0.s8 %v7768
        %v7770 = vlaneseq
        %v7771 = vshrl.u32 %v7770, 7
        %v7772 = vsub.s32 %v7769, %v7771
        %v7773 = vrot.slane %v7765, %v7772
        %v7775 = vunpack.c.l.s4 1983009808
        %v7776 = vunpack.c.0.s8 %v7775
        %v7777 = vlaneseq
        %v7778 = vshrl.u32 %v7777, 7
        %v7779 = vsub.s32 %v7776, %v7778
        %v7780 = vrot.slane %v7766, %v7779
        %v7781 = vcombine.low %v7355, %v7489
        %v7782 = vcombine.high %v7355, %v7489
        %v7784 = vunpack.c.l.s4 1983009808
        %v7785 = vunpack.c.0.s8 %v7784
        %v7786 = vlaneseq
        %v7787 = vshrl.u32 %v7786, 7
        %v7788 = vsub.s32 %v7785, %v7787
        %v7789 = vrot.slane %v7781, %v7788
        %v7791 = vunpack.c.l.s4 1983009808
        %v7792 = vunpack.c.0.s8 %v7791
        %v7793 = vlaneseq
        %v7794 = vshrl.u32 %v7793, 7
        %v7795 = vsub.s32 %v7792, %v7794
        %v7796 = vrot.slane %v7782, %v7795
        %v7797 = vcombine.low %v7422, %v7556
        %v7798 = vcombine.high %v7422, %v7556
        %v7800 = vunpack.c.l.s4 1983009808
        %v7801 = vunpack.c.0.s8 %v7800
        %v7802 = vlaneseq
        %v7803 = vshrl.u32 %v7802, 7
        %v7804 = vsub.s32 %v7801, %v7803
        %v7805 = vrot.slane %v7797, %v7804
        %v7807 = vunpack.c.l.s4 1983009808
        %v7808 = vunpack.c.0.s8 %v7807
        %v7809 = vlaneseq
        %v7810 = vshrl.u32 %v7809, 7
        %v7811 = vsub.s32 %v7808, %v7810
        %v7812 = vrot.slane %v7798, %v7811
        %v7813 = vcombine.low %v7757, %v7773
        %v7814 = vcombine.high %v7757, %v7773
        %v7816 = vunpack.c.l.s4 1934713408
        %v7817 = vunpack.c.0.s8 %v7816
        %v7818 = vlaneseq
        %v7819 = vshrl.u32 %v7818, 7
        %v7820 = vsub.s32 %v7817, %v7819
        %v7821 = vrot.slane %v7813, %v7820
        %v7823 = vunpack.c.l.s4 1934713408
        %v7824 = vunpack.c.0.s8 %v7823
        %v7825 = vlaneseq
        %v7826 = vshrl.u32 %v7825, 7
        %v7827 = vsub.s32 %v7824, %v7826
        %v7828 = vrot.slane %v7814, %v7827
        %v7829 = vcombine.low %v7764, %v7780
        %v7830 = vcombine.high %v7764, %v7780
        %v7832 = vunpack.c.l.s4 1934713408
        %v7833 = vunpack.c.0.s8 %v7832
        %v7834 = vlaneseq
        %v7835 = vshrl.u32 %v7834, 7
        %v7836 = vsub.s32 %v7833, %v7835
        %v7837 = vrot.slane %v7829, %v7836
        %v7839 = vunpack.c.l.s4 1934713408
        %v7840 = vunpack.c.0.s8 %v7839
        %v7841 = vlaneseq
        %v7842 = vshrl.u32 %v7841, 7
        %v7843 = vsub.s32 %v7840, %v7842
        %v7844 = vrot.slane %v7830, %v7843
        %v7845 = vcombine.low %v7789, %v7805
        %v7846 = vcombine.high %v7789, %v7805
        %v7848 = vunpack.c.l.s4 1934713408
        %v7849 = vunpack.c.0.s8 %v7848
        %v7850 = vlaneseq
        %v7851 = vshrl.u32 %v7850, 7
        %v7852 = vsub.s32 %v7849, %v7851
        %v7853 = vrot.slane %v7845, %v7852
        %v7855 = vunpack.c.l.s4 1934713408
        %v7856 = vunpack.c.0.s8 %v7855
        %v7857 = vlaneseq
        %v7858 = vshrl.u32 %v7857, 7
        %v7859 = vsub.s32 %v7856, %v7858
        %v7860 = vrot.slane %v7846, %v7859
        %v7861 = vcombine.low %v7796, %v7812
        %v7862 = vcombine.high %v7796, %v7812
        %v7864 = vunpack.c.l.s4 1934713408
        %v7865 = vunpack.c.0.s8 %v7864
        %v7866 = vlaneseq
        %v7867 = vshrl.u32 %v7866, 7
        %v7868 = vsub.s32 %v7865, %v7867
        %v7869 = vrot.slane %v7861, %v7868
        %v7871 = vunpack.c.l.s4 1934713408
        %v7872 = vunpack.c.0.s8 %v7871
        %v7873 = vlaneseq
        %v7874 = vshrl.u32 %v7873, 7
        %v7875 = vsub.s32 %v7872, %v7874
        %v7876 = vrot.slane %v7862, %v7875
        %v7877 = vcombine.low %v7821, %v7853
        %v7878 = vcombine.high %v7821, %v7853
        %v7879 = vcombine.low %v7828, %v7860
        %v7880 = vcombine.high %v7828, %v7860
        %v7881 = vcombine.low %v7837, %v7869
        %v7882 = vcombine.high %v7837, %v7869
        %v7883 = vcombine.low %v7844, %v7876
        %v7884 = vcombine.high %v7844, %v7876
        %v7885 = vcombine.low %v7091, %v7225
        %v7886 = vcombine.high %v7091, %v7225
        %v7888 = vunpack.c.l.s4 1983009808
        %v7889 = vunpack.c.0.s8 %v7888
        %v7890 = vlaneseq
        %v7891 = vshrl.u32 %v7890, 7
        %v7892 = vsub.s32 %v7889, %v7891
        %v7893 = vrot.slane %v7885, %v7892
        %v7895 = vunpack.c.l.s4 1983009808
        %v7896 = vunpack.c.0.s8 %v7895
        %v7897 = vlaneseq
        %v7898 = vshrl.u32 %v7897, 7
        %v7899 = vsub.s32 %v7896, %v7898
        %v7900 = vrot.slane %v7886, %v7899
        %v7901 = vcombine.low %v7158, %v7292
        %v7902 = vcombine.high %v7158, %v7292
        %v7904 = vunpack.c.l.s4 1983009808
        %v7905 = vunpack.c.0.s8 %v7904
        %v7906 = vlaneseq
        %v7907 = vshrl.u32 %v7906, 7
        %v7908 = vsub.s32 %v7905, %v7907
        %v7909 = vrot.slane %v7901, %v7908
        %v7911 = vunpack.c.l.s4 1983009808
        %v7912 = vunpack.c.0.s8 %v7911
        %v7913 = vlaneseq
        %v7914 = vshrl.u32 %v7913, 7
        %v7915 = vsub.s32 %v7912, %v7914
        %v7916 = vrot.slane %v7902, %v7915
        %v7917 = vcombine.low %v7359, %v7493
        %v7918 = vcombine.high %v7359, %v7493
        %v7920 = vunpack.c.l.s4 1983009808
        %v7921 = vunpack.c.0.s8 %v7920
        %v7922 = vlaneseq
        %v7923 = vshrl.u32 %v7922, 7
        %v7924 = vsub.s32 %v7921, %v7923
        %v7925 = vrot.slane %v7917, %v7924
        %v7927 = vunpack.c.l.s4 1983009808
        %v7928 = vunpack.c.0.s8 %v7927
        %v7929 = vlaneseq
        %v7930 = vshrl.u32 %v7929, 7
        %v7931 = vsub.s32 %v7928, %v7930
        %v7932 = vrot.slane %v7918, %v7931
        %v7933 = vcombine.low %v7426, %v7560
        %v7934 = vcombine.high %v7426, %v7560
        %v7936 = vunpack.c.l.s4 1983009808
        %v7937 = vunpack.c.0.s8 %v7936
        %v7938 = vlaneseq
        %v7939 = vshrl.u32 %v7938, 7
        %v7940 = vsub.s32 %v7937, %v7939
        %v7941 = vrot.slane %v7933, %v7940
        %v7943 = vunpack.c.l.s4 1983009808
        %v7944 = vunpack.c.0.s8 %v7943
        %v7945 = vlaneseq
        %v7946 = vshrl.u32 %v7945, 7
        %v7947 = vsub.s32 %v7944, %v7946
        %v7948 = vrot.slane %v7934, %v7947
        %v7949 = vcombine.low %v7893, %v7909
        %v7950 = vcombine.high %v7893, %v7909
        %v7952 = vunpack.c.l.s4 1934713408
        %v7953 = vunpack.c.0.s8 %v7952
        %v7954 = vlaneseq
        %v7955 = vshrl.u32 %v7954, 7
        %v7956 = vsub.s32 %v7953, %v7955
        %v7957 = vrot.slane %v7949, %v7956
        %v7959 = vunpack.c.l.s4 1934713408
        %v7960 = vunpack.c.0.s8 %v7959
        %v7961 = vlaneseq
        %v7962 = vshrl.u32 %v7961, 7
        %v7963 = vsub.s32 %v7960, %v7962
        %v7964 = vrot.slane %v7950, %v7963
        %v7965 = vcombine.low %v7900, %v7916
        %v7966 = vcombine.high %v7900, %v7916
        %v7968 = vunpack.c.l.s4 1934713408
        %v7969 = vunpack.c.0.s8 %v7968
        %v7970 = vlaneseq
        %v7971 = vshrl.u32 %v7970, 7
        %v7972 = vsub.s32 %v7969, %v7971
        %v7973 = vrot.slane %v7965, %v7972
        %v7975 = vunpack.c.l.s4 1934713408
        %v7976 = vunpack.c.0.s8 %v7975
        %v7977 = vlaneseq
        %v7978 = vshrl.u32 %v7977, 7
        %v7979 = vsub.s32 %v7976, %v7978
        %v7980 = vrot.slane %v7966, %v7979
        %v7981 = vcombine.low %v7925, %v7941
        %v7982 = vcombine.high %v7925, %v7941
        %v7984 = vunpack.c.l.s4 1934713408
        %v7985 = vunpack.c.0.s8 %v7984
        %v7986 = vlaneseq
        %v7987 = vshrl.u32 %v7986, 7
        %v7988 = vsub.s32 %v7985, %v7987
        %v7989 = vrot.slane %v7981, %v7988
        %v7991 = vunpack.c.l.s4 1934713408
        %v7992 = vunpack.c.0.s8 %v7991
        %v7993 = vlaneseq
        %v7994 = vshrl.u32 %v7993, 7
        %v7995 = vsub.s32 %v7992, %v7994
        %v7996 = vrot.slane %v7982, %v7995
        %v7997 = vcombine.low %v7932, %v7948
        %v7998 = vcombine.high %v7932, %v7948
        %v8000 = vunpack.c.l.s4 1934713408
        %v8001 = vunpack.c.0.s8 %v8000
        %v8002 = vlaneseq
        %v8003 = vshrl.u32 %v8002, 7
        %v8004 = vsub.s32 %v8001, %v8003
        %v8005 = vrot.slane %v7997, %v8004
        %v8007 = vunpack.c.l.s4 1934713408
        %v8008 = vunpack.c.0.s8 %v8007
        %v8009 = vlaneseq
        %v8010 = vshrl.u32 %v8009, 7
        %v8011 = vsub.s32 %v8008, %v8010
        %v8012 = vrot.slane %v7998, %v8011
        %v8013 = vcombine.low %v7957, %v7989
        %v8014 = vcombine.high %v7957, %v7989
        %v8015 = vcombine.low %v7964, %v7996
        %v8016 = vcombine.high %v7964, %v7996
        %v8017 = vcombine.low %v7973, %v8005
        %v8018 = vcombine.high %v7973, %v8005
        %v8019 = vcombine.low %v7980, %v8012
        %v8020 = vcombine.high %v7980, %v8012
        %v8021 = vcombine.low %v7095, %v7229
        %v8022 = vcombine.high %v7095, %v7229
        %v8024 = vunpack.c.l.s4 1983009808
        %v8025 = vunpack.c.0.s8 %v8024
        %v8026 = vlaneseq
        %v8027 = vshrl.u32 %v8026, 7
        %v8028 = vsub.s32 %v8025, %v8027
        %v8029 = vrot.slane %v8021, %v8028
        %v8031 = vunpack.c.l.s4 1983009808
        %v8032 = vunpack.c.0.s8 %v8031
        %v8033 = vlaneseq
        %v8034 = vshrl.u32 %v8033, 7
        %v8035 = vsub.s32 %v8032, %v8034
        %v8036 = vrot.slane %v8022, %v8035
        %v8037 = vcombine.low %v7162, %v7296
        %v8038 = vcombine.high %v7162, %v7296
        %v8040 = vunpack.c.l.s4 1983009808
        %v8041 = vunpack.c.0.s8 %v8040
        %v8042 = vlaneseq
        %v8043 = vshrl.u32 %v8042, 7
        %v8044 = vsub.s32 %v8041, %v8043
        %v8045 = vrot.slane %v8037, %v8044
        %v8047 = vunpack.c.l.s4 1983009808
        %v8048 = vunpack.c.0.s8 %v8047
        %v8049 = vlaneseq
        %v8050 = vshrl.u32 %v8049, 7
        %v8051 = vsub.s32 %v8048, %v8050
        %v8052 = vrot.slane %v8038, %v8051
        %v8053 = vcombine.low %v7363, %v7497
        %v8054 = vcombine.high %v7363, %v7497
        %v8056 = vunpack.c.l.s4 1983009808
        %v8057 = vunpack.c.0.s8 %v8056
        %v8058 = vlaneseq
        %v8059 = vshrl.u32 %v8058, 7
        %v8060 = vsub.s32 %v8057, %v8059
        %v8061 = vrot.slane %v8053, %v8060
        %v8063 = vunpack.c.l.s4 1983009808
        %v8064 = vunpack.c.0.s8 %v8063
        %v8065 = vlaneseq
        %v8066 = vshrl.u32 %v8065, 7
        %v8067 = vsub.s32 %v8064, %v8066
        %v8068 = vrot.slane %v8054, %v8067
        %v8069 = vcombine.low %v7430, %v7564
        %v8070 = vcombine.high %v7430, %v7564
        %v8072 = vunpack.c.l.s4 1983009808
        %v8073 = vunpack.c.0.s8 %v8072
        %v8074 = vlaneseq
        %v8075 = vshrl.u32 %v8074, 7
        %v8076 = vsub.s32 %v8073, %v8075
        %v8077 = vrot.slane %v8069, %v8076
        %v8079 = vunpack.c.l.s4 1983009808
        %v8080 = vunpack.c.0.s8 %v8079
        %v8081 = vlaneseq
        %v8082 = vshrl.u32 %v8081, 7
        %v8083 = vsub.s32 %v8080, %v8082
        %v8084 = vrot.slane %v8070, %v8083
        %v8085 = vcombine.low %v8029, %v8045
        %v8086 = vcombine.high %v8029, %v8045
        %v8088 = vunpack.c.l.s4 1934713408
        %v8089 = vunpack.c.0.s8 %v8088
        %v8090 = vlaneseq
        %v8091 = vshrl.u32 %v8090, 7
        %v8092 = vsub.s32 %v8089, %v8091
        %v8093 = vrot.slane %v8085, %v8092
        %v8095 = vunpack.c.l.s4 1934713408
        %v8096 = vunpack.c.0.s8 %v8095
        %v8097 = vlaneseq
        %v8098 = vshrl.u32 %v8097, 7
        %v8099 = vsub.s32 %v8096, %v8098
        %v8100 = vrot.slane %v8086, %v8099
        %v8101 = vcombine.low %v8036, %v8052
        %v8102 = vcombine.high %v8036, %v8052
        %v8104 = vunpack.c.l.s4 1934713408
        %v8105 = vunpack.c.0.s8 %v8104
        %v8106 = vlaneseq
        %v8107 = vshrl.u32 %v8106, 7
        %v8108 = vsub.s32 %v8105, %v8107
        %v8109 = vrot.slane %v8101, %v8108
        %v8111 = vunpack.c.l.s4 1934713408
        %v8112 = vunpack.c.0.s8 %v8111
        %v8113 = vlaneseq
        %v8114 = vshrl.u32 %v8113, 7
        %v8115 = vsub.s32 %v8112, %v8114
        %v8116 = vrot.slane %v8102, %v8115
        %v8117 = vcombine.low %v8061, %v8077
        %v8118 = vcombine.high %v8061, %v8077
        %v8120 = vunpack.c.l.s4 1934713408
        %v8121 = vunpack.c.0.s8 %v8120
        %v8122 = vlaneseq
        %v8123 = vshrl.u32 %v8122, 7
        %v8124 = vsub.s32 %v8121, %v8123
        %v8125 = vrot.slane %v8117, %v8124
        %v8127 = vunpack.c.l.s4 1934713408
        %v8128 = vunpack.c.0.s8 %v8127
        %v8129 = vlaneseq
        %v8130 = vshrl.u32 %v8129, 7
        %v8131 = vsub.s32 %v8128, %v8130
        %v8132 = vrot.slane %v8118, %v8131
        %v8133 = vcombine.low %v8068, %v8084
        %v8134 = vcombine.high %v8068, %v8084
        %v8136 = vunpack.c.l.s4 1934713408
        %v8137 = vunpack.c.0.s8 %v8136
        %v8138 = vlaneseq
        %v8139 = vshrl.u32 %v8138, 7
        %v8140 = vsub.s32 %v8137, %v8139
        %v8141 = vrot.slane %v8133, %v8140
        %v8143 = vunpack.c.l.s4 1934713408
        %v8144 = vunpack.c.0.s8 %v8143
        %v8145 = vlaneseq
        %v8146 = vshrl.u32 %v8145, 7
        %v8147 = vsub.s32 %v8144, %v8146
        %v8148 = vrot.slane %v8134, %v8147
        %v8149 = vcombine.low %v8093, %v8125
        %v8150 = vcombine.high %v8093, %v8125
        %v8151 = vcombine.low %v8100, %v8132
        %v8152 = vcombine.high %v8100, %v8132
        %v8153 = vcombine.low %v8109, %v8141
        %v8154 = vcombine.high %v8109, %v8141
        %v8155 = vcombine.low %v8116, %v8148
        %v8156 = vcombine.high %v8116, %v8148
        %v8157 = vcombine.low %v7099, %v7233
        %v8158 = vcombine.high %v7099, %v7233
        %v8160 = vunpack.c.l.s4 1983009808
        %v8161 = vunpack.c.0.s8 %v8160
        %v8162 = vlaneseq
        %v8163 = vshrl.u32 %v8162, 7
        %v8164 = vsub.s32 %v8161, %v8163
        %v8165 = vrot.slane %v8157, %v8164
        %v8167 = vunpack.c.l.s4 1983009808
        %v8168 = vunpack.c.0.s8 %v8167
        %v8169 = vlaneseq
        %v8170 = vshrl.u32 %v8169, 7
        %v8171 = vsub.s32 %v8168, %v8170
        %v8172 = vrot.slane %v8158, %v8171
        %v8173 = vcombine.low %v7166, %v7300
        %v8174 = vcombine.high %v7166, %v7300
        %v8176 = vunpack.c.l.s4 1983009808
        %v8177 = vunpack.c.0.s8 %v8176
        %v8178 = vlaneseq
        %v8179 = vshrl.u32 %v8178, 7
        %v8180 = vsub.s32 %v8177, %v8179
        %v8181 = vrot.slane %v8173, %v8180
        %v8183 = vunpack.c.l.s4 1983009808
        %v8184 = vunpack.c.0.s8 %v8183
        %v8185 = vlaneseq
        %v8186 = vshrl.u32 %v8185, 7
        %v8187 = vsub.s32 %v8184, %v8186
        %v8188 = vrot.slane %v8174, %v8187
        %v8189 = vcombine.low %v7367, %v7501
        %v8190 = vcombine.high %v7367, %v7501
        %v8192 = vunpack.c.l.s4 1983009808
        %v8193 = vunpack.c.0.s8 %v8192
        %v8194 = vlaneseq
        %v8195 = vshrl.u32 %v8194, 7
        %v8196 = vsub.s32 %v8193, %v8195
        %v8197 = vrot.slane %v8189, %v8196
        %v8199 = vunpack.c.l.s4 1983009808
        %v8200 = vunpack.c.0.s8 %v8199
        %v8201 = vlaneseq
        %v8202 = vshrl.u32 %v8201, 7
        %v8203 = vsub.s32 %v8200, %v8202
        %v8204 = vrot.slane %v8190, %v8203
        %v8205 = vcombine.low %v7434, %v7568
        %v8206 = vcombine.high %v7434, %v7568
        %v8208 = vunpack.c.l.s4 1983009808
        %v8209 = vunpack.c.0.s8 %v8208
        %v8210 = vlaneseq
        %v8211 = vshrl.u32 %v8210, 7
        %v8212 = vsub.s32 %v8209, %v8211
        %v8213 = vrot.slane %v8205, %v8212
        %v8215 = vunpack.c.l.s4 1983009808
        %v8216 = vunpack.c.0.s8 %v8215
        %v8217 = vlaneseq
        %v8218 = vshrl.u32 %v8217, 7
        %v8219 = vsub.s32 %v8216, %v8218
        %v8220 = vrot.slane %v8206, %v8219
        %v8221 = vcombine.low %v8165, %v8181
        %v8222 = vcombine.high %v8165, %v8181
        %v8224 = vunpack.c.l.s4 1934713408
        %v8225 = vunpack.c.0.s8 %v8224
        %v8226 = vlaneseq
        %v8227 = vshrl.u32 %v8226, 7
        %v8228 = vsub.s32 %v8225, %v8227
        %v8229 = vrot.slane %v8221, %v8228
        %v8231 = vunpack.c.l.s4 1934713408
        %v8232 = vunpack.c.0.s8 %v8231
        %v8233 = vlaneseq
        %v8234 = vshrl.u32 %v8233, 7
        %v8235 = vsub.s32 %v8232, %v8234
        %v8236 = vrot.slane %v8222, %v8235
        %v8237 = vcombine.low %v8172, %v8188
        %v8238 = vcombine.high %v8172, %v8188
        %v8240 = vunpack.c.l.s4 1934713408
        %v8241 = vunpack.c.0.s8 %v8240
        %v8242 = vlaneseq
        %v8243 = vshrl.u32 %v8242, 7
        %v8244 = vsub.s32 %v8241, %v8243
        %v8245 = vrot.slane %v8237, %v8244
        %v8247 = vunpack.c.l.s4 1934713408
        %v8248 = vunpack.c.0.s8 %v8247
        %v8249 = vlaneseq
        %v8250 = vshrl.u32 %v8249, 7
        %v8251 = vsub.s32 %v8248, %v8250
        %v8252 = vrot.slane %v8238, %v8251
        %v8253 = vcombine.low %v8197, %v8213
        %v8254 = vcombine.high %v8197, %v8213
        %v8256 = vunpack.c.l.s4 1934713408
        %v8257 = vunpack.c.0.s8 %v8256
        %v8258 = vlaneseq
        %v8259 = vshrl.u32 %v8258, 7
        %v8260 = vsub.s32 %v8257, %v8259
        %v8261 = vrot.slane %v8253, %v8260
        %v8263 = vunpack.c.l.s4 1934713408
        %v8264 = vunpack.c.0.s8 %v8263
        %v8265 = vlaneseq
        %v8266 = vshrl.u32 %v8265, 7
        %v8267 = vsub.s32 %v8264, %v8266
        %v8268 = vrot.slane %v8254, %v8267
        %v8269 = vcombine.low %v8204, %v8220
        %v8270 = vcombine.high %v8204, %v8220
        %v8272 = vunpack.c.l.s4 1934713408
        %v8273 = vunpack.c.0.s8 %v8272
        %v8274 = vlaneseq
        %v8275 = vshrl.u32 %v8274, 7
        %v8276 = vsub.s32 %v8273, %v8275
        %v8277 = vrot.slane %v8269, %v8276
        %v8279 = vunpack.c.l.s4 1934713408
        %v8280 = vunpack.c.0.s8 %v8279
        %v8281 = vlaneseq
        %v8282 = vshrl.u32 %v8281, 7
        %v8283 = vsub.s32 %v8280, %v8282
        %v8284 = vrot.slane %v8270, %v8283
        %v8285 = vcombine.low %v8229, %v8261
        %v8286 = vcombine.high %v8229, %v8261
        %v8287 = vcombine.low %v8236, %v8268
        %v8288 = vcombine.high %v8236, %v8268
        %v8289 = vcombine.low %v8245, %v8277
        %v8290 = vcombine.high %v8245, %v8277
        %v8291 = vcombine.low %v8252, %v8284
        %v8292 = vcombine.high %v8252, %v8284
        %v8293 = vcombine.low %v7103, %v7237
        %v8294 = vcombine.high %v7103, %v7237
        %v8296 = vunpack.c.l.s4 1983009808
        %v8297 = vunpack.c.0.s8 %v8296
        %v8298 = vlaneseq
        %v8299 = vshrl.u32 %v8298, 7
        %v8300 = vsub.s32 %v8297, %v8299
        %v8301 = vrot.slane %v8293, %v8300
        %v8303 = vunpack.c.l.s4 1983009808
        %v8304 = vunpack.c.0.s8 %v8303
        %v8305 = vlaneseq
        %v8306 = vshrl.u32 %v8305, 7
        %v8307 = vsub.s32 %v8304, %v8306
        %v8308 = vrot.slane %v8294, %v8307
        %v8309 = vcombine.low %v7170, %v7304
        %v8310 = vcombine.high %v7170, %v7304
        %v8312 = vunpack.c.l.s4 1983009808
        %v8313 = vunpack.c.0.s8 %v8312
        %v8314 = vlaneseq
        %v8315 = vshrl.u32 %v8314, 7
        %v8316 = vsub.s32 %v8313, %v8315
        %v8317 = vrot.slane %v8309, %v8316
        %v8319 = vunpack.c.l.s4 1983009808
        %v8320 = vunpack.c.0.s8 %v8319
        %v8321 = vlaneseq
        %v8322 = vshrl.u32 %v8321, 7
        %v8323 = vsub.s32 %v8320, %v8322
        %v8324 = vrot.slane %v8310, %v8323
        %v8325 = vcombine.low %v7371, %v7505
        %v8326 = vcombine.high %v7371, %v7505
        %v8328 = vunpack.c.l.s4 1983009808
        %v8329 = vunpack.c.0.s8 %v8328
        %v8330 = vlaneseq
        %v8331 = vshrl.u32 %v8330, 7
        %v8332 = vsub.s32 %v8329, %v8331
        %v8333 = vrot.slane %v8325, %v8332
        %v8335 = vunpack.c.l.s4 1983009808
        %v8336 = vunpack.c.0.s8 %v8335
        %v8337 = vlaneseq
        %v8338 = vshrl.u32 %v8337, 7
        %v8339 = vsub.s32 %v8336, %v8338
        %v8340 = vrot.slane %v8326, %v8339
        %v8341 = vcombine.low %v7438, %v7572
        %v8342 = vcombine.high %v7438, %v7572
        %v8344 = vunpack.c.l.s4 1983009808
        %v8345 = vunpack.c.0.s8 %v8344
        %v8346 = vlaneseq
        %v8347 = vshrl.u32 %v8346, 7
        %v8348 = vsub.s32 %v8345, %v8347
        %v8349 = vrot.slane %v8341, %v8348
        %v8351 = vunpack.c.l.s4 1983009808
        %v8352 = vunpack.c.0.s8 %v8351
        %v8353 = vlaneseq
        %v8354 = vshrl.u32 %v8353, 7
        %v8355 = vsub.s32 %v8352, %v8354
        %v8356 = vrot.slane %v8342, %v8355
        %v8357 = vcombine.low %v8301, %v8317
        %v8358 = vcombine.high %v8301, %v8317
        %v8360 = vunpack.c.l.s4 1934713408
        %v8361 = vunpack.c.0.s8 %v8360
        %v8362 = vlaneseq
        %v8363 = vshrl.u32 %v8362, 7
        %v8364 = vsub.s32 %v8361, %v8363
        %v8365 = vrot.slane %v8357, %v8364
        %v8367 = vunpack.c.l.s4 1934713408
        %v8368 = vunpack.c.0.s8 %v8367
        %v8369 = vlaneseq
        %v8370 = vshrl.u32 %v8369, 7
        %v8371 = vsub.s32 %v8368, %v8370
        %v8372 = vrot.slane %v8358, %v8371
        %v8373 = vcombine.low %v8308, %v8324
        %v8374 = vcombine.high %v8308, %v8324
        %v8376 = vunpack.c.l.s4 1934713408
        %v8377 = vunpack.c.0.s8 %v8376
        %v8378 = vlaneseq
        %v8379 = vshrl.u32 %v8378, 7
        %v8380 = vsub.s32 %v8377, %v8379
        %v8381 = vrot.slane %v8373, %v8380
        %v8383 = vunpack.c.l.s4 1934713408
        %v8384 = vunpack.c.0.s8 %v8383
        %v8385 = vlaneseq
        %v8386 = vshrl.u32 %v8385, 7
        %v8387 = vsub.s32 %v8384, %v8386
        %v8388 = vrot.slane %v8374, %v8387
        %v8389 = vcombine.low %v8333, %v8349
        %v8390 = vcombine.high %v8333, %v8349
        %v8392 = vunpack.c.l.s4 1934713408
        %v8393 = vunpack.c.0.s8 %v8392
        %v8394 = vlaneseq
        %v8395 = vshrl.u32 %v8394, 7
        %v8396 = vsub.s32 %v8393, %v8395
        %v8397 = vrot.slane %v8389, %v8396
        %v8399 = vunpack.c.l.s4 1934713408
        %v8400 = vunpack.c.0.s8 %v8399
        %v8401 = vlaneseq
        %v8402 = vshrl.u32 %v8401, 7
        %v8403 = vsub.s32 %v8400, %v8402
        %v8404 = vrot.slane %v8390, %v8403
        %v8405 = vcombine.low %v8340, %v8356
        %v8406 = vcombine.high %v8340, %v8356
        %v8408 = vunpack.c.l.s4 1934713408
        %v8409 = vunpack.c.0.s8 %v8408
        %v8410 = vlaneseq
        %v8411 = vshrl.u32 %v8410, 7
        %v8412 = vsub.s32 %v8409, %v8411
        %v8413 = vrot.slane %v8405, %v8412
        %v8415 = vunpack.c.l.s4 1934713408
        %v8416 = vunpack.c.0.s8 %v8415
        %v8417 = vlaneseq
        %v8418 = vshrl.u32 %v8417, 7
        %v8419 = vsub.s32 %v8416, %v8418
        %v8420 = vrot.slane %v8406, %v8419
        %v8421 = vcombine.low %v8365, %v8397
        %v8422 = vcombine.high %v8365, %v8397
        %v8423 = vcombine.low %v8372, %v8404
        %v8424 = vcombine.high %v8372, %v8404
        %v8425 = vcombine.low %v8381, %v8413
        %v8426 = vcombine.high %v8381, %v8413
        %v8427 = vcombine.low %v8388, %v8420
        %v8428 = vcombine.high %v8388, %v8420
        %v8429 = vcombine.low %v7107, %v7241
        %v8430 = vcombine.high %v7107, %v7241
        %v8432 = vunpack.c.l.s4 1983009808
        %v8433 = vunpack.c.0.s8 %v8432
        %v8434 = vlaneseq
        %v8435 = vshrl.u32 %v8434, 7
        %v8436 = vsub.s32 %v8433, %v8435
        %v8437 = vrot.slane %v8429, %v8436
        %v8439 = vunpack.c.l.s4 1983009808
        %v8440 = vunpack.c.0.s8 %v8439
        %v8441 = vlaneseq
        %v8442 = vshrl.u32 %v8441, 7
        %v8443 = vsub.s32 %v8440, %v8442
        %v8444 = vrot.slane %v8430, %v8443
        %v8445 = vcombine.low %v7174, %v7308
        %v8446 = vcombine.high %v7174, %v7308
        %v8448 = vunpack.c.l.s4 1983009808
        %v8449 = vunpack.c.0.s8 %v8448
        %v8450 = vlaneseq
        %v8451 = vshrl.u32 %v8450, 7
        %v8452 = vsub.s32 %v8449, %v8451
        %v8453 = vrot.slane %v8445, %v8452
        %v8455 = vunpack.c.l.s4 1983009808
        %v8456 = vunpack.c.0.s8 %v8455
        %v8457 = vlaneseq
        %v8458 = vshrl.u32 %v8457, 7
        %v8459 = vsub.s32 %v8456, %v8458
        %v8460 = vrot.slane %v8446, %v8459
        %v8461 = vcombine.low %v7375, %v7509
        %v8462 = vcombine.high %v7375, %v7509
        %v8464 = vunpack.c.l.s4 1983009808
        %v8465 = vunpack.c.0.s8 %v8464
        %v8466 = vlaneseq
        %v8467 = vshrl.u32 %v8466, 7
        %v8468 = vsub.s32 %v8465, %v8467
        %v8469 = vrot.slane %v8461, %v8468
        %v8471 = vunpack.c.l.s4 1983009808
        %v8472 = vunpack.c.0.s8 %v8471
        %v8473 = vlaneseq
        %v8474 = vshrl.u32 %v8473, 7
        %v8475 = vsub.s32 %v8472, %v8474
        %v8476 = vrot.slane %v8462, %v8475
        %v8477 = vcombine.low %v7442, %v7576
        %v8478 = vcombine.high %v7442, %v7576
        %v8480 = vunpack.c.l.s4 1983009808
        %v8481 = vunpack.c.0.s8 %v8480
        %v8482 = vlaneseq
        %v8483 = vshrl.u32 %v8482, 7
        %v8484 = vsub.s32 %v8481, %v8483
        %v8485 = vrot.slane %v8477, %v8484
        %v8487 = vunpack.c.l.s4 1983009808
        %v8488 = vunpack.c.0.s8 %v8487
        %v8489 = vlaneseq
        %v8490 = vshrl.u32 %v8489, 7
        %v8491 = vsub.s32 %v8488, %v8490
        %v8492 = vrot.slane %v8478, %v8491
        %v8493 = vcombine.low %v8437, %v8453
        %v8494 = vcombine.high %v8437, %v8453
        %v8496 = vunpack.c.l.s4 1934713408
        %v8497 = vunpack.c.0.s8 %v8496
        %v8498 = vlaneseq
        %v8499 = vshrl.u32 %v8498, 7
        %v8500 = vsub.s32 %v8497, %v8499
        %v8501 = vrot.slane %v8493, %v8500
        %v8503 = vunpack.c.l.s4 1934713408
        %v8504 = vunpack.c.0.s8 %v8503
        %v8505 = vlaneseq
        %v8506 = vshrl.u32 %v8505, 7
        %v8507 = vsub.s32 %v8504, %v8506
        %v8508 = vrot.slane %v8494, %v8507
        %v8509 = vcombine.low %v8444, %v8460
        %v8510 = vcombine.high %v8444, %v8460
        %v8512 = vunpack.c.l.s4 1934713408
        %v8513 = vunpack.c.0.s8 %v8512
        %v8514 = vlaneseq
        %v8515 = vshrl.u32 %v8514, 7
        %v8516 = vsub.s32 %v8513, %v8515
        %v8517 = vrot.slane %v8509, %v8516
        %v8519 = vunpack.c.l.s4 1934713408
        %v8520 = vunpack.c.0.s8 %v8519
        %v8521 = vlaneseq
        %v8522 = vshrl.u32 %v8521, 7
        %v8523 = vsub.s32 %v8520, %v8522
        %v8524 = vrot.slane %v8510, %v8523
        %v8525 = vcombine.low %v8469, %v8485
        %v8526 = vcombine.high %v8469, %v8485
        %v8528 = vunpack.c.l.s4 1934713408
        %v8529 = vunpack.c.0.s8 %v8528
        %v8530 = vlaneseq
        %v8531 = vshrl.u32 %v8530, 7
        %v8532 = vsub.s32 %v8529, %v8531
        %v8533 = vrot.slane %v8525, %v8532
        %v8535 = vunpack.c.l.s4 1934713408
        %v8536 = vunpack.c.0.s8 %v8535
        %v8537 = vlaneseq
        %v8538 = vshrl.u32 %v8537, 7
        %v8539 = vsub.s32 %v8536, %v8538
        %v8540 = vrot.slane %v8526, %v8539
        %v8541 = vcombine.low %v8476, %v8492
        %v8542 = vcombine.high %v8476, %v8492
        %v8544 = vunpack.c.l.s4 1934713408
        %v8545 = vunpack.c.0.s8 %v8544
        %v8546 = vlaneseq
        %v8547 = vshrl.u32 %v8546, 7
        %v8548 = vsub.s32 %v8545, %v8547
        %v8549 = vrot.slane %v8541, %v8548
        %v8551 = vunpack.c.l.s4 1934713408
        %v8552 = vunpack.c.0.s8 %v8551
        %v8553 = vlaneseq
        %v8554 = vshrl.u32 %v8553, 7
        %v8555 = vsub.s32 %v8552, %v8554
        %v8556 = vrot.slane %v8542, %v8555
        %v8557 = vcombine.low %v8501, %v8533
        %v8558 = vcombine.high %v8501, %v8533
        %v8559 = vcombine.low %v8508, %v8540
        %v8560 = vcombine.high %v8508, %v8540
        %v8561 = vcombine.low %v8517, %v8549
        %v8562 = vcombine.high %v8517, %v8549
        %v8563 = vcombine.low %v8524, %v8556
        %v8564 = vcombine.high %v8524, %v8556
        %v8565 = vcombine.low %v7111, %v7245
        %v8566 = vcombine.high %v7111, %v7245
        %v8568 = vunpack.c.l.s4 1983009808
        %v8569 = vunpack.c.0.s8 %v8568
        %v8570 = vlaneseq
        %v8571 = vshrl.u32 %v8570, 7
        %v8572 = vsub.s32 %v8569, %v8571
        %v8573 = vrot.slane %v8565, %v8572
        %v8575 = vunpack.c.l.s4 1983009808
        %v8576 = vunpack.c.0.s8 %v8575
        %v8577 = vlaneseq
        %v8578 = vshrl.u32 %v8577, 7
        %v8579 = vsub.s32 %v8576, %v8578
        %v8580 = vrot.slane %v8566, %v8579
        %v8581 = vcombine.low %v7178, %v7312
        %v8582 = vcombine.high %v7178, %v7312
        %v8584 = vunpack.c.l.s4 1983009808
        %v8585 = vunpack.c.0.s8 %v8584
        %v8586 = vlaneseq
        %v8587 = vshrl.u32 %v8586, 7
        %v8588 = vsub.s32 %v8585, %v8587
        %v8589 = vrot.slane %v8581, %v8588
        %v8591 = vunpack.c.l.s4 1983009808
        %v8592 = vunpack.c.0.s8 %v8591
        %v8593 = vlaneseq
        %v8594 = vshrl.u32 %v8593, 7
        %v8595 = vsub.s32 %v8592, %v8594
        %v8596 = vrot.slane %v8582, %v8595
        %v8597 = vcombine.low %v7379, %v7513
        %v8598 = vcombine.high %v7379, %v7513
        %v8600 = vunpack.c.l.s4 1983009808
        %v8601 = vunpack.c.0.s8 %v8600
        %v8602 = vlaneseq
        %v8603 = vshrl.u32 %v8602, 7
        %v8604 = vsub.s32 %v8601, %v8603
        %v8605 = vrot.slane %v8597, %v8604
        %v8607 = vunpack.c.l.s4 1983009808
        %v8608 = vunpack.c.0.s8 %v8607
        %v8609 = vlaneseq
        %v8610 = vshrl.u32 %v8609, 7
        %v8611 = vsub.s32 %v8608, %v8610
        %v8612 = vrot.slane %v8598, %v8611
        %v8613 = vcombine.low %v7446, %v7580
        %v8614 = vcombine.high %v7446, %v7580
        %v8616 = vunpack.c.l.s4 1983009808
        %v8617 = vunpack.c.0.s8 %v8616
        %v8618 = vlaneseq
        %v8619 = vshrl.u32 %v8618, 7
        %v8620 = vsub.s32 %v8617, %v8619
        %v8621 = vrot.slane %v8613, %v8620
        %v8623 = vunpack.c.l.s4 1983009808
        %v8624 = vunpack.c.0.s8 %v8623
        %v8625 = vlaneseq
        %v8626 = vshrl.u32 %v8625, 7
        %v8627 = vsub.s32 %v8624, %v8626
        %v8628 = vrot.slane %v8614, %v8627
        %v8629 = vcombine.low %v8573, %v8589
        %v8630 = vcombine.high %v8573, %v8589
        %v8632 = vunpack.c.l.s4 1934713408
        %v8633 = vunpack.c.0.s8 %v8632
        %v8634 = vlaneseq
        %v8635 = vshrl.u32 %v8634, 7
        %v8636 = vsub.s32 %v8633, %v8635
        %v8637 = vrot.slane %v8629, %v8636
        %v8639 = vunpack.c.l.s4 1934713408
        %v8640 = vunpack.c.0.s8 %v8639
        %v8641 = vlaneseq
        %v8642 = vshrl.u32 %v8641, 7
        %v8643 = vsub.s32 %v8640, %v8642
        %v8644 = vrot.slane %v8630, %v8643
        %v8645 = vcombine.low %v8580, %v8596
        %v8646 = vcombine.high %v8580, %v8596
        %v8648 = vunpack.c.l.s4 1934713408
        %v8649 = vunpack.c.0.s8 %v8648
        %v8650 = vlaneseq
        %v8651 = vshrl.u32 %v8650, 7
        %v8652 = vsub.s32 %v8649, %v8651
        %v8653 = vrot.slane %v8645, %v8652
        %v8655 = vunpack.c.l.s4 1934713408
        %v8656 = vunpack.c.0.s8 %v8655
        %v8657 = vlaneseq
        %v8658 = vshrl.u32 %v8657, 7
        %v8659 = vsub.s32 %v8656, %v8658
        %v8660 = vrot.slane %v8646, %v8659
        %v8661 = vcombine.low %v8605, %v8621
        %v8662 = vcombine.high %v8605, %v8621
        %v8664 = vunpack.c.l.s4 1934713408
        %v8665 = vunpack.c.0.s8 %v8664
        %v8666 = vlaneseq
        %v8667 = vshrl.u32 %v8666, 7
        %v8668 = vsub.s32 %v8665, %v8667
        %v8669 = vrot.slane %v8661, %v8668
        %v8671 = vunpack.c.l.s4 1934713408
        %v8672 = vunpack.c.0.s8 %v8671
        %v8673 = vlaneseq
        %v8674 = vshrl.u32 %v8673, 7
        %v8675 = vsub.s32 %v8672, %v8674
        %v8676 = vrot.slane %v8662, %v8675
        %v8677 = vcombine.low %v8612, %v8628
        %v8678 = vcombine.high %v8612, %v8628
        %v8680 = vunpack.c.l.s4 1934713408
        %v8681 = vunpack.c.0.s8 %v8680
        %v8682 = vlaneseq
        %v8683 = vshrl.u32 %v8682, 7
        %v8684 = vsub.s32 %v8681, %v8683
        %v8685 = vrot.slane %v8677, %v8684
        %v8687 = vunpack.c.l.s4 1934713408
        %v8688 = vunpack.c.0.s8 %v8687
        %v8689 = vlaneseq
        %v8690 = vshrl.u32 %v8689, 7
        %v8691 = vsub.s32 %v8688, %v8690
        %v8692 = vrot.slane %v8678, %v8691
        %v8693 = vcombine.low %v8637, %v8669
        %v8694 = vcombine.high %v8637, %v8669
        %v8695 = vcombine.low %v8644, %v8676
        %v8696 = vcombine.high %v8644, %v8676
        %v8697 = vcombine.low %v8653, %v8685
        %v8698 = vcombine.high %v8653, %v8685
        %v8699 = vcombine.low %v8660, %v8692
        %v8700 = vcombine.high %v8660, %v8692
        %v8701 = vcombine.low %v7115, %v7249
        %v8702 = vcombine.high %v7115, %v7249
        %v8704 = vunpack.c.l.s4 1983009808
        %v8705 = vunpack.c.0.s8 %v8704
        %v8706 = vlaneseq
        %v8707 = vshrl.u32 %v8706, 7
        %v8708 = vsub.s32 %v8705, %v8707
        %v8709 = vrot.slane %v8701, %v8708
        %v8711 = vunpack.c.l.s4 1983009808
        %v8712 = vunpack.c.0.s8 %v8711
        %v8713 = vlaneseq
        %v8714 = vshrl.u32 %v8713, 7
        %v8715 = vsub.s32 %v8712, %v8714
        %v8716 = vrot.slane %v8702, %v8715
        %v8717 = vcombine.low %v7182, %v7316
        %v8718 = vcombine.high %v7182, %v7316
        %v8720 = vunpack.c.l.s4 1983009808
        %v8721 = vunpack.c.0.s8 %v8720
        %v8722 = vlaneseq
        %v8723 = vshrl.u32 %v8722, 7
        %v8724 = vsub.s32 %v8721, %v8723
        %v8725 = vrot.slane %v8717, %v8724
        %v8727 = vunpack.c.l.s4 1983009808
        %v8728 = vunpack.c.0.s8 %v8727
        %v8729 = vlaneseq
        %v8730 = vshrl.u32 %v8729, 7
        %v8731 = vsub.s32 %v8728, %v8730
        %v8732 = vrot.slane %v8718, %v8731
        %v8733 = vcombine.low %v7383, %v7517
        %v8734 = vcombine.high %v7383, %v7517
        %v8736 = vunpack.c.l.s4 1983009808
        %v8737 = vunpack.c.0.s8 %v8736
        %v8738 = vlaneseq
        %v8739 = vshrl.u32 %v8738, 7
        %v8740 = vsub.s32 %v8737, %v8739
        %v8741 = vrot.slane %v8733, %v8740
        %v8743 = vunpack.c.l.s4 1983009808
        %v8744 = vunpack.c.0.s8 %v8743
        %v8745 = vlaneseq
        %v8746 = vshrl.u32 %v8745, 7
        %v8747 = vsub.s32 %v8744, %v8746
        %v8748 = vrot.slane %v8734, %v8747
        %v8749 = vcombine.low %v7450, %v7584
        %v8750 = vcombine.high %v7450, %v7584
        %v8752 = vunpack.c.l.s4 1983009808
        %v8753 = vunpack.c.0.s8 %v8752
        %v8754 = vlaneseq
        %v8755 = vshrl.u32 %v8754, 7
        %v8756 = vsub.s32 %v8753, %v8755
        %v8757 = vrot.slane %v8749, %v8756
        %v8759 = vunpack.c.l.s4 1983009808
        %v8760 = vunpack.c.0.s8 %v8759
        %v8761 = vlaneseq
        %v8762 = vshrl.u32 %v8761, 7
        %v8763 = vsub.s32 %v8760, %v8762
        %v8764 = vrot.slane %v8750, %v8763
        %v8765 = vcombine.low %v8709, %v8725
        %v8766 = vcombine.high %v8709, %v8725
        %v8768 = vunpack.c.l.s4 1934713408
        %v8769 = vunpack.c.0.s8 %v8768
        %v8770 = vlaneseq
        %v8771 = vshrl.u32 %v8770, 7
        %v8772 = vsub.s32 %v8769, %v8771
        %v8773 = vrot.slane %v8765, %v8772
        %v8775 = vunpack.c.l.s4 1934713408
        %v8776 = vunpack.c.0.s8 %v8775
        %v8777 = vlaneseq
        %v8778 = vshrl.u32 %v8777, 7
        %v8779 = vsub.s32 %v8776, %v8778
        %v8780 = vrot.slane %v8766, %v8779
        %v8781 = vcombine.low %v8716, %v8732
        %v8782 = vcombine.high %v8716, %v8732
        %v8784 = vunpack.c.l.s4 1934713408
        %v8785 = vunpack.c.0.s8 %v8784
        %v8786 = vlaneseq
        %v8787 = vshrl.u32 %v8786, 7
        %v8788 = vsub.s32 %v8785, %v8787
        %v8789 = vrot.slane %v8781, %v8788
        %v8791 = vunpack.c.l.s4 1934713408
        %v8792 = vunpack.c.0.s8 %v8791
        %v8793 = vlaneseq
        %v8794 = vshrl.u32 %v8793, 7
        %v8795 = vsub.s32 %v8792, %v8794
        %v8796 = vrot.slane %v8782, %v8795
        %v8797 = vcombine.low %v8741, %v8757
        %v8798 = vcombine.high %v8741, %v8757
        %v8800 = vunpack.c.l.s4 1934713408
        %v8801 = vunpack.c.0.s8 %v8800
        %v8802 = vlaneseq
        %v8803 = vshrl.u32 %v8802, 7
        %v8804 = vsub.s32 %v8801, %v8803
        %v8805 = vrot.slane %v8797, %v8804
        %v8807 = vunpack.c.l.s4 1934713408
        %v8808 = vunpack.c.0.s8 %v8807
        %v8809 = vlaneseq
        %v8810 = vshrl.u32 %v8809, 7
        %v8811 = vsub.s32 %v8808, %v8810
        %v8812 = vrot.slane %v8798, %v8811
        %v8813 = vcombine.low %v8748, %v8764
        %v8814 = vcombine.high %v8748, %v8764
        %v8816 = vunpack.c.l.s4 1934713408
        %v8817 = vunpack.c.0.s8 %v8816
        %v8818 = vlaneseq
        %v8819 = vshrl.u32 %v8818, 7
        %v8820 = vsub.s32 %v8817, %v8819
        %v8821 = vrot.slane %v8813, %v8820
        %v8823 = vunpack.c.l.s4 1934713408
        %v8824 = vunpack.c.0.s8 %v8823
        %v8825 = vlaneseq
        %v8826 = vshrl.u32 %v8825, 7
        %v8827 = vsub.s32 %v8824, %v8826
        %v8828 = vrot.slane %v8814, %v8827
        %v8829 = vcombine.low %v8773, %v8805
        %v8830 = vcombine.high %v8773, %v8805
        %v8831 = vcombine.low %v8780, %v8812
        %v8832 = vcombine.high %v8780, %v8812
        %v8833 = vcombine.low %v8789, %v8821
        %v8834 = vcombine.high %v8789, %v8821
        %v8835 = vcombine.low %v8796, %v8828
        %v8836 = vcombine.high %v8796, %v8828
        %v8837 = vcombine.low %v7119, %v7253
        %v8838 = vcombine.high %v7119, %v7253
        %v8840 = vunpack.c.l.s4 1983009808
        %v8841 = vunpack.c.0.s8 %v8840
        %v8842 = vlaneseq
        %v8843 = vshrl.u32 %v8842, 7
        %v8844 = vsub.s32 %v8841, %v8843
        %v8845 = vrot.slane %v8837, %v8844
        %v8847 = vunpack.c.l.s4 1983009808
        %v8848 = vunpack.c.0.s8 %v8847
        %v8849 = vlaneseq
        %v8850 = vshrl.u32 %v8849, 7
        %v8851 = vsub.s32 %v8848, %v8850
        %v8852 = vrot.slane %v8838, %v8851
        %v8853 = vcombine.low %v7186, %v7320
        %v8854 = vcombine.high %v7186, %v7320
        %v8856 = vunpack.c.l.s4 1983009808
        %v8857 = vunpack.c.0.s8 %v8856
        %v8858 = vlaneseq
        %v8859 = vshrl.u32 %v8858, 7
        %v8860 = vsub.s32 %v8857, %v8859
        %v8861 = vrot.slane %v8853, %v8860
        %v8863 = vunpack.c.l.s4 1983009808
        %v8864 = vunpack.c.0.s8 %v8863
        %v8865 = vlaneseq
        %v8866 = vshrl.u32 %v8865, 7
        %v8867 = vsub.s32 %v8864, %v8866
        %v8868 = vrot.slane %v8854, %v8867
        %v8869 = vcombine.low %v7387, %v7521
        %v8870 = vcombine.high %v7387, %v7521
        %v8872 = vunpack.c.l.s4 1983009808
        %v8873 = vunpack.c.0.s8 %v8872
        %v8874 = vlaneseq
        %v8875 = vshrl.u32 %v8874, 7
        %v8876 = vsub.s32 %v8873, %v8875
        %v8877 = vrot.slane %v8869, %v8876
        %v8879 = vunpack.c.l.s4 1983009808
        %v8880 = vunpack.c.0.s8 %v8879
        %v8881 = vlaneseq
        %v8882 = vshrl.u32 %v8881, 7
        %v8883 = vsub.s32 %v8880, %v8882
        %v8884 = vrot.slane %v8870, %v8883
        %v8885 = vcombine.low %v7454, %v7588
        %v8886 = vcombine.high %v7454, %v7588
        %v8888 = vunpack.c.l.s4 1983009808
        %v8889 = vunpack.c.0.s8 %v8888
        %v8890 = vlaneseq
        %v8891 = vshrl.u32 %v8890, 7
        %v8892 = vsub.s32 %v8889, %v8891
        %v8893 = vrot.slane %v8885, %v8892
        %v8895 = vunpack.c.l.s4 1983009808
        %v8896 = vunpack.c.0.s8 %v8895
        %v8897 = vlaneseq
        %v8898 = vshrl.u32 %v8897, 7
        %v8899 = vsub.s32 %v8896, %v8898
        %v8900 = vrot.slane %v8886, %v8899
        %v8901 = vcombine.low %v8845, %v8861
        %v8902 = vcombine.high %v8845, %v8861
        %v8904 = vunpack.c.l.s4 1934713408
        %v8905 = vunpack.c.0.s8 %v8904
        %v8906 = vlaneseq
        %v8907 = vshrl.u32 %v8906, 7
        %v8908 = vsub.s32 %v8905, %v8907
        %v8909 = vrot.slane %v8901, %v8908
        %v8911 = vunpack.c.l.s4 1934713408
        %v8912 = vunpack.c.0.s8 %v8911
        %v8913 = vlaneseq
        %v8914 = vshrl.u32 %v8913, 7
        %v8915 = vsub.s32 %v8912, %v8914
        %v8916 = vrot.slane %v8902, %v8915
        %v8917 = vcombine.low %v8852, %v8868
        %v8918 = vcombine.high %v8852, %v8868
        %v8920 = vunpack.c.l.s4 1934713408
        %v8921 = vunpack.c.0.s8 %v8920
        %v8922 = vlaneseq
        %v8923 = vshrl.u32 %v8922, 7
        %v8924 = vsub.s32 %v8921, %v8923
        %v8925 = vrot.slane %v8917, %v8924
        %v8927 = vunpack.c.l.s4 1934713408
        %v8928 = vunpack.c.0.s8 %v8927
        %v8929 = vlaneseq
        %v8930 = vshrl.u32 %v8929, 7
        %v8931 = vsub.s32 %v8928, %v8930
        %v8932 = vrot.slane %v8918, %v8931
        %v8933 = vcombine.low %v8877, %v8893
        %v8934 = vcombine.high %v8877, %v8893
        %v8936 = vunpack.c.l.s4 1934713408
        %v8937 = vunpack.c.0.s8 %v8936
        %v8938 = vlaneseq
        %v8939 = vshrl.u32 %v8938, 7
        %v8940 = vsub.s32 %v8937, %v8939
        %v8941 = vrot.slane %v8933, %v8940
        %v8943 = vunpack.c.l.s4 1934713408
        %v8944 = vunpack.c.0.s8 %v8943
        %v8945 = vlaneseq
        %v8946 = vshrl.u32 %v8945, 7
        %v8947 = vsub.s32 %v8944, %v8946
        %v8948 = vrot.slane %v8934, %v8947
        %v8949 = vcombine.low %v8884, %v8900
        %v8950 = vcombine.high %v8884, %v8900
        %v8952 = vunpack.c.l.s4 1934713408
        %v8953 = vunpack.c.0.s8 %v8952
        %v8954 = vlaneseq
        %v8955 = vshrl.u32 %v8954, 7
        %v8956 = vsub.s32 %v8953, %v8955
        %v8957 = vrot.slane %v8949, %v8956
        %v8959 = vunpack.c.l.s4 1934713408
        %v8960 = vunpack.c.0.s8 %v8959
        %v8961 = vlaneseq
        %v8962 = vshrl.u32 %v8961, 7
        %v8963 = vsub.s32 %v8960, %v8962
        %v8964 = vrot.slane %v8950, %v8963
        %v8965 = vcombine.low %v8909, %v8941
        %v8966 = vcombine.high %v8909, %v8941
        %v8967 = vcombine.low %v8916, %v8948
        %v8968 = vcombine.high %v8916, %v8948
        %v8969 = vcombine.low %v8925, %v8957
        %v8970 = vcombine.high %v8925, %v8957
        %v8971 = vcombine.low %v8932, %v8964
        %v8972 = vcombine.high %v8932, %v8964
        %v8973 = vcombine.low %v7123, %v7257
        %v8974 = vcombine.high %v7123, %v7257
        %v8976 = vunpack.c.l.s4 1983009808
        %v8977 = vunpack.c.0.s8 %v8976
        %v8978 = vlaneseq
        %v8979 = vshrl.u32 %v8978, 7
        %v8980 = vsub.s32 %v8977, %v8979
        %v8981 = vrot.slane %v8973, %v8980
        %v8983 = vunpack.c.l.s4 1983009808
        %v8984 = vunpack.c.0.s8 %v8983
        %v8985 = vlaneseq
        %v8986 = vshrl.u32 %v8985, 7
        %v8987 = vsub.s32 %v8984, %v8986
        %v8988 = vrot.slane %v8974, %v8987
        %v8989 = vcombine.low %v7190, %v7324
        %v8990 = vcombine.high %v7190, %v7324
        %v8992 = vunpack.c.l.s4 1983009808
        %v8993 = vunpack.c.0.s8 %v8992
        %v8994 = vlaneseq
        %v8995 = vshrl.u32 %v8994, 7
        %v8996 = vsub.s32 %v8993, %v8995
        %v8997 = vrot.slane %v8989, %v8996
        %v8999 = vunpack.c.l.s4 1983009808
        %v9000 = vunpack.c.0.s8 %v8999
        %v9001 = vlaneseq
        %v9002 = vshrl.u32 %v9001, 7
        %v9003 = vsub.s32 %v9000, %v9002
        %v9004 = vrot.slane %v8990, %v9003
        %v9005 = vcombine.low %v7391, %v7525
        %v9006 = vcombine.high %v7391, %v7525
        %v9008 = vunpack.c.l.s4 1983009808
        %v9009 = vunpack.c.0.s8 %v9008
        %v9010 = vlaneseq
        %v9011 = vshrl.u32 %v9010, 7
        %v9012 = vsub.s32 %v9009, %v9011
        %v9013 = vrot.slane %v9005, %v9012
        %v9015 = vunpack.c.l.s4 1983009808
        %v9016 = vunpack.c.0.s8 %v9015
        %v9017 = vlaneseq
        %v9018 = vshrl.u32 %v9017, 7
        %v9019 = vsub.s32 %v9016, %v9018
        %v9020 = vrot.slane %v9006, %v9019
        %v9021 = vcombine.low %v7458, %v7592
        %v9022 = vcombine.high %v7458, %v7592
        %v9024 = vunpack.c.l.s4 1983009808
        %v9025 = vunpack.c.0.s8 %v9024
        %v9026 = vlaneseq
        %v9027 = vshrl.u32 %v9026, 7
        %v9028 = vsub.s32 %v9025, %v9027
        %v9029 = vrot.slane %v9021, %v9028
        %v9031 = vunpack.c.l.s4 1983009808
        %v9032 = vunpack.c.0.s8 %v9031
        %v9033 = vlaneseq
        %v9034 = vshrl.u32 %v9033, 7
        %v9035 = vsub.s32 %v9032, %v9034
        %v9036 = vrot.slane %v9022, %v9035
        %v9037 = vcombine.low %v8981, %v8997
        %v9038 = vcombine.high %v8981, %v8997
        %v9040 = vunpack.c.l.s4 1934713408
        %v9041 = vunpack.c.0.s8 %v9040
        %v9042 = vlaneseq
        %v9043 = vshrl.u32 %v9042, 7
        %v9044 = vsub.s32 %v9041, %v9043
        %v9045 = vrot.slane %v9037, %v9044
        %v9047 = vunpack.c.l.s4 1934713408
        %v9048 = vunpack.c.0.s8 %v9047
        %v9049 = vlaneseq
        %v9050 = vshrl.u32 %v9049, 7
        %v9051 = vsub.s32 %v9048, %v9050
        %v9052 = vrot.slane %v9038, %v9051
        %v9053 = vcombine.low %v8988, %v9004
        %v9054 = vcombine.high %v8988, %v9004
        %v9056 = vunpack.c.l.s4 1934713408
        %v9057 = vunpack.c.0.s8 %v9056
        %v9058 = vlaneseq
        %v9059 = vshrl.u32 %v9058, 7
        %v9060 = vsub.s32 %v9057, %v9059
        %v9061 = vrot.slane %v9053, %v9060
        %v9063 = vunpack.c.l.s4 1934713408
        %v9064 = vunpack.c.0.s8 %v9063
        %v9065 = vlaneseq
        %v9066 = vshrl.u32 %v9065, 7
        %v9067 = vsub.s32 %v9064, %v9066
        %v9068 = vrot.slane %v9054, %v9067
        %v9069 = vcombine.low %v9013, %v9029
        %v9070 = vcombine.high %v9013, %v9029
        %v9072 = vunpack.c.l.s4 1934713408
        %v9073 = vunpack.c.0.s8 %v9072
        %v9074 = vlaneseq
        %v9075 = vshrl.u32 %v9074, 7
        %v9076 = vsub.s32 %v9073, %v9075
        %v9077 = vrot.slane %v9069, %v9076
        %v9079 = vunpack.c.l.s4 1934713408
        %v9080 = vunpack.c.0.s8 %v9079
        %v9081 = vlaneseq
        %v9082 = vshrl.u32 %v9081, 7
        %v9083 = vsub.s32 %v9080, %v9082
        %v9084 = vrot.slane %v9070, %v9083
        %v9085 = vcombine.low %v9020, %v9036
        %v9086 = vcombine.high %v9020, %v9036
        %v9088 = vunpack.c.l.s4 1934713408
        %v9089 = vunpack.c.0.s8 %v9088
        %v9090 = vlaneseq
        %v9091 = vshrl.u32 %v9090, 7
        %v9092 = vsub.s32 %v9089, %v9091
        %v9093 = vrot.slane %v9085, %v9092
        %v9095 = vunpack.c.l.s4 1934713408
        %v9096 = vunpack.c.0.s8 %v9095
        %v9097 = vlaneseq
        %v9098 = vshrl.u32 %v9097, 7
        %v9099 = vsub.s32 %v9096, %v9098
        %v9100 = vrot.slane %v9086, %v9099
        %v9101 = vcombine.low %v9045, %v9077
        %v9102 = vcombine.high %v9045, %v9077
        %v9103 = vcombine.low %v9052, %v9084
        %v9104 = vcombine.high %v9052, %v9084
        %v9105 = vcombine.low %v9061, %v9093
        %v9106 = vcombine.high %v9061, %v9093
        %v9107 = vcombine.low %v9068, %v9100
        %v9108 = vcombine.high %v9068, %v9100
        %v9109 = vcombine.low %v7127, %v7261
        %v9110 = vcombine.high %v7127, %v7261
        %v9112 = vunpack.c.l.s4 1983009808
        %v9113 = vunpack.c.0.s8 %v9112
        %v9114 = vlaneseq
        %v9115 = vshrl.u32 %v9114, 7
        %v9116 = vsub.s32 %v9113, %v9115
        %v9117 = vrot.slane %v9109, %v9116
        %v9119 = vunpack.c.l.s4 1983009808
        %v9120 = vunpack.c.0.s8 %v9119
        %v9121 = vlaneseq
        %v9122 = vshrl.u32 %v9121, 7
        %v9123 = vsub.s32 %v9120, %v9122
        %v9124 = vrot.slane %v9110, %v9123
        %v9125 = vcombine.low %v7194, %v7328
        %v9126 = vcombine.high %v7194, %v7328
        %v9128 = vunpack.c.l.s4 1983009808
        %v9129 = vunpack.c.0.s8 %v9128
        %v9130 = vlaneseq
        %v9131 = vshrl.u32 %v9130, 7
        %v9132 = vsub.s32 %v9129, %v9131
        %v9133 = vrot.slane %v9125, %v9132
        %v9135 = vunpack.c.l.s4 1983009808
        %v9136 = vunpack.c.0.s8 %v9135
        %v9137 = vlaneseq
        %v9138 = vshrl.u32 %v9137, 7
        %v9139 = vsub.s32 %v9136, %v9138
        %v9140 = vrot.slane %v9126, %v9139
        %v9141 = vcombine.low %v7395, %v7529
        %v9142 = vcombine.high %v7395, %v7529
        %v9144 = vunpack.c.l.s4 1983009808
        %v9145 = vunpack.c.0.s8 %v9144
        %v9146 = vlaneseq
        %v9147 = vshrl.u32 %v9146, 7
        %v9148 = vsub.s32 %v9145, %v9147
        %v9149 = vrot.slane %v9141, %v9148
        %v9151 = vunpack.c.l.s4 1983009808
        %v9152 = vunpack.c.0.s8 %v9151
        %v9153 = vlaneseq
        %v9154 = vshrl.u32 %v9153, 7
        %v9155 = vsub.s32 %v9152, %v9154
        %v9156 = vrot.slane %v9142, %v9155
        %v9157 = vcombine.low %v7462, %v7596
        %v9158 = vcombine.high %v7462, %v7596
        %v9160 = vunpack.c.l.s4 1983009808
        %v9161 = vunpack.c.0.s8 %v9160
        %v9162 = vlaneseq
        %v9163 = vshrl.u32 %v9162, 7
        %v9164 = vsub.s32 %v9161, %v9163
        %v9165 = vrot.slane %v9157, %v9164
        %v9167 = vunpack.c.l.s4 1983009808
        %v9168 = vunpack.c.0.s8 %v9167
        %v9169 = vlaneseq
        %v9170 = vshrl.u32 %v9169, 7
        %v9171 = vsub.s32 %v9168, %v9170
        %v9172 = vrot.slane %v9158, %v9171
        %v9173 = vcombine.low %v9117, %v9133
        %v9174 = vcombine.high %v9117, %v9133
        %v9176 = vunpack.c.l.s4 1934713408
        %v9177 = vunpack.c.0.s8 %v9176
        %v9178 = vlaneseq
        %v9179 = vshrl.u32 %v9178, 7
        %v9180 = vsub.s32 %v9177, %v9179
        %v9181 = vrot.slane %v9173, %v9180
        %v9183 = vunpack.c.l.s4 1934713408
        %v9184 = vunpack.c.0.s8 %v9183
        %v9185 = vlaneseq
        %v9186 = vshrl.u32 %v9185, 7
        %v9187 = vsub.s32 %v9184, %v9186
        %v9188 = vrot.slane %v9174, %v9187
        %v9189 = vcombine.low %v9124, %v9140
        %v9190 = vcombine.high %v9124, %v9140
        %v9192 = vunpack.c.l.s4 1934713408
        %v9193 = vunpack.c.0.s8 %v9192
        %v9194 = vlaneseq
        %v9195 = vshrl.u32 %v9194, 7
        %v9196 = vsub.s32 %v9193, %v9195
        %v9197 = vrot.slane %v9189, %v9196
        %v9199 = vunpack.c.l.s4 1934713408
        %v9200 = vunpack.c.0.s8 %v9199
        %v9201 = vlaneseq
        %v9202 = vshrl.u32 %v9201, 7
        %v9203 = vsub.s32 %v9200, %v9202
        %v9204 = vrot.slane %v9190, %v9203
        %v9205 = vcombine.low %v9149, %v9165
        %v9206 = vcombine.high %v9149, %v9165
        %v9208 = vunpack.c.l.s4 1934713408
        %v9209 = vunpack.c.0.s8 %v9208
        %v9210 = vlaneseq
        %v9211 = vshrl.u32 %v9210, 7
        %v9212 = vsub.s32 %v9209, %v9211
        %v9213 = vrot.slane %v9205, %v9212
        %v9215 = vunpack.c.l.s4 1934713408
        %v9216 = vunpack.c.0.s8 %v9215
        %v9217 = vlaneseq
        %v9218 = vshrl.u32 %v9217, 7
        %v9219 = vsub.s32 %v9216, %v9218
        %v9220 = vrot.slane %v9206, %v9219
        %v9221 = vcombine.low %v9156, %v9172
        %v9222 = vcombine.high %v9156, %v9172
        %v9224 = vunpack.c.l.s4 1934713408
        %v9225 = vunpack.c.0.s8 %v9224
        %v9226 = vlaneseq
        %v9227 = vshrl.u32 %v9226, 7
        %v9228 = vsub.s32 %v9225, %v9227
        %v9229 = vrot.slane %v9221, %v9228
        %v9231 = vunpack.c.l.s4 1934713408
        %v9232 = vunpack.c.0.s8 %v9231
        %v9233 = vlaneseq
        %v9234 = vshrl.u32 %v9233, 7
        %v9235 = vsub.s32 %v9232, %v9234
        %v9236 = vrot.slane %v9222, %v9235
        %v9237 = vcombine.low %v9181, %v9213
        %v9238 = vcombine.high %v9181, %v9213
        %v9239 = vcombine.low %v9188, %v9220
        %v9240 = vcombine.high %v9188, %v9220
        %v9241 = vcombine.low %v9197, %v9229
        %v9242 = vcombine.high %v9197, %v9229
        %v9243 = vcombine.low %v9204, %v9236
        %v9244 = vcombine.high %v9204, %v9236
        %v9245 = vcombine.low %v7131, %v7265
        %v9246 = vcombine.high %v7131, %v7265
        %v9248 = vunpack.c.l.s4 1983009808
        %v9249 = vunpack.c.0.s8 %v9248
        %v9250 = vlaneseq
        %v9251 = vshrl.u32 %v9250, 7
        %v9252 = vsub.s32 %v9249, %v9251
        %v9253 = vrot.slane %v9245, %v9252
        %v9255 = vunpack.c.l.s4 1983009808
        %v9256 = vunpack.c.0.s8 %v9255
        %v9257 = vlaneseq
        %v9258 = vshrl.u32 %v9257, 7
        %v9259 = vsub.s32 %v9256, %v9258
        %v9260 = vrot.slane %v9246, %v9259
        %v9261 = vcombine.low %v7198, %v7332
        %v9262 = vcombine.high %v7198, %v7332
        %v9264 = vunpack.c.l.s4 1983009808
        %v9265 = vunpack.c.0.s8 %v9264
        %v9266 = vlaneseq
        %v9267 = vshrl.u32 %v9266, 7
        %v9268 = vsub.s32 %v9265, %v9267
        %v9269 = vrot.slane %v9261, %v9268
        %v9271 = vunpack.c.l.s4 1983009808
        %v9272 = vunpack.c.0.s8 %v9271
        %v9273 = vlaneseq
        %v9274 = vshrl.u32 %v9273, 7
        %v9275 = vsub.s32 %v9272, %v9274
        %v9276 = vrot.slane %v9262, %v9275
        %v9277 = vcombine.low %v7399, %v7533
        %v9278 = vcombine.high %v7399, %v7533
        %v9280 = vunpack.c.l.s4 1983009808
        %v9281 = vunpack.c.0.s8 %v9280
        %v9282 = vlaneseq
        %v9283 = vshrl.u32 %v9282, 7
        %v9284 = vsub.s32 %v9281, %v9283
        %v9285 = vrot.slane %v9277, %v9284
        %v9287 = vunpack.c.l.s4 1983009808
        %v9288 = vunpack.c.0.s8 %v9287
        %v9289 = vlaneseq
        %v9290 = vshrl.u32 %v9289, 7
        %v9291 = vsub.s32 %v9288, %v9290
        %v9292 = vrot.slane %v9278, %v9291
        %v9293 = vcombine.low %v7466, %v7600
        %v9294 = vcombine.high %v7466, %v7600
        %v9296 = vunpack.c.l.s4 1983009808
        %v9297 = vunpack.c.0.s8 %v9296
        %v9298 = vlaneseq
        %v9299 = vshrl.u32 %v9298, 7
        %v9300 = vsub.s32 %v9297, %v9299
        %v9301 = vrot.slane %v9293, %v9300
        %v9303 = vunpack.c.l.s4 1983009808
        %v9304 = vunpack.c.0.s8 %v9303
        %v9305 = vlaneseq
        %v9306 = vshrl.u32 %v9305, 7
        %v9307 = vsub.s32 %v9304, %v9306
        %v9308 = vrot.slane %v9294, %v9307
        %v9309 = vcombine.low %v9253, %v9269
        %v9310 = vcombine.high %v9253, %v9269
        %v9312 = vunpack.c.l.s4 1934713408
        %v9313 = vunpack.c.0.s8 %v9312
        %v9314 = vlaneseq
        %v9315 = vshrl.u32 %v9314, 7
        %v9316 = vsub.s32 %v9313, %v9315
        %v9317 = vrot.slane %v9309, %v9316
        %v9319 = vunpack.c.l.s4 1934713408
        %v9320 = vunpack.c.0.s8 %v9319
        %v9321 = vlaneseq
        %v9322 = vshrl.u32 %v9321, 7
        %v9323 = vsub.s32 %v9320, %v9322
        %v9324 = vrot.slane %v9310, %v9323
        %v9325 = vcombine.low %v9260, %v9276
        %v9326 = vcombine.high %v9260, %v9276
        %v9328 = vunpack.c.l.s4 1934713408
        %v9329 = vunpack.c.0.s8 %v9328
        %v9330 = vlaneseq
        %v9331 = vshrl.u32 %v9330, 7
        %v9332 = vsub.s32 %v9329, %v9331
        %v9333 = vrot.slane %v9325, %v9332
        %v9335 = vunpack.c.l.s4 1934713408
        %v9336 = vunpack.c.0.s8 %v9335
        %v9337 = vlaneseq
        %v9338 = vshrl.u32 %v9337, 7
        %v9339 = vsub.s32 %v9336, %v9338
        %v9340 = vrot.slane %v9326, %v9339
        %v9341 = vcombine.low %v9285, %v9301
        %v9342 = vcombine.high %v9285, %v9301
        %v9344 = vunpack.c.l.s4 1934713408
        %v9345 = vunpack.c.0.s8 %v9344
        %v9346 = vlaneseq
        %v9347 = vshrl.u32 %v9346, 7
        %v9348 = vsub.s32 %v9345, %v9347
        %v9349 = vrot.slane %v9341, %v9348
        %v9351 = vunpack.c.l.s4 1934713408
        %v9352 = vunpack.c.0.s8 %v9351
        %v9353 = vlaneseq
        %v9354 = vshrl.u32 %v9353, 7
        %v9355 = vsub.s32 %v9352, %v9354
        %v9356 = vrot.slane %v9342, %v9355
        %v9357 = vcombine.low %v9292, %v9308
        %v9358 = vcombine.high %v9292, %v9308
        %v9360 = vunpack.c.l.s4 1934713408
        %v9361 = vunpack.c.0.s8 %v9360
        %v9362 = vlaneseq
        %v9363 = vshrl.u32 %v9362, 7
        %v9364 = vsub.s32 %v9361, %v9363
        %v9365 = vrot.slane %v9357, %v9364
        %v9367 = vunpack.c.l.s4 1934713408
        %v9368 = vunpack.c.0.s8 %v9367
        %v9369 = vlaneseq
        %v9370 = vshrl.u32 %v9369, 7
        %v9371 = vsub.s32 %v9368, %v9370
        %v9372 = vrot.slane %v9358, %v9371
        %v9373 = vcombine.low %v9317, %v9349
        %v9374 = vcombine.high %v9317, %v9349
        %v9375 = vcombine.low %v9324, %v9356
        %v9376 = vcombine.high %v9324, %v9356
        %v9377 = vcombine.low %v9333, %v9365
        %v9378 = vcombine.high %v9333, %v9365
        %v9379 = vcombine.low %v9340, %v9372
        %v9380 = vcombine.high %v9340, %v9372
        %v9381 = vcombine.low %v7135, %v7269
        %v9382 = vcombine.high %v7135, %v7269
        %v9384 = vunpack.c.l.s4 1983009808
        %v9385 = vunpack.c.0.s8 %v9384
        %v9386 = vlaneseq
        %v9387 = vshrl.u32 %v9386, 7
        %v9388 = vsub.s32 %v9385, %v9387
        %v9389 = vrot.slane %v9381, %v9388
        %v9391 = vunpack.c.l.s4 1983009808
        %v9392 = vunpack.c.0.s8 %v9391
        %v9393 = vlaneseq
        %v9394 = vshrl.u32 %v9393, 7
        %v9395 = vsub.s32 %v9392, %v9394
        %v9396 = vrot.slane %v9382, %v9395
        %v9397 = vcombine.low %v7202, %v7336
        %v9398 = vcombine.high %v7202, %v7336
        %v9400 = vunpack.c.l.s4 1983009808
        %v9401 = vunpack.c.0.s8 %v9400
        %v9402 = vlaneseq
        %v9403 = vshrl.u32 %v9402, 7
        %v9404 = vsub.s32 %v9401, %v9403
        %v9405 = vrot.slane %v9397, %v9404
        %v9407 = vunpack.c.l.s4 1983009808
        %v9408 = vunpack.c.0.s8 %v9407
        %v9409 = vlaneseq
        %v9410 = vshrl.u32 %v9409, 7
        %v9411 = vsub.s32 %v9408, %v9410
        %v9412 = vrot.slane %v9398, %v9411
        %v9413 = vcombine.low %v7403, %v7537
        %v9414 = vcombine.high %v7403, %v7537
        %v9416 = vunpack.c.l.s4 1983009808
        %v9417 = vunpack.c.0.s8 %v9416
        %v9418 = vlaneseq
        %v9419 = vshrl.u32 %v9418, 7
        %v9420 = vsub.s32 %v9417, %v9419
        %v9421 = vrot.slane %v9413, %v9420
        %v9423 = vunpack.c.l.s4 1983009808
        %v9424 = vunpack.c.0.s8 %v9423
        %v9425 = vlaneseq
        %v9426 = vshrl.u32 %v9425, 7
        %v9427 = vsub.s32 %v9424, %v9426
        %v9428 = vrot.slane %v9414, %v9427
        %v9429 = vcombine.low %v7470, %v7604
        %v9430 = vcombine.high %v7470, %v7604
        %v9432 = vunpack.c.l.s4 1983009808
        %v9433 = vunpack.c.0.s8 %v9432
        %v9434 = vlaneseq
        %v9435 = vshrl.u32 %v9434, 7
        %v9436 = vsub.s32 %v9433, %v9435
        %v9437 = vrot.slane %v9429, %v9436
        %v9439 = vunpack.c.l.s4 1983009808
        %v9440 = vunpack.c.0.s8 %v9439
        %v9441 = vlaneseq
        %v9442 = vshrl.u32 %v9441, 7
        %v9443 = vsub.s32 %v9440, %v9442
        %v9444 = vrot.slane %v9430, %v9443
        %v9445 = vcombine.low %v9389, %v9405
        %v9446 = vcombine.high %v9389, %v9405
        %v9448 = vunpack.c.l.s4 1934713408
        %v9449 = vunpack.c.0.s8 %v9448
        %v9450 = vlaneseq
        %v9451 = vshrl.u32 %v9450, 7
        %v9452 = vsub.s32 %v9449, %v9451
        %v9453 = vrot.slane %v9445, %v9452
        %v9455 = vunpack.c.l.s4 1934713408
        %v9456 = vunpack.c.0.s8 %v9455
        %v9457 = vlaneseq
        %v9458 = vshrl.u32 %v9457, 7
        %v9459 = vsub.s32 %v9456, %v9458
        %v9460 = vrot.slane %v9446, %v9459
        %v9461 = vcombine.low %v9396, %v9412
        %v9462 = vcombine.high %v9396, %v9412
        %v9464 = vunpack.c.l.s4 1934713408
        %v9465 = vunpack.c.0.s8 %v9464
        %v9466 = vlaneseq
        %v9467 = vshrl.u32 %v9466, 7
        %v9468 = vsub.s32 %v9465, %v9467
        %v9469 = vrot.slane %v9461, %v9468
        %v9471 = vunpack.c.l.s4 1934713408
        %v9472 = vunpack.c.0.s8 %v9471
        %v9473 = vlaneseq
        %v9474 = vshrl.u32 %v9473, 7
        %v9475 = vsub.s32 %v9472, %v9474
        %v9476 = vrot.slane %v9462, %v9475
        %v9477 = vcombine.low %v9421, %v9437
        %v9478 = vcombine.high %v9421, %v9437
        %v9480 = vunpack.c.l.s4 1934713408
        %v9481 = vunpack.c.0.s8 %v9480
        %v9482 = vlaneseq
        %v9483 = vshrl.u32 %v9482, 7
        %v9484 = vsub.s32 %v9481, %v9483
        %v9485 = vrot.slane %v9477, %v9484
        %v9487 = vunpack.c.l.s4 1934713408
        %v9488 = vunpack.c.0.s8 %v9487
        %v9489 = vlaneseq
        %v9490 = vshrl.u32 %v9489, 7
        %v9491 = vsub.s32 %v9488, %v9490
        %v9492 = vrot.slane %v9478, %v9491
        %v9493 = vcombine.low %v9428, %v9444
        %v9494 = vcombine.high %v9428, %v9444
        %v9496 = vunpack.c.l.s4 1934713408
        %v9497 = vunpack.c.0.s8 %v9496
        %v9498 = vlaneseq
        %v9499 = vshrl.u32 %v9498, 7
        %v9500 = vsub.s32 %v9497, %v9499
        %v9501 = vrot.slane %v9493, %v9500
        %v9503 = vunpack.c.l.s4 1934713408
        %v9504 = vunpack.c.0.s8 %v9503
        %v9505 = vlaneseq
        %v9506 = vshrl.u32 %v9505, 7
        %v9507 = vsub.s32 %v9504, %v9506
        %v9508 = vrot.slane %v9494, %v9507
        %v9509 = vcombine.low %v9453, %v9485
        %v9510 = vcombine.high %v9453, %v9485
        %v9511 = vcombine.low %v9460, %v9492
        %v9512 = vcombine.high %v9460, %v9492
        %v9513 = vcombine.low %v9469, %v9501
        %v9514 = vcombine.high %v9469, %v9501
        %v9515 = vcombine.low %v9476, %v9508
        %v9516 = vcombine.high %v9476, %v9508
        %v9517 = vcombine.low %v7139, %v7273
        %v9518 = vcombine.high %v7139, %v7273
        %v9520 = vunpack.c.l.s4 1983009808
        %v9521 = vunpack.c.0.s8 %v9520
        %v9522 = vlaneseq
        %v9523 = vshrl.u32 %v9522, 7
        %v9524 = vsub.s32 %v9521, %v9523
        %v9525 = vrot.slane %v9517, %v9524
        %v9527 = vunpack.c.l.s4 1983009808
        %v9528 = vunpack.c.0.s8 %v9527
        %v9529 = vlaneseq
        %v9530 = vshrl.u32 %v9529, 7
        %v9531 = vsub.s32 %v9528, %v9530
        %v9532 = vrot.slane %v9518, %v9531
        %v9533 = vcombine.low %v7206, %v7340
        %v9534 = vcombine.high %v7206, %v7340
        %v9536 = vunpack.c.l.s4 1983009808
        %v9537 = vunpack.c.0.s8 %v9536
        %v9538 = vlaneseq
        %v9539 = vshrl.u32 %v9538, 7
        %v9540 = vsub.s32 %v9537, %v9539
        %v9541 = vrot.slane %v9533, %v9540
        %v9543 = vunpack.c.l.s4 1983009808
        %v9544 = vunpack.c.0.s8 %v9543
        %v9545 = vlaneseq
        %v9546 = vshrl.u32 %v9545, 7
        %v9547 = vsub.s32 %v9544, %v9546
        %v9548 = vrot.slane %v9534, %v9547
        %v9549 = vcombine.low %v7407, %v7541
        %v9550 = vcombine.high %v7407, %v7541
        %v9552 = vunpack.c.l.s4 1983009808
        %v9553 = vunpack.c.0.s8 %v9552
        %v9554 = vlaneseq
        %v9555 = vshrl.u32 %v9554, 7
        %v9556 = vsub.s32 %v9553, %v9555
        %v9557 = vrot.slane %v9549, %v9556
        %v9559 = vunpack.c.l.s4 1983009808
        %v9560 = vunpack.c.0.s8 %v9559
        %v9561 = vlaneseq
        %v9562 = vshrl.u32 %v9561, 7
        %v9563 = vsub.s32 %v9560, %v9562
        %v9564 = vrot.slane %v9550, %v9563
        %v9565 = vcombine.low %v7474, %v7608
        %v9566 = vcombine.high %v7474, %v7608
        %v9568 = vunpack.c.l.s4 1983009808
        %v9569 = vunpack.c.0.s8 %v9568
        %v9570 = vlaneseq
        %v9571 = vshrl.u32 %v9570, 7
        %v9572 = vsub.s32 %v9569, %v9571
        %v9573 = vrot.slane %v9565, %v9572
        %v9575 = vunpack.c.l.s4 1983009808
        %v9576 = vunpack.c.0.s8 %v9575
        %v9577 = vlaneseq
        %v9578 = vshrl.u32 %v9577, 7
        %v9579 = vsub.s32 %v9576, %v9578
        %v9580 = vrot.slane %v9566, %v9579
        %v9581 = vcombine.low %v9525, %v9541
        %v9582 = vcombine.high %v9525, %v9541
        %v9584 = vunpack.c.l.s4 1934713408
        %v9585 = vunpack.c.0.s8 %v9584
        %v9586 = vlaneseq
        %v9587 = vshrl.u32 %v9586, 7
        %v9588 = vsub.s32 %v9585, %v9587
        %v9589 = vrot.slane %v9581, %v9588
        %v9591 = vunpack.c.l.s4 1934713408
        %v9592 = vunpack.c.0.s8 %v9591
        %v9593 = vlaneseq
        %v9594 = vshrl.u32 %v9593, 7
        %v9595 = vsub.s32 %v9592, %v9594
        %v9596 = vrot.slane %v9582, %v9595
        %v9597 = vcombine.low %v9532, %v9548
        %v9598 = vcombine.high %v9532, %v9548
        %v9600 = vunpack.c.l.s4 1934713408
        %v9601 = vunpack.c.0.s8 %v9600
        %v9602 = vlaneseq
        %v9603 = vshrl.u32 %v9602, 7
        %v9604 = vsub.s32 %v9601, %v9603
        %v9605 = vrot.slane %v9597, %v9604
        %v9607 = vunpack.c.l.s4 1934713408
        %v9608 = vunpack.c.0.s8 %v9607
        %v9609 = vlaneseq
        %v9610 = vshrl.u32 %v9609, 7
        %v9611 = vsub.s32 %v9608, %v9610
        %v9612 = vrot.slane %v9598, %v9611
        %v9613 = vcombine.low %v9557, %v9573
        %v9614 = vcombine.high %v9557, %v9573
        %v9616 = vunpack.c.l.s4 1934713408
        %v9617 = vunpack.c.0.s8 %v9616
        %v9618 = vlaneseq
        %v9619 = vshrl.u32 %v9618, 7
        %v9620 = vsub.s32 %v9617, %v9619
        %v9621 = vrot.slane %v9613, %v9620
        %v9623 = vunpack.c.l.s4 1934713408
        %v9624 = vunpack.c.0.s8 %v9623
        %v9625 = vlaneseq
        %v9626 = vshrl.u32 %v9625, 7
        %v9627 = vsub.s32 %v9624, %v9626
        %v9628 = vrot.slane %v9614, %v9627
        %v9629 = vcombine.low %v9564, %v9580
        %v9630 = vcombine.high %v9564, %v9580
        %v9632 = vunpack.c.l.s4 1934713408
        %v9633 = vunpack.c.0.s8 %v9632
        %v9634 = vlaneseq
        %v9635 = vshrl.u32 %v9634, 7
        %v9636 = vsub.s32 %v9633, %v9635
        %v9637 = vrot.slane %v9629, %v9636
        %v9639 = vunpack.c.l.s4 1934713408
        %v9640 = vunpack.c.0.s8 %v9639
        %v9641 = vlaneseq
        %v9642 = vshrl.u32 %v9641, 7
        %v9643 = vsub.s32 %v9640, %v9642
        %v9644 = vrot.slane %v9630, %v9643
        %v9645 = vcombine.low %v9589, %v9621
        %v9646 = vcombine.high %v9589, %v9621
        %v9647 = vcombine.low %v9596, %v9628
        %v9648 = vcombine.high %v9596, %v9628
        %v9649 = vcombine.low %v9605, %v9637
        %v9650 = vcombine.high %v9605, %v9637
        %v9651 = vcombine.low %v9612, %v9644
        %v9652 = vcombine.high %v9612, %v9644
        %v9653 = vcombine.low %v7143, %v7277
        %v9654 = vcombine.high %v7143, %v7277
        %v9656 = vunpack.c.l.s4 1983009808
        %v9657 = vunpack.c.0.s8 %v9656
        %v9658 = vlaneseq
        %v9659 = vshrl.u32 %v9658, 7
        %v9660 = vsub.s32 %v9657, %v9659
        %v9661 = vrot.slane %v9653, %v9660
        %v9663 = vunpack.c.l.s4 1983009808
        %v9664 = vunpack.c.0.s8 %v9663
        %v9665 = vlaneseq
        %v9666 = vshrl.u32 %v9665, 7
        %v9667 = vsub.s32 %v9664, %v9666
        %v9668 = vrot.slane %v9654, %v9667
        %v9669 = vcombine.low %v7210, %v7344
        %v9670 = vcombine.high %v7210, %v7344
        %v9672 = vunpack.c.l.s4 1983009808
        %v9673 = vunpack.c.0.s8 %v9672
        %v9674 = vlaneseq
        %v9675 = vshrl.u32 %v9674, 7
        %v9676 = vsub.s32 %v9673, %v9675
        %v9677 = vrot.slane %v9669, %v9676
        %v9679 = vunpack.c.l.s4 1983009808
        %v9680 = vunpack.c.0.s8 %v9679
        %v9681 = vlaneseq
        %v9682 = vshrl.u32 %v9681, 7
        %v9683 = vsub.s32 %v9680, %v9682
        %v9684 = vrot.slane %v9670, %v9683
        %v9685 = vcombine.low %v7411, %v7545
        %v9686 = vcombine.high %v7411, %v7545
        %v9688 = vunpack.c.l.s4 1983009808
        %v9689 = vunpack.c.0.s8 %v9688
        %v9690 = vlaneseq
        %v9691 = vshrl.u32 %v9690, 7
        %v9692 = vsub.s32 %v9689, %v9691
        %v9693 = vrot.slane %v9685, %v9692
        %v9695 = vunpack.c.l.s4 1983009808
        %v9696 = vunpack.c.0.s8 %v9695
        %v9697 = vlaneseq
        %v9698 = vshrl.u32 %v9697, 7
        %v9699 = vsub.s32 %v9696, %v9698
        %v9700 = vrot.slane %v9686, %v9699
        %v9701 = vcombine.low %v7478, %v7612
        %v9702 = vcombine.high %v7478, %v7612
        %v9704 = vunpack.c.l.s4 1983009808
        %v9705 = vunpack.c.0.s8 %v9704
        %v9706 = vlaneseq
        %v9707 = vshrl.u32 %v9706, 7
        %v9708 = vsub.s32 %v9705, %v9707
        %v9709 = vrot.slane %v9701, %v9708
        %v9711 = vunpack.c.l.s4 1983009808
        %v9712 = vunpack.c.0.s8 %v9711
        %v9713 = vlaneseq
        %v9714 = vshrl.u32 %v9713, 7
        %v9715 = vsub.s32 %v9712, %v9714
        %v9716 = vrot.slane %v9702, %v9715
        %v9717 = vcombine.low %v9661, %v9677
        %v9718 = vcombine.high %v9661, %v9677
        %v9720 = vunpack.c.l.s4 1934713408
        %v9721 = vunpack.c.0.s8 %v9720
        %v9722 = vlaneseq
        %v9723 = vshrl.u32 %v9722, 7
        %v9724 = vsub.s32 %v9721, %v9723
        %v9725 = vrot.slane %v9717, %v9724
        %v9727 = vunpack.c.l.s4 1934713408
        %v9728 = vunpack.c.0.s8 %v9727
        %v9729 = vlaneseq
        %v9730 = vshrl.u32 %v9729, 7
        %v9731 = vsub.s32 %v9728, %v9730
        %v9732 = vrot.slane %v9718, %v9731
        %v9733 = vcombine.low %v9668, %v9684
        %v9734 = vcombine.high %v9668, %v9684
        %v9736 = vunpack.c.l.s4 1934713408
        %v9737 = vunpack.c.0.s8 %v9736
        %v9738 = vlaneseq
        %v9739 = vshrl.u32 %v9738, 7
        %v9740 = vsub.s32 %v9737, %v9739
        %v9741 = vrot.slane %v9733, %v9740
        %v9743 = vunpack.c.l.s4 1934713408
        %v9744 = vunpack.c.0.s8 %v9743
        %v9745 = vlaneseq
        %v9746 = vshrl.u32 %v9745, 7
        %v9747 = vsub.s32 %v9744, %v9746
        %v9748 = vrot.slane %v9734, %v9747
        %v9749 = vcombine.low %v9693, %v9709
        %v9750 = vcombine.high %v9693, %v9709
        %v9752 = vunpack.c.l.s4 1934713408
        %v9753 = vunpack.c.0.s8 %v9752
        %v9754 = vlaneseq
        %v9755 = vshrl.u32 %v9754, 7
        %v9756 = vsub.s32 %v9753, %v9755
        %v9757 = vrot.slane %v9749, %v9756
        %v9759 = vunpack.c.l.s4 1934713408
        %v9760 = vunpack.c.0.s8 %v9759
        %v9761 = vlaneseq
        %v9762 = vshrl.u32 %v9761, 7
        %v9763 = vsub.s32 %v9760, %v9762
        %v9764 = vrot.slane %v9750, %v9763
        %v9765 = vcombine.low %v9700, %v9716
        %v9766 = vcombine.high %v9700, %v9716
        %v9768 = vunpack.c.l.s4 1934713408
        %v9769 = vunpack.c.0.s8 %v9768
        %v9770 = vlaneseq
        %v9771 = vshrl.u32 %v9770, 7
        %v9772 = vsub.s32 %v9769, %v9771
        %v9773 = vrot.slane %v9765, %v9772
        %v9775 = vunpack.c.l.s4 1934713408
        %v9776 = vunpack.c.0.s8 %v9775
        %v9777 = vlaneseq
        %v9778 = vshrl.u32 %v9777, 7
        %v9779 = vsub.s32 %v9776, %v9778
        %v9780 = vrot.slane %v9766, %v9779
        %v9781 = vcombine.low %v9725, %v9757
        %v9782 = vcombine.high %v9725, %v9757
        %v9783 = vcombine.low %v9732, %v9764
        %v9784 = vcombine.high %v9732, %v9764
        %v9785 = vcombine.low %v9741, %v9773
        %v9786 = vcombine.high %v9741, %v9773
        %v9787 = vcombine.low %v9748, %v9780
        %v9788 = vcombine.high %v9748, %v9780
        %9790 = vrot.lane.b32.xlu0 %v7742, 2
        %v9791 = vpop.permute.xlu0 %9790
        %9794 = vrot.lane.b32.xlu0 %v7743, 4
        %v9795 = vpop.permute.xlu0 %9794
        %9798 = vrot.lane.b32.xlu0 %v7744, 6
        %v9799 = vpop.permute.xlu0 %9798
        %9802 = vrot.lane.b32.xlu0 %v7745, 8
        %v9803 = vpop.permute.xlu0 %9802
        %9806 = vrot.lane.b32.xlu0 %v7746, 10
        %v9807 = vpop.permute.xlu0 %9806
        %9810 = vrot.lane.b32.xlu0 %v7747, 12
        %v9811 = vpop.permute.xlu0 %9810
        %9814 = vrot.lane.b32.xlu0 %v7748, 14
        %v9815 = vpop.permute.xlu0 %9814
        %9818 = vrot.lane.b32.xlu0 %v7877, 16
        %v9819 = vpop.permute.xlu0 %9818
        %9822 = vrot.lane.b32.xlu0 %v7878, 18
        %v9823 = vpop.permute.xlu0 %9822
        %9826 = vrot.lane.b32.xlu0 %v7879, 20
        %v9827 = vpop.permute.xlu0 %9826
        %9830 = vrot.lane.b32.xlu0 %v7880, 22
        %v9831 = vpop.permute.xlu0 %9830
        %9834 = vrot.lane.b32.xlu0 %v7881, 24
        %v9835 = vpop.permute.xlu0 %9834
        %9838 = vrot.lane.b32.xlu0 %v7882, 26
        %v9839 = vpop.permute.xlu0 %9838
        %9842 = vrot.lane.b32.xlu0 %v7883, 28
        %v9843 = vpop.permute.xlu0 %9842
        %9846 = vrot.lane.b32.xlu0 %v7884, 30
        %v9847 = vpop.permute.xlu0 %9846
        %9850 = vrot.lane.b32.xlu0 %v8013, 32
        %v9851 = vpop.permute.xlu0 %9850
        %9854 = vrot.lane.b32.xlu0 %v8014, 34
        %v9855 = vpop.permute.xlu0 %9854
        %9858 = vrot.lane.b32.xlu0 %v8015, 36
        %v9859 = vpop.permute.xlu0 %9858
        %9862 = vrot.lane.b32.xlu0 %v8016, 38
        %v9863 = vpop.permute.xlu0 %9862
        %9866 = vrot.lane.b32.xlu0 %v8017, 40
        %v9867 = vpop.permute.xlu0 %9866
        %9870 = vrot.lane.b32.xlu0 %v8018, 42
        %v9871 = vpop.permute.xlu0 %9870
        %9874 = vrot.lane.b32.xlu0 %v8019, 44
        %v9875 = vpop.permute.xlu0 %9874
        %9878 = vrot.lane.b32.xlu0 %v8020, 46
        %v9879 = vpop.permute.xlu0 %9878
        %9882 = vrot.lane.b32.xlu0 %v8149, 48
        %v9883 = vpop.permute.xlu0 %9882
        %9886 = vrot.lane.b32.xlu0 %v8150, 50
        %v9887 = vpop.permute.xlu0 %9886
        %9890 = vrot.lane.b32.xlu0 %v8151, 52
        %v9891 = vpop.permute.xlu0 %9890
        %9894 = vrot.lane.b32.xlu0 %v8152, 54
        %v9895 = vpop.permute.xlu0 %9894
        %9898 = vrot.lane.b32.xlu0 %v8153, 56
        %v9899 = vpop.permute.xlu0 %9898
        %9902 = vrot.lane.b32.xlu0 %v8154, 58
        %v9903 = vpop.permute.xlu0 %9902
        %9906 = vrot.lane.b32.xlu0 %v8155, 60
        %v9907 = vpop.permute.xlu0 %9906
        %9910 = vrot.lane.b32.xlu0 %v8156, 62
        %v9911 = vpop.permute.xlu0 %9910
        %9914 = vrot.lane.b32.xlu0 %v8285, 64
        %v9915 = vpop.permute.xlu0 %9914
        %9918 = vrot.lane.b32.xlu0 %v8286, 66
        %v9919 = vpop.permute.xlu0 %9918
        %9922 = vrot.lane.b32.xlu0 %v8287, 68
        %v9923 = vpop.permute.xlu0 %9922
        %9926 = vrot.lane.b32.xlu0 %v8288, 70
        %v9927 = vpop.permute.xlu0 %9926
        %9930 = vrot.lane.b32.xlu0 %v8289, 72
        %v9931 = vpop.permute.xlu0 %9930
        %9934 = vrot.lane.b32.xlu0 %v8290, 74
        %v9935 = vpop.permute.xlu0 %9934
        %9938 = vrot.lane.b32.xlu0 %v8291, 76
        %v9939 = vpop.permute.xlu0 %9938
        %9942 = vrot.lane.b32.xlu0 %v8292, 78
        %v9943 = vpop.permute.xlu0 %9942
        %9946 = vrot.lane.b32.xlu0 %v8421, 80
        %v9947 = vpop.permute.xlu0 %9946
        %9950 = vrot.lane.b32.xlu0 %v8422, 82
        %v9951 = vpop.permute.xlu0 %9950
        %9954 = vrot.lane.b32.xlu0 %v8423, 84
        %v9955 = vpop.permute.xlu0 %9954
        %9958 = vrot.lane.b32.xlu0 %v8424, 86
        %v9959 = vpop.permute.xlu0 %9958
        %9962 = vrot.lane.b32.xlu0 %v8425, 88
        %v9963 = vpop.permute.xlu0 %9962
        %9966 = vrot.lane.b32.xlu0 %v8426, 90
        %v9967 = vpop.permute.xlu0 %9966
        %9970 = vrot.lane.b32.xlu0 %v8427, 92
        %v9971 = vpop.permute.xlu0 %9970
        %9974 = vrot.lane.b32.xlu0 %v8428, 94
        %v9975 = vpop.permute.xlu0 %9974
        %9978 = vrot.lane.b32.xlu0 %v8557, 96
        %v9979 = vpop.permute.xlu0 %9978
        %9982 = vrot.lane.b32.xlu0 %v8558, 98
        %v9983 = vpop.permute.xlu0 %9982
        %9986 = vrot.lane.b32.xlu0 %v8559, 100
        %v9987 = vpop.permute.xlu0 %9986
        %9990 = vrot.lane.b32.xlu0 %v8560, 102
        %v9991 = vpop.permute.xlu0 %9990
        %9994 = vrot.lane.b32.xlu0 %v8561, 104
        %v9995 = vpop.permute.xlu0 %9994
        %9998 = vrot.lane.b32.xlu0 %v8562, 106
        %v9999 = vpop.permute.xlu0 %9998
        %10002 = vrot.lane.b32.xlu0 %v8563, 108
        %v10003 = vpop.permute.xlu0 %10002
        %10006 = vrot.lane.b32.xlu0 %v8564, 110
        %v10007 = vpop.permute.xlu0 %10006
        %10010 = vrot.lane.b32.xlu0 %v8693, 112
        %v10011 = vpop.permute.xlu0 %10010
        %10014 = vrot.lane.b32.xlu0 %v8694, 114
        %v10015 = vpop.permute.xlu0 %10014
        %10018 = vrot.lane.b32.xlu0 %v8695, 116
        %v10019 = vpop.permute.xlu0 %10018
        %10022 = vrot.lane.b32.xlu0 %v8696, 118
        %v10023 = vpop.permute.xlu0 %10022
        %10026 = vrot.lane.b32.xlu0 %v8697, 120
        %v10027 = vpop.permute.xlu0 %10026
        %10030 = vrot.lane.b32.xlu0 %v8698, 122
        %v10031 = vpop.permute.xlu0 %10030
        %10034 = vrot.lane.b32.xlu0 %v8699, 124
        %v10035 = vpop.permute.xlu0 %10034
        %10038 = vrot.lane.b32.xlu0 %v8700, 126
        %v10039 = vpop.permute.xlu0 %10038
        %10042 = vrot.lane.b32.xlu0 %v8830, 2
        %v10043 = vpop.permute.xlu0 %10042
        %10046 = vrot.lane.b32.xlu0 %v8831, 4
        %v10047 = vpop.permute.xlu0 %10046
        %10050 = vrot.lane.b32.xlu0 %v8832, 6
        %v10051 = vpop.permute.xlu0 %10050
        %10054 = vrot.lane.b32.xlu0 %v8833, 8
        %v10055 = vpop.permute.xlu0 %10054
        %10058 = vrot.lane.b32.xlu0 %v8834, 10
        %v10059 = vpop.permute.xlu0 %10058
        %10062 = vrot.lane.b32.xlu0 %v8835, 12
        %v10063 = vpop.permute.xlu0 %10062
        %10066 = vrot.lane.b32.xlu0 %v8836, 14
        %v10067 = vpop.permute.xlu0 %10066
        %10070 = vrot.lane.b32.xlu0 %v8965, 16
        %v10071 = vpop.permute.xlu0 %10070
        %10074 = vrot.lane.b32.xlu0 %v8966, 18
        %v10075 = vpop.permute.xlu0 %10074
        %10078 = vrot.lane.b32.xlu0 %v8967, 20
        %v10079 = vpop.permute.xlu0 %10078
        %10082 = vrot.lane.b32.xlu0 %v8968, 22
        %v10083 = vpop.permute.xlu0 %10082
        %10086 = vrot.lane.b32.xlu0 %v8969, 24
        %v10087 = vpop.permute.xlu0 %10086
        %10090 = vrot.lane.b32.xlu0 %v8970, 26
        %v10091 = vpop.permute.xlu0 %10090
        %10094 = vrot.lane.b32.xlu0 %v8971, 28
        %v10095 = vpop.permute.xlu0 %10094
        %10098 = vrot.lane.b32.xlu0 %v8972, 30
        %v10099 = vpop.permute.xlu0 %10098
        %10102 = vrot.lane.b32.xlu0 %v9101, 32
        %v10103 = vpop.permute.xlu0 %10102
        %10106 = vrot.lane.b32.xlu0 %v9102, 34
        %v10107 = vpop.permute.xlu0 %10106
        %10110 = vrot.lane.b32.xlu0 %v9103, 36
        %v10111 = vpop.permute.xlu0 %10110
        %10114 = vrot.lane.b32.xlu0 %v9104, 38
        %v10115 = vpop.permute.xlu0 %10114
        %10118 = vrot.lane.b32.xlu0 %v9105, 40
        %v10119 = vpop.permute.xlu0 %10118
        %10122 = vrot.lane.b32.xlu0 %v9106, 42
        %v10123 = vpop.permute.xlu0 %10122
        %10126 = vrot.lane.b32.xlu0 %v9107, 44
        %v10127 = vpop.permute.xlu0 %10126
        %10130 = vrot.lane.b32.xlu0 %v9108, 46
        %v10131 = vpop.permute.xlu0 %10130
        %10134 = vrot.lane.b32.xlu0 %v9237, 48
        %v10135 = vpop.permute.xlu0 %10134
        %10138 = vrot.lane.b32.xlu0 %v9238, 50
        %v10139 = vpop.permute.xlu0 %10138
        %10142 = vrot.lane.b32.xlu0 %v9239, 52
        %v10143 = vpop.permute.xlu0 %10142
        %10146 = vrot.lane.b32.xlu0 %v9240, 54
        %v10147 = vpop.permute.xlu0 %10146
        %10150 = vrot.lane.b32.xlu0 %v9241, 56
        %v10151 = vpop.permute.xlu0 %10150
        %10154 = vrot.lane.b32.xlu0 %v9242, 58
        %v10155 = vpop.permute.xlu0 %10154
        %10158 = vrot.lane.b32.xlu0 %v9243, 60
        %v10159 = vpop.permute.xlu0 %10158
        %10162 = vrot.lane.b32.xlu0 %v9244, 62
        %v10163 = vpop.permute.xlu0 %10162
        %10166 = vrot.lane.b32.xlu0 %v9373, 64
        %v10167 = vpop.permute.xlu0 %10166
        %10170 = vrot.lane.b32.xlu0 %v9374, 66
        %v10171 = vpop.permute.xlu0 %10170
        %10174 = vrot.lane.b32.xlu0 %v9375, 68
        %v10175 = vpop.permute.xlu0 %10174
        %10178 = vrot.lane.b32.xlu0 %v9376, 70
        %v10179 = vpop.permute.xlu0 %10178
        %10182 = vrot.lane.b32.xlu0 %v9377, 72
        %v10183 = vpop.permute.xlu0 %10182
        %10186 = vrot.lane.b32.xlu0 %v9378, 74
        %v10187 = vpop.permute.xlu0 %10186
        %10190 = vrot.lane.b32.xlu0 %v9379, 76
        %v10191 = vpop.permute.xlu0 %10190
        %10194 = vrot.lane.b32.xlu0 %v9380, 78
        %v10195 = vpop.permute.xlu0 %10194
        %10198 = vrot.lane.b32.xlu0 %v9509, 80
        %v10199 = vpop.permute.xlu0 %10198
        %10202 = vrot.lane.b32.xlu0 %v9510, 82
        %v10203 = vpop.permute.xlu0 %10202
        %10206 = vrot.lane.b32.xlu0 %v9511, 84
        %v10207 = vpop.permute.xlu0 %10206
        %10210 = vrot.lane.b32.xlu0 %v9512, 86
        %v10211 = vpop.permute.xlu0 %10210
        %10214 = vrot.lane.b32.xlu0 %v9513, 88
        %v10215 = vpop.permute.xlu0 %10214
        %10218 = vrot.lane.b32.xlu0 %v9514, 90
        %v10219 = vpop.permute.xlu0 %10218
        %10222 = vrot.lane.b32.xlu0 %v9515, 92
        %v10223 = vpop.permute.xlu0 %10222
        %10226 = vrot.lane.b32.xlu0 %v9516, 94
        %v10227 = vpop.permute.xlu0 %10226
        %10230 = vrot.lane.b32.xlu0 %v9645, 96
        %v10231 = vpop.permute.xlu0 %10230
        %10234 = vrot.lane.b32.xlu0 %v9646, 98
        %v10235 = vpop.permute.xlu0 %10234
        %10238 = vrot.lane.b32.xlu0 %v9647, 100
        %v10239 = vpop.permute.xlu0 %10238
        %10242 = vrot.lane.b32.xlu0 %v9648, 102
        %v10243 = vpop.permute.xlu0 %10242
        %10246 = vrot.lane.b32.xlu0 %v9649, 104
        %v10247 = vpop.permute.xlu0 %10246
        %10250 = vrot.lane.b32.xlu0 %v9650, 106
        %v10251 = vpop.permute.xlu0 %10250
        %10254 = vrot.lane.b32.xlu0 %v9651, 108
        %v10255 = vpop.permute.xlu0 %10254
        %10258 = vrot.lane.b32.xlu0 %v9652, 110
        %v10259 = vpop.permute.xlu0 %10258
        %10262 = vrot.lane.b32.xlu0 %v9781, 112
        %v10263 = vpop.permute.xlu0 %10262
        %10266 = vrot.lane.b32.xlu0 %v9782, 114
        %v10267 = vpop.permute.xlu0 %10266
        %10270 = vrot.lane.b32.xlu0 %v9783, 116
        %v10271 = vpop.permute.xlu0 %10270
        %10274 = vrot.lane.b32.xlu0 %v9784, 118
        %v10275 = vpop.permute.xlu0 %10274
        %10278 = vrot.lane.b32.xlu0 %v9785, 120
        %v10279 = vpop.permute.xlu0 %10278
        %10282 = vrot.lane.b32.xlu0 %v9786, 122
        %v10283 = vpop.permute.xlu0 %10282
        %10286 = vrot.lane.b32.xlu0 %v9787, 124
        %v10287 = vpop.permute.xlu0 %10286
        %10290 = vrot.lane.b32.xlu0 %v9788, 126
        %v10291 = vpop.permute.xlu0 %10290
        %v10293 = vsel %vm3535, %v7741, %v9791
        %v10294 = vsel %vm3537, %v10293, %v9795
        %v10295 = vsel %vm3539, %v10294, %v9799
        %v10296 = vsel %vm3541, %v10295, %v9803
        %v10297 = vsel %vm3543, %v10296, %v9807
        %v10298 = vsel %vm3545, %v10297, %v9811
        %v10299 = vsel %vm3547, %v10298, %v9815
        %v10300 = vsel %vm3549, %v10299, %v9819
        %v10301 = vsel %vm3551, %v10300, %v9823
        %v10302 = vsel %vm3553, %v10301, %v9827
        %v10303 = vsel %vm3555, %v10302, %v9831
        %v10304 = vsel %vm3557, %v10303, %v9835
        %v10305 = vsel %vm3559, %v10304, %v9839
        %v10306 = vsel %vm3561, %v10305, %v9843
        %v10307 = vsel %vm3563, %v10306, %v9847
        %v10308 = vsel %vm3565, %v10307, %v9851
        %v10309 = vsel %vm3567, %v10308, %v9855
        %v10310 = vsel %vm3569, %v10309, %v9859
        %v10311 = vsel %vm3571, %v10310, %v9863
        %v10312 = vsel %vm3573, %v10311, %v9867
        %v10313 = vsel %vm3575, %v10312, %v9871
        %v10314 = vsel %vm3577, %v10313, %v9875
        %v10315 = vsel %vm3579, %v10314, %v9879
        %v10316 = vsel %vm3581, %v10315, %v9883
        %v10317 = vsel %vm3583, %v10316, %v9887
        %v10318 = vsel %vm3585, %v10317, %v9891
        %v10319 = vsel %vm3587, %v10318, %v9895
        %v10320 = vsel %vm3589, %v10319, %v9899
        %v10321 = vsel %vm3591, %v10320, %v9903
        %v10322 = vsel %vm3593, %v10321, %v9907
        %v10323 = vsel %vm3595, %v10322, %v9911
        %v10324 = vsel %vm3597, %v10323, %v9915
        %v10325 = vsel %vm3599, %v10324, %v9919
        %v10326 = vsel %vm3601, %v10325, %v9923
        %v10327 = vsel %vm3603, %v10326, %v9927
        %v10328 = vsel %vm3605, %v10327, %v9931
        %v10329 = vsel %vm3607, %v10328, %v9935
        %v10330 = vsel %vm3609, %v10329, %v9939
        %v10331 = vsel %vm3611, %v10330, %v9943
        %v10332 = vsel %vm3613, %v10331, %v9947
        %v10333 = vsel %vm3615, %v10332, %v9951
        %v10334 = vsel %vm3617, %v10333, %v9955
        %v10335 = vsel %vm3619, %v10334, %v9959
        %v10336 = vsel %vm3621, %v10335, %v9963
        %v10337 = vsel %vm3623, %v10336, %v9967
        %v10338 = vsel %vm3625, %v10337, %v9971
        %v10339 = vsel %vm3627, %v10338, %v9975
        %v10340 = vsel %vm3629, %v10339, %v9979
        %v10341 = vsel %vm3631, %v10340, %v9983
        %v10342 = vsel %vm3633, %v10341, %v9987
        %v10343 = vsel %vm3635, %v10342, %v9991
        %v10344 = vsel %vm3637, %v10343, %v9995
        %v10345 = vsel %vm3639, %v10344, %v9999
        %v10346 = vsel %vm3641, %v10345, %v10003
        %v10347 = vsel %vm3643, %v10346, %v10007
        %v10348 = vsel %vm3645, %v10347, %v10011
        %v10349 = vsel %vm3647, %v10348, %v10015
        %v10350 = vsel %vm3649, %v10349, %v10019
        %v10351 = vsel %vm3651, %v10350, %v10023
        %v10352 = vsel %vm3653, %v10351, %v10027
        %v10353 = vsel %vm3655, %v10352, %v10031
        %v10354 = vsel %vm3657, %v10353, %v10035
        %v10355 = vsel %vm3659, %v10354, %v10039
        %v10356 = vsel %vm3535, %v8829, %v10043
        %v10357 = vsel %vm3537, %v10356, %v10047
        %v10358 = vsel %vm3539, %v10357, %v10051
        %v10359 = vsel %vm3541, %v10358, %v10055
        %v10360 = vsel %vm3543, %v10359, %v10059
        %v10361 = vsel %vm3545, %v10360, %v10063
        %v10362 = vsel %vm3547, %v10361, %v10067
        %v10363 = vsel %vm3549, %v10362, %v10071
        %v10364 = vsel %vm3551, %v10363, %v10075
        %v10365 = vsel %vm3553, %v10364, %v10079
        %v10366 = vsel %vm3555, %v10365, %v10083
        %v10367 = vsel %vm3557, %v10366, %v10087
        %v10368 = vsel %vm3559, %v10367, %v10091
        %v10369 = vsel %vm3561, %v10368, %v10095
        %v10370 = vsel %vm3563, %v10369, %v10099
        %v10371 = vsel %vm3565, %v10370, %v10103
        %v10372 = vsel %vm3567, %v10371, %v10107
        %v10373 = vsel %vm3569, %v10372, %v10111
        %v10374 = vsel %vm3571, %v10373, %v10115
        %v10375 = vsel %vm3573, %v10374, %v10119
        %v10376 = vsel %vm3575, %v10375, %v10123
        %v10377 = vsel %vm3577, %v10376, %v10127
        %v10378 = vsel %vm3579, %v10377, %v10131
        %v10379 = vsel %vm3581, %v10378, %v10135
        %v10380 = vsel %vm3583, %v10379, %v10139
        %v10381 = vsel %vm3585, %v10380, %v10143
        %v10382 = vsel %vm3587, %v10381, %v10147
        %v10383 = vsel %vm3589, %v10382, %v10151
        %v10384 = vsel %vm3591, %v10383, %v10155
        %v10385 = vsel %vm3593, %v10384, %v10159
        %v10386 = vsel %vm3595, %v10385, %v10163
        %v10387 = vsel %vm3597, %v10386, %v10167
        %v10388 = vsel %vm3599, %v10387, %v10171
        %v10389 = vsel %vm3601, %v10388, %v10175
        %v10390 = vsel %vm3603, %v10389, %v10179
        %v10391 = vsel %vm3605, %v10390, %v10183
        %v10392 = vsel %vm3607, %v10391, %v10187
        %v10393 = vsel %vm3609, %v10392, %v10191
        %v10394 = vsel %vm3611, %v10393, %v10195
        %v10395 = vsel %vm3613, %v10394, %v10199
        %v10396 = vsel %vm3615, %v10395, %v10203
        %v10397 = vsel %vm3617, %v10396, %v10207
        %v10398 = vsel %vm3619, %v10397, %v10211
        %v10399 = vsel %vm3621, %v10398, %v10215
        %v10400 = vsel %vm3623, %v10399, %v10219
        %v10401 = vsel %vm3625, %v10400, %v10223
        %v10402 = vsel %vm3627, %v10401, %v10227
        %v10403 = vsel %vm3629, %v10402, %v10231
        %v10404 = vsel %vm3631, %v10403, %v10235
        %v10405 = vsel %vm3633, %v10404, %v10239
        %v10406 = vsel %vm3635, %v10405, %v10243
        %v10407 = vsel %vm3637, %v10406, %v10247
        %v10408 = vsel %vm3639, %v10407, %v10251
        %v10409 = vsel %vm3641, %v10408, %v10255
        %v10410 = vsel %vm3643, %v10409, %v10259
        %v10411 = vsel %vm3645, %v10410, %v10263
        %v10412 = vsel %vm3647, %v10411, %v10267
        %v10413 = vsel %vm3649, %v10412, %v10271
        %v10414 = vsel %vm3651, %v10413, %v10275
        %v10415 = vsel %vm3653, %v10414, %v10279
        %v10416 = vsel %vm3655, %v10415, %v10283
        %v10417 = vsel %vm3657, %v10416, %v10287
        %v10418 = vsel %vm3659, %v10417, %v10291
        %v10419 = vadd.f32 %v10355, %v3724
        %v10420 = vadd.f32 %v10418, %v3725
        %10421 = vst [vmem:[%s282 + $0x10] sm:$0xff] %v10419
        %10422 = vst [vmem:[%s282 + $0x18] sm:$0xff] %v10420
        %s10423 = sand.u32 %s129, 1
        %s10424 = scalar_lea.sflag [#allocation4], %s10423
        %s10425 = sand.u32 %s129, 1
        %s10426 = smul.addr %s10425, 32
        %s10427 = scalar_lea.vmem [#allocation8], %s10426
        // Predicated region
        $region45: #{tpu_custom_call.1} parent=31 // pred_check
          %p10428 = pneg %p139
        $region46: #{tpu_custom_call.1} parent=31 // pred_check_branch
          %10430 = sbr.rel (%p10428) target = $region48
        $region47: #{tpu_custom_call.1} parent=31 // pred_region
          %s10432 = ssub.s32 512, 512
          %10433 = vsyncadd %s10424, %s10432
          %s10434 = smul.addr %s28, 4
          %s10435 = smul.addr %s27, 16
          %s10436 = sadd.s32 %s10434, %s10435
          %s10437 = smul.addr %s10436, 128
          %s10438 = scalar_lea.hbm %s3, %s10437
          %s10440 = sshll.u32 %s10427, 4
          %s10441 = int_to_ptr.vmem [resolvable:$true] %s10440
          %10443 = dma.vmem_to_hbm [thread:$0]  %s10441, 512, %s10438, %s10424
        $region48: #{tpu_custom_call.1} parent=31 // pred_fallthru
          _
      $region32: #{tpu_custom_call.1} parent=5 // pred_fallthru
        _
      %p10444 = scmp.le.s32.totalorder 2, %s18
      // Predicated region
      $region49: #{tpu_custom_call.1} parent=5 // pred_check
        %p10445 = pneg %p10444
      $region50: #{tpu_custom_call.1} parent=5 // pred_check_branch
        %10447 = sbr.rel (%p10445) target = $region52
      $region51: #{tpu_custom_call.1} parent=5 // pred_region
        %s10448 = ssub.s32 %s18, 2
        // Predicated region
        $region53: #{tpu_custom_call.1} parent=51 // pred_check
          %p10449 = pneg %p145
        $region54: #{tpu_custom_call.1} parent=51 // pred_check_branch
          %10451 = sbr.rel (%p10449) target = $region56
        $region55: #{tpu_custom_call.1} parent=51 // pred_region
          %s10452 = sand.u32 %s130, 1
          %s10453 = scalar_lea.sflag [#allocation4], %s10452
          %s10454 = sand.u32 %s130, 1
          %s10455 = smul.addr %s10454, 32
          %s10456 = scalar_lea.vmem [#allocation8], %s10455
          %10457 = dma.done %s10453, 512
        $region56: #{tpu_custom_call.1} parent=51 // pred_fallthru
          _
      $region52: #{tpu_custom_call.1} parent=5 // pred_fallthru
        _
    $region6: #{tpu_custom_call.1} parent=1 // loop_footer
      %s22 = sadd.s32 1, %s18
    $region7: #{tpu_custom_call.1} parent=1 // loop_footer_branch
      %17 = sbr.rel target = $region3
    $region8: #{tpu_custom_call.1} parent=1 // loop_exit
      _
    %10458 = vsyncpa [#allocation3], 1
    %s10459 = scalar_lea.sflag [#allocation3], 1
    %10460 = vsyncpa %s10459, 1
    %10461 = vsyncpa [#allocation6], 1
    %s10462 = scalar_lea.sflag [#allocation6], 1
    %10463 = vsyncpa %s10462, 1
    %10464 = vsyncpa [#allocation4], 1
    %s10465 = scalar_lea.sflag [#allocation4], 1
    %10466 = vsyncpa %s10465, 1

</llo_original>
